<compile_context>
chip_gen: v5e
topology: v5e:2x2
jax: 0.10.0
libtpu: 0.0.40
codegen_flags: <defaults>
</compile_context>

<pallas_src>
import math
import functools
import numpy as np
import jax
import jax.numpy as jnp
from jax.experimental import pallas as pl
from jax.experimental.pallas import tpu as pltpu


# ----------------------------------------------------------------------------
# Fused kernel: start conv + gated dilated TCN + skip + BN + SE + transformer
#               encoder + residual + end Linear layers
# ----------------------------------------------------------------------------
def lightcts_kernel(xin_ref, sw_ref, sb_ref,
                    wtop_ref, wbot_ref, bt_ref, bng_ref, bnb_ref,
                    wse1_ref, wse2_ref,
                    wqkv_ref, bqkv_ref, wo_ref, bo_ref,
                    ln1g_ref, ln1b_ref, wf1_ref, bf1_ref, wf2_ref, bf2_ref,
                    ln2g_ref, ln2b_ref,
                    we1_ref, be1_ref, we2_ref, be2_ref,
                    out_ref, *, T, B, N, heads, dilations):
    f32 = jnp.float32
    bf16 = jnp.bfloat16
    C = sw_ref.shape[-1]
    M = B * N
    Lc = wtop_ref.shape[0]
    L = wqkv_ref.shape[0]
    H = heads
    dh = C // H

    # ---------------- start_conv: one broadcasted op over the whole slab ----
    # TODO(synk): xin has a 1-wide lane dim; negligible at toy size, fold into
    # the first TCN layer's packed weights (or re-layout) once B*N scales.
    x = xin_ref[...] * sw_ref[...] + sb_ref[...]                     # (T*M, C)

    # ---------------- TCN: two K=C matmuls per layer (no lane concat) --------
    skip = jnp.zeros((M, C), f32)
    t_len = T
    for l in range(Lc):
        d = dilations[l]
        t_out = t_len - d
        x_bf = x.astype(bf16)                                        # cast once
        fg = (jnp.dot(x_bf[: t_out * M], wtop_ref[l],
                      preferred_element_type=f32)
              + jnp.dot(x_bf[d * M: t_len * M], wbot_ref[l],
                        preferred_element_type=f32)
              + bt_ref[l])                                           # (t_out*M, 2C)
        xnew = jnp.tanh(fg[:, :C]) * jax.nn.sigmoid(fg[:, C:])       # (t_out*M, C)

        # skip += x[:, :, :, -1:]   (last output time slab, shuffle folded in W)
        skip = skip + xnew[(t_out - 1) * M: t_out * M]

        if l == Lc - 1:
            break

        # residual: x = x + residual[:, :, :, -t_out:]  (f32)
        xnew = xnew + x[d * M: t_len * M]

        # BatchNorm2d, training-mode batch statistics (one-pass reduction)
        inv_cnt = 1.0 / float(t_out * M)
        s1 = jnp.sum(xnew, axis=0, keepdims=True)
        s2 = jnp.sum(xnew * xnew, axis=0, keepdims=True)
        mean = s1 * inv_cnt
        var = s2 * inv_cnt - mean * mean
        inv = jax.lax.rsqrt(var + 1e-5)
        x = (xnew - mean) * (inv * bng_ref[l]) + bnb_ref[l]
        t_len = t_out

    # ---------------- SE layer (vectorized pool/gate over B) -----------------
    xh3 = skip.reshape(B, N, C)                                      # (B, N, C)
    pool = jnp.mean(xh3, axis=1)                                     # (B, C)
    y = jnp.maximum(jnp.dot(pool.astype(bf16), wse1_ref[...],
                            preferred_element_type=f32), 0.0)
    y = jax.nn.sigmoid(jnp.dot(y.astype(bf16), wse2_ref[...],
                               preferred_element_type=f32))          # (B, C)
    xh = (xh3 * y[:, None, :]).reshape(M, C)
    x_res = xh                                                       # residual AFTER SE

    # ---------------- transformer encoder ------------------------------------
    # TODO(synk): the original `Transformer` class is external/unavailable; it is
    # approximated as a standard post-LN encoder (MHA + FFN), mask is all-False.
    def layer_norm(v, g, b):
        mu = jnp.mean(v, axis=-1, keepdims=True)
        var = jnp.mean((v - mu) ** 2, axis=-1, keepdims=True)
        return (v - mu) * jax.lax.rsqrt(var + 1e-5) * g + b

    for l in range(L):
        # fused QKV on the whole (B*N, C) slab: one (M,C)@(C,3C) matmul.
        # 1/sqrt(dh) score scale is folded into Wq/bq on the host.
        qkv = jnp.dot(xh.astype(bf16), wqkv_ref[l],
                      preferred_element_type=f32) + bqkv_ref[l]      # (M, 3C)
        qkv3 = qkv.astype(bf16).reshape(B, N, 3 * C)                 # cast once

        attn = jnp.zeros((M, C), f32)
        for h in range(H):
            qh = qkv3[:, :, h * dh:(h + 1) * dh]                     # (B, N, dh)
            kh = qkv3[:, :, C + h * dh:C + (h + 1) * dh]
            vh = qkv3[:, :, 2 * C + h * dh:2 * C + (h + 1) * dh]
            s = jnp.einsum("bqd,bkd->bqk", qh, kh,
                           preferred_element_type=f32)               # (B, N, N)
            s = s - jnp.max(s, axis=-1, keepdims=True)
            e = jnp.exp(s)
            p = e * pl.reciprocal(jnp.sum(e, axis=-1, keepdims=True), approx=True)
            ctx = jnp.einsum("bqk,bkd->bqd", p.astype(bf16), vh,
                             preferred_element_type=f32)             # (B, N, dh)
            # accumulate the output projection per head -> no lane concat
            attn = attn + jnp.dot(ctx.reshape(M, dh).astype(bf16), wo_ref[l, h],
                                  preferred_element_type=f32)        # (M, C)
        attn = attn + bo_ref[l]
        xh = layer_norm(xh + attn, ln1g_ref[l], ln1b_ref[l])

        ff = jnp.maximum(jnp.dot(xh.astype(bf16), wf1_ref[l],
                                 preferred_element_type=f32) + bf1_ref[l], 0.0)
        ff = jnp.dot(ff.astype(bf16), wf2_ref[l],
                     preferred_element_type=f32) + bf2_ref[l]
        xh = layer_norm(xh + ff, ln2g_ref[l], ln2b_ref[l])

    # ---------------- residual + end Linear layers ---------------------------
    xh = xh + x_res
    h1 = jnp.maximum(jnp.dot(xh.astype(bf16), we1_ref[...],
                             preferred_element_type=f32) + be1_ref[...], 0.0)
    out = jnp.dot(h1.astype(bf16), we2_ref[...],
                  preferred_element_type=f32) + be2_ref[...]         # (M, pred_len)
    out_ref[...] = out    # pred_len=12 -> masked stores; tiny at this size


# ----------------------------------------------------------------------------
# Parameter construction (deterministic, mirrors the torch module's structure;
# grouped convs expanded to block-diagonal dense weights, channel_shuffle and
# filter/gate packing + attention scale folded on the host)
# ----------------------------------------------------------------------------
def init_params(key, *, hid=32, pred_len=12, layers=2, cnn_layers=4,
                group=4, heads=8, reduction=8):
    C = hid
    cpg = C // group
    dh = C // heads
    f32 = jnp.float32
    bf16 = jnp.bfloat16
    ks = jax.random.split(key, 32)
    it = iter(ks)

    def nrm(shape, scale=0.1):
        return jax.random.normal(next(it), shape, dtype=f32) * scale

    p = {}
    # start_conv: Conv2d(1, C, (1,1)) == per-position scale + bias
    p["start_w"] = nrm((1, C))
    p["start_b"] = nrm((1, C), 0.01)

    # channel_shuffle(groups) as a permutation matrix (folded into conv weights)
    perm = np.array([(c % group) * cpg + c // group for c in range(C)], dtype=np.int64)
    pm_np = np.zeros((C, C), np.float32)
    pm_np[perm, np.arange(C)] = 1.0
    pm = jnp.asarray(pm_np)

    # grouped dilated Conv2d(C, C, (1,2), groups=group) as block-diagonal dense
    def grouped_dense():
        w = nrm((cnn_layers, group, cpg, cpg, 2))
        dense = jnp.zeros((cnn_layers, 2, C, C), f32)
        for g in range(group):
            blk = jnp.transpose(w[:, g], (0, 3, 2, 1))   # (Lc, tap, in, out)
            dense = dense.at[:, :, g * cpg:(g + 1) * cpg, g * cpg:(g + 1) * cpg].set(blk)
        return dense

    wf_d = grouped_dense()
    wg_d = grouped_dense()
    bf = nrm((cnn_layers, 1, C), 0.01)
    bg = nrm((cnn_layers, 1, C), 0.01)

    # fold the channel-shuffle permutation into output channels
    wf_s = jnp.einsum("ltio,oj->ltij", wf_d, pm)
    wg_s = jnp.einsum("ltio,oj->ltij", wg_d, pm)
    bf_s = jnp.einsum("lio,oj->lij", bf, pm)
    bg_s = jnp.einsum("lio,oj->lij", bg, pm)

    # per-tap weights, cols [filter | gate]; taps kept SEPARATE (no lane concat)
    p["w_tcn_top"] = jnp.concatenate([wf_s[:, 0], wg_s[:, 0]], axis=-1).astype(bf16)  # (Lc, C, 2C)
    p["w_tcn_bot"] = jnp.concatenate([wf_s[:, 1], wg_s[:, 1]], axis=-1).astype(bf16)  # (Lc, C, 2C)
    p["b_tcn"] = jnp.concatenate([bf_s, bg_s], axis=-1)                               # (Lc, 1, 2C)

    # BatchNorm2d affine params (training-mode stats computed in-kernel)
    p["bn_g"] = 1.0 + nrm((cnn_layers, 1, C), 0.1)
    p["bn_b"] = nrm((cnn_layers, 1, C), 0.1)

    # SELayer (bias-free bottleneck MLP)
    p["se_w1"] = nrm((C, C // reduction)).astype(bf16)
    p["se_w2"] = nrm((C // reduction, C)).astype(bf16)

    # transformer encoder: fused QKV; 1/sqrt(dh) folded into Wq/bq
    scale = 1.0 / math.sqrt(float(dh))
    wq = nrm((layers, C, C)) * scale
    wk = nrm((layers, C, C))
    wv = nrm((layers, C, C))
    bq = nrm((layers, 1, C), 0.01) * scale
    bk = nrm((layers, 1, C), 0.01)
    bv = nrm((layers, 1, C), 0.01)
    p["w_qkv"] = jnp.concatenate([wq, wk, wv], axis=-1).astype(bf16)   # (L, C, 3C)
    p["b_qkv"] = jnp.concatenate([bq, bk, bv], axis=-1)                # (L, 1, 3C)
    # output projection pre-split per head: (L, H, dh, C)
    p["w_o"] = nrm((layers, C, C)).reshape(layers, heads, dh, C).astype(bf16)
    p["b_o"] = nrm((layers, 1, C), 0.01)
    p["ln1_g"] = jnp.ones((layers, 1, C), f32)
    p["ln1_b"] = jnp.zeros((layers, 1, C), f32)
    p["wf1"] = nrm((layers, C, 4 * C)).astype(bf16)
    p["bf1"] = nrm((layers, 1, 4 * C), 0.01)
    p["wf2"] = nrm((layers, 4 * C, C)).astype(bf16)
    p["bf2"] = nrm((layers, 1, C), 0.01)
    p["ln2_g"] = jnp.ones((layers, 1, C), f32)
    p["ln2_b"] = jnp.zeros((layers, 1, C), f32)

    # end_conv1 / end_conv2 (nn.Linear on the last dim)
    p["we1"] = nrm((C, 4 * C)).astype(bf16)
    p["be1"] = nrm((1, 4 * C), 0.01)
    p["we2"] = nrm((4 * C, pred_len)).astype(bf16)
    p["be2"] = nrm((1, pred_len), 0.01)
    return p


# ----------------------------------------------------------------------------
# Advisory cost estimate for the fused custom call
# ----------------------------------------------------------------------------
def _cost_estimate(args, out_nbytes, *, T, B, N, C, L, Lc, H, pred_len, dils):
    M = B * N
    dh = C // H
    flops = 0
    trans = 0
    t_len = T
    for i in range(Lc):
        t_out = t_len - dils[i]
        flops += 2 * 2 * (t_out * M) * C * (2 * C)        # two tap matmuls
        trans += 3 * t_out * M * C                        # tanh + sigmoid
        t_len = t_out
    flops += 4 * B * C * max(C // 8, 1)                   # SE bottleneck MLP
    trans += B * C
    per_layer = (2 * M * C * (3 * C)                      # fused QKV
                 + H * (2 * 2 * B * N * N * dh            # scores + context
                        + 2 * M * dh * C)                 # per-head out proj
                 + 2 * (2 * M * C * (4 * C)))             # FFN
    flops += L * per_layer
    trans += L * B * N * N * H                            # softmax exp
    flops += 2 * M * C * (4 * C) + 2 * M * (4 * C) * pred_len
    bytes_accessed = sum(int(np.prod(a.shape)) * a.dtype.itemsize for a in args)
    bytes_accessed += out_nbytes
    return pl.CostEstimate(flops=int(flops), transcendentals=int(trans),
                           bytes_accessed=int(bytes_accessed))


# ----------------------------------------------------------------------------
# Forward wrapper: single fused pallas_call
# ----------------------------------------------------------------------------
def model_forward(x, params, *, heads=8, receptive_field=16):
    # x: (B, T, N) float32
    B, T, N = x.shape
    pred_len = params["we2"].shape[-1]
    C = params["start_w"].shape[-1]

    if T < receptive_field:
        x = jnp.pad(x, ((0, 0), (receptive_field - T, 0), (0, 0)))
        T = receptive_field

    M = B * N
    # rows ordered (t, b, n); trailing size-1 dim so start_conv is one broadcast
    x_rows = jnp.transpose(x, (1, 0, 2)).reshape(T * M, 1).astype(jnp.float32)

    cnn_layers = params["w_tcn_top"].shape[0]
    layers = params["w_qkv"].shape[0]
    dils = (1, 2, 4, 8)[:cnn_layers]

    kernel = functools.partial(lightcts_kernel, T=T, B=B, N=N, heads=heads,
                               dilations=dils)

    args = (x_rows, params["start_w"], params["start_b"],
            params["w_tcn_top"], params["w_tcn_bot"], params["b_tcn"],
            params["bn_g"], params["bn_b"],
            params["se_w1"], params["se_w2"],
            params["w_qkv"], params["b_qkv"], params["w_o"], params["b_o"],
            params["ln1_g"], params["ln1_b"], params["wf1"], params["bf1"],
            params["wf2"], params["bf2"], params["ln2_g"], params["ln2_b"],
            params["we1"], params["be1"], params["we2"], params["be2"])

    ce = _cost_estimate(args, M * pred_len * 4, T=T, B=B, N=N, C=C,
                        L=layers, Lc=cnn_layers, H=heads,
                        pred_len=pred_len, dils=dils)

    vmem = pltpu.MemorySpace.VMEM
    out = pl.pallas_call(
        kernel,
        out_shape=jax.ShapeDtypeStruct((M, pred_len), jnp.float32),
        in_specs=[pl.BlockSpec(memory_space=vmem) for _ in args],
        out_specs=pl.BlockSpec(memory_space=vmem),
        compiler_params=pltpu.CompilerParams(vmem_limit_bytes=32 * 1024 * 1024),
        cost_estimate=ce,
    )(*args)

    # (B*N, pred_len) -> (B, pred_len, N), same as the torch module
    return jnp.transpose(out.reshape(B, N, pred_len), (0, 2, 1))


if __name__ == "__main__":
    key = jax.random.PRNGKey(0)
    k_in, k_par = jax.random.split(key)

    B, T, N = 2, 16, 8            # batch, seq_len, num_nodes (expConfig['dim'] = 8)
    hid, layers, cnn_layers = 32, 2, 4
    group, heads, pred_len = 4, 8, 12

    x = jax.random.normal(k_in, (B, T, N), dtype=jnp.float32)
    params = init_params(k_par, hid=hid, pred_len=pred_len, layers=layers,
                         cnn_layers=cnn_layers, group=group, heads=heads)

    fwd = jax.jit(lambda a: model_forward(a, params, heads=heads))
    out = jax.block_until_ready(fwd(x))
    assert out.shape == (B, pred_len, N), out.shape
    assert bool(jnp.all(jnp.isfinite(out)))
    print("KERNEL_OK")
</pallas_src>

<mosaic_0001>
module attributes {stable_mosaic.version = 11 : i64} {
  func.func @lightcts_kernel(%arg0: memref<256x1xf32, #tpu.memory_space<vmem>>, %arg1: memref<1x32xf32, #tpu.memory_space<vmem>>, %arg2: memref<1x32xf32, #tpu.memory_space<vmem>>, %arg3: memref<4x32x64xbf16, #tpu.memory_space<vmem>>, %arg4: memref<4x32x64xbf16, #tpu.memory_space<vmem>>, %arg5: memref<4x1x64xf32, #tpu.memory_space<vmem>>, %arg6: memref<4x1x32xf32, #tpu.memory_space<vmem>>, %arg7: memref<4x1x32xf32, #tpu.memory_space<vmem>>, %arg8: memref<32x4xbf16, #tpu.memory_space<vmem>>, %arg9: memref<4x32xbf16, #tpu.memory_space<vmem>>, %arg10: memref<2x32x96xbf16, #tpu.memory_space<vmem>>, %arg11: memref<2x1x96xf32, #tpu.memory_space<vmem>>, %arg12: memref<2x8x4x32xbf16, #tpu.memory_space<vmem>>, %arg13: memref<2x1x32xf32, #tpu.memory_space<vmem>>, %arg14: memref<2x1x32xf32, #tpu.memory_space<vmem>>, %arg15: memref<2x1x32xf32, #tpu.memory_space<vmem>>, %arg16: memref<2x32x128xbf16, #tpu.memory_space<vmem>>, %arg17: memref<2x1x128xf32, #tpu.memory_space<vmem>>, %arg18: memref<2x128x32xbf16, #tpu.memory_space<vmem>>, %arg19: memref<2x1x32xf32, #tpu.memory_space<vmem>>, %arg20: memref<2x1x32xf32, #tpu.memory_space<vmem>>, %arg21: memref<2x1x32xf32, #tpu.memory_space<vmem>>, %arg22: memref<32x128xbf16, #tpu.memory_space<vmem>>, %arg23: memref<1x128xf32, #tpu.memory_space<vmem>>, %arg24: memref<128x12xbf16, #tpu.memory_space<vmem>>, %arg25: memref<1x12xf32, #tpu.memory_space<vmem>>, %arg26: memref<16x12xf32, #tpu.memory_space<vmem>>) attributes {dimension_semantics = [], scalar_prefetch = 0 : i64, scratch_operands = 0 : i64, tpu.core_type = #tpu.core_type<tc>} {
    %c0 = arith.constant 0 : index
    %c0_0 = arith.constant 0 : index
    %0 = vector.load %arg0[%c0, %c0_0] : memref<256x1xf32, #tpu.memory_space<vmem>>, vector<256x1xf32>
    %c0_1 = arith.constant 0 : index
    %c0_2 = arith.constant 0 : index
    %1 = vector.load %arg1[%c0_1, %c0_2] : memref<1x32xf32, #tpu.memory_space<vmem>>, vector<1x32xf32>
    %2 = vector.broadcast %0 : vector<256x1xf32> to vector<256x32xf32>
    %3 = vector.broadcast %1 : vector<1x32xf32> to vector<256x32xf32>
    %4 = arith.mulf %2, %3 : vector<256x32xf32>
    %c0_3 = arith.constant 0 : index
    %c0_4 = arith.constant 0 : index
    %5 = vector.load %arg2[%c0_3, %c0_4] : memref<1x32xf32, #tpu.memory_space<vmem>>, vector<1x32xf32>
    %6 = vector.broadcast %5 : vector<1x32xf32> to vector<256x32xf32>
    %7 = arith.addf %4, %6 : vector<256x32xf32>
    %cst = arith.constant 0.000000e+00 : f32
    %8 = vector.broadcast %cst : f32 to vector<16x32xf32>
    %9 = arith.truncf %7 : vector<256x32xf32> to vector<256x32xbf16>
    %10 = vector.extract_strided_slice %9 {offsets = [0, 0], sizes = [240, 32], strides = [1, 1]} : vector<256x32xbf16> to vector<240x32xbf16>
    %c0_5 = arith.constant 0 : index
    %c0_6 = arith.constant 0 : index
    %c0_7 = arith.constant 0 : index
    %11 = vector.load %arg3[%c0_5, %c0_6, %c0_7] : memref<4x32x64xbf16, #tpu.memory_space<vmem>>, vector<1x32x64xbf16>
    %12 = vector.shape_cast %11 : vector<1x32x64xbf16> to vector<32x64xbf16>
    %cst_8 = arith.constant dense<0.000000e+00> : vector<240x64xf32>
    %13 = tpu.matmul %10, %12, %cst_8 {dimension_numbers = #tpu.dot_dimension_numbers<[1], [0], [0], [1], [0, 0, 1, 1], [], []>} : vector<240x32xbf16>, vector<32x64xbf16>, vector<240x64xf32> -> vector<240x64xf32>
    %14 = vector.extract_strided_slice %9 {offsets = [16, 0], sizes = [240, 32], strides = [1, 1]} : vector<256x32xbf16> to vector<240x32xbf16>
    %c0_9 = arith.constant 0 : index
    %c0_10 = arith.constant 0 : index
    %c0_11 = arith.constant 0 : index
    %15 = vector.load %arg4[%c0_9, %c0_10, %c0_11] : memref<4x32x64xbf16, #tpu.memory_space<vmem>>, vector<1x32x64xbf16>
    %16 = vector.shape_cast %15 : vector<1x32x64xbf16> to vector<32x64xbf16>
    %cst_12 = arith.constant dense<0.000000e+00> : vector<240x64xf32>
    %17 = tpu.matmul %14, %16, %cst_12 {dimension_numbers = #tpu.dot_dimension_numbers<[1], [0], [0], [1], [0, 0, 1, 1], [], []>} : vector<240x32xbf16>, vector<32x64xbf16>, vector<240x64xf32> -> vector<240x64xf32>
    %18 = arith.addf %13, %17 : vector<240x64xf32>
    %c0_13 = arith.constant 0 : index
    %c0_14 = arith.constant 0 : index
    %c0_15 = arith.constant 0 : index
    %19 = vector.load %arg5[%c0_13, %c0_14, %c0_15] : memref<4x1x64xf32, #tpu.memory_space<vmem>>, vector<1x1x64xf32>
    %20 = vector.shape_cast %19 : vector<1x1x64xf32> to vector<1x64xf32>
    %21 = vector.broadcast %20 : vector<1x64xf32> to vector<240x64xf32>
    %22 = arith.addf %18, %21 : vector<240x64xf32>
    %23 = vector.extract_strided_slice %22 {offsets = [0, 0], sizes = [240, 32], strides = [1, 1]} : vector<240x64xf32> to vector<240x32xf32>
    %24 = math.tanh %23 : vector<240x32xf32>
    %25 = vector.extract_strided_slice %22 {offsets = [0, 32], sizes = [240, 32], strides = [1, 1]} : vector<240x64xf32> to vector<240x32xf32>
    %26 = arith.negf %25 : vector<240x32xf32>
    %27 = math.exp %26 : vector<240x32xf32>
    %cst_16 = arith.constant 1.000000e+00 : f32
    %28 = vector.broadcast %cst_16 : f32 to vector<240x32xf32>
    %29 = arith.addf %28, %27 : vector<240x32xf32>
    %30 = arith.divf %28, %29 : vector<240x32xf32>
    %31 = arith.mulf %24, %30 : vector<240x32xf32>
    %32 = vector.extract_strided_slice %31 {offsets = [224, 0], sizes = [16, 32], strides = [1, 1]} : vector<240x32xf32> to vector<16x32xf32>
    %33 = arith.addf %8, %32 : vector<16x32xf32>
    %34 = vector.extract_strided_slice %7 {offsets = [16, 0], sizes = [240, 32], strides = [1, 1]} : vector<256x32xf32> to vector<240x32xf32>
    %35 = arith.addf %31, %34 : vector<240x32xf32>
    %cst_17 = arith.constant dense<0.000000e+00> : vector<32xf32>
    %36 = vector.multi_reduction <add>, %35, %cst_17 [0] : vector<240x32xf32> to vector<32xf32>
    %37 = vector.shape_cast %36 : vector<32xf32> to vector<1x32xf32>
    %38 = arith.mulf %35, %35 : vector<240x32xf32>
    %cst_18 = arith.constant dense<0.000000e+00> : vector<32xf32>
    %39 = vector.multi_reduction <add>, %38, %cst_18 [0] : vector<240x32xf32> to vector<32xf32>
    %40 = vector.shape_cast %39 : vector<32xf32> to vector<1x32xf32>
    %cst_19 = arith.constant 0.00416666688 : f32
    %41 = vector.broadcast %cst_19 : f32 to vector<1x32xf32>
    %42 = arith.mulf %37, %41 : vector<1x32xf32>
    %cst_20 = arith.constant 0.00416666688 : f32
    %43 = vector.broadcast %cst_20 : f32 to vector<1x32xf32>
    %44 = arith.mulf %40, %43 : vector<1x32xf32>
    %45 = arith.mulf %42, %42 : vector<1x32xf32>
    %46 = arith.subf %44, %45 : vector<1x32xf32>
    %cst_21 = arith.constant 9.99999974E-6 : f32
    %47 = vector.broadcast %cst_21 : f32 to vector<1x32xf32>
    %48 = arith.addf %46, %47 : vector<1x32xf32>
    %49 = math.rsqrt %48 : vector<1x32xf32>
    %50 = vector.broadcast %42 : vector<1x32xf32> to vector<240x32xf32>
    %51 = arith.subf %35, %50 : vector<240x32xf32>
    %c0_22 = arith.constant 0 : index
    %c0_23 = arith.constant 0 : index
    %c0_24 = arith.constant 0 : index
    %52 = vector.load %arg6[%c0_22, %c0_23, %c0_24] : memref<4x1x32xf32, #tpu.memory_space<vmem>>, vector<1x1x32xf32>
    %53 = vector.shape_cast %52 : vector<1x1x32xf32> to vector<1x32xf32>
    %54 = arith.mulf %49, %53 : vector<1x32xf32>
    %55 = vector.broadcast %54 : vector<1x32xf32> to vector<240x32xf32>
    %56 = arith.mulf %51, %55 : vector<240x32xf32>
    %c0_25 = arith.constant 0 : index
    %c0_26 = arith.constant 0 : index
    %c0_27 = arith.constant 0 : index
    %57 = vector.load %arg7[%c0_25, %c0_26, %c0_27] : memref<4x1x32xf32, #tpu.memory_space<vmem>>, vector<1x1x32xf32>
    %58 = vector.shape_cast %57 : vector<1x1x32xf32> to vector<1x32xf32>
    %59 = vector.broadcast %58 : vector<1x32xf32> to vector<240x32xf32>
    %60 = arith.addf %56, %59 : vector<240x32xf32>
    %61 = arith.truncf %60 : vector<240x32xf32> to vector<240x32xbf16>
    %62 = vector.extract_strided_slice %61 {offsets = [0, 0], sizes = [208, 32], strides = [1, 1]} : vector<240x32xbf16> to vector<208x32xbf16>
    %c1 = arith.constant 1 : index
    %c0_28 = arith.constant 0 : index
    %c0_29 = arith.constant 0 : index
    %63 = vector.load %arg3[%c1, %c0_28, %c0_29] : memref<4x32x64xbf16, #tpu.memory_space<vmem>>, vector<1x32x64xbf16>
    %64 = vector.shape_cast %63 : vector<1x32x64xbf16> to vector<32x64xbf16>
    %cst_30 = arith.constant dense<0.000000e+00> : vector<208x64xf32>
    %65 = tpu.matmul %62, %64, %cst_30 {dimension_numbers = #tpu.dot_dimension_numbers<[1], [0], [0], [1], [0, 0, 1, 1], [], []>} : vector<208x32xbf16>, vector<32x64xbf16>, vector<208x64xf32> -> vector<208x64xf32>
    %66 = vector.extract_strided_slice %61 {offsets = [32, 0], sizes = [208, 32], strides = [1, 1]} : vector<240x32xbf16> to vector<208x32xbf16>
    %c1_31 = arith.constant 1 : index
    %c0_32 = arith.constant 0 : index
    %c0_33 = arith.constant 0 : index
    %67 = vector.load %arg4[%c1_31, %c0_32, %c0_33] : memref<4x32x64xbf16, #tpu.memory_space<vmem>>, vector<1x32x64xbf16>
    %68 = vector.shape_cast %67 : vector<1x32x64xbf16> to vector<32x64xbf16>
    %cst_34 = arith.constant dense<0.000000e+00> : vector<208x64xf32>
    %69 = tpu.matmul %66, %68, %cst_34 {dimension_numbers = #tpu.dot_dimension_numbers<[1], [0], [0], [1], [0, 0, 1, 1], [], []>} : vector<208x32xbf16>, vector<32x64xbf16>, vector<208x64xf32> -> vector<208x64xf32>
    %70 = arith.addf %65, %69 : vector<208x64xf32>
    %c1_35 = arith.constant 1 : index
    %c0_36 = arith.constant 0 : index
    %c0_37 = arith.constant 0 : index
    %71 = vector.load %arg5[%c1_35, %c0_36, %c0_37] : memref<4x1x64xf32, #tpu.memory_space<vmem>>, vector<1x1x64xf32>
    %72 = vector.shape_cast %71 : vector<1x1x64xf32> to vector<1x64xf32>
    %73 = vector.broadcast %72 : vector<1x64xf32> to vector<208x64xf32>
    %74 = arith.addf %70, %73 : vector<208x64xf32>
    %75 = vector.extract_strided_slice %74 {offsets = [0, 0], sizes = [208, 32], strides = [1, 1]} : vector<208x64xf32> to vector<208x32xf32>
    %76 = math.tanh %75 : vector<208x32xf32>
    %77 = vector.extract_strided_slice %74 {offsets = [0, 32], sizes = [208, 32], strides = [1, 1]} : vector<208x64xf32> to vector<208x32xf32>
    %78 = arith.negf %77 : vector<208x32xf32>
    %79 = math.exp %78 : vector<208x32xf32>
    %cst_38 = arith.constant 1.000000e+00 : f32
    %80 = vector.broadcast %cst_38 : f32 to vector<208x32xf32>
    %81 = arith.addf %80, %79 : vector<208x32xf32>
    %82 = arith.divf %80, %81 : vector<208x32xf32>
    %83 = arith.mulf %76, %82 : vector<208x32xf32>
    %84 = vector.extract_strided_slice %83 {offsets = [192, 0], sizes = [16, 32], strides = [1, 1]} : vector<208x32xf32> to vector<16x32xf32>
    %85 = arith.addf %33, %84 : vector<16x32xf32>
    %86 = vector.extract_strided_slice %60 {offsets = [32, 0], sizes = [208, 32], strides = [1, 1]} : vector<240x32xf32> to vector<208x32xf32>
    %87 = arith.addf %83, %86 : vector<208x32xf32>
    %cst_39 = arith.constant dense<0.000000e+00> : vector<32xf32>
    %88 = vector.multi_reduction <add>, %87, %cst_39 [0] : vector<208x32xf32> to vector<32xf32>
    %89 = vector.shape_cast %88 : vector<32xf32> to vector<1x32xf32>
    %90 = arith.mulf %87, %87 : vector<208x32xf32>
    %cst_40 = arith.constant dense<0.000000e+00> : vector<32xf32>
    %91 = vector.multi_reduction <add>, %90, %cst_40 [0] : vector<208x32xf32> to vector<32xf32>
    %92 = vector.shape_cast %91 : vector<32xf32> to vector<1x32xf32>
    %cst_41 = arith.constant 0.00480769249 : f32
    %93 = vector.broadcast %cst_41 : f32 to vector<1x32xf32>
    %94 = arith.mulf %89, %93 : vector<1x32xf32>
    %cst_42 = arith.constant 0.00480769249 : f32
    %95 = vector.broadcast %cst_42 : f32 to vector<1x32xf32>
    %96 = arith.mulf %92, %95 : vector<1x32xf32>
    %97 = arith.mulf %94, %94 : vector<1x32xf32>
    %98 = arith.subf %96, %97 : vector<1x32xf32>
    %cst_43 = arith.constant 9.99999974E-6 : f32
    %99 = vector.broadcast %cst_43 : f32 to vector<1x32xf32>
    %100 = arith.addf %98, %99 : vector<1x32xf32>
    %101 = math.rsqrt %100 : vector<1x32xf32>
    %102 = vector.broadcast %94 : vector<1x32xf32> to vector<208x32xf32>
    %103 = arith.subf %87, %102 : vector<208x32xf32>
    %c1_44 = arith.constant 1 : index
    %c0_45 = arith.constant 0 : index
    %c0_46 = arith.constant 0 : index
    %104 = vector.load %arg6[%c1_44, %c0_45, %c0_46] : memref<4x1x32xf32, #tpu.memory_space<vmem>>, vector<1x1x32xf32>
    %105 = vector.shape_cast %104 : vector<1x1x32xf32> to vector<1x32xf32>
    %106 = arith.mulf %101, %105 : vector<1x32xf32>
    %107 = vector.broadcast %106 : vector<1x32xf32> to vector<208x32xf32>
    %108 = arith.mulf %103, %107 : vector<208x32xf32>
    %c1_47 = arith.constant 1 : index
    %c0_48 = arith.constant 0 : index
    %c0_49 = arith.constant 0 : index
    %109 = vector.load %arg7[%c1_47, %c0_48, %c0_49] : memref<4x1x32xf32, #tpu.memory_space<vmem>>, vector<1x1x32xf32>
    %110 = vector.shape_cast %109 : vector<1x1x32xf32> to vector<1x32xf32>
    %111 = vector.broadcast %110 : vector<1x32xf32> to vector<208x32xf32>
    %112 = arith.addf %108, %111 : vector<208x32xf32>
    %113 = arith.truncf %112 : vector<208x32xf32> to vector<208x32xbf16>
    %114 = vector.extract_strided_slice %113 {offsets = [0, 0], sizes = [144, 32], strides = [1, 1]} : vector<208x32xbf16> to vector<144x32xbf16>
    %c2 = arith.constant 2 : index
    %c0_50 = arith.constant 0 : index
    %c0_51 = arith.constant 0 : index
    %115 = vector.load %arg3[%c2, %c0_50, %c0_51] : memref<4x32x64xbf16, #tpu.memory_space<vmem>>, vector<1x32x64xbf16>
    %116 = vector.shape_cast %115 : vector<1x32x64xbf16> to vector<32x64xbf16>
    %cst_52 = arith.constant dense<0.000000e+00> : vector<144x64xf32>
    %117 = tpu.matmul %114, %116, %cst_52 {dimension_numbers = #tpu.dot_dimension_numbers<[1], [0], [0], [1], [0, 0, 1, 1], [], []>} : vector<144x32xbf16>, vector<32x64xbf16>, vector<144x64xf32> -> vector<144x64xf32>
    %118 = vector.extract_strided_slice %113 {offsets = [64, 0], sizes = [144, 32], strides = [1, 1]} : vector<208x32xbf16> to vector<144x32xbf16>
    %c2_53 = arith.constant 2 : index
    %c0_54 = arith.constant 0 : index
    %c0_55 = arith.constant 0 : index
    %119 = vector.load %arg4[%c2_53, %c0_54, %c0_55] : memref<4x32x64xbf16, #tpu.memory_space<vmem>>, vector<1x32x64xbf16>
    %120 = vector.shape_cast %119 : vector<1x32x64xbf16> to vector<32x64xbf16>
    %cst_56 = arith.constant dense<0.000000e+00> : vector<144x64xf32>
    %121 = tpu.matmul %118, %120, %cst_56 {dimension_numbers = #tpu.dot_dimension_numbers<[1], [0], [0], [1], [0, 0, 1, 1], [], []>} : vector<144x32xbf16>, vector<32x64xbf16>, vector<144x64xf32> -> vector<144x64xf32>
    %122 = arith.addf %117, %121 : vector<144x64xf32>
    %c2_57 = arith.constant 2 : index
    %c0_58 = arith.constant 0 : index
    %c0_59 = arith.constant 0 : index
    %123 = vector.load %arg5[%c2_57, %c0_58, %c0_59] : memref<4x1x64xf32, #tpu.memory_space<vmem>>, vector<1x1x64xf32>
    %124 = vector.shape_cast %123 : vector<1x1x64xf32> to vector<1x64xf32>
    %125 = vector.broadcast %124 : vector<1x64xf32> to vector<144x64xf32>
    %126 = arith.addf %122, %125 : vector<144x64xf32>
    %127 = vector.extract_strided_slice %126 {offsets = [0, 0], sizes = [144, 32], strides = [1, 1]} : vector<144x64xf32> to vector<144x32xf32>
    %128 = math.tanh %127 : vector<144x32xf32>
    %129 = vector.extract_strided_slice %126 {offsets = [0, 32], sizes = [144, 32], strides = [1, 1]} : vector<144x64xf32> to vector<144x32xf32>
    %130 = arith.negf %129 : vector<144x32xf32>
    %131 = math.exp %130 : vector<144x32xf32>
    %cst_60 = arith.constant 1.000000e+00 : f32
    %132 = vector.broadcast %cst_60 : f32 to vector<144x32xf32>
    %133 = arith.addf %132, %131 : vector<144x32xf32>
    %134 = arith.divf %132, %133 : vector<144x32xf32>
    %135 = arith.mulf %128, %134 : vector<144x32xf32>
    %136 = vector.extract_strided_slice %135 {offsets = [128, 0], sizes = [16, 32], strides = [1, 1]} : vector<144x32xf32> to vector<16x32xf32>
    %137 = arith.addf %85, %136 : vector<16x32xf32>
    %138 = vector.extract_strided_slice %112 {offsets = [64, 0], sizes = [144, 32], strides = [1, 1]} : vector<208x32xf32> to vector<144x32xf32>
    %139 = arith.addf %135, %138 : vector<144x32xf32>
    %cst_61 = arith.constant dense<0.000000e+00> : vector<32xf32>
    %140 = vector.multi_reduction <add>, %139, %cst_61 [0] : vector<144x32xf32> to vector<32xf32>
    %141 = vector.shape_cast %140 : vector<32xf32> to vector<1x32xf32>
    %142 = arith.mulf %139, %139 : vector<144x32xf32>
    %cst_62 = arith.constant dense<0.000000e+00> : vector<32xf32>
    %143 = vector.multi_reduction <add>, %142, %cst_62 [0] : vector<144x32xf32> to vector<32xf32>
    %144 = vector.shape_cast %143 : vector<32xf32> to vector<1x32xf32>
    %cst_63 = arith.constant 0.0069444445 : f32
    %145 = vector.broadcast %cst_63 : f32 to vector<1x32xf32>
    %146 = arith.mulf %141, %145 : vector<1x32xf32>
    %cst_64 = arith.constant 0.0069444445 : f32
    %147 = vector.broadcast %cst_64 : f32 to vector<1x32xf32>
    %148 = arith.mulf %144, %147 : vector<1x32xf32>
    %149 = arith.mulf %146, %146 : vector<1x32xf32>
    %150 = arith.subf %148, %149 : vector<1x32xf32>
    %cst_65 = arith.constant 9.99999974E-6 : f32
    %151 = vector.broadcast %cst_65 : f32 to vector<1x32xf32>
    %152 = arith.addf %150, %151 : vector<1x32xf32>
    %153 = math.rsqrt %152 : vector<1x32xf32>
    %154 = vector.broadcast %146 : vector<1x32xf32> to vector<144x32xf32>
    %155 = arith.subf %139, %154 : vector<144x32xf32>
    %c2_66 = arith.constant 2 : index
    %c0_67 = arith.constant 0 : index
    %c0_68 = arith.constant 0 : index
    %156 = vector.load %arg6[%c2_66, %c0_67, %c0_68] : memref<4x1x32xf32, #tpu.memory_space<vmem>>, vector<1x1x32xf32>
    %157 = vector.shape_cast %156 : vector<1x1x32xf32> to vector<1x32xf32>
    %158 = arith.mulf %153, %157 : vector<1x32xf32>
    %159 = vector.broadcast %158 : vector<1x32xf32> to vector<144x32xf32>
    %160 = arith.mulf %155, %159 : vector<144x32xf32>
    %c2_69 = arith.constant 2 : index
    %c0_70 = arith.constant 0 : index
    %c0_71 = arith.constant 0 : index
    %161 = vector.load %arg7[%c2_69, %c0_70, %c0_71] : memref<4x1x32xf32, #tpu.memory_space<vmem>>, vector<1x1x32xf32>
    %162 = vector.shape_cast %161 : vector<1x1x32xf32> to vector<1x32xf32>
    %163 = vector.broadcast %162 : vector<1x32xf32> to vector<144x32xf32>
    %164 = arith.addf %160, %163 : vector<144x32xf32>
    %165 = arith.truncf %164 : vector<144x32xf32> to vector<144x32xbf16>
    %166 = vector.extract_strided_slice %165 {offsets = [0, 0], sizes = [16, 32], strides = [1, 1]} : vector<144x32xbf16> to vector<16x32xbf16>
    %c3 = arith.constant 3 : index
    %c0_72 = arith.constant 0 : index
    %c0_73 = arith.constant 0 : index
    %167 = vector.load %arg3[%c3, %c0_72, %c0_73] : memref<4x32x64xbf16, #tpu.memory_space<vmem>>, vector<1x32x64xbf16>
    %168 = vector.shape_cast %167 : vector<1x32x64xbf16> to vector<32x64xbf16>
    %cst_74 = arith.constant dense<0.000000e+00> : vector<16x64xf32>
    %169 = tpu.matmul %166, %168, %cst_74 {dimension_numbers = #tpu.dot_dimension_numbers<[1], [0], [0], [1], [0, 0, 1, 1], [], []>} : vector<16x32xbf16>, vector<32x64xbf16>, vector<16x64xf32> -> vector<16x64xf32>
    %170 = vector.extract_strided_slice %165 {offsets = [128, 0], sizes = [16, 32], strides = [1, 1]} : vector<144x32xbf16> to vector<16x32xbf16>
    %c3_75 = arith.constant 3 : index
    %c0_76 = arith.constant 0 : index
    %c0_77 = arith.constant 0 : index
    %171 = vector.load %arg4[%c3_75, %c0_76, %c0_77] : memref<4x32x64xbf16, #tpu.memory_space<vmem>>, vector<1x32x64xbf16>
    %172 = vector.shape_cast %171 : vector<1x32x64xbf16> to vector<32x64xbf16>
    %cst_78 = arith.constant dense<0.000000e+00> : vector<16x64xf32>
    %173 = tpu.matmul %170, %172, %cst_78 {dimension_numbers = #tpu.dot_dimension_numbers<[1], [0], [0], [1], [0, 0, 1, 1], [], []>} : vector<16x32xbf16>, vector<32x64xbf16>, vector<16x64xf32> -> vector<16x64xf32>
    %174 = arith.addf %169, %173 : vector<16x64xf32>
    %c3_79 = arith.constant 3 : index
    %c0_80 = arith.constant 0 : index
    %c0_81 = arith.constant 0 : index
    %175 = vector.load %arg5[%c3_79, %c0_80, %c0_81] : memref<4x1x64xf32, #tpu.memory_space<vmem>>, vector<1x1x64xf32>
    %176 = vector.shape_cast %175 : vector<1x1x64xf32> to vector<1x64xf32>
    %177 = vector.broadcast %176 : vector<1x64xf32> to vector<16x64xf32>
    %178 = arith.addf %174, %177 : vector<16x64xf32>
    %179 = vector.extract_strided_slice %178 {offsets = [0, 0], sizes = [16, 32], strides = [1, 1]} : vector<16x64xf32> to vector<16x32xf32>
    %180 = math.tanh %179 : vector<16x32xf32>
    %181 = vector.extract_strided_slice %178 {offsets = [0, 32], sizes = [16, 32], strides = [1, 1]} : vector<16x64xf32> to vector<16x32xf32>
    %182 = arith.negf %181 : vector<16x32xf32>
    %183 = math.exp %182 : vector<16x32xf32>
    %cst_82 = arith.constant 1.000000e+00 : f32
    %184 = vector.broadcast %cst_82 : f32 to vector<16x32xf32>
    %185 = arith.addf %184, %183 : vector<16x32xf32>
    %186 = arith.divf %184, %185 : vector<16x32xf32>
    %187 = arith.mulf %180, %186 : vector<16x32xf32>
    %188 = arith.addf %137, %187 : vector<16x32xf32>
    %189 = vector.shape_cast %188 : vector<16x32xf32> to vector<2x8x32xf32>
    %cst_83 = arith.constant dense<0.000000e+00> : vector<2x32xf32>
    %190 = vector.multi_reduction <add>, %189, %cst_83 [1] : vector<2x8x32xf32> to vector<2x32xf32>
    %cst_84 = arith.constant 8.000000e+00 : f32
    %191 = vector.broadcast %cst_84 : f32 to vector<2x32xf32>
    %192 = arith.divf %190, %191 : vector<2x32xf32>
    %193 = arith.truncf %192 : vector<2x32xf32> to vector<2x32xbf16>
    %c0_85 = arith.constant 0 : index
    %c0_86 = arith.constant 0 : index
    %194 = vector.load %arg8[%c0_85, %c0_86] : memref<32x4xbf16, #tpu.memory_space<vmem>>, vector<32x4xbf16>
    %cst_87 = arith.constant dense<0.000000e+00> : vector<2x4xf32>
    %195 = tpu.matmul %193, %194, %cst_87 {dimension_numbers = #tpu.dot_dimension_numbers<[1], [0], [0], [1], [0, 0, 1, 1], [], []>} : vector<2x32xbf16>, vector<32x4xbf16>, vector<2x4xf32> -> vector<2x4xf32>
    %cst_88 = arith.constant 0.000000e+00 : f32
    %196 = vector.broadcast %cst_88 : f32 to vector<2x4xf32>
    %197 = arith.maximumf %195, %196 : vector<2x4xf32>
    %198 = arith.truncf %197 : vector<2x4xf32> to vector<2x4xbf16>
    %c0_89 = arith.constant 0 : index
    %c0_90 = arith.constant 0 : index
    %199 = vector.load %arg9[%c0_89, %c0_90] : memref<4x32xbf16, #tpu.memory_space<vmem>>, vector<4x32xbf16>
    %cst_91 = arith.constant dense<0.000000e+00> : vector<2x32xf32>
    %200 = tpu.matmul %198, %199, %cst_91 {dimension_numbers = #tpu.dot_dimension_numbers<[1], [0], [0], [1], [0, 0, 1, 1], [], []>} : vector<2x4xbf16>, vector<4x32xbf16>, vector<2x32xf32> -> vector<2x32xf32>
    %201 = arith.negf %200 : vector<2x32xf32>
    %202 = math.exp %201 : vector<2x32xf32>
    %cst_92 = arith.constant 1.000000e+00 : f32
    %203 = vector.broadcast %cst_92 : f32 to vector<2x32xf32>
    %204 = arith.addf %203, %202 : vector<2x32xf32>
    %205 = arith.divf %203, %204 : vector<2x32xf32>
    %206 = vector.shape_cast %205 : vector<2x32xf32> to vector<2x1x32xf32>
    %207 = vector.broadcast %206 : vector<2x1x32xf32> to vector<2x8x32xf32>
    %208 = arith.mulf %189, %207 : vector<2x8x32xf32>
    %209 = vector.shape_cast %208 : vector<2x8x32xf32> to vector<16x32xf32>
    %210 = arith.truncf %209 : vector<16x32xf32> to vector<16x32xbf16>
    %c0_93 = arith.constant 0 : index
    %c0_94 = arith.constant 0 : index
    %c0_95 = arith.constant 0 : index
    %211 = vector.load %arg10[%c0_93, %c0_94, %c0_95] : memref<2x32x96xbf16, #tpu.memory_space<vmem>>, vector<1x32x96xbf16>
    %212 = vector.shape_cast %211 : vector<1x32x96xbf16> to vector<32x96xbf16>
    %cst_96 = arith.constant dense<0.000000e+00> : vector<16x96xf32>
    %213 = tpu.matmul %210, %212, %cst_96 {dimension_numbers = #tpu.dot_dimension_numbers<[1], [0], [0], [1], [0, 0, 1, 1], [], []>} : vector<16x32xbf16>, vector<32x96xbf16>, vector<16x96xf32> -> vector<16x96xf32>
    %c0_97 = arith.constant 0 : index
    %c0_98 = arith.constant 0 : index
    %c0_99 = arith.constant 0 : index
    %214 = vector.load %arg11[%c0_97, %c0_98, %c0_99] : memref<2x1x96xf32, #tpu.memory_space<vmem>>, vector<1x1x96xf32>
    %215 = vector.shape_cast %214 : vector<1x1x96xf32> to vector<1x96xf32>
    %216 = vector.broadcast %215 : vector<1x96xf32> to vector<16x96xf32>
    %217 = arith.addf %213, %216 : vector<16x96xf32>
    %218 = arith.truncf %217 : vector<16x96xf32> to vector<16x96xbf16>
    %219 = vector.shape_cast %218 : vector<16x96xbf16> to vector<2x8x96xbf16>
    %cst_100 = arith.constant 0.000000e+00 : f32
    %220 = vector.broadcast %cst_100 : f32 to vector<16x32xf32>
    %221 = vector.extract_strided_slice %219 {offsets = [0, 0, 0], sizes = [2, 8, 4], strides = [1, 1, 1]} : vector<2x8x96xbf16> to vector<2x8x4xbf16>
    %222 = vector.extract_strided_slice %219 {offsets = [0, 0, 32], sizes = [2, 8, 4], strides = [1, 1, 1]} : vector<2x8x96xbf16> to vector<2x8x4xbf16>
    %223 = vector.extract_strided_slice %219 {offsets = [0, 0, 64], sizes = [2, 8, 4], strides = [1, 1, 1]} : vector<2x8x96xbf16> to vector<2x8x4xbf16>
    "tpu.trace_start"() <{level = 10 : i32, message = "bqd,bkd->bqk"}> : () -> ()
    %cst_101 = arith.constant dense<0.000000e+00> : vector<2x8x8xf32>
    %224 = tpu.matmul %221, %222, %cst_101 {dimension_numbers = #tpu.dot_dimension_numbers<[2], [2], [1], [1], [0, 0, 0, 1, 1, 1], [0], [0]>} : vector<2x8x4xbf16>, vector<2x8x4xbf16>, vector<2x8x8xf32> -> vector<2x8x8xf32>
    "tpu.trace_stop"() : () -> ()
    %cst_102 = arith.constant dense<0xFF800000> : vector<2x8xf32>
    %225 = vector.multi_reduction <maximumf>, %224, %cst_102 [2] : vector<2x8x8xf32> to vector<2x8xf32>
    %226 = vector.shape_cast %225 : vector<2x8xf32> to vector<2x8x1xf32>
    %227 = vector.broadcast %226 : vector<2x8x1xf32> to vector<2x8x8xf32>
    %228 = arith.subf %224, %227 : vector<2x8x8xf32>
    %229 = math.exp %228 : vector<2x8x8xf32>
    %cst_103 = arith.constant dense<0.000000e+00> : vector<2x8xf32>
    %230 = vector.multi_reduction <add>, %229, %cst_103 [2] : vector<2x8x8xf32> to vector<2x8xf32>
    %231 = vector.shape_cast %230 : vector<2x8xf32> to vector<2x8x1xf32>
    %232 = tpu.reciprocal %231 {approx = true} : vector<2x8x1xf32> -> vector<2x8x1xf32>
    %233 = vector.broadcast %232 : vector<2x8x1xf32> to vector<2x8x8xf32>
    %234 = arith.mulf %229, %233 : vector<2x8x8xf32>
    %235 = arith.truncf %234 : vector<2x8x8xf32> to vector<2x8x8xbf16>
    "tpu.trace_start"() <{level = 10 : i32, message = "bqk,bkd->bqd"}> : () -> ()
    %cst_104 = arith.constant dense<0.000000e+00> : vector<2x8x4xf32>
    %236 = tpu.matmul %235, %223, %cst_104 {dimension_numbers = #tpu.dot_dimension_numbers<[2], [1], [1], [2], [0, 0, 0, 1, 1, 2], [0], [0]>} : vector<2x8x8xbf16>, vector<2x8x4xbf16>, vector<2x8x4xf32> -> vector<2x8x4xf32>
    "tpu.trace_stop"() : () -> ()
    %237 = vector.shape_cast %236 : vector<2x8x4xf32> to vector<16x4xf32>
    %238 = arith.truncf %237 : vector<16x4xf32> to vector<16x4xbf16>
    %c0_105 = arith.constant 0 : index
    %c0_106 = arith.constant 0 : index
    %c0_107 = arith.constant 0 : index
    %c0_108 = arith.constant 0 : index
    %239 = vector.load %arg12[%c0_105, %c0_106, %c0_107, %c0_108] : memref<2x8x4x32xbf16, #tpu.memory_space<vmem>>, vector<1x1x4x32xbf16>
    %240 = vector.shape_cast %239 : vector<1x1x4x32xbf16> to vector<4x32xbf16>
    %cst_109 = arith.constant dense<0.000000e+00> : vector<16x32xf32>
    %241 = tpu.matmul %238, %240, %cst_109 {dimension_numbers = #tpu.dot_dimension_numbers<[1], [0], [0], [1], [0, 0, 1, 1], [], []>} : vector<16x4xbf16>, vector<4x32xbf16>, vector<16x32xf32> -> vector<16x32xf32>
    %242 = arith.addf %220, %241 : vector<16x32xf32>
    %243 = vector.extract_strided_slice %219 {offsets = [0, 0, 4], sizes = [2, 8, 4], strides = [1, 1, 1]} : vector<2x8x96xbf16> to vector<2x8x4xbf16>
    %244 = vector.extract_strided_slice %219 {offsets = [0, 0, 36], sizes = [2, 8, 4], strides = [1, 1, 1]} : vector<2x8x96xbf16> to vector<2x8x4xbf16>
    %245 = vector.extract_strided_slice %219 {offsets = [0, 0, 68], sizes = [2, 8, 4], strides = [1, 1, 1]} : vector<2x8x96xbf16> to vector<2x8x4xbf16>
    "tpu.trace_start"() <{level = 10 : i32, message = "bqd,bkd->bqk"}> : () -> ()
    %cst_110 = arith.constant dense<0.000000e+00> : vector<2x8x8xf32>
    %246 = tpu.matmul %243, %244, %cst_110 {dimension_numbers = #tpu.dot_dimension_numbers<[2], [2], [1], [1], [0, 0, 0, 1, 1, 1], [0], [0]>} : vector<2x8x4xbf16>, vector<2x8x4xbf16>, vector<2x8x8xf32> -> vector<2x8x8xf32>
    "tpu.trace_stop"() : () -> ()
    %cst_111 = arith.constant dense<0xFF800000> : vector<2x8xf32>
    %247 = vector.multi_reduction <maximumf>, %246, %cst_111 [2] : vector<2x8x8xf32> to vector<2x8xf32>
    %248 = vector.shape_cast %247 : vector<2x8xf32> to vector<2x8x1xf32>
    %249 = vector.broadcast %248 : vector<2x8x1xf32> to vector<2x8x8xf32>
    %250 = arith.subf %246, %249 : vector<2x8x8xf32>
    %251 = math.exp %250 : vector<2x8x8xf32>
    %cst_112 = arith.constant dense<0.000000e+00> : vector<2x8xf32>
    %252 = vector.multi_reduction <add>, %251, %cst_112 [2] : vector<2x8x8xf32> to vector<2x8xf32>
    %253 = vector.shape_cast %252 : vector<2x8xf32> to vector<2x8x1xf32>
    %254 = tpu.reciprocal %253 {approx = true} : vector<2x8x1xf32> -> vector<2x8x1xf32>
    %255 = vector.broadcast %254 : vector<2x8x1xf32> to vector<2x8x8xf32>
    %256 = arith.mulf %251, %255 : vector<2x8x8xf32>
    %257 = arith.truncf %256 : vector<2x8x8xf32> to vector<2x8x8xbf16>
    "tpu.trace_start"() <{level = 10 : i32, message = "bqk,bkd->bqd"}> : () -> ()
    %cst_113 = arith.constant dense<0.000000e+00> : vector<2x8x4xf32>
    %258 = tpu.matmul %257, %245, %cst_113 {dimension_numbers = #tpu.dot_dimension_numbers<[2], [1], [1], [2], [0, 0, 0, 1, 1, 2], [0], [0]>} : vector<2x8x8xbf16>, vector<2x8x4xbf16>, vector<2x8x4xf32> -> vector<2x8x4xf32>
    "tpu.trace_stop"() : () -> ()
    %259 = vector.shape_cast %258 : vector<2x8x4xf32> to vector<16x4xf32>
    %260 = arith.truncf %259 : vector<16x4xf32> to vector<16x4xbf16>
    %c0_114 = arith.constant 0 : index
    %c1_115 = arith.constant 1 : index
    %c0_116 = arith.constant 0 : index
    %c0_117 = arith.constant 0 : index
    %261 = vector.load %arg12[%c0_114, %c1_115, %c0_116, %c0_117] : memref<2x8x4x32xbf16, #tpu.memory_space<vmem>>, vector<1x1x4x32xbf16>
    %262 = vector.shape_cast %261 : vector<1x1x4x32xbf16> to vector<4x32xbf16>
    %cst_118 = arith.constant dense<0.000000e+00> : vector<16x32xf32>
    %263 = tpu.matmul %260, %262, %cst_118 {dimension_numbers = #tpu.dot_dimension_numbers<[1], [0], [0], [1], [0, 0, 1, 1], [], []>} : vector<16x4xbf16>, vector<4x32xbf16>, vector<16x32xf32> -> vector<16x32xf32>
    %264 = arith.addf %242, %263 : vector<16x32xf32>
    %265 = vector.extract_strided_slice %219 {offsets = [0, 0, 8], sizes = [2, 8, 4], strides = [1, 1, 1]} : vector<2x8x96xbf16> to vector<2x8x4xbf16>
    %266 = vector.extract_strided_slice %219 {offsets = [0, 0, 40], sizes = [2, 8, 4], strides = [1, 1, 1]} : vector<2x8x96xbf16> to vector<2x8x4xbf16>
    %267 = vector.extract_strided_slice %219 {offsets = [0, 0, 72], sizes = [2, 8, 4], strides = [1, 1, 1]} : vector<2x8x96xbf16> to vector<2x8x4xbf16>
    "tpu.trace_start"() <{level = 10 : i32, message = "bqd,bkd->bqk"}> : () -> ()
    %cst_119 = arith.constant dense<0.000000e+00> : vector<2x8x8xf32>
    %268 = tpu.matmul %265, %266, %cst_119 {dimension_numbers = #tpu.dot_dimension_numbers<[2], [2], [1], [1], [0, 0, 0, 1, 1, 1], [0], [0]>} : vector<2x8x4xbf16>, vector<2x8x4xbf16>, vector<2x8x8xf32> -> vector<2x8x8xf32>
    "tpu.trace_stop"() : () -> ()
    %cst_120 = arith.constant dense<0xFF800000> : vector<2x8xf32>
    %269 = vector.multi_reduction <maximumf>, %268, %cst_120 [2] : vector<2x8x8xf32> to vector<2x8xf32>
    %270 = vector.shape_cast %269 : vector<2x8xf32> to vector<2x8x1xf32>
    %271 = vector.broadcast %270 : vector<2x8x1xf32> to vector<2x8x8xf32>
    %272 = arith.subf %268, %271 : vector<2x8x8xf32>
    %273 = math.exp %272 : vector<2x8x8xf32>
    %cst_121 = arith.constant dense<0.000000e+00> : vector<2x8xf32>
    %274 = vector.multi_reduction <add>, %273, %cst_121 [2] : vector<2x8x8xf32> to vector<2x8xf32>
    %275 = vector.shape_cast %274 : vector<2x8xf32> to vector<2x8x1xf32>
    %276 = tpu.reciprocal %275 {approx = true} : vector<2x8x1xf32> -> vector<2x8x1xf32>
    %277 = vector.broadcast %276 : vector<2x8x1xf32> to vector<2x8x8xf32>
    %278 = arith.mulf %273, %277 : vector<2x8x8xf32>
    %279 = arith.truncf %278 : vector<2x8x8xf32> to vector<2x8x8xbf16>
    "tpu.trace_start"() <{level = 10 : i32, message = "bqk,bkd->bqd"}> : () -> ()
    %cst_122 = arith.constant dense<0.000000e+00> : vector<2x8x4xf32>
    %280 = tpu.matmul %279, %267, %cst_122 {dimension_numbers = #tpu.dot_dimension_numbers<[2], [1], [1], [2], [0, 0, 0, 1, 1, 2], [0], [0]>} : vector<2x8x8xbf16>, vector<2x8x4xbf16>, vector<2x8x4xf32> -> vector<2x8x4xf32>
    "tpu.trace_stop"() : () -> ()
    %281 = vector.shape_cast %280 : vector<2x8x4xf32> to vector<16x4xf32>
    %282 = arith.truncf %281 : vector<16x4xf32> to vector<16x4xbf16>
    %c0_123 = arith.constant 0 : index
    %c2_124 = arith.constant 2 : index
    %c0_125 = arith.constant 0 : index
    %c0_126 = arith.constant 0 : index
    %283 = vector.load %arg12[%c0_123, %c2_124, %c0_125, %c0_126] : memref<2x8x4x32xbf16, #tpu.memory_space<vmem>>, vector<1x1x4x32xbf16>
    %284 = vector.shape_cast %283 : vector<1x1x4x32xbf16> to vector<4x32xbf16>
    %cst_127 = arith.constant dense<0.000000e+00> : vector<16x32xf32>
    %285 = tpu.matmul %282, %284, %cst_127 {dimension_numbers = #tpu.dot_dimension_numbers<[1], [0], [0], [1], [0, 0, 1, 1], [], []>} : vector<16x4xbf16>, vector<4x32xbf16>, vector<16x32xf32> -> vector<16x32xf32>
    %286 = arith.addf %264, %285 : vector<16x32xf32>
    %287 = vector.extract_strided_slice %219 {offsets = [0, 0, 12], sizes = [2, 8, 4], strides = [1, 1, 1]} : vector<2x8x96xbf16> to vector<2x8x4xbf16>
    %288 = vector.extract_strided_slice %219 {offsets = [0, 0, 44], sizes = [2, 8, 4], strides = [1, 1, 1]} : vector<2x8x96xbf16> to vector<2x8x4xbf16>
    %289 = vector.extract_strided_slice %219 {offsets = [0, 0, 76], sizes = [2, 8, 4], strides = [1, 1, 1]} : vector<2x8x96xbf16> to vector<2x8x4xbf16>
    "tpu.trace_start"() <{level = 10 : i32, message = "bqd,bkd->bqk"}> : () -> ()
    %cst_128 = arith.constant dense<0.000000e+00> : vector<2x8x8xf32>
    %290 = tpu.matmul %287, %288, %cst_128 {dimension_numbers = #tpu.dot_dimension_numbers<[2], [2], [1], [1], [0, 0, 0, 1, 1, 1], [0], [0]>} : vector<2x8x4xbf16>, vector<2x8x4xbf16>, vector<2x8x8xf32> -> vector<2x8x8xf32>
    "tpu.trace_stop"() : () -> ()
    %cst_129 = arith.constant dense<0xFF800000> : vector<2x8xf32>
    %291 = vector.multi_reduction <maximumf>, %290, %cst_129 [2] : vector<2x8x8xf32> to vector<2x8xf32>
    %292 = vector.shape_cast %291 : vector<2x8xf32> to vector<2x8x1xf32>
    %293 = vector.broadcast %292 : vector<2x8x1xf32> to vector<2x8x8xf32>
    %294 = arith.subf %290, %293 : vector<2x8x8xf32>
    %295 = math.exp %294 : vector<2x8x8xf32>
    %cst_130 = arith.constant dense<0.000000e+00> : vector<2x8xf32>
    %296 = vector.multi_reduction <add>, %295, %cst_130 [2] : vector<2x8x8xf32> to vector<2x8xf32>
    %297 = vector.shape_cast %296 : vector<2x8xf32> to vector<2x8x1xf32>
    %298 = tpu.reciprocal %297 {approx = true} : vector<2x8x1xf32> -> vector<2x8x1xf32>
    %299 = vector.broadcast %298 : vector<2x8x1xf32> to vector<2x8x8xf32>
    %300 = arith.mulf %295, %299 : vector<2x8x8xf32>
    %301 = arith.truncf %300 : vector<2x8x8xf32> to vector<2x8x8xbf16>
    "tpu.trace_start"() <{level = 10 : i32, message = "bqk,bkd->bqd"}> : () -> ()
    %cst_131 = arith.constant dense<0.000000e+00> : vector<2x8x4xf32>
    %302 = tpu.matmul %301, %289, %cst_131 {dimension_numbers = #tpu.dot_dimension_numbers<[2], [1], [1], [2], [0, 0, 0, 1, 1, 2], [0], [0]>} : vector<2x8x8xbf16>, vector<2x8x4xbf16>, vector<2x8x4xf32> -> vector<2x8x4xf32>
    "tpu.trace_stop"() : () -> ()
    %303 = vector.shape_cast %302 : vector<2x8x4xf32> to vector<16x4xf32>
    %304 = arith.truncf %303 : vector<16x4xf32> to vector<16x4xbf16>
    %c0_132 = arith.constant 0 : index
    %c3_133 = arith.constant 3 : index
    %c0_134 = arith.constant 0 : index
    %c0_135 = arith.constant 0 : index
    %305 = vector.load %arg12[%c0_132, %c3_133, %c0_134, %c0_135] : memref<2x8x4x32xbf16, #tpu.memory_space<vmem>>, vector<1x1x4x32xbf16>
    %306 = vector.shape_cast %305 : vector<1x1x4x32xbf16> to vector<4x32xbf16>
    %cst_136 = arith.constant dense<0.000000e+00> : vector<16x32xf32>
    %307 = tpu.matmul %304, %306, %cst_136 {dimension_numbers = #tpu.dot_dimension_numbers<[1], [0], [0], [1], [0, 0, 1, 1], [], []>} : vector<16x4xbf16>, vector<4x32xbf16>, vector<16x32xf32> -> vector<16x32xf32>
    %308 = arith.addf %286, %307 : vector<16x32xf32>
    %309 = vector.extract_strided_slice %219 {offsets = [0, 0, 16], sizes = [2, 8, 4], strides = [1, 1, 1]} : vector<2x8x96xbf16> to vector<2x8x4xbf16>
    %310 = vector.extract_strided_slice %219 {offsets = [0, 0, 48], sizes = [2, 8, 4], strides = [1, 1, 1]} : vector<2x8x96xbf16> to vector<2x8x4xbf16>
    %311 = vector.extract_strided_slice %219 {offsets = [0, 0, 80], sizes = [2, 8, 4], strides = [1, 1, 1]} : vector<2x8x96xbf16> to vector<2x8x4xbf16>
    "tpu.trace_start"() <{level = 10 : i32, message = "bqd,bkd->bqk"}> : () -> ()
    %cst_137 = arith.constant dense<0.000000e+00> : vector<2x8x8xf32>
    %312 = tpu.matmul %309, %310, %cst_137 {dimension_numbers = #tpu.dot_dimension_numbers<[2], [2], [1], [1], [0, 0, 0, 1, 1, 1], [0], [0]>} : vector<2x8x4xbf16>, vector<2x8x4xbf16>, vector<2x8x8xf32> -> vector<2x8x8xf32>
    "tpu.trace_stop"() : () -> ()
    %cst_138 = arith.constant dense<0xFF800000> : vector<2x8xf32>
    %313 = vector.multi_reduction <maximumf>, %312, %cst_138 [2] : vector<2x8x8xf32> to vector<2x8xf32>
    %314 = vector.shape_cast %313 : vector<2x8xf32> to vector<2x8x1xf32>
    %315 = vector.broadcast %314 : vector<2x8x1xf32> to vector<2x8x8xf32>
    %316 = arith.subf %312, %315 : vector<2x8x8xf32>
    %317 = math.exp %316 : vector<2x8x8xf32>
    %cst_139 = arith.constant dense<0.000000e+00> : vector<2x8xf32>
    %318 = vector.multi_reduction <add>, %317, %cst_139 [2] : vector<2x8x8xf32> to vector<2x8xf32>
    %319 = vector.shape_cast %318 : vector<2x8xf32> to vector<2x8x1xf32>
    %320 = tpu.reciprocal %319 {approx = true} : vector<2x8x1xf32> -> vector<2x8x1xf32>
    %321 = vector.broadcast %320 : vector<2x8x1xf32> to vector<2x8x8xf32>
    %322 = arith.mulf %317, %321 : vector<2x8x8xf32>
    %323 = arith.truncf %322 : vector<2x8x8xf32> to vector<2x8x8xbf16>
    "tpu.trace_start"() <{level = 10 : i32, message = "bqk,bkd->bqd"}> : () -> ()
    %cst_140 = arith.constant dense<0.000000e+00> : vector<2x8x4xf32>
    %324 = tpu.matmul %323, %311, %cst_140 {dimension_numbers = #tpu.dot_dimension_numbers<[2], [1], [1], [2], [0, 0, 0, 1, 1, 2], [0], [0]>} : vector<2x8x8xbf16>, vector<2x8x4xbf16>, vector<2x8x4xf32> -> vector<2x8x4xf32>
    "tpu.trace_stop"() : () -> ()
    %325 = vector.shape_cast %324 : vector<2x8x4xf32> to vector<16x4xf32>
    %326 = arith.truncf %325 : vector<16x4xf32> to vector<16x4xbf16>
    %c0_141 = arith.constant 0 : index
    %c4 = arith.constant 4 : index
    %c0_142 = arith.constant 0 : index
    %c0_143 = arith.constant 0 : index
    %327 = vector.load %arg12[%c0_141, %c4, %c0_142, %c0_143] : memref<2x8x4x32xbf16, #tpu.memory_space<vmem>>, vector<1x1x4x32xbf16>
    %328 = vector.shape_cast %327 : vector<1x1x4x32xbf16> to vector<4x32xbf16>
    %cst_144 = arith.constant dense<0.000000e+00> : vector<16x32xf32>
    %329 = tpu.matmul %326, %328, %cst_144 {dimension_numbers = #tpu.dot_dimension_numbers<[1], [0], [0], [1], [0, 0, 1, 1], [], []>} : vector<16x4xbf16>, vector<4x32xbf16>, vector<16x32xf32> -> vector<16x32xf32>
    %330 = arith.addf %308, %329 : vector<16x32xf32>
    %331 = vector.extract_strided_slice %219 {offsets = [0, 0, 20], sizes = [2, 8, 4], strides = [1, 1, 1]} : vector<2x8x96xbf16> to vector<2x8x4xbf16>
    %332 = vector.extract_strided_slice %219 {offsets = [0, 0, 52], sizes = [2, 8, 4], strides = [1, 1, 1]} : vector<2x8x96xbf16> to vector<2x8x4xbf16>
    %333 = vector.extract_strided_slice %219 {offsets = [0, 0, 84], sizes = [2, 8, 4], strides = [1, 1, 1]} : vector<2x8x96xbf16> to vector<2x8x4xbf16>
    "tpu.trace_start"() <{level = 10 : i32, message = "bqd,bkd->bqk"}> : () -> ()
    %cst_145 = arith.constant dense<0.000000e+00> : vector<2x8x8xf32>
    %334 = tpu.matmul %331, %332, %cst_145 {dimension_numbers = #tpu.dot_dimension_numbers<[2], [2], [1], [1], [0, 0, 0, 1, 1, 1], [0], [0]>} : vector<2x8x4xbf16>, vector<2x8x4xbf16>, vector<2x8x8xf32> -> vector<2x8x8xf32>
    "tpu.trace_stop"() : () -> ()
    %cst_146 = arith.constant dense<0xFF800000> : vector<2x8xf32>
    %335 = vector.multi_reduction <maximumf>, %334, %cst_146 [2] : vector<2x8x8xf32> to vector<2x8xf32>
    %336 = vector.shape_cast %335 : vector<2x8xf32> to vector<2x8x1xf32>
    %337 = vector.broadcast %336 : vector<2x8x1xf32> to vector<2x8x8xf32>
    %338 = arith.subf %334, %337 : vector<2x8x8xf32>
    %339 = math.exp %338 : vector<2x8x8xf32>
    %cst_147 = arith.constant dense<0.000000e+00> : vector<2x8xf32>
    %340 = vector.multi_reduction <add>, %339, %cst_147 [2] : vector<2x8x8xf32> to vector<2x8xf32>
    %341 = vector.shape_cast %340 : vector<2x8xf32> to vector<2x8x1xf32>
    %342 = tpu.reciprocal %341 {approx = true} : vector<2x8x1xf32> -> vector<2x8x1xf32>
    %343 = vector.broadcast %342 : vector<2x8x1xf32> to vector<2x8x8xf32>
    %344 = arith.mulf %339, %343 : vector<2x8x8xf32>
    %345 = arith.truncf %344 : vector<2x8x8xf32> to vector<2x8x8xbf16>
    "tpu.trace_start"() <{level = 10 : i32, message = "bqk,bkd->bqd"}> : () -> ()
    %cst_148 = arith.constant dense<0.000000e+00> : vector<2x8x4xf32>
    %346 = tpu.matmul %345, %333, %cst_148 {dimension_numbers = #tpu.dot_dimension_numbers<[2], [1], [1], [2], [0, 0, 0, 1, 1, 2], [0], [0]>} : vector<2x8x8xbf16>, vector<2x8x4xbf16>, vector<2x8x4xf32> -> vector<2x8x4xf32>
    "tpu.trace_stop"() : () -> ()
    %347 = vector.shape_cast %346 : vector<2x8x4xf32> to vector<16x4xf32>
    %348 = arith.truncf %347 : vector<16x4xf32> to vector<16x4xbf16>
    %c0_149 = arith.constant 0 : index
    %c5 = arith.constant 5 : index
    %c0_150 = arith.constant 0 : index
    %c0_151 = arith.constant 0 : index
    %349 = vector.load %arg12[%c0_149, %c5, %c0_150, %c0_151] : memref<2x8x4x32xbf16, #tpu.memory_space<vmem>>, vector<1x1x4x32xbf16>
    %350 = vector.shape_cast %349 : vector<1x1x4x32xbf16> to vector<4x32xbf16>
    %cst_152 = arith.constant dense<0.000000e+00> : vector<16x32xf32>
    %351 = tpu.matmul %348, %350, %cst_152 {dimension_numbers = #tpu.dot_dimension_numbers<[1], [0], [0], [1], [0, 0, 1, 1], [], []>} : vector<16x4xbf16>, vector<4x32xbf16>, vector<16x32xf32> -> vector<16x32xf32>
    %352 = arith.addf %330, %351 : vector<16x32xf32>
    %353 = vector.extract_strided_slice %219 {offsets = [0, 0, 24], sizes = [2, 8, 4], strides = [1, 1, 1]} : vector<2x8x96xbf16> to vector<2x8x4xbf16>
    %354 = vector.extract_strided_slice %219 {offsets = [0, 0, 56], sizes = [2, 8, 4], strides = [1, 1, 1]} : vector<2x8x96xbf16> to vector<2x8x4xbf16>
    %355 = vector.extract_strided_slice %219 {offsets = [0, 0, 88], sizes = [2, 8, 4], strides = [1, 1, 1]} : vector<2x8x96xbf16> to vector<2x8x4xbf16>
    "tpu.trace_start"() <{level = 10 : i32, message = "bqd,bkd->bqk"}> : () -> ()
    %cst_153 = arith.constant dense<0.000000e+00> : vector<2x8x8xf32>
    %356 = tpu.matmul %353, %354, %cst_153 {dimension_numbers = #tpu.dot_dimension_numbers<[2], [2], [1], [1], [0, 0, 0, 1, 1, 1], [0], [0]>} : vector<2x8x4xbf16>, vector<2x8x4xbf16>, vector<2x8x8xf32> -> vector<2x8x8xf32>
    "tpu.trace_stop"() : () -> ()
    %cst_154 = arith.constant dense<0xFF800000> : vector<2x8xf32>
    %357 = vector.multi_reduction <maximumf>, %356, %cst_154 [2] : vector<2x8x8xf32> to vector<2x8xf32>
    %358 = vector.shape_cast %357 : vector<2x8xf32> to vector<2x8x1xf32>
    %359 = vector.broadcast %358 : vector<2x8x1xf32> to vector<2x8x8xf32>
    %360 = arith.subf %356, %359 : vector<2x8x8xf32>
    %361 = math.exp %360 : vector<2x8x8xf32>
    %cst_155 = arith.constant dense<0.000000e+00> : vector<2x8xf32>
    %362 = vector.multi_reduction <add>, %361, %cst_155 [2] : vector<2x8x8xf32> to vector<2x8xf32>
    %363 = vector.shape_cast %362 : vector<2x8xf32> to vector<2x8x1xf32>
    %364 = tpu.reciprocal %363 {approx = true} : vector<2x8x1xf32> -> vector<2x8x1xf32>
    %365 = vector.broadcast %364 : vector<2x8x1xf32> to vector<2x8x8xf32>
    %366 = arith.mulf %361, %365 : vector<2x8x8xf32>
    %367 = arith.truncf %366 : vector<2x8x8xf32> to vector<2x8x8xbf16>
    "tpu.trace_start"() <{level = 10 : i32, message = "bqk,bkd->bqd"}> : () -> ()
    %cst_156 = arith.constant dense<0.000000e+00> : vector<2x8x4xf32>
    %368 = tpu.matmul %367, %355, %cst_156 {dimension_numbers = #tpu.dot_dimension_numbers<[2], [1], [1], [2], [0, 0, 0, 1, 1, 2], [0], [0]>} : vector<2x8x8xbf16>, vector<2x8x4xbf16>, vector<2x8x4xf32> -> vector<2x8x4xf32>
    "tpu.trace_stop"() : () -> ()
    %369 = vector.shape_cast %368 : vector<2x8x4xf32> to vector<16x4xf32>
    %370 = arith.truncf %369 : vector<16x4xf32> to vector<16x4xbf16>
    %c0_157 = arith.constant 0 : index
    %c6 = arith.constant 6 : index
    %c0_158 = arith.constant 0 : index
    %c0_159 = arith.constant 0 : index
    %371 = vector.load %arg12[%c0_157, %c6, %c0_158, %c0_159] : memref<2x8x4x32xbf16, #tpu.memory_space<vmem>>, vector<1x1x4x32xbf16>
    %372 = vector.shape_cast %371 : vector<1x1x4x32xbf16> to vector<4x32xbf16>
    %cst_160 = arith.constant dense<0.000000e+00> : vector<16x32xf32>
    %373 = tpu.matmul %370, %372, %cst_160 {dimension_numbers = #tpu.dot_dimension_numbers<[1], [0], [0], [1], [0, 0, 1, 1], [], []>} : vector<16x4xbf16>, vector<4x32xbf16>, vector<16x32xf32> -> vector<16x32xf32>
    %374 = arith.addf %352, %373 : vector<16x32xf32>
    %375 = vector.extract_strided_slice %219 {offsets = [0, 0, 28], sizes = [2, 8, 4], strides = [1, 1, 1]} : vector<2x8x96xbf16> to vector<2x8x4xbf16>
    %376 = vector.extract_strided_slice %219 {offsets = [0, 0, 60], sizes = [2, 8, 4], strides = [1, 1, 1]} : vector<2x8x96xbf16> to vector<2x8x4xbf16>
    %377 = vector.extract_strided_slice %219 {offsets = [0, 0, 92], sizes = [2, 8, 4], strides = [1, 1, 1]} : vector<2x8x96xbf16> to vector<2x8x4xbf16>
    "tpu.trace_start"() <{level = 10 : i32, message = "bqd,bkd->bqk"}> : () -> ()
    %cst_161 = arith.constant dense<0.000000e+00> : vector<2x8x8xf32>
    %378 = tpu.matmul %375, %376, %cst_161 {dimension_numbers = #tpu.dot_dimension_numbers<[2], [2], [1], [1], [0, 0, 0, 1, 1, 1], [0], [0]>} : vector<2x8x4xbf16>, vector<2x8x4xbf16>, vector<2x8x8xf32> -> vector<2x8x8xf32>
    "tpu.trace_stop"() : () -> ()
    %cst_162 = arith.constant dense<0xFF800000> : vector<2x8xf32>
    %379 = vector.multi_reduction <maximumf>, %378, %cst_162 [2] : vector<2x8x8xf32> to vector<2x8xf32>
    %380 = vector.shape_cast %379 : vector<2x8xf32> to vector<2x8x1xf32>
    %381 = vector.broadcast %380 : vector<2x8x1xf32> to vector<2x8x8xf32>
    %382 = arith.subf %378, %381 : vector<2x8x8xf32>
    %383 = math.exp %382 : vector<2x8x8xf32>
    %cst_163 = arith.constant dense<0.000000e+00> : vector<2x8xf32>
    %384 = vector.multi_reduction <add>, %383, %cst_163 [2] : vector<2x8x8xf32> to vector<2x8xf32>
    %385 = vector.shape_cast %384 : vector<2x8xf32> to vector<2x8x1xf32>
    %386 = tpu.reciprocal %385 {approx = true} : vector<2x8x1xf32> -> vector<2x8x1xf32>
    %387 = vector.broadcast %386 : vector<2x8x1xf32> to vector<2x8x8xf32>
    %388 = arith.mulf %383, %387 : vector<2x8x8xf32>
    %389 = arith.truncf %388 : vector<2x8x8xf32> to vector<2x8x8xbf16>
    "tpu.trace_start"() <{level = 10 : i32, message = "bqk,bkd->bqd"}> : () -> ()
    %cst_164 = arith.constant dense<0.000000e+00> : vector<2x8x4xf32>
    %390 = tpu.matmul %389, %377, %cst_164 {dimension_numbers = #tpu.dot_dimension_numbers<[2], [1], [1], [2], [0, 0, 0, 1, 1, 2], [0], [0]>} : vector<2x8x8xbf16>, vector<2x8x4xbf16>, vector<2x8x4xf32> -> vector<2x8x4xf32>
    "tpu.trace_stop"() : () -> ()
    %391 = vector.shape_cast %390 : vector<2x8x4xf32> to vector<16x4xf32>
    %392 = arith.truncf %391 : vector<16x4xf32> to vector<16x4xbf16>
    %c0_165 = arith.constant 0 : index
    %c7 = arith.constant 7 : index
    %c0_166 = arith.constant 0 : index
    %c0_167 = arith.constant 0 : index
    %393 = vector.load %arg12[%c0_165, %c7, %c0_166, %c0_167] : memref<2x8x4x32xbf16, #tpu.memory_space<vmem>>, vector<1x1x4x32xbf16>
    %394 = vector.shape_cast %393 : vector<1x1x4x32xbf16> to vector<4x32xbf16>
    %cst_168 = arith.constant dense<0.000000e+00> : vector<16x32xf32>
    %395 = tpu.matmul %392, %394, %cst_168 {dimension_numbers = #tpu.dot_dimension_numbers<[1], [0], [0], [1], [0, 0, 1, 1], [], []>} : vector<16x4xbf16>, vector<4x32xbf16>, vector<16x32xf32> -> vector<16x32xf32>
    %396 = arith.addf %374, %395 : vector<16x32xf32>
    %c0_169 = arith.constant 0 : index
    %c0_170 = arith.constant 0 : index
    %c0_171 = arith.constant 0 : index
    %397 = vector.load %arg13[%c0_169, %c0_170, %c0_171] : memref<2x1x32xf32, #tpu.memory_space<vmem>>, vector<1x1x32xf32>
    %398 = vector.shape_cast %397 : vector<1x1x32xf32> to vector<1x32xf32>
    %399 = vector.broadcast %398 : vector<1x32xf32> to vector<16x32xf32>
    %400 = arith.addf %396, %399 : vector<16x32xf32>
    %401 = arith.addf %209, %400 : vector<16x32xf32>
    %c0_172 = arith.constant 0 : index
    %c0_173 = arith.constant 0 : index
    %c0_174 = arith.constant 0 : index
    %402 = vector.load %arg14[%c0_172, %c0_173, %c0_174] : memref<2x1x32xf32, #tpu.memory_space<vmem>>, vector<1x1x32xf32>
    %403 = vector.shape_cast %402 : vector<1x1x32xf32> to vector<1x32xf32>
    %c0_175 = arith.constant 0 : index
    %c0_176 = arith.constant 0 : index
    %c0_177 = arith.constant 0 : index
    %404 = vector.load %arg15[%c0_175, %c0_176, %c0_177] : memref<2x1x32xf32, #tpu.memory_space<vmem>>, vector<1x1x32xf32>
    %405 = vector.shape_cast %404 : vector<1x1x32xf32> to vector<1x32xf32>
    %cst_178 = arith.constant dense<0.000000e+00> : vector<16xf32>
    %406 = vector.multi_reduction <add>, %401, %cst_178 [1] : vector<16x32xf32> to vector<16xf32>
    %407 = vector.shape_cast %406 : vector<16xf32> to vector<16x1xf32>
    %cst_179 = arith.constant 3.200000e+01 : f32
    %408 = vector.broadcast %cst_179 : f32 to vector<16x1xf32>
    %409 = arith.divf %407, %408 : vector<16x1xf32>
    %410 = vector.broadcast %409 : vector<16x1xf32> to vector<16x32xf32>
    %411 = arith.subf %401, %410 : vector<16x32xf32>
    %412 = arith.mulf %411, %411 : vector<16x32xf32>
    %cst_180 = arith.constant dense<0.000000e+00> : vector<16xf32>
    %413 = vector.multi_reduction <add>, %412, %cst_180 [1] : vector<16x32xf32> to vector<16xf32>
    %414 = vector.shape_cast %413 : vector<16xf32> to vector<16x1xf32>
    %cst_181 = arith.constant 3.200000e+01 : f32
    %415 = vector.broadcast %cst_181 : f32 to vector<16x1xf32>
    %416 = arith.divf %414, %415 : vector<16x1xf32>
    %417 = vector.broadcast %409 : vector<16x1xf32> to vector<16x32xf32>
    %418 = arith.subf %401, %417 : vector<16x32xf32>
    %cst_182 = arith.constant 9.99999974E-6 : f32
    %419 = vector.broadcast %cst_182 : f32 to vector<16x1xf32>
    %420 = arith.addf %416, %419 : vector<16x1xf32>
    %421 = math.rsqrt %420 : vector<16x1xf32>
    %422 = vector.broadcast %421 : vector<16x1xf32> to vector<16x32xf32>
    %423 = arith.mulf %418, %422 : vector<16x32xf32>
    %424 = vector.broadcast %403 : vector<1x32xf32> to vector<16x32xf32>
    %425 = arith.mulf %423, %424 : vector<16x32xf32>
    %426 = vector.broadcast %405 : vector<1x32xf32> to vector<16x32xf32>
    %427 = arith.addf %425, %426 : vector<16x32xf32>
    %428 = arith.truncf %427 : vector<16x32xf32> to vector<16x32xbf16>
    %c0_183 = arith.constant 0 : index
    %c0_184 = arith.constant 0 : index
    %c0_185 = arith.constant 0 : index
    %429 = vector.load %arg16[%c0_183, %c0_184, %c0_185] : memref<2x32x128xbf16, #tpu.memory_space<vmem>>, vector<1x32x128xbf16>
    %430 = vector.shape_cast %429 : vector<1x32x128xbf16> to vector<32x128xbf16>
    %cst_186 = arith.constant dense<0.000000e+00> : vector<16x128xf32>
    %431 = tpu.matmul %428, %430, %cst_186 {dimension_numbers = #tpu.dot_dimension_numbers<[1], [0], [0], [1], [0, 0, 1, 1], [], []>} : vector<16x32xbf16>, vector<32x128xbf16>, vector<16x128xf32> -> vector<16x128xf32>
    %c0_187 = arith.constant 0 : index
    %c0_188 = arith.constant 0 : index
    %c0_189 = arith.constant 0 : index
    %432 = vector.load %arg17[%c0_187, %c0_188, %c0_189] : memref<2x1x128xf32, #tpu.memory_space<vmem>>, vector<1x1x128xf32>
    %433 = vector.shape_cast %432 : vector<1x1x128xf32> to vector<1x128xf32>
    %434 = vector.broadcast %433 : vector<1x128xf32> to vector<16x128xf32>
    %435 = arith.addf %431, %434 : vector<16x128xf32>
    %cst_190 = arith.constant 0.000000e+00 : f32
    %436 = vector.broadcast %cst_190 : f32 to vector<16x128xf32>
    %437 = arith.maximumf %435, %436 : vector<16x128xf32>
    %438 = arith.truncf %437 : vector<16x128xf32> to vector<16x128xbf16>
    %c0_191 = arith.constant 0 : index
    %c0_192 = arith.constant 0 : index
    %c0_193 = arith.constant 0 : index
    %439 = vector.load %arg18[%c0_191, %c0_192, %c0_193] : memref<2x128x32xbf16, #tpu.memory_space<vmem>>, vector<1x128x32xbf16>
    %440 = vector.shape_cast %439 : vector<1x128x32xbf16> to vector<128x32xbf16>
    %cst_194 = arith.constant dense<0.000000e+00> : vector<16x32xf32>
    %441 = tpu.matmul %438, %440, %cst_194 {dimension_numbers = #tpu.dot_dimension_numbers<[1], [0], [0], [1], [0, 0, 1, 1], [], []>} : vector<16x128xbf16>, vector<128x32xbf16>, vector<16x32xf32> -> vector<16x32xf32>
    %c0_195 = arith.constant 0 : index
    %c0_196 = arith.constant 0 : index
    %c0_197 = arith.constant 0 : index
    %442 = vector.load %arg19[%c0_195, %c0_196, %c0_197] : memref<2x1x32xf32, #tpu.memory_space<vmem>>, vector<1x1x32xf32>
    %443 = vector.shape_cast %442 : vector<1x1x32xf32> to vector<1x32xf32>
    %444 = vector.broadcast %443 : vector<1x32xf32> to vector<16x32xf32>
    %445 = arith.addf %441, %444 : vector<16x32xf32>
    %446 = arith.addf %427, %445 : vector<16x32xf32>
    %c0_198 = arith.constant 0 : index
    %c0_199 = arith.constant 0 : index
    %c0_200 = arith.constant 0 : index
    %447 = vector.load %arg20[%c0_198, %c0_199, %c0_200] : memref<2x1x32xf32, #tpu.memory_space<vmem>>, vector<1x1x32xf32>
    %448 = vector.shape_cast %447 : vector<1x1x32xf32> to vector<1x32xf32>
    %c0_201 = arith.constant 0 : index
    %c0_202 = arith.constant 0 : index
    %c0_203 = arith.constant 0 : index
    %449 = vector.load %arg21[%c0_201, %c0_202, %c0_203] : memref<2x1x32xf32, #tpu.memory_space<vmem>>, vector<1x1x32xf32>
    %450 = vector.shape_cast %449 : vector<1x1x32xf32> to vector<1x32xf32>
    %cst_204 = arith.constant dense<0.000000e+00> : vector<16xf32>
    %451 = vector.multi_reduction <add>, %446, %cst_204 [1] : vector<16x32xf32> to vector<16xf32>
    %452 = vector.shape_cast %451 : vector<16xf32> to vector<16x1xf32>
    %cst_205 = arith.constant 3.200000e+01 : f32
    %453 = vector.broadcast %cst_205 : f32 to vector<16x1xf32>
    %454 = arith.divf %452, %453 : vector<16x1xf32>
    %455 = vector.broadcast %454 : vector<16x1xf32> to vector<16x32xf32>
    %456 = arith.subf %446, %455 : vector<16x32xf32>
    %457 = arith.mulf %456, %456 : vector<16x32xf32>
    %cst_206 = arith.constant dense<0.000000e+00> : vector<16xf32>
    %458 = vector.multi_reduction <add>, %457, %cst_206 [1] : vector<16x32xf32> to vector<16xf32>
    %459 = vector.shape_cast %458 : vector<16xf32> to vector<16x1xf32>
    %cst_207 = arith.constant 3.200000e+01 : f32
    %460 = vector.broadcast %cst_207 : f32 to vector<16x1xf32>
    %461 = arith.divf %459, %460 : vector<16x1xf32>
    %462 = vector.broadcast %454 : vector<16x1xf32> to vector<16x32xf32>
    %463 = arith.subf %446, %462 : vector<16x32xf32>
    %cst_208 = arith.constant 9.99999974E-6 : f32
    %464 = vector.broadcast %cst_208 : f32 to vector<16x1xf32>
    %465 = arith.addf %461, %464 : vector<16x1xf32>
    %466 = math.rsqrt %465 : vector<16x1xf32>
    %467 = vector.broadcast %466 : vector<16x1xf32> to vector<16x32xf32>
    %468 = arith.mulf %463, %467 : vector<16x32xf32>
    %469 = vector.broadcast %448 : vector<1x32xf32> to vector<16x32xf32>
    %470 = arith.mulf %468, %469 : vector<16x32xf32>
    %471 = vector.broadcast %450 : vector<1x32xf32> to vector<16x32xf32>
    %472 = arith.addf %470, %471 : vector<16x32xf32>
    %473 = arith.truncf %472 : vector<16x32xf32> to vector<16x32xbf16>
    %c1_209 = arith.constant 1 : index
    %c0_210 = arith.constant 0 : index
    %c0_211 = arith.constant 0 : index
    %474 = vector.load %arg10[%c1_209, %c0_210, %c0_211] : memref<2x32x96xbf16, #tpu.memory_space<vmem>>, vector<1x32x96xbf16>
    %475 = vector.shape_cast %474 : vector<1x32x96xbf16> to vector<32x96xbf16>
    %cst_212 = arith.constant dense<0.000000e+00> : vector<16x96xf32>
    %476 = tpu.matmul %473, %475, %cst_212 {dimension_numbers = #tpu.dot_dimension_numbers<[1], [0], [0], [1], [0, 0, 1, 1], [], []>} : vector<16x32xbf16>, vector<32x96xbf16>, vector<16x96xf32> -> vector<16x96xf32>
    %c1_213 = arith.constant 1 : index
    %c0_214 = arith.constant 0 : index
    %c0_215 = arith.constant 0 : index
    %477 = vector.load %arg11[%c1_213, %c0_214, %c0_215] : memref<2x1x96xf32, #tpu.memory_space<vmem>>, vector<1x1x96xf32>
    %478 = vector.shape_cast %477 : vector<1x1x96xf32> to vector<1x96xf32>
    %479 = vector.broadcast %478 : vector<1x96xf32> to vector<16x96xf32>
    %480 = arith.addf %476, %479 : vector<16x96xf32>
    %481 = arith.truncf %480 : vector<16x96xf32> to vector<16x96xbf16>
    %482 = vector.shape_cast %481 : vector<16x96xbf16> to vector<2x8x96xbf16>
    %cst_216 = arith.constant 0.000000e+00 : f32
    %483 = vector.broadcast %cst_216 : f32 to vector<16x32xf32>
    %484 = vector.extract_strided_slice %482 {offsets = [0, 0, 0], sizes = [2, 8, 4], strides = [1, 1, 1]} : vector<2x8x96xbf16> to vector<2x8x4xbf16>
    %485 = vector.extract_strided_slice %482 {offsets = [0, 0, 32], sizes = [2, 8, 4], strides = [1, 1, 1]} : vector<2x8x96xbf16> to vector<2x8x4xbf16>
    %486 = vector.extract_strided_slice %482 {offsets = [0, 0, 64], sizes = [2, 8, 4], strides = [1, 1, 1]} : vector<2x8x96xbf16> to vector<2x8x4xbf16>
    "tpu.trace_start"() <{level = 10 : i32, message = "bqd,bkd->bqk"}> : () -> ()
    %cst_217 = arith.constant dense<0.000000e+00> : vector<2x8x8xf32>
    %487 = tpu.matmul %484, %485, %cst_217 {dimension_numbers = #tpu.dot_dimension_numbers<[2], [2], [1], [1], [0, 0, 0, 1, 1, 1], [0], [0]>} : vector<2x8x4xbf16>, vector<2x8x4xbf16>, vector<2x8x8xf32> -> vector<2x8x8xf32>
    "tpu.trace_stop"() : () -> ()
    %cst_218 = arith.constant dense<0xFF800000> : vector<2x8xf32>
    %488 = vector.multi_reduction <maximumf>, %487, %cst_218 [2] : vector<2x8x8xf32> to vector<2x8xf32>
    %489 = vector.shape_cast %488 : vector<2x8xf32> to vector<2x8x1xf32>
    %490 = vector.broadcast %489 : vector<2x8x1xf32> to vector<2x8x8xf32>
    %491 = arith.subf %487, %490 : vector<2x8x8xf32>
    %492 = math.exp %491 : vector<2x8x8xf32>
    %cst_219 = arith.constant dense<0.000000e+00> : vector<2x8xf32>
    %493 = vector.multi_reduction <add>, %492, %cst_219 [2] : vector<2x8x8xf32> to vector<2x8xf32>
    %494 = vector.shape_cast %493 : vector<2x8xf32> to vector<2x8x1xf32>
    %495 = tpu.reciprocal %494 {approx = true} : vector<2x8x1xf32> -> vector<2x8x1xf32>
    %496 = vector.broadcast %495 : vector<2x8x1xf32> to vector<2x8x8xf32>
    %497 = arith.mulf %492, %496 : vector<2x8x8xf32>
    %498 = arith.truncf %497 : vector<2x8x8xf32> to vector<2x8x8xbf16>
    "tpu.trace_start"() <{level = 10 : i32, message = "bqk,bkd->bqd"}> : () -> ()
    %cst_220 = arith.constant dense<0.000000e+00> : vector<2x8x4xf32>
    %499 = tpu.matmul %498, %486, %cst_220 {dimension_numbers = #tpu.dot_dimension_numbers<[2], [1], [1], [2], [0, 0, 0, 1, 1, 2], [0], [0]>} : vector<2x8x8xbf16>, vector<2x8x4xbf16>, vector<2x8x4xf32> -> vector<2x8x4xf32>
    "tpu.trace_stop"() : () -> ()
    %500 = vector.shape_cast %499 : vector<2x8x4xf32> to vector<16x4xf32>
    %501 = arith.truncf %500 : vector<16x4xf32> to vector<16x4xbf16>
    %c1_221 = arith.constant 1 : index
    %c0_222 = arith.constant 0 : index
    %c0_223 = arith.constant 0 : index
    %c0_224 = arith.constant 0 : index
    %502 = vector.load %arg12[%c1_221, %c0_222, %c0_223, %c0_224] : memref<2x8x4x32xbf16, #tpu.memory_space<vmem>>, vector<1x1x4x32xbf16>
    %503 = vector.shape_cast %502 : vector<1x1x4x32xbf16> to vector<4x32xbf16>
    %cst_225 = arith.constant dense<0.000000e+00> : vector<16x32xf32>
    %504 = tpu.matmul %501, %503, %cst_225 {dimension_numbers = #tpu.dot_dimension_numbers<[1], [0], [0], [1], [0, 0, 1, 1], [], []>} : vector<16x4xbf16>, vector<4x32xbf16>, vector<16x32xf32> -> vector<16x32xf32>
    %505 = arith.addf %483, %504 : vector<16x32xf32>
    %506 = vector.extract_strided_slice %482 {offsets = [0, 0, 4], sizes = [2, 8, 4], strides = [1, 1, 1]} : vector<2x8x96xbf16> to vector<2x8x4xbf16>
    %507 = vector.extract_strided_slice %482 {offsets = [0, 0, 36], sizes = [2, 8, 4], strides = [1, 1, 1]} : vector<2x8x96xbf16> to vector<2x8x4xbf16>
    %508 = vector.extract_strided_slice %482 {offsets = [0, 0, 68], sizes = [2, 8, 4], strides = [1, 1, 1]} : vector<2x8x96xbf16> to vector<2x8x4xbf16>
    "tpu.trace_start"() <{level = 10 : i32, message = "bqd,bkd->bqk"}> : () -> ()
    %cst_226 = arith.constant dense<0.000000e+00> : vector<2x8x8xf32>
    %509 = tpu.matmul %506, %507, %cst_226 {dimension_numbers = #tpu.dot_dimension_numbers<[2], [2], [1], [1], [0, 0, 0, 1, 1, 1], [0], [0]>} : vector<2x8x4xbf16>, vector<2x8x4xbf16>, vector<2x8x8xf32> -> vector<2x8x8xf32>
    "tpu.trace_stop"() : () -> ()
    %cst_227 = arith.constant dense<0xFF800000> : vector<2x8xf32>
    %510 = vector.multi_reduction <maximumf>, %509, %cst_227 [2] : vector<2x8x8xf32> to vector<2x8xf32>
    %511 = vector.shape_cast %510 : vector<2x8xf32> to vector<2x8x1xf32>
    %512 = vector.broadcast %511 : vector<2x8x1xf32> to vector<2x8x8xf32>
    %513 = arith.subf %509, %512 : vector<2x8x8xf32>
    %514 = math.exp %513 : vector<2x8x8xf32>
    %cst_228 = arith.constant dense<0.000000e+00> : vector<2x8xf32>
    %515 = vector.multi_reduction <add>, %514, %cst_228 [2] : vector<2x8x8xf32> to vector<2x8xf32>
    %516 = vector.shape_cast %515 : vector<2x8xf32> to vector<2x8x1xf32>
    %517 = tpu.reciprocal %516 {approx = true} : vector<2x8x1xf32> -> vector<2x8x1xf32>
    %518 = vector.broadcast %517 : vector<2x8x1xf32> to vector<2x8x8xf32>
    %519 = arith.mulf %514, %518 : vector<2x8x8xf32>
    %520 = arith.truncf %519 : vector<2x8x8xf32> to vector<2x8x8xbf16>
    "tpu.trace_start"() <{level = 10 : i32, message = "bqk,bkd->bqd"}> : () -> ()
    %cst_229 = arith.constant dense<0.000000e+00> : vector<2x8x4xf32>
    %521 = tpu.matmul %520, %508, %cst_229 {dimension_numbers = #tpu.dot_dimension_numbers<[2], [1], [1], [2], [0, 0, 0, 1, 1, 2], [0], [0]>} : vector<2x8x8xbf16>, vector<2x8x4xbf16>, vector<2x8x4xf32> -> vector<2x8x4xf32>
    "tpu.trace_stop"() : () -> ()
    %522 = vector.shape_cast %521 : vector<2x8x4xf32> to vector<16x4xf32>
    %523 = arith.truncf %522 : vector<16x4xf32> to vector<16x4xbf16>
    %c1_230 = arith.constant 1 : index
    %c1_231 = arith.constant 1 : index
    %c0_232 = arith.constant 0 : index
    %c0_233 = arith.constant 0 : index
    %524 = vector.load %arg12[%c1_230, %c1_231, %c0_232, %c0_233] : memref<2x8x4x32xbf16, #tpu.memory_space<vmem>>, vector<1x1x4x32xbf16>
    %525 = vector.shape_cast %524 : vector<1x1x4x32xbf16> to vector<4x32xbf16>
    %cst_234 = arith.constant dense<0.000000e+00> : vector<16x32xf32>
    %526 = tpu.matmul %523, %525, %cst_234 {dimension_numbers = #tpu.dot_dimension_numbers<[1], [0], [0], [1], [0, 0, 1, 1], [], []>} : vector<16x4xbf16>, vector<4x32xbf16>, vector<16x32xf32> -> vector<16x32xf32>
    %527 = arith.addf %505, %526 : vector<16x32xf32>
    %528 = vector.extract_strided_slice %482 {offsets = [0, 0, 8], sizes = [2, 8, 4], strides = [1, 1, 1]} : vector<2x8x96xbf16> to vector<2x8x4xbf16>
    %529 = vector.extract_strided_slice %482 {offsets = [0, 0, 40], sizes = [2, 8, 4], strides = [1, 1, 1]} : vector<2x8x96xbf16> to vector<2x8x4xbf16>
    %530 = vector.extract_strided_slice %482 {offsets = [0, 0, 72], sizes = [2, 8, 4], strides = [1, 1, 1]} : vector<2x8x96xbf16> to vector<2x8x4xbf16>
    "tpu.trace_start"() <{level = 10 : i32, message = "bqd,bkd->bqk"}> : () -> ()
    %cst_235 = arith.constant dense<0.000000e+00> : vector<2x8x8xf32>
    %531 = tpu.matmul %528, %529, %cst_235 {dimension_numbers = #tpu.dot_dimension_numbers<[2], [2], [1], [1], [0, 0, 0, 1, 1, 1], [0], [0]>} : vector<2x8x4xbf16>, vector<2x8x4xbf16>, vector<2x8x8xf32> -> vector<2x8x8xf32>
    "tpu.trace_stop"() : () -> ()
    %cst_236 = arith.constant dense<0xFF800000> : vector<2x8xf32>
    %532 = vector.multi_reduction <maximumf>, %531, %cst_236 [2] : vector<2x8x8xf32> to vector<2x8xf32>
    %533 = vector.shape_cast %532 : vector<2x8xf32> to vector<2x8x1xf32>
    %534 = vector.broadcast %533 : vector<2x8x1xf32> to vector<2x8x8xf32>
    %535 = arith.subf %531, %534 : vector<2x8x8xf32>
    %536 = math.exp %535 : vector<2x8x8xf32>
    %cst_237 = arith.constant dense<0.000000e+00> : vector<2x8xf32>
    %537 = vector.multi_reduction <add>, %536, %cst_237 [2] : vector<2x8x8xf32> to vector<2x8xf32>
    %538 = vector.shape_cast %537 : vector<2x8xf32> to vector<2x8x1xf32>
    %539 = tpu.reciprocal %538 {approx = true} : vector<2x8x1xf32> -> vector<2x8x1xf32>
    %540 = vector.broadcast %539 : vector<2x8x1xf32> to vector<2x8x8xf32>
    %541 = arith.mulf %536, %540 : vector<2x8x8xf32>
    %542 = arith.truncf %541 : vector<2x8x8xf32> to vector<2x8x8xbf16>
    "tpu.trace_start"() <{level = 10 : i32, message = "bqk,bkd->bqd"}> : () -> ()
    %cst_238 = arith.constant dense<0.000000e+00> : vector<2x8x4xf32>
    %543 = tpu.matmul %542, %530, %cst_238 {dimension_numbers = #tpu.dot_dimension_numbers<[2], [1], [1], [2], [0, 0, 0, 1, 1, 2], [0], [0]>} : vector<2x8x8xbf16>, vector<2x8x4xbf16>, vector<2x8x4xf32> -> vector<2x8x4xf32>
    "tpu.trace_stop"() : () -> ()
    %544 = vector.shape_cast %543 : vector<2x8x4xf32> to vector<16x4xf32>
    %545 = arith.truncf %544 : vector<16x4xf32> to vector<16x4xbf16>
    %c1_239 = arith.constant 1 : index
    %c2_240 = arith.constant 2 : index
    %c0_241 = arith.constant 0 : index
    %c0_242 = arith.constant 0 : index
    %546 = vector.load %arg12[%c1_239, %c2_240, %c0_241, %c0_242] : memref<2x8x4x32xbf16, #tpu.memory_space<vmem>>, vector<1x1x4x32xbf16>
    %547 = vector.shape_cast %546 : vector<1x1x4x32xbf16> to vector<4x32xbf16>
    %cst_243 = arith.constant dense<0.000000e+00> : vector<16x32xf32>
    %548 = tpu.matmul %545, %547, %cst_243 {dimension_numbers = #tpu.dot_dimension_numbers<[1], [0], [0], [1], [0, 0, 1, 1], [], []>} : vector<16x4xbf16>, vector<4x32xbf16>, vector<16x32xf32> -> vector<16x32xf32>
    %549 = arith.addf %527, %548 : vector<16x32xf32>
    %550 = vector.extract_strided_slice %482 {offsets = [0, 0, 12], sizes = [2, 8, 4], strides = [1, 1, 1]} : vector<2x8x96xbf16> to vector<2x8x4xbf16>
    %551 = vector.extract_strided_slice %482 {offsets = [0, 0, 44], sizes = [2, 8, 4], strides = [1, 1, 1]} : vector<2x8x96xbf16> to vector<2x8x4xbf16>
    %552 = vector.extract_strided_slice %482 {offsets = [0, 0, 76], sizes = [2, 8, 4], strides = [1, 1, 1]} : vector<2x8x96xbf16> to vector<2x8x4xbf16>
    "tpu.trace_start"() <{level = 10 : i32, message = "bqd,bkd->bqk"}> : () -> ()
    %cst_244 = arith.constant dense<0.000000e+00> : vector<2x8x8xf32>
    %553 = tpu.matmul %550, %551, %cst_244 {dimension_numbers = #tpu.dot_dimension_numbers<[2], [2], [1], [1], [0, 0, 0, 1, 1, 1], [0], [0]>} : vector<2x8x4xbf16>, vector<2x8x4xbf16>, vector<2x8x8xf32> -> vector<2x8x8xf32>
    "tpu.trace_stop"() : () -> ()
    %cst_245 = arith.constant dense<0xFF800000> : vector<2x8xf32>
    %554 = vector.multi_reduction <maximumf>, %553, %cst_245 [2] : vector<2x8x8xf32> to vector<2x8xf32>
    %555 = vector.shape_cast %554 : vector<2x8xf32> to vector<2x8x1xf32>
    %556 = vector.broadcast %555 : vector<2x8x1xf32> to vector<2x8x8xf32>
    %557 = arith.subf %553, %556 : vector<2x8x8xf32>
    %558 = math.exp %557 : vector<2x8x8xf32>
    %cst_246 = arith.constant dense<0.000000e+00> : vector<2x8xf32>
    %559 = vector.multi_reduction <add>, %558, %cst_246 [2] : vector<2x8x8xf32> to vector<2x8xf32>
    %560 = vector.shape_cast %559 : vector<2x8xf32> to vector<2x8x1xf32>
    %561 = tpu.reciprocal %560 {approx = true} : vector<2x8x1xf32> -> vector<2x8x1xf32>
    %562 = vector.broadcast %561 : vector<2x8x1xf32> to vector<2x8x8xf32>
    %563 = arith.mulf %558, %562 : vector<2x8x8xf32>
    %564 = arith.truncf %563 : vector<2x8x8xf32> to vector<2x8x8xbf16>
    "tpu.trace_start"() <{level = 10 : i32, message = "bqk,bkd->bqd"}> : () -> ()
    %cst_247 = arith.constant dense<0.000000e+00> : vector<2x8x4xf32>
    %565 = tpu.matmul %564, %552, %cst_247 {dimension_numbers = #tpu.dot_dimension_numbers<[2], [1], [1], [2], [0, 0, 0, 1, 1, 2], [0], [0]>} : vector<2x8x8xbf16>, vector<2x8x4xbf16>, vector<2x8x4xf32> -> vector<2x8x4xf32>
    "tpu.trace_stop"() : () -> ()
    %566 = vector.shape_cast %565 : vector<2x8x4xf32> to vector<16x4xf32>
    %567 = arith.truncf %566 : vector<16x4xf32> to vector<16x4xbf16>
    %c1_248 = arith.constant 1 : index
    %c3_249 = arith.constant 3 : index
    %c0_250 = arith.constant 0 : index
    %c0_251 = arith.constant 0 : index
    %568 = vector.load %arg12[%c1_248, %c3_249, %c0_250, %c0_251] : memref<2x8x4x32xbf16, #tpu.memory_space<vmem>>, vector<1x1x4x32xbf16>
    %569 = vector.shape_cast %568 : vector<1x1x4x32xbf16> to vector<4x32xbf16>
    %cst_252 = arith.constant dense<0.000000e+00> : vector<16x32xf32>
    %570 = tpu.matmul %567, %569, %cst_252 {dimension_numbers = #tpu.dot_dimension_numbers<[1], [0], [0], [1], [0, 0, 1, 1], [], []>} : vector<16x4xbf16>, vector<4x32xbf16>, vector<16x32xf32> -> vector<16x32xf32>
    %571 = arith.addf %549, %570 : vector<16x32xf32>
    %572 = vector.extract_strided_slice %482 {offsets = [0, 0, 16], sizes = [2, 8, 4], strides = [1, 1, 1]} : vector<2x8x96xbf16> to vector<2x8x4xbf16>
    %573 = vector.extract_strided_slice %482 {offsets = [0, 0, 48], sizes = [2, 8, 4], strides = [1, 1, 1]} : vector<2x8x96xbf16> to vector<2x8x4xbf16>
    %574 = vector.extract_strided_slice %482 {offsets = [0, 0, 80], sizes = [2, 8, 4], strides = [1, 1, 1]} : vector<2x8x96xbf16> to vector<2x8x4xbf16>
    "tpu.trace_start"() <{level = 10 : i32, message = "bqd,bkd->bqk"}> : () -> ()
    %cst_253 = arith.constant dense<0.000000e+00> : vector<2x8x8xf32>
    %575 = tpu.matmul %572, %573, %cst_253 {dimension_numbers = #tpu.dot_dimension_numbers<[2], [2], [1], [1], [0, 0, 0, 1, 1, 1], [0], [0]>} : vector<2x8x4xbf16>, vector<2x8x4xbf16>, vector<2x8x8xf32> -> vector<2x8x8xf32>
    "tpu.trace_stop"() : () -> ()
    %cst_254 = arith.constant dense<0xFF800000> : vector<2x8xf32>
    %576 = vector.multi_reduction <maximumf>, %575, %cst_254 [2] : vector<2x8x8xf32> to vector<2x8xf32>
    %577 = vector.shape_cast %576 : vector<2x8xf32> to vector<2x8x1xf32>
    %578 = vector.broadcast %577 : vector<2x8x1xf32> to vector<2x8x8xf32>
    %579 = arith.subf %575, %578 : vector<2x8x8xf32>
    %580 = math.exp %579 : vector<2x8x8xf32>
    %cst_255 = arith.constant dense<0.000000e+00> : vector<2x8xf32>
    %581 = vector.multi_reduction <add>, %580, %cst_255 [2] : vector<2x8x8xf32> to vector<2x8xf32>
    %582 = vector.shape_cast %581 : vector<2x8xf32> to vector<2x8x1xf32>
    %583 = tpu.reciprocal %582 {approx = true} : vector<2x8x1xf32> -> vector<2x8x1xf32>
    %584 = vector.broadcast %583 : vector<2x8x1xf32> to vector<2x8x8xf32>
    %585 = arith.mulf %580, %584 : vector<2x8x8xf32>
    %586 = arith.truncf %585 : vector<2x8x8xf32> to vector<2x8x8xbf16>
    "tpu.trace_start"() <{level = 10 : i32, message = "bqk,bkd->bqd"}> : () -> ()
    %cst_256 = arith.constant dense<0.000000e+00> : vector<2x8x4xf32>
    %587 = tpu.matmul %586, %574, %cst_256 {dimension_numbers = #tpu.dot_dimension_numbers<[2], [1], [1], [2], [0, 0, 0, 1, 1, 2], [0], [0]>} : vector<2x8x8xbf16>, vector<2x8x4xbf16>, vector<2x8x4xf32> -> vector<2x8x4xf32>
    "tpu.trace_stop"() : () -> ()
    %588 = vector.shape_cast %587 : vector<2x8x4xf32> to vector<16x4xf32>
    %589 = arith.truncf %588 : vector<16x4xf32> to vector<16x4xbf16>
    %c1_257 = arith.constant 1 : index
    %c4_258 = arith.constant 4 : index
    %c0_259 = arith.constant 0 : index
    %c0_260 = arith.constant 0 : index
    %590 = vector.load %arg12[%c1_257, %c4_258, %c0_259, %c0_260] : memref<2x8x4x32xbf16, #tpu.memory_space<vmem>>, vector<1x1x4x32xbf16>
    %591 = vector.shape_cast %590 : vector<1x1x4x32xbf16> to vector<4x32xbf16>
    %cst_261 = arith.constant dense<0.000000e+00> : vector<16x32xf32>
    %592 = tpu.matmul %589, %591, %cst_261 {dimension_numbers = #tpu.dot_dimension_numbers<[1], [0], [0], [1], [0, 0, 1, 1], [], []>} : vector<16x4xbf16>, vector<4x32xbf16>, vector<16x32xf32> -> vector<16x32xf32>
    %593 = arith.addf %571, %592 : vector<16x32xf32>
    %594 = vector.extract_strided_slice %482 {offsets = [0, 0, 20], sizes = [2, 8, 4], strides = [1, 1, 1]} : vector<2x8x96xbf16> to vector<2x8x4xbf16>
    %595 = vector.extract_strided_slice %482 {offsets = [0, 0, 52], sizes = [2, 8, 4], strides = [1, 1, 1]} : vector<2x8x96xbf16> to vector<2x8x4xbf16>
    %596 = vector.extract_strided_slice %482 {offsets = [0, 0, 84], sizes = [2, 8, 4], strides = [1, 1, 1]} : vector<2x8x96xbf16> to vector<2x8x4xbf16>
    "tpu.trace_start"() <{level = 10 : i32, message = "bqd,bkd->bqk"}> : () -> ()
    %cst_262 = arith.constant dense<0.000000e+00> : vector<2x8x8xf32>
    %597 = tpu.matmul %594, %595, %cst_262 {dimension_numbers = #tpu.dot_dimension_numbers<[2], [2], [1], [1], [0, 0, 0, 1, 1, 1], [0], [0]>} : vector<2x8x4xbf16>, vector<2x8x4xbf16>, vector<2x8x8xf32> -> vector<2x8x8xf32>
    "tpu.trace_stop"() : () -> ()
    %cst_263 = arith.constant dense<0xFF800000> : vector<2x8xf32>
    %598 = vector.multi_reduction <maximumf>, %597, %cst_263 [2] : vector<2x8x8xf32> to vector<2x8xf32>
    %599 = vector.shape_cast %598 : vector<2x8xf32> to vector<2x8x1xf32>
    %600 = vector.broadcast %599 : vector<2x8x1xf32> to vector<2x8x8xf32>
    %601 = arith.subf %597, %600 : vector<2x8x8xf32>
    %602 = math.exp %601 : vector<2x8x8xf32>
    %cst_264 = arith.constant dense<0.000000e+00> : vector<2x8xf32>
    %603 = vector.multi_reduction <add>, %602, %cst_264 [2] : vector<2x8x8xf32> to vector<2x8xf32>
    %604 = vector.shape_cast %603 : vector<2x8xf32> to vector<2x8x1xf32>
    %605 = tpu.reciprocal %604 {approx = true} : vector<2x8x1xf32> -> vector<2x8x1xf32>
    %606 = vector.broadcast %605 : vector<2x8x1xf32> to vector<2x8x8xf32>
    %607 = arith.mulf %602, %606 : vector<2x8x8xf32>
    %608 = arith.truncf %607 : vector<2x8x8xf32> to vector<2x8x8xbf16>
    "tpu.trace_start"() <{level = 10 : i32, message = "bqk,bkd->bqd"}> : () -> ()
    %cst_265 = arith.constant dense<0.000000e+00> : vector<2x8x4xf32>
    %609 = tpu.matmul %608, %596, %cst_265 {dimension_numbers = #tpu.dot_dimension_numbers<[2], [1], [1], [2], [0, 0, 0, 1, 1, 2], [0], [0]>} : vector<2x8x8xbf16>, vector<2x8x4xbf16>, vector<2x8x4xf32> -> vector<2x8x4xf32>
    "tpu.trace_stop"() : () -> ()
    %610 = vector.shape_cast %609 : vector<2x8x4xf32> to vector<16x4xf32>
    %611 = arith.truncf %610 : vector<16x4xf32> to vector<16x4xbf16>
    %c1_266 = arith.constant 1 : index
    %c5_267 = arith.constant 5 : index
    %c0_268 = arith.constant 0 : index
    %c0_269 = arith.constant 0 : index
    %612 = vector.load %arg12[%c1_266, %c5_267, %c0_268, %c0_269] : memref<2x8x4x32xbf16, #tpu.memory_space<vmem>>, vector<1x1x4x32xbf16>
    %613 = vector.shape_cast %612 : vector<1x1x4x32xbf16> to vector<4x32xbf16>
    %cst_270 = arith.constant dense<0.000000e+00> : vector<16x32xf32>
    %614 = tpu.matmul %611, %613, %cst_270 {dimension_numbers = #tpu.dot_dimension_numbers<[1], [0], [0], [1], [0, 0, 1, 1], [], []>} : vector<16x4xbf16>, vector<4x32xbf16>, vector<16x32xf32> -> vector<16x32xf32>
    %615 = arith.addf %593, %614 : vector<16x32xf32>
    %616 = vector.extract_strided_slice %482 {offsets = [0, 0, 24], sizes = [2, 8, 4], strides = [1, 1, 1]} : vector<2x8x96xbf16> to vector<2x8x4xbf16>
    %617 = vector.extract_strided_slice %482 {offsets = [0, 0, 56], sizes = [2, 8, 4], strides = [1, 1, 1]} : vector<2x8x96xbf16> to vector<2x8x4xbf16>
    %618 = vector.extract_strided_slice %482 {offsets = [0, 0, 88], sizes = [2, 8, 4], strides = [1, 1, 1]} : vector<2x8x96xbf16> to vector<2x8x4xbf16>
    "tpu.trace_start"() <{level = 10 : i32, message = "bqd,bkd->bqk"}> : () -> ()
    %cst_271 = arith.constant dense<0.000000e+00> : vector<2x8x8xf32>
    %619 = tpu.matmul %616, %617, %cst_271 {dimension_numbers = #tpu.dot_dimension_numbers<[2], [2], [1], [1], [0, 0, 0, 1, 1, 1], [0], [0]>} : vector<2x8x4xbf16>, vector<2x8x4xbf16>, vector<2x8x8xf32> -> vector<2x8x8xf32>
    "tpu.trace_stop"() : () -> ()
    %cst_272 = arith.constant dense<0xFF800000> : vector<2x8xf32>
    %620 = vector.multi_reduction <maximumf>, %619, %cst_272 [2] : vector<2x8x8xf32> to vector<2x8xf32>
    %621 = vector.shape_cast %620 : vector<2x8xf32> to vector<2x8x1xf32>
    %622 = vector.broadcast %621 : vector<2x8x1xf32> to vector<2x8x8xf32>
    %623 = arith.subf %619, %622 : vector<2x8x8xf32>
    %624 = math.exp %623 : vector<2x8x8xf32>
    %cst_273 = arith.constant dense<0.000000e+00> : vector<2x8xf32>
    %625 = vector.multi_reduction <add>, %624, %cst_273 [2] : vector<2x8x8xf32> to vector<2x8xf32>
    %626 = vector.shape_cast %625 : vector<2x8xf32> to vector<2x8x1xf32>
    %627 = tpu.reciprocal %626 {approx = true} : vector<2x8x1xf32> -> vector<2x8x1xf32>
    %628 = vector.broadcast %627 : vector<2x8x1xf32> to vector<2x8x8xf32>
    %629 = arith.mulf %624, %628 : vector<2x8x8xf32>
    %630 = arith.truncf %629 : vector<2x8x8xf32> to vector<2x8x8xbf16>
    "tpu.trace_start"() <{level = 10 : i32, message = "bqk,bkd->bqd"}> : () -> ()
    %cst_274 = arith.constant dense<0.000000e+00> : vector<2x8x4xf32>
    %631 = tpu.matmul %630, %618, %cst_274 {dimension_numbers = #tpu.dot_dimension_numbers<[2], [1], [1], [2], [0, 0, 0, 1, 1, 2], [0], [0]>} : vector<2x8x8xbf16>, vector<2x8x4xbf16>, vector<2x8x4xf32> -> vector<2x8x4xf32>
    "tpu.trace_stop"() : () -> ()
    %632 = vector.shape_cast %631 : vector<2x8x4xf32> to vector<16x4xf32>
    %633 = arith.truncf %632 : vector<16x4xf32> to vector<16x4xbf16>
    %c1_275 = arith.constant 1 : index
    %c6_276 = arith.constant 6 : index
    %c0_277 = arith.constant 0 : index
    %c0_278 = arith.constant 0 : index
    %634 = vector.load %arg12[%c1_275, %c6_276, %c0_277, %c0_278] : memref<2x8x4x32xbf16, #tpu.memory_space<vmem>>, vector<1x1x4x32xbf16>
    %635 = vector.shape_cast %634 : vector<1x1x4x32xbf16> to vector<4x32xbf16>
    %cst_279 = arith.constant dense<0.000000e+00> : vector<16x32xf32>
    %636 = tpu.matmul %633, %635, %cst_279 {dimension_numbers = #tpu.dot_dimension_numbers<[1], [0], [0], [1], [0, 0, 1, 1], [], []>} : vector<16x4xbf16>, vector<4x32xbf16>, vector<16x32xf32> -> vector<16x32xf32>
    %637 = arith.addf %615, %636 : vector<16x32xf32>
    %638 = vector.extract_strided_slice %482 {offsets = [0, 0, 28], sizes = [2, 8, 4], strides = [1, 1, 1]} : vector<2x8x96xbf16> to vector<2x8x4xbf16>
    %639 = vector.extract_strided_slice %482 {offsets = [0, 0, 60], sizes = [2, 8, 4], strides = [1, 1, 1]} : vector<2x8x96xbf16> to vector<2x8x4xbf16>
    %640 = vector.extract_strided_slice %482 {offsets = [0, 0, 92], sizes = [2, 8, 4], strides = [1, 1, 1]} : vector<2x8x96xbf16> to vector<2x8x4xbf16>
    "tpu.trace_start"() <{level = 10 : i32, message = "bqd,bkd->bqk"}> : () -> ()
    %cst_280 = arith.constant dense<0.000000e+00> : vector<2x8x8xf32>
    %641 = tpu.matmul %638, %639, %cst_280 {dimension_numbers = #tpu.dot_dimension_numbers<[2], [2], [1], [1], [0, 0, 0, 1, 1, 1], [0], [0]>} : vector<2x8x4xbf16>, vector<2x8x4xbf16>, vector<2x8x8xf32> -> vector<2x8x8xf32>
    "tpu.trace_stop"() : () -> ()
    %cst_281 = arith.constant dense<0xFF800000> : vector<2x8xf32>
    %642 = vector.multi_reduction <maximumf>, %641, %cst_281 [2] : vector<2x8x8xf32> to vector<2x8xf32>
    %643 = vector.shape_cast %642 : vector<2x8xf32> to vector<2x8x1xf32>
    %644 = vector.broadcast %643 : vector<2x8x1xf32> to vector<2x8x8xf32>
    %645 = arith.subf %641, %644 : vector<2x8x8xf32>
    %646 = math.exp %645 : vector<2x8x8xf32>
    %cst_282 = arith.constant dense<0.000000e+00> : vector<2x8xf32>
    %647 = vector.multi_reduction <add>, %646, %cst_282 [2] : vector<2x8x8xf32> to vector<2x8xf32>
    %648 = vector.shape_cast %647 : vector<2x8xf32> to vector<2x8x1xf32>
    %649 = tpu.reciprocal %648 {approx = true} : vector<2x8x1xf32> -> vector<2x8x1xf32>
    %650 = vector.broadcast %649 : vector<2x8x1xf32> to vector<2x8x8xf32>
    %651 = arith.mulf %646, %650 : vector<2x8x8xf32>
    %652 = arith.truncf %651 : vector<2x8x8xf32> to vector<2x8x8xbf16>
    "tpu.trace_start"() <{level = 10 : i32, message = "bqk,bkd->bqd"}> : () -> ()
    %cst_283 = arith.constant dense<0.000000e+00> : vector<2x8x4xf32>
    %653 = tpu.matmul %652, %640, %cst_283 {dimension_numbers = #tpu.dot_dimension_numbers<[2], [1], [1], [2], [0, 0, 0, 1, 1, 2], [0], [0]>} : vector<2x8x8xbf16>, vector<2x8x4xbf16>, vector<2x8x4xf32> -> vector<2x8x4xf32>
    "tpu.trace_stop"() : () -> ()
    %654 = vector.shape_cast %653 : vector<2x8x4xf32> to vector<16x4xf32>
    %655 = arith.truncf %654 : vector<16x4xf32> to vector<16x4xbf16>
    %c1_284 = arith.constant 1 : index
    %c7_285 = arith.constant 7 : index
    %c0_286 = arith.constant 0 : index
    %c0_287 = arith.constant 0 : index
    %656 = vector.load %arg12[%c1_284, %c7_285, %c0_286, %c0_287] : memref<2x8x4x32xbf16, #tpu.memory_space<vmem>>, vector<1x1x4x32xbf16>
    %657 = vector.shape_cast %656 : vector<1x1x4x32xbf16> to vector<4x32xbf16>
    %cst_288 = arith.constant dense<0.000000e+00> : vector<16x32xf32>
    %658 = tpu.matmul %655, %657, %cst_288 {dimension_numbers = #tpu.dot_dimension_numbers<[1], [0], [0], [1], [0, 0, 1, 1], [], []>} : vector<16x4xbf16>, vector<4x32xbf16>, vector<16x32xf32> -> vector<16x32xf32>
    %659 = arith.addf %637, %658 : vector<16x32xf32>
    %c1_289 = arith.constant 1 : index
    %c0_290 = arith.constant 0 : index
    %c0_291 = arith.constant 0 : index
    %660 = vector.load %arg13[%c1_289, %c0_290, %c0_291] : memref<2x1x32xf32, #tpu.memory_space<vmem>>, vector<1x1x32xf32>
    %661 = vector.shape_cast %660 : vector<1x1x32xf32> to vector<1x32xf32>
    %662 = vector.broadcast %661 : vector<1x32xf32> to vector<16x32xf32>
    %663 = arith.addf %659, %662 : vector<16x32xf32>
    %664 = arith.addf %472, %663 : vector<16x32xf32>
    %c1_292 = arith.constant 1 : index
    %c0_293 = arith.constant 0 : index
    %c0_294 = arith.constant 0 : index
    %665 = vector.load %arg14[%c1_292, %c0_293, %c0_294] : memref<2x1x32xf32, #tpu.memory_space<vmem>>, vector<1x1x32xf32>
    %666 = vector.shape_cast %665 : vector<1x1x32xf32> to vector<1x32xf32>
    %c1_295 = arith.constant 1 : index
    %c0_296 = arith.constant 0 : index
    %c0_297 = arith.constant 0 : index
    %667 = vector.load %arg15[%c1_295, %c0_296, %c0_297] : memref<2x1x32xf32, #tpu.memory_space<vmem>>, vector<1x1x32xf32>
    %668 = vector.shape_cast %667 : vector<1x1x32xf32> to vector<1x32xf32>
    %cst_298 = arith.constant dense<0.000000e+00> : vector<16xf32>
    %669 = vector.multi_reduction <add>, %664, %cst_298 [1] : vector<16x32xf32> to vector<16xf32>
    %670 = vector.shape_cast %669 : vector<16xf32> to vector<16x1xf32>
    %cst_299 = arith.constant 3.200000e+01 : f32
    %671 = vector.broadcast %cst_299 : f32 to vector<16x1xf32>
    %672 = arith.divf %670, %671 : vector<16x1xf32>
    %673 = vector.broadcast %672 : vector<16x1xf32> to vector<16x32xf32>
    %674 = arith.subf %664, %673 : vector<16x32xf32>
    %675 = arith.mulf %674, %674 : vector<16x32xf32>
    %cst_300 = arith.constant dense<0.000000e+00> : vector<16xf32>
    %676 = vector.multi_reduction <add>, %675, %cst_300 [1] : vector<16x32xf32> to vector<16xf32>
    %677 = vector.shape_cast %676 : vector<16xf32> to vector<16x1xf32>
    %cst_301 = arith.constant 3.200000e+01 : f32
    %678 = vector.broadcast %cst_301 : f32 to vector<16x1xf32>
    %679 = arith.divf %677, %678 : vector<16x1xf32>
    %680 = vector.broadcast %672 : vector<16x1xf32> to vector<16x32xf32>
    %681 = arith.subf %664, %680 : vector<16x32xf32>
    %cst_302 = arith.constant 9.99999974E-6 : f32
    %682 = vector.broadcast %cst_302 : f32 to vector<16x1xf32>
    %683 = arith.addf %679, %682 : vector<16x1xf32>
    %684 = math.rsqrt %683 : vector<16x1xf32>
    %685 = vector.broadcast %684 : vector<16x1xf32> to vector<16x32xf32>
    %686 = arith.mulf %681, %685 : vector<16x32xf32>
    %687 = vector.broadcast %666 : vector<1x32xf32> to vector<16x32xf32>
    %688 = arith.mulf %686, %687 : vector<16x32xf32>
    %689 = vector.broadcast %668 : vector<1x32xf32> to vector<16x32xf32>
    %690 = arith.addf %688, %689 : vector<16x32xf32>
    %691 = arith.truncf %690 : vector<16x32xf32> to vector<16x32xbf16>
    %c1_303 = arith.constant 1 : index
    %c0_304 = arith.constant 0 : index
    %c0_305 = arith.constant 0 : index
    %692 = vector.load %arg16[%c1_303, %c0_304, %c0_305] : memref<2x32x128xbf16, #tpu.memory_space<vmem>>, vector<1x32x128xbf16>
    %693 = vector.shape_cast %692 : vector<1x32x128xbf16> to vector<32x128xbf16>
    %cst_306 = arith.constant dense<0.000000e+00> : vector<16x128xf32>
    %694 = tpu.matmul %691, %693, %cst_306 {dimension_numbers = #tpu.dot_dimension_numbers<[1], [0], [0], [1], [0, 0, 1, 1], [], []>} : vector<16x32xbf16>, vector<32x128xbf16>, vector<16x128xf32> -> vector<16x128xf32>
    %c1_307 = arith.constant 1 : index
    %c0_308 = arith.constant 0 : index
    %c0_309 = arith.constant 0 : index
    %695 = vector.load %arg17[%c1_307, %c0_308, %c0_309] : memref<2x1x128xf32, #tpu.memory_space<vmem>>, vector<1x1x128xf32>
    %696 = vector.shape_cast %695 : vector<1x1x128xf32> to vector<1x128xf32>
    %697 = vector.broadcast %696 : vector<1x128xf32> to vector<16x128xf32>
    %698 = arith.addf %694, %697 : vector<16x128xf32>
    %cst_310 = arith.constant 0.000000e+00 : f32
    %699 = vector.broadcast %cst_310 : f32 to vector<16x128xf32>
    %700 = arith.maximumf %698, %699 : vector<16x128xf32>
    %701 = arith.truncf %700 : vector<16x128xf32> to vector<16x128xbf16>
    %c1_311 = arith.constant 1 : index
    %c0_312 = arith.constant 0 : index
    %c0_313 = arith.constant 0 : index
    %702 = vector.load %arg18[%c1_311, %c0_312, %c0_313] : memref<2x128x32xbf16, #tpu.memory_space<vmem>>, vector<1x128x32xbf16>
    %703 = vector.shape_cast %702 : vector<1x128x32xbf16> to vector<128x32xbf16>
    %cst_314 = arith.constant dense<0.000000e+00> : vector<16x32xf32>
    %704 = tpu.matmul %701, %703, %cst_314 {dimension_numbers = #tpu.dot_dimension_numbers<[1], [0], [0], [1], [0, 0, 1, 1], [], []>} : vector<16x128xbf16>, vector<128x32xbf16>, vector<16x32xf32> -> vector<16x32xf32>
    %c1_315 = arith.constant 1 : index
    %c0_316 = arith.constant 0 : index
    %c0_317 = arith.constant 0 : index
    %705 = vector.load %arg19[%c1_315, %c0_316, %c0_317] : memref<2x1x32xf32, #tpu.memory_space<vmem>>, vector<1x1x32xf32>
    %706 = vector.shape_cast %705 : vector<1x1x32xf32> to vector<1x32xf32>
    %707 = vector.broadcast %706 : vector<1x32xf32> to vector<16x32xf32>
    %708 = arith.addf %704, %707 : vector<16x32xf32>
    %709 = arith.addf %690, %708 : vector<16x32xf32>
    %c1_318 = arith.constant 1 : index
    %c0_319 = arith.constant 0 : index
    %c0_320 = arith.constant 0 : index
    %710 = vector.load %arg20[%c1_318, %c0_319, %c0_320] : memref<2x1x32xf32, #tpu.memory_space<vmem>>, vector<1x1x32xf32>
    %711 = vector.shape_cast %710 : vector<1x1x32xf32> to vector<1x32xf32>
    %c1_321 = arith.constant 1 : index
    %c0_322 = arith.constant 0 : index
    %c0_323 = arith.constant 0 : index
    %712 = vector.load %arg21[%c1_321, %c0_322, %c0_323] : memref<2x1x32xf32, #tpu.memory_space<vmem>>, vector<1x1x32xf32>
    %713 = vector.shape_cast %712 : vector<1x1x32xf32> to vector<1x32xf32>
    %cst_324 = arith.constant dense<0.000000e+00> : vector<16xf32>
    %714 = vector.multi_reduction <add>, %709, %cst_324 [1] : vector<16x32xf32> to vector<16xf32>
    %715 = vector.shape_cast %714 : vector<16xf32> to vector<16x1xf32>
    %cst_325 = arith.constant 3.200000e+01 : f32
    %716 = vector.broadcast %cst_325 : f32 to vector<16x1xf32>
    %717 = arith.divf %715, %716 : vector<16x1xf32>
    %718 = vector.broadcast %717 : vector<16x1xf32> to vector<16x32xf32>
    %719 = arith.subf %709, %718 : vector<16x32xf32>
    %720 = arith.mulf %719, %719 : vector<16x32xf32>
    %cst_326 = arith.constant dense<0.000000e+00> : vector<16xf32>
    %721 = vector.multi_reduction <add>, %720, %cst_326 [1] : vector<16x32xf32> to vector<16xf32>
    %722 = vector.shape_cast %721 : vector<16xf32> to vector<16x1xf32>
    %cst_327 = arith.constant 3.200000e+01 : f32
    %723 = vector.broadcast %cst_327 : f32 to vector<16x1xf32>
    %724 = arith.divf %722, %723 : vector<16x1xf32>
    %725 = vector.broadcast %717 : vector<16x1xf32> to vector<16x32xf32>
    %726 = arith.subf %709, %725 : vector<16x32xf32>
    %cst_328 = arith.constant 9.99999974E-6 : f32
    %727 = vector.broadcast %cst_328 : f32 to vector<16x1xf32>
    %728 = arith.addf %724, %727 : vector<16x1xf32>
    %729 = math.rsqrt %728 : vector<16x1xf32>
    %730 = vector.broadcast %729 : vector<16x1xf32> to vector<16x32xf32>
    %731 = arith.mulf %726, %730 : vector<16x32xf32>
    %732 = vector.broadcast %711 : vector<1x32xf32> to vector<16x32xf32>
    %733 = arith.mulf %731, %732 : vector<16x32xf32>
    %734 = vector.broadcast %713 : vector<1x32xf32> to vector<16x32xf32>
    %735 = arith.addf %733, %734 : vector<16x32xf32>
    %736 = arith.addf %735, %209 : vector<16x32xf32>
    %737 = arith.truncf %736 : vector<16x32xf32> to vector<16x32xbf16>
    %c0_329 = arith.constant 0 : index
    %c0_330 = arith.constant 0 : index
    %738 = vector.load %arg22[%c0_329, %c0_330] : memref<32x128xbf16, #tpu.memory_space<vmem>>, vector<32x128xbf16>
    %cst_331 = arith.constant dense<0.000000e+00> : vector<16x128xf32>
    %739 = tpu.matmul %737, %738, %cst_331 {dimension_numbers = #tpu.dot_dimension_numbers<[1], [0], [0], [1], [0, 0, 1, 1], [], []>} : vector<16x32xbf16>, vector<32x128xbf16>, vector<16x128xf32> -> vector<16x128xf32>
    %c0_332 = arith.constant 0 : index
    %c0_333 = arith.constant 0 : index
    %740 = vector.load %arg23[%c0_332, %c0_333] : memref<1x128xf32, #tpu.memory_space<vmem>>, vector<1x128xf32>
    %741 = vector.broadcast %740 : vector<1x128xf32> to vector<16x128xf32>
    %742 = arith.addf %739, %741 : vector<16x128xf32>
    %cst_334 = arith.constant 0.000000e+00 : f32
    %743 = vector.broadcast %cst_334 : f32 to vector<16x128xf32>
    %744 = arith.maximumf %742, %743 : vector<16x128xf32>
    %745 = arith.truncf %744 : vector<16x128xf32> to vector<16x128xbf16>
    %c0_335 = arith.constant 0 : index
    %c0_336 = arith.constant 0 : index
    %746 = vector.load %arg24[%c0_335, %c0_336] : memref<128x12xbf16, #tpu.memory_space<vmem>>, vector<128x12xbf16>
    %cst_337 = arith.constant dense<0.000000e+00> : vector<16x12xf32>
    %747 = tpu.matmul %745, %746, %cst_337 {dimension_numbers = #tpu.dot_dimension_numbers<[1], [0], [0], [1], [0, 0, 1, 1], [], []>} : vector<16x128xbf16>, vector<128x12xbf16>, vector<16x12xf32> -> vector<16x12xf32>
    %c0_338 = arith.constant 0 : index
    %c0_339 = arith.constant 0 : index
    %748 = vector.load %arg25[%c0_338, %c0_339] : memref<1x12xf32, #tpu.memory_space<vmem>>, vector<1x12xf32>
    %749 = vector.broadcast %748 : vector<1x12xf32> to vector<16x12xf32>
    %750 = arith.addf %747, %749 : vector<16x12xf32>
    %c0_340 = arith.constant 0 : index
    %c0_341 = arith.constant 0 : index
    %751 = vector.load %arg26[%c0_340, %c0_341] : memref<16x12xf32, #tpu.memory_space<vmem>>, vector<16x12xf32>
    tpu.vector_store %arg26[%c0_340, %c0_341], %750 {strides = array<i32>} : memref<16x12xf32, #tpu.memory_space<vmem>>, vector<16x12xf32>,
    return
  }
}

</mosaic_0001>

<llo_original>
// kernel: _lambda_.1
$region0: #{_lambda_.1}
  #allocation0 [shape = 'u32[]', space=smem, size = 0x4, offset = 0x4, fixed_abs, tag = 'smem constant byte address 0x4 - core index']
  #allocation1 [shape = 'u32[72,128]{1,0:T(1,128)}', space=vmem, size = 0x9000, scoped, tag = 'internal scratch']
  %s0 = inlined_call_operand.vmem [shape: f32[256,1], index: 0, kind: input, shape index: {}]
  %s1 = inlined_call_operand.vmem [shape: f32[1,32], index: 1, kind: input, shape index: {}]
  %s2 = inlined_call_operand.vmem [shape: f32[1,32], index: 2, kind: input, shape index: {}]
  %s3 = inlined_call_operand.vmem [shape: bf16[4,32,64], index: 3, kind: input, shape index: {}]
  %s4 = inlined_call_operand.vmem [shape: bf16[4,32,64], index: 4, kind: input, shape index: {}]
  %s5 = inlined_call_operand.vmem [shape: f32[4,1,64], index: 5, kind: input, shape index: {}]
  %s6 = inlined_call_operand.hbm [shape: f32[4,1,32], index: 6, kind: input, shape index: {}]
  %s7 = inlined_call_operand.hbm [shape: f32[4,1,32], index: 7, kind: input, shape index: {}]
  %s8 = inlined_call_operand.hbm [shape: bf16[32,4], index: 8, kind: input, shape index: {}]
  %s9 = inlined_call_operand.hbm [shape: bf16[4,32], index: 9, kind: input, shape index: {}]
  %s10 = inlined_call_operand.vmem [shape: bf16[2,32,96], index: 10, kind: input, shape index: {}]
  %s11 = inlined_call_operand.hbm [shape: f32[2,1,96], index: 11, kind: input, shape index: {}]
  %s12 = inlined_call_operand.hbm [shape: bf16[2,8,4,32], index: 12, kind: input, shape index: {}]
  %s13 = inlined_call_operand.hbm [shape: f32[2,1,32], index: 13, kind: input, shape index: {}]
  %s14 = inlined_call_operand.vmem [shape: f32[2,1,32], index: 14, kind: input, shape index: {}, may-alias: {14,20}]
  %s15 = inlined_call_operand.vmem [shape: f32[2,1,32], index: 15, kind: input, shape index: {}, may-alias: {15,21}]
  %s16 = inlined_call_operand.hbm [shape: bf16[2,32,128], index: 16, kind: input, shape index: {}]
  %s17 = inlined_call_operand.hbm [shape: f32[2,1,128], index: 17, kind: input, shape index: {}]
  %s18 = inlined_call_operand.vmem [shape: bf16[2,128,32], index: 18, kind: input, shape index: {}]
  %s19 = inlined_call_operand.hbm [shape: f32[2,1,32], index: 19, kind: input, shape index: {}]
  %s20 = inlined_call_operand.vmem [shape: f32[2,1,32], index: 20, kind: input, shape index: {}, may-alias: {14,20}]
  %s21 = inlined_call_operand.vmem [shape: f32[2,1,32], index: 21, kind: input, shape index: {}, may-alias: {15,21}]
  %s22 = inlined_call_operand.hbm [shape: bf16[32,128], index: 22, kind: input, shape index: {}]
  %s23 = inlined_call_operand.hbm [shape: f32[1,128], index: 23, kind: input, shape index: {}]
  %s24 = inlined_call_operand.vmem [shape: bf16[128,12], index: 24, kind: input, shape index: {}]
  %s25 = inlined_call_operand.hbm [shape: f32[1,12], index: 25, kind: input, shape index: {}]
  %s26 = inlined_call_operand.hbm [shape: f32[16,12], index: 26, kind: output, shape index: {}]
  %s27 = sld [smem:[#allocation0]]
  $region166: #{_lambda_.1} parent=0
    _
  %s29 = ssub.s32 1, %s27
  %s30 = scalar_select 0, %s29, %s27
  $region1: #{_lambda_.1} parent=0
    #allocation2 [shape = 'u8[2048]{0}', space=vmem, size = 0x800, scoped, tag = 'input window, operand 6, single buffered']
    #allocation3 [shape = 's32[1]{0}', space=sflag, size = 0x4, scoped, tag = 'scoped memory for _lambda_.1']
    #allocation4 [shape = 's32[1]{0}', space=sflag, size = 0x4, scoped, tag = 'scoped memory for _lambda_.1']
    #allocation5 [shape = 'u8[2048]{0}', space=vmem, size = 0x800, scoped, tag = 'input window, operand 7, single buffered']
    #allocation6 [shape = 's32[1]{0}', space=sflag, size = 0x4, scoped, tag = 'scoped memory for _lambda_.1']
    #allocation7 [shape = 'u8[8192]{0}', space=vmem, size = 0x2000, scoped, tag = 'input window, operand 8, single buffered']
    #allocation8 [shape = 'u8[1024]{0}', space=vmem, size = 0x400, scoped, tag = 'input window, operand 9, single buffered']
    #allocation9 [shape = 's32[1]{0}', space=sflag, size = 0x4, scoped, tag = 'scoped memory for _lambda_.1']
    #allocation10 [shape = 'u8[1024]{0}', space=vmem, size = 0x400, scoped, tag = 'input window, operand 11, single buffered']
    #allocation11 [shape = 'u8[16384]{0}', space=vmem, size = 0x4000, scoped, tag = 'input window, operand 12, single buffered']
    #allocation12 [shape = 's32[1]{0}', space=sflag, size = 0x4, scoped, tag = 'scoped memory for _lambda_.1']
    #allocation13 [shape = 'u8[1024]{0}', space=vmem, size = 0x400, scoped, tag = 'input window, operand 13, single buffered']
    #allocation14 [shape = 'u8[16384]{0}', space=vmem, size = 0x4000, scoped, tag = 'input window, operand 16, single buffered']
    #allocation15 [shape = 's32[1]{0}', space=sflag, size = 0x4, scoped, tag = 'scoped memory for _lambda_.1']
    #allocation16 [shape = 'u8[1024]{0}', space=vmem, size = 0x400, scoped, tag = 'input window, operand 17, single buffered']
    #allocation17 [shape = 'u8[1024]{0}', space=vmem, size = 0x400, scoped, tag = 'input window, operand 19, single buffered']
    #allocation18 [shape = 's32[1]{0}', space=sflag, size = 0x4, scoped, tag = 'scoped memory for _lambda_.1']
    #allocation19 [shape = 'u8[8192]{0}', space=vmem, size = 0x2000, scoped, tag = 'input window, operand 22, single buffered']
    #allocation20 [shape = 'u8[512]{0}', space=vmem, size = 0x400, scoped, tag = 'input window, operand 23, single buffered']
    #allocation21 [shape = 's32[1]{0}', space=sflag, size = 0x4, scoped, tag = 'scoped memory for _lambda_.1']
    #allocation22 [shape = 'u8[512]{0}', space=vmem, size = 0x400, scoped, tag = 'input window, operand 25, single buffered']
    #allocation23 [shape = 'u8[8192]{0}', space=vmem, size = 0x2000, scoped, tag = 'output window, operand 0, single buffered']
    %31 = vsyncpa [#allocation3], 0
    %32 = vsyncpa [#allocation6], 0
    %33 = vsyncpa [#allocation9], 0
    %34 = vsyncpa [#allocation12], 0
    %35 = vsyncpa [#allocation15], 0
    %36 = vsyncpa [#allocation18], 0
    %37 = vsyncpa [#allocation21], 0
    %38 = vsyncpa [#allocation4], 0
    // Predicated region
    $region2: #{_lambda_.1} parent=1 // pred_check
      _
    $region3: #{_lambda_.1} parent=1 // pred_check_branch
      %40 = sbr.rel (0) target = $region5
    $region4: #{_lambda_.1} parent=1 // pred_region
      _
    $region5: #{_lambda_.1} parent=1 // pred_fallthru
      _
    // Predicated region
    $region6: #{_lambda_.1} parent=1 // pred_check
      _
    $region7: #{_lambda_.1} parent=1 // pred_check_branch
      %42 = sbr.rel (0) target = $region9
    $region8: #{_lambda_.1} parent=1 // pred_region
      _
    $region9: #{_lambda_.1} parent=1 // pred_fallthru
      _
    // Predicated region
    $region10: #{_lambda_.1} parent=1 // pred_check
      _
    $region11: #{_lambda_.1} parent=1 // pred_check_branch
      %44 = sbr.rel (0) target = $region13
    $region12: #{_lambda_.1} parent=1 // pred_region
      _
    $region13: #{_lambda_.1} parent=1 // pred_fallthru
      _
    // Predicated region
    $region14: #{_lambda_.1} parent=1 // pred_check
      _
    $region15: #{_lambda_.1} parent=1 // pred_check_branch
      %46 = sbr.rel (0) target = $region17
    $region16: #{_lambda_.1} parent=1 // pred_region
      _
    $region17: #{_lambda_.1} parent=1 // pred_fallthru
      _
    // Predicated region
    $region18: #{_lambda_.1} parent=1 // pred_check
      _
    $region19: #{_lambda_.1} parent=1 // pred_check_branch
      %48 = sbr.rel (0) target = $region21
    $region20: #{_lambda_.1} parent=1 // pred_region
      _
    $region21: #{_lambda_.1} parent=1 // pred_fallthru
      _
    // Predicated region
    $region22: #{_lambda_.1} parent=1 // pred_check
      _
    $region23: #{_lambda_.1} parent=1 // pred_check_branch
      %50 = sbr.rel (0) target = $region25
    $region24: #{_lambda_.1} parent=1 // pred_region
      _
    $region25: #{_lambda_.1} parent=1 // pred_fallthru
      _
    // Predicated region
    $region26: #{_lambda_.1} parent=1 // pred_check
      _
    $region27: #{_lambda_.1} parent=1 // pred_check_branch
      %52 = sbr.rel (0) target = $region29
    $region28: #{_lambda_.1} parent=1 // pred_region
      %54 = vsyncadd [#allocation3], 0
      %s55 = sshll.u32 %s6, 4
      %s56 = int_to_ptr.hbm [resolvable:$true] %s55
      %s57 = sshll.u32 [#allocation2], 4
      %s58 = int_to_ptr.vmem [resolvable:$true] %s57
      %63 = dma.hbm_to_vmem [thread:$0]  %s56, 64, %s58, [#allocation3], 16, 16, 1
    $region29: #{_lambda_.1} parent=1 // pred_fallthru
      _
    // Predicated region
    $region30: #{_lambda_.1} parent=1 // pred_check
      _
    $region31: #{_lambda_.1} parent=1 // pred_check_branch
      %65 = sbr.rel (0) target = $region33
    $region32: #{_lambda_.1} parent=1 // pred_region
      %67 = vsyncadd [#allocation6], 0
      %s68 = sshll.u32 %s7, 4
      %s69 = int_to_ptr.hbm [resolvable:$true] %s68
      %s70 = sshll.u32 [#allocation5], 4
      %s71 = int_to_ptr.vmem [resolvable:$true] %s70
      %76 = dma.hbm_to_vmem [thread:$0]  %s69, 64, %s71, [#allocation6], 16, 16, 1
    $region33: #{_lambda_.1} parent=1 // pred_fallthru
      _
    // Predicated region
    $region34: #{_lambda_.1} parent=1 // pred_check
      _
    $region35: #{_lambda_.1} parent=1 // pred_check_branch
      %78 = sbr.rel (0) target = $region37
    $region36: #{_lambda_.1} parent=1 // pred_region
      %80 = vsyncadd [#allocation6], 0
      %s81 = sshll.u32 %s8, 4
      %s82 = int_to_ptr.hbm [resolvable:$true] %s81
      %s83 = sshll.u32 [#allocation7], 4
      %s84 = int_to_ptr.vmem [resolvable:$true] %s83
      %89 = dma.hbm_to_vmem [thread:$0]  %s82, 256, %s84, [#allocation6], 64, 64, 4
    $region37: #{_lambda_.1} parent=1 // pred_fallthru
      _
    // Predicated region
    $region38: #{_lambda_.1} parent=1 // pred_check
      _
    $region39: #{_lambda_.1} parent=1 // pred_check_branch
      %91 = sbr.rel (0) target = $region41
    $region40: #{_lambda_.1} parent=1 // pred_region
      %93 = vsyncadd [#allocation9], 0
      %s95 = sshll.u32 %s9, 4
      %s96 = int_to_ptr.hbm [resolvable:$true] %s95
      %s97 = sshll.u32 [#allocation8], 4
      %s98 = int_to_ptr.vmem [resolvable:$true] %s97
      %100 = dma.hbm_to_vmem [thread:$0]  %s96, 32, %s98, [#allocation9]
    $region41: #{_lambda_.1} parent=1 // pred_fallthru
      _
    // Predicated region
    $region42: #{_lambda_.1} parent=1 // pred_check
      _
    $region43: #{_lambda_.1} parent=1 // pred_check_branch
      %102 = sbr.rel (0) target = $region45
    $region44: #{_lambda_.1} parent=1 // pred_region
      _
    $region45: #{_lambda_.1} parent=1 // pred_fallthru
      _
    // Predicated region
    $region46: #{_lambda_.1} parent=1 // pred_check
      _
    $region47: #{_lambda_.1} parent=1 // pred_check_branch
      %104 = sbr.rel (0) target = $region49
    $region48: #{_lambda_.1} parent=1 // pred_region
      %106 = vsyncadd [#allocation9], 0
      %s107 = sshll.u32 %s11, 4
      %s108 = int_to_ptr.hbm [resolvable:$true] %s107
      %s109 = sshll.u32 [#allocation10], 4
      %s110 = int_to_ptr.vmem [resolvable:$true] %s109
      %115 = dma.hbm_to_vmem [thread:$0]  %s108, 32, %s110, [#allocation9], 16, 16, 1
    $region49: #{_lambda_.1} parent=1 // pred_fallthru
      _
    // Predicated region
    $region50: #{_lambda_.1} parent=1 // pred_check
      _
    $region51: #{_lambda_.1} parent=1 // pred_check_branch
      %117 = sbr.rel (0) target = $region53
    $region52: #{_lambda_.1} parent=1 // pred_region
      %119 = vsyncadd [#allocation12], 0
      %s120 = sshll.u32 %s12, 4
      %s121 = int_to_ptr.hbm [resolvable:$true] %s120
      %s122 = sshll.u32 [#allocation11], 4
      %s123 = int_to_ptr.vmem [resolvable:$true] %s122
      %128 = dma.hbm_to_vmem [thread:$0]  %s121, 512, %s123, [#allocation12], 32, 32, 2
    $region53: #{_lambda_.1} parent=1 // pred_fallthru
      _
    // Predicated region
    $region54: #{_lambda_.1} parent=1 // pred_check
      _
    $region55: #{_lambda_.1} parent=1 // pred_check_branch
      %130 = sbr.rel (0) target = $region57
    $region56: #{_lambda_.1} parent=1 // pred_region
      %132 = vsyncadd [#allocation12], 0
      %s133 = sshll.u32 %s13, 4
      %s134 = int_to_ptr.hbm [resolvable:$true] %s133
      %s135 = sshll.u32 [#allocation13], 4
      %s136 = int_to_ptr.vmem [resolvable:$true] %s135
      %141 = dma.hbm_to_vmem [thread:$0]  %s134, 32, %s136, [#allocation12], 16, 16, 1
    $region57: #{_lambda_.1} parent=1 // pred_fallthru
      _
    // Predicated region
    $region58: #{_lambda_.1} parent=1 // pred_check
      _
    $region59: #{_lambda_.1} parent=1 // pred_check_branch
      %143 = sbr.rel (0) target = $region61
    $region60: #{_lambda_.1} parent=1 // pred_region
      _
    $region61: #{_lambda_.1} parent=1 // pred_fallthru
      _
    // Predicated region
    $region62: #{_lambda_.1} parent=1 // pred_check
      _
    $region63: #{_lambda_.1} parent=1 // pred_check_branch
      %145 = sbr.rel (0) target = $region65
    $region64: #{_lambda_.1} parent=1 // pred_region
      _
    $region65: #{_lambda_.1} parent=1 // pred_fallthru
      _
    // Predicated region
    $region66: #{_lambda_.1} parent=1 // pred_check
      _
    $region67: #{_lambda_.1} parent=1 // pred_check_branch
      %147 = sbr.rel (0) target = $region69
    $region68: #{_lambda_.1} parent=1 // pred_region
      %149 = vsyncadd [#allocation15], 0
      %s150 = sshll.u32 %s16, 4
      %s151 = int_to_ptr.hbm [resolvable:$true] %s150
      %s152 = sshll.u32 [#allocation14], 4
      %s153 = int_to_ptr.vmem [resolvable:$true] %s152
      %158 = dma.hbm_to_vmem [thread:$0]  %s151, 512, %s153, [#allocation15], 64, 64, 4
    $region69: #{_lambda_.1} parent=1 // pred_fallthru
      _
    // Predicated region
    $region70: #{_lambda_.1} parent=1 // pred_check
      _
    $region71: #{_lambda_.1} parent=1 // pred_check_branch
      %160 = sbr.rel (0) target = $region73
    $region72: #{_lambda_.1} parent=1 // pred_region
      %162 = vsyncadd [#allocation15], 0
      %s163 = sshll.u32 %s17, 4
      %s164 = int_to_ptr.hbm [resolvable:$true] %s163
      %s165 = sshll.u32 [#allocation16], 4
      %s166 = int_to_ptr.vmem [resolvable:$true] %s165
      %171 = dma.hbm_to_vmem [thread:$0]  %s164, 32, %s166, [#allocation15], 16, 16, 1
    $region73: #{_lambda_.1} parent=1 // pred_fallthru
      _
    // Predicated region
    $region74: #{_lambda_.1} parent=1 // pred_check
      _
    $region75: #{_lambda_.1} parent=1 // pred_check_branch
      %173 = sbr.rel (0) target = $region77
    $region76: #{_lambda_.1} parent=1 // pred_region
      _
    $region77: #{_lambda_.1} parent=1 // pred_fallthru
      _
    // Predicated region
    $region78: #{_lambda_.1} parent=1 // pred_check
      _
    $region79: #{_lambda_.1} parent=1 // pred_check_branch
      %175 = sbr.rel (0) target = $region81
    $region80: #{_lambda_.1} parent=1 // pred_region
      %177 = vsyncadd [#allocation18], 0
      %s178 = sshll.u32 %s19, 4
      %s179 = int_to_ptr.hbm [resolvable:$true] %s178
      %s180 = sshll.u32 [#allocation17], 4
      %s181 = int_to_ptr.vmem [resolvable:$true] %s180
      %186 = dma.hbm_to_vmem [thread:$0]  %s179, 32, %s181, [#allocation18], 16, 16, 1
    $region81: #{_lambda_.1} parent=1 // pred_fallthru
      _
    // Predicated region
    $region82: #{_lambda_.1} parent=1 // pred_check
      _
    $region83: #{_lambda_.1} parent=1 // pred_check_branch
      %188 = sbr.rel (0) target = $region85
    $region84: #{_lambda_.1} parent=1 // pred_region
      _
    $region85: #{_lambda_.1} parent=1 // pred_fallthru
      _
    // Predicated region
    $region86: #{_lambda_.1} parent=1 // pred_check
      _
    $region87: #{_lambda_.1} parent=1 // pred_check_branch
      %190 = sbr.rel (0) target = $region89
    $region88: #{_lambda_.1} parent=1 // pred_region
      _
    $region89: #{_lambda_.1} parent=1 // pred_fallthru
      _
    // Predicated region
    $region90: #{_lambda_.1} parent=1 // pred_check
      _
    $region91: #{_lambda_.1} parent=1 // pred_check_branch
      %192 = sbr.rel (0) target = $region93
    $region92: #{_lambda_.1} parent=1 // pred_region
      %194 = vsyncadd [#allocation18], 0
      %s195 = sshll.u32 %s22, 4
      %s196 = int_to_ptr.hbm [resolvable:$true] %s195
      %s197 = sshll.u32 [#allocation19], 4
      %s198 = int_to_ptr.vmem [resolvable:$true] %s197
      %203 = dma.hbm_to_vmem [thread:$0]  %s196, 256, %s198, [#allocation18], 64, 64, 4
    $region93: #{_lambda_.1} parent=1 // pred_fallthru
      _
    // Predicated region
    $region94: #{_lambda_.1} parent=1 // pred_check
      _
    $region95: #{_lambda_.1} parent=1 // pred_check_branch
      %205 = sbr.rel (0) target = $region97
    $region96: #{_lambda_.1} parent=1 // pred_region
      %207 = vsyncadd [#allocation21], 0
      %s209 = sshll.u32 %s23, 4
      %s210 = int_to_ptr.hbm [resolvable:$true] %s209
      %s211 = sshll.u32 [#allocation20], 4
      %s212 = int_to_ptr.vmem [resolvable:$true] %s211
      %214 = dma.hbm_to_vmem [thread:$0]  %s210, 16, %s212, [#allocation21]
    $region97: #{_lambda_.1} parent=1 // pred_fallthru
      _
    // Predicated region
    $region98: #{_lambda_.1} parent=1 // pred_check
      _
    $region99: #{_lambda_.1} parent=1 // pred_check_branch
      %216 = sbr.rel (0) target = $region101
    $region100: #{_lambda_.1} parent=1 // pred_region
      _
    $region101: #{_lambda_.1} parent=1 // pred_fallthru
      _
    // Predicated region
    $region102: #{_lambda_.1} parent=1 // pred_check
      _
    $region103: #{_lambda_.1} parent=1 // pred_check_branch
      %218 = sbr.rel (0) target = $region105
    $region104: #{_lambda_.1} parent=1 // pred_region
      %220 = vsyncadd [#allocation21], 0
      %s222 = sshll.u32 %s25, 4
      %s223 = int_to_ptr.hbm [resolvable:$true] %s222
      %s224 = sshll.u32 [#allocation22], 4
      %s225 = int_to_ptr.vmem [resolvable:$true] %s224
      %227 = dma.hbm_to_vmem [thread:$0]  %s223, 16, %s225, [#allocation21]
    $region105: #{_lambda_.1} parent=1 // pred_fallthru
      _
    // Predicated region
    $region106: #{_lambda_.1} parent=1 // pred_check
      _
    $region107: #{_lambda_.1} parent=1 // pred_check_branch
      %229 = sbr.rel (0) target = $region109
    $region108: #{_lambda_.1} parent=1 // pred_region
      %231 = dma.done [#allocation3], 64
    $region109: #{_lambda_.1} parent=1 // pred_fallthru
      _
    // Predicated region
    $region110: #{_lambda_.1} parent=1 // pred_check
      _
    $region111: #{_lambda_.1} parent=1 // pred_check_branch
      %233 = sbr.rel (0) target = $region113
    $region112: #{_lambda_.1} parent=1 // pred_region
      %235 = dma.done [#allocation6], 64
    $region113: #{_lambda_.1} parent=1 // pred_fallthru
      _
    // Predicated region
    $region114: #{_lambda_.1} parent=1 // pred_check
      _
    $region115: #{_lambda_.1} parent=1 // pred_check_branch
      %237 = sbr.rel (0) target = $region117
    $region116: #{_lambda_.1} parent=1 // pred_region
      %239 = dma.done [#allocation6], 256
    $region117: #{_lambda_.1} parent=1 // pred_fallthru
      _
    // Predicated region
    $region118: #{_lambda_.1} parent=1 // pred_check
      _
    $region119: #{_lambda_.1} parent=1 // pred_check_branch
      %241 = sbr.rel (0) target = $region121
    $region120: #{_lambda_.1} parent=1 // pred_region
      %243 = dma.done [#allocation9], 32
    $region121: #{_lambda_.1} parent=1 // pred_fallthru
      _
    // Predicated region
    $region122: #{_lambda_.1} parent=1 // pred_check
      _
    $region123: #{_lambda_.1} parent=1 // pred_check_branch
      %245 = sbr.rel (0) target = $region125
    $region124: #{_lambda_.1} parent=1 // pred_region
      %247 = dma.done [#allocation9], 32
    $region125: #{_lambda_.1} parent=1 // pred_fallthru
      _
    // Predicated region
    $region126: #{_lambda_.1} parent=1 // pred_check
      _
    $region127: #{_lambda_.1} parent=1 // pred_check_branch
      %249 = sbr.rel (0) target = $region129
    $region128: #{_lambda_.1} parent=1 // pred_region
      %251 = dma.done [#allocation12], 512
    $region129: #{_lambda_.1} parent=1 // pred_fallthru
      _
    // Predicated region
    $region130: #{_lambda_.1} parent=1 // pred_check
      _
    $region131: #{_lambda_.1} parent=1 // pred_check_branch
      %253 = sbr.rel (0) target = $region133
    $region132: #{_lambda_.1} parent=1 // pred_region
      %255 = dma.done [#allocation12], 32
    $region133: #{_lambda_.1} parent=1 // pred_fallthru
      _
    // Predicated region
    $region134: #{_lambda_.1} parent=1 // pred_check
      _
    $region135: #{_lambda_.1} parent=1 // pred_check_branch
      %257 = sbr.rel (0) target = $region137
    $region136: #{_lambda_.1} parent=1 // pred_region
      %259 = dma.done [#allocation15], 512
    $region137: #{_lambda_.1} parent=1 // pred_fallthru
      _
    // Predicated region
    $region138: #{_lambda_.1} parent=1 // pred_check
      _
    $region139: #{_lambda_.1} parent=1 // pred_check_branch
      %261 = sbr.rel (0) target = $region141
    $region140: #{_lambda_.1} parent=1 // pred_region
      %263 = dma.done [#allocation15], 32
    $region141: #{_lambda_.1} parent=1 // pred_fallthru
      _
    // Predicated region
    $region142: #{_lambda_.1} parent=1 // pred_check
      _
    $region143: #{_lambda_.1} parent=1 // pred_check_branch
      %265 = sbr.rel (0) target = $region145
    $region144: #{_lambda_.1} parent=1 // pred_region
      %267 = dma.done [#allocation18], 32
    $region145: #{_lambda_.1} parent=1 // pred_fallthru
      _
    // Predicated region
    $region146: #{_lambda_.1} parent=1 // pred_check
      _
    $region147: #{_lambda_.1} parent=1 // pred_check_branch
      %269 = sbr.rel (0) target = $region149
    $region148: #{_lambda_.1} parent=1 // pred_region
      %271 = dma.done [#allocation18], 256
    $region149: #{_lambda_.1} parent=1 // pred_fallthru
      _
    // Predicated region
    $region150: #{_lambda_.1} parent=1 // pred_check
      _
    $region151: #{_lambda_.1} parent=1 // pred_check_branch
      %273 = sbr.rel (0) target = $region153
    $region152: #{_lambda_.1} parent=1 // pred_region
      %275 = dma.done [#allocation21], 16
    $region153: #{_lambda_.1} parent=1 // pred_fallthru
      _
    // Predicated region
    $region154: #{_lambda_.1} parent=1 // pred_check
      _
    $region155: #{_lambda_.1} parent=1 // pred_check_branch
      %277 = sbr.rel (0) target = $region157
    $region156: #{_lambda_.1} parent=1 // pred_region
      %279 = dma.done [#allocation21], 16
    $region157: #{_lambda_.1} parent=1 // pred_fallthru
      _
    %v281 = vld [vmem:[%s0] sm:$0xff]
    %v282 = vld [vmem:[%s0 + $0x8] sm:$0xff]
    %v283 = vld [vmem:[%s0 + $0x10] sm:$0xff]
    %v284 = vld [vmem:[%s0 + $0x18] sm:$0xff]
    %v285 = vld [vmem:[%s0 + $0x20] sm:$0xff]
    %v286 = vld [vmem:[%s0 + $0x28] sm:$0xff]
    %v287 = vld [vmem:[%s0 + $0x30] sm:$0xff]
    %v288 = vld [vmem:[%s0 + $0x38] sm:$0xff]
    %v289 = vld [vmem:[%s0 + $0x40] sm:$0xff]
    %v290 = vld [vmem:[%s0 + $0x48] sm:$0xff]
    %v291 = vld [vmem:[%s0 + $0x50] sm:$0xff]
    %v292 = vld [vmem:[%s0 + $0x58] sm:$0xff]
    %v293 = vld [vmem:[%s0 + $0x60] sm:$0xff]
    %v294 = vld [vmem:[%s0 + $0x68] sm:$0xff]
    %v295 = vld [vmem:[%s0 + $0x70] sm:$0xff]
    %v296 = vld [vmem:[%s0 + $0x78] sm:$0xff]
    %v297 = vld [vmem:[%s0 + $0x80] sm:$0xff]
    %v298 = vld [vmem:[%s0 + $0x88] sm:$0xff]
    %v299 = vld [vmem:[%s0 + $0x90] sm:$0xff]
    %v300 = vld [vmem:[%s0 + $0x98] sm:$0xff]
    %v301 = vld [vmem:[%s0 + $0xa0] sm:$0xff]
    %v302 = vld [vmem:[%s0 + $0xa8] sm:$0xff]
    %v303 = vld [vmem:[%s0 + $0xb0] sm:$0xff]
    %v304 = vld [vmem:[%s0 + $0xb8] sm:$0xff]
    %v305 = vld [vmem:[%s0 + $0xc0] sm:$0xff]
    %v306 = vld [vmem:[%s0 + $0xc8] sm:$0xff]
    %v307 = vld [vmem:[%s0 + $0xd0] sm:$0xff]
    %v308 = vld [vmem:[%s0 + $0xd8] sm:$0xff]
    %v309 = vld [vmem:[%s0 + $0xe0] sm:$0xff]
    %v310 = vld [vmem:[%s0 + $0xe8] sm:$0xff]
    %v311 = vld [vmem:[%s0 + $0xf0] sm:$0xff]
    %v312 = vld [vmem:[%s0 + $0xf8] sm:$0xff]
    %v313 = vld [vmem:[%s1] sm:$0x1]
    %315 = vset.pattern.permute.xlu0 0
    %316 = vperm.xlu0 %315, %v281
    %v317 = vpop.permute.xlu0 %316
    %320 = vset.pattern.permute.xlu0 0
    %321 = vperm.xlu0 %320, %v282
    %v322 = vpop.permute.xlu0 %321
    %325 = vset.pattern.permute.xlu0 0
    %326 = vperm.xlu0 %325, %v283
    %v327 = vpop.permute.xlu0 %326
    %330 = vset.pattern.permute.xlu0 0
    %331 = vperm.xlu0 %330, %v284
    %v332 = vpop.permute.xlu0 %331
    %335 = vset.pattern.permute.xlu0 0
    %336 = vperm.xlu0 %335, %v285
    %v337 = vpop.permute.xlu0 %336
    %340 = vset.pattern.permute.xlu0 0
    %341 = vperm.xlu0 %340, %v286
    %v342 = vpop.permute.xlu0 %341
    %345 = vset.pattern.permute.xlu0 0
    %346 = vperm.xlu0 %345, %v287
    %v347 = vpop.permute.xlu0 %346
    %350 = vset.pattern.permute.xlu0 0
    %351 = vperm.xlu0 %350, %v288
    %v352 = vpop.permute.xlu0 %351
    %355 = vset.pattern.permute.xlu0 0
    %356 = vperm.xlu0 %355, %v289
    %v357 = vpop.permute.xlu0 %356
    %360 = vset.pattern.permute.xlu0 0
    %361 = vperm.xlu0 %360, %v290
    %v362 = vpop.permute.xlu0 %361
    %365 = vset.pattern.permute.xlu0 0
    %366 = vperm.xlu0 %365, %v291
    %v367 = vpop.permute.xlu0 %366
    %370 = vset.pattern.permute.xlu0 0
    %371 = vperm.xlu0 %370, %v292
    %v372 = vpop.permute.xlu0 %371
    %375 = vset.pattern.permute.xlu0 0
    %376 = vperm.xlu0 %375, %v293
    %v377 = vpop.permute.xlu0 %376
    %380 = vset.pattern.permute.xlu0 0
    %381 = vperm.xlu0 %380, %v294
    %v382 = vpop.permute.xlu0 %381
    %385 = vset.pattern.permute.xlu0 0
    %386 = vperm.xlu0 %385, %v295
    %v387 = vpop.permute.xlu0 %386
    %390 = vset.pattern.permute.xlu0 0
    %391 = vperm.xlu0 %390, %v296
    %v392 = vpop.permute.xlu0 %391
    %395 = vset.pattern.permute.xlu0 0
    %396 = vperm.xlu0 %395, %v297
    %v397 = vpop.permute.xlu0 %396
    %400 = vset.pattern.permute.xlu0 0
    %401 = vperm.xlu0 %400, %v298
    %v402 = vpop.permute.xlu0 %401
    %405 = vset.pattern.permute.xlu0 0
    %406 = vperm.xlu0 %405, %v299
    %v407 = vpop.permute.xlu0 %406
    %410 = vset.pattern.permute.xlu0 0
    %411 = vperm.xlu0 %410, %v300
    %v412 = vpop.permute.xlu0 %411
    %415 = vset.pattern.permute.xlu0 0
    %416 = vperm.xlu0 %415, %v301
    %v417 = vpop.permute.xlu0 %416
    %420 = vset.pattern.permute.xlu0 0
    %421 = vperm.xlu0 %420, %v302
    %v422 = vpop.permute.xlu0 %421
    %425 = vset.pattern.permute.xlu0 0
    %426 = vperm.xlu0 %425, %v303
    %v427 = vpop.permute.xlu0 %426
    %430 = vset.pattern.permute.xlu0 0
    %431 = vperm.xlu0 %430, %v304
    %v432 = vpop.permute.xlu0 %431
    %435 = vset.pattern.permute.xlu0 0
    %436 = vperm.xlu0 %435, %v305
    %v437 = vpop.permute.xlu0 %436
    %440 = vset.pattern.permute.xlu0 0
    %441 = vperm.xlu0 %440, %v306
    %v442 = vpop.permute.xlu0 %441
    %445 = vset.pattern.permute.xlu0 0
    %446 = vperm.xlu0 %445, %v307
    %v447 = vpop.permute.xlu0 %446
    %450 = vset.pattern.permute.xlu0 0
    %451 = vperm.xlu0 %450, %v308
    %v452 = vpop.permute.xlu0 %451
    %455 = vset.pattern.permute.xlu0 0
    %456 = vperm.xlu0 %455, %v309
    %v457 = vpop.permute.xlu0 %456
    %460 = vset.pattern.permute.xlu0 0
    %461 = vperm.xlu0 %460, %v310
    %v462 = vpop.permute.xlu0 %461
    %465 = vset.pattern.permute.xlu0 0
    %466 = vperm.xlu0 %465, %v311
    %v467 = vpop.permute.xlu0 %466
    %470 = vset.pattern.permute.xlu0 0
    %471 = vperm.xlu0 %470, %v312
    %v472 = vpop.permute.xlu0 %471
    %v475 = vperm.slane %v313, 0
    %v477 = vmul.f32 %v317, %v475
    %v478 = vmul.f32 %v322, %v475
    %v479 = vmul.f32 %v327, %v475
    %v480 = vmul.f32 %v332, %v475
    %v481 = vmul.f32 %v337, %v475
    %v482 = vmul.f32 %v342, %v475
    %v483 = vmul.f32 %v347, %v475
    %v484 = vmul.f32 %v352, %v475
    %v485 = vmul.f32 %v357, %v475
    %v486 = vmul.f32 %v362, %v475
    %v487 = vmul.f32 %v367, %v475
    %v488 = vmul.f32 %v372, %v475
    %v489 = vmul.f32 %v377, %v475
    %v490 = vmul.f32 %v382, %v475
    %v491 = vmul.f32 %v387, %v475
    %v492 = vmul.f32 %v392, %v475
    %v493 = vmul.f32 %v397, %v475
    %v494 = vmul.f32 %v402, %v475
    %v495 = vmul.f32 %v407, %v475
    %v496 = vmul.f32 %v412, %v475
    %v497 = vmul.f32 %v417, %v475
    %v498 = vmul.f32 %v422, %v475
    %v499 = vmul.f32 %v427, %v475
    %v500 = vmul.f32 %v432, %v475
    %v501 = vmul.f32 %v437, %v475
    %v502 = vmul.f32 %v442, %v475
    %v503 = vmul.f32 %v447, %v475
    %v504 = vmul.f32 %v452, %v475
    %v505 = vmul.f32 %v457, %v475
    %v506 = vmul.f32 %v462, %v475
    %v507 = vmul.f32 %v467, %v475
    %v508 = vmul.f32 %v472, %v475
    %v509 = vld [vmem:[%s2] sm:$0x1]
    %v511 = vperm.slane %v509, 0
    %v513 = vadd.f32 %v477, %v511
    %v514 = vadd.f32 %v478, %v511
    %v515 = vadd.f32 %v479, %v511
    %v516 = vadd.f32 %v480, %v511
    %v517 = vadd.f32 %v481, %v511
    %v518 = vadd.f32 %v482, %v511
    %v519 = vadd.f32 %v483, %v511
    %v520 = vadd.f32 %v484, %v511
    %v521 = vadd.f32 %v485, %v511
    %v522 = vadd.f32 %v486, %v511
    %v523 = vadd.f32 %v487, %v511
    %v524 = vadd.f32 %v488, %v511
    %v525 = vadd.f32 %v489, %v511
    %v526 = vadd.f32 %v490, %v511
    %v527 = vadd.f32 %v491, %v511
    %v528 = vadd.f32 %v492, %v511
    %v529 = vadd.f32 %v493, %v511
    %v530 = vadd.f32 %v494, %v511
    %v531 = vadd.f32 %v495, %v511
    %v532 = vadd.f32 %v496, %v511
    %v533 = vadd.f32 %v497, %v511
    %v534 = vadd.f32 %v498, %v511
    %v535 = vadd.f32 %v499, %v511
    %v536 = vadd.f32 %v500, %v511
    %v537 = vadd.f32 %v501, %v511
    %v538 = vadd.f32 %v502, %v511
    %v539 = vadd.f32 %v503, %v511
    %v540 = vadd.f32 %v504, %v511
    %v541 = vadd.f32 %v505, %v511
    %v542 = vadd.f32 %v506, %v511
    %v543 = vadd.f32 %v507, %v511
    %v544 = vadd.f32 %v508, %v511
    %v545 = vpack.c.bf16 %v513, %v513
    %v546 = vpack.c.bf16 %v514, %v514
    %v547 = vpack.c.bf16 %v515, %v515
    %v548 = vpack.c.bf16 %v516, %v516
    %v549 = vpack.c.bf16 %v517, %v517
    %v550 = vpack.c.bf16 %v518, %v518
    %v551 = vpack.c.bf16 %v519, %v519
    %v552 = vpack.c.bf16 %v520, %v520
    %v553 = vpack.c.bf16 %v521, %v521
    %v554 = vpack.c.bf16 %v522, %v522
    %v555 = vpack.c.bf16 %v523, %v523
    %v556 = vpack.c.bf16 %v524, %v524
    %v557 = vpack.c.bf16 %v525, %v525
    %v558 = vpack.c.bf16 %v526, %v526
    %v559 = vpack.c.bf16 %v527, %v527
    %v560 = vpack.c.bf16 %v528, %v528
    %v561 = vpack.c.bf16 %v529, %v529
    %v562 = vpack.c.bf16 %v530, %v530
    %v563 = vpack.c.bf16 %v531, %v531
    %v564 = vpack.c.bf16 %v532, %v532
    %v565 = vpack.c.bf16 %v533, %v533
    %v566 = vpack.c.bf16 %v534, %v534
    %v567 = vpack.c.bf16 %v535, %v535
    %v568 = vpack.c.bf16 %v536, %v536
    %v569 = vpack.c.bf16 %v537, %v537
    %v570 = vpack.c.bf16 %v538, %v538
    %v571 = vpack.c.bf16 %v539, %v539
    %v572 = vpack.c.bf16 %v540, %v540
    %v573 = vpack.c.bf16 %v541, %v541
    %v574 = vpack.c.bf16 %v542, %v542
    %v575 = vpack.c.bf16 %v543, %v543
    %v576 = vpack.c.bf16 %v544, %v544
    %v577 = vld [vmem:[%s3] sm:$0xf]
    %v578 = vld [vmem:[%s3 + $0x4] sm:$0xf]
    %v579 = vld [vmem:[%s3 + $0x8] sm:$0xf]
    %v580 = vld [vmem:[%s3 + $0xc] sm:$0xf]
    %v581 = vld [vmem:[%s4] sm:$0xf]
    %v582 = vld [vmem:[%s4 + $0x4] sm:$0xf]
    %v583 = vld [vmem:[%s4 + $0x8] sm:$0xf]
    %v584 = vld [vmem:[%s4 + $0xc] sm:$0xf]
    %v615 = vunpack.c.l.b16 %v547
    %v616 = vunpack.c.l.b16 %v548
    %v617 = vunpack.c.l.b16 %v549
    %v618 = vunpack.c.l.b16 %v550
    %v619 = vunpack.c.l.b16 %v551
    %v620 = vunpack.c.l.b16 %v552
    %v621 = vunpack.c.l.b16 %v553
    %v622 = vunpack.c.l.b16 %v554
    %v623 = vunpack.c.l.b16 %v555
    %v624 = vunpack.c.l.b16 %v556
    %v625 = vunpack.c.l.b16 %v557
    %v626 = vunpack.c.l.b16 %v558
    %v627 = vunpack.c.l.b16 %v559
    %v628 = vunpack.c.l.b16 %v560
    %v629 = vunpack.c.l.b16 %v561
    %v630 = vunpack.c.l.b16 %v562
    %v631 = vunpack.c.l.b16 %v563
    %v632 = vunpack.c.l.b16 %v564
    %v633 = vunpack.c.l.b16 %v565
    %v634 = vunpack.c.l.b16 %v566
    %v635 = vunpack.c.l.b16 %v567
    %v636 = vunpack.c.l.b16 %v568
    %v637 = vunpack.c.l.b16 %v569
    %v638 = vunpack.c.l.b16 %v570
    %v639 = vunpack.c.l.b16 %v571
    %v640 = vunpack.c.l.b16 %v572
    %v641 = vunpack.c.l.b16 %v573
    %v642 = vunpack.c.l.b16 %v574
    %v643 = vunpack.c.l.b16 %v575
    %v644 = vunpack.c.l.b16 %v576
    %v645 = vpack.c.b16 %v616, %v615
    %v646 = vpack.c.b16 %v618, %v617
    %v647 = vpack.c.b16 %v620, %v619
    %v648 = vpack.c.b16 %v622, %v621
    %v649 = vpack.c.b16 %v624, %v623
    %v650 = vpack.c.b16 %v626, %v625
    %v651 = vpack.c.b16 %v628, %v627
    %v652 = vpack.c.b16 %v630, %v629
    %v653 = vpack.c.b16 %v632, %v631
    %v654 = vpack.c.b16 %v634, %v633
    %v655 = vpack.c.b16 %v636, %v635
    %v656 = vpack.c.b16 %v638, %v637
    %v657 = vpack.c.b16 %v640, %v639
    %v658 = vpack.c.b16 %v642, %v641
    %v659 = vpack.c.b16 %v644, %v643
    %v664 = vunpack.c.l.b16 %v581
    %v665 = vunpack.c.l.b16 %v582
    %v666 = vunpack.c.l.b16 %v583
    %v667 = vunpack.c.l.b16 %v584
    %v668 = vpack.c.b16 %v665, %v664
    %v669 = vpack.c.b16 %v667, %v666
    %vm672 = vcmask 261120
    %v674 = vsel %vm672, %v645, 0
    %v677 = vsel %vm672, %v646, 0
    %v680 = vsel %vm672, %v647, 0
    %v683 = vsel %vm672, %v648, 0
    %v686 = vsel %vm672, %v649, 0
    %v689 = vsel %vm672, %v650, 0
    %v692 = vsel %vm672, %v651, 0
    %v695 = vsel %vm672, %v652, 0
    %v698 = vsel %vm672, %v653, 0
    %v701 = vsel %vm672, %v654, 0
    %v704 = vsel %vm672, %v655, 0
    %v707 = vsel %vm672, %v656, 0
    %v710 = vsel %vm672, %v657, 0
    %v713 = vsel %vm672, %v658, 0
    %v716 = vsel %vm672, %v659, 0
    %718 = vmatpush.bf16.msra.mxu0 0
    %719 = vmatpush.bf16.msra.mxu0 0
    %720 = vmatpush.bf16.msra.mxu0 0
    %721 = vmatpush.bf16.msra.mxu0 0
    %722 = vmatpush.bf16.msra.mxu0 0
    %723 = vmatpush.bf16.msra.mxu0 0
    %724 = vmatpush.bf16.msra.mxu0 %v669
    %725 = vmatpush.bf16.msra.mxu0 %v668
    %726 = vmatmul.bf16.gmra.mxu0 %v674
    %v727 = vpop.f32.mrf.mxu0
    %v728 = vadd.f32 0.0, %v727
    %v729 = vpop.f32.mrf.mxu0
    %v730 = vadd.f32 0.0, %v729
    %731 = vmatmul.bf16.gmra.mxu0 %v677
    %v732 = vpop.f32.mrf.mxu0
    %v733 = vadd.f32 0.0, %v732
    %v734 = vpop.f32.mrf.mxu0
    %v735 = vadd.f32 0.0, %v734
    %736 = vmatmul.bf16.gmra.mxu0 %v680
    %v737 = vpop.f32.mrf.mxu0
    %v738 = vadd.f32 0.0, %v737
    %v739 = vpop.f32.mrf.mxu0
    %v740 = vadd.f32 0.0, %v739
    %741 = vmatmul.bf16.gmra.mxu0 %v683
    %v742 = vpop.f32.mrf.mxu0
    %v743 = vadd.f32 0.0, %v742
    %v744 = vpop.f32.mrf.mxu0
    %v745 = vadd.f32 0.0, %v744
    %746 = vmatmul.bf16.gmra.mxu0 %v686
    %v747 = vpop.f32.mrf.mxu0
    %v748 = vadd.f32 0.0, %v747
    %v749 = vpop.f32.mrf.mxu0
    %v750 = vadd.f32 0.0, %v749
    %751 = vmatmul.bf16.gmra.mxu0 %v689
    %v752 = vpop.f32.mrf.mxu0
    %v753 = vadd.f32 0.0, %v752
    %v754 = vpop.f32.mrf.mxu0
    %v755 = vadd.f32 0.0, %v754
    %756 = vmatmul.bf16.gmra.mxu0 %v692
    %v757 = vpop.f32.mrf.mxu0
    %v758 = vadd.f32 0.0, %v757
    %v759 = vpop.f32.mrf.mxu0
    %v760 = vadd.f32 0.0, %v759
    %761 = vmatmul.bf16.gmra.mxu0 %v695
    %v762 = vpop.f32.mrf.mxu0
    %v763 = vadd.f32 0.0, %v762
    %v764 = vpop.f32.mrf.mxu0
    %v765 = vadd.f32 0.0, %v764
    %766 = vmatmul.bf16.gmra.mxu0 %v698
    %v767 = vpop.f32.mrf.mxu0
    %v768 = vadd.f32 0.0, %v767
    %v769 = vpop.f32.mrf.mxu0
    %v770 = vadd.f32 0.0, %v769
    %771 = vmatmul.bf16.gmra.mxu0 %v701
    %v772 = vpop.f32.mrf.mxu0
    %v773 = vadd.f32 0.0, %v772
    %v774 = vpop.f32.mrf.mxu0
    %v775 = vadd.f32 0.0, %v774
    %776 = vmatmul.bf16.gmra.mxu0 %v704
    %v777 = vpop.f32.mrf.mxu0
    %v778 = vadd.f32 0.0, %v777
    %v779 = vpop.f32.mrf.mxu0
    %v780 = vadd.f32 0.0, %v779
    %781 = vmatmul.bf16.gmra.mxu0 %v707
    %v782 = vpop.f32.mrf.mxu0
    %v783 = vadd.f32 0.0, %v782
    %v784 = vpop.f32.mrf.mxu0
    %v785 = vadd.f32 0.0, %v784
    %786 = vmatmul.bf16.gmra.mxu0 %v710
    %v787 = vpop.f32.mrf.mxu0
    %v788 = vadd.f32 0.0, %v787
    %v789 = vpop.f32.mrf.mxu0
    %v790 = vadd.f32 0.0, %v789
    %791 = vmatmul.bf16.gmra.mxu0 %v713
    %v792 = vpop.f32.mrf.mxu0
    %v793 = vadd.f32 0.0, %v792
    %v794 = vpop.f32.mrf.mxu0
    %v795 = vadd.f32 0.0, %v794
    %796 = vmatmul.bf16.gmra.mxu0 %v716
    %v797 = vpop.f32.mrf.mxu0
    %v798 = vadd.f32 0.0, %v797
    %v799 = vpop.f32.mrf.mxu0
    %v800 = vadd.f32 0.0, %v799
    %801 = vdwg.mxu0
    %v804 = vunpack.c.l.b16 %v545
    %v805 = vunpack.c.l.b16 %v546
    %v806 = vpack.c.b16 %v805, %v804
    %v811 = vunpack.c.l.b16 %v577
    %v812 = vunpack.c.l.b16 %v578
    %v813 = vunpack.c.l.b16 %v579
    %v814 = vunpack.c.l.b16 %v580
    %v815 = vpack.c.b16 %v812, %v811
    %v816 = vpack.c.b16 %v814, %v813
    %v820 = vsel %vm672, %v806, 0
    %822 = vmatpush.bf16.msra.mxu0 0
    %823 = vmatpush.bf16.msra.mxu0 0
    %824 = vmatpush.bf16.msra.mxu0 0
    %825 = vmatpush.bf16.msra.mxu0 0
    %826 = vmatpush.bf16.msra.mxu0 0
    %827 = vmatpush.bf16.msra.mxu0 0
    %828 = vmatpush.bf16.msra.mxu0 %v816
    %829 = vmatpush.bf16.msra.mxu0 %v815
    %830 = vmatmul.bf16.gmra.mxu0 %v820
    %v831 = vpop.f32.mrf.mxu0
    %v832 = vadd.f32 %v728, %v831
    %v833 = vpop.f32.mrf.mxu0
    %v834 = vadd.f32 %v730, %v833
    %835 = vmatmul.bf16.gmra.mxu0 %v674
    %v836 = vpop.f32.mrf.mxu0
    %v837 = vadd.f32 %v733, %v836
    %v838 = vpop.f32.mrf.mxu0
    %v839 = vadd.f32 %v735, %v838
    %840 = vmatmul.bf16.gmra.mxu0 %v677
    %v841 = vpop.f32.mrf.mxu0
    %v842 = vadd.f32 %v738, %v841
    %v843 = vpop.f32.mrf.mxu0
    %v844 = vadd.f32 %v740, %v843
    %845 = vmatmul.bf16.gmra.mxu0 %v680
    %v846 = vpop.f32.mrf.mxu0
    %v847 = vadd.f32 %v743, %v846
    %v848 = vpop.f32.mrf.mxu0
    %v849 = vadd.f32 %v745, %v848
    %850 = vmatmul.bf16.gmra.mxu0 %v683
    %v851 = vpop.f32.mrf.mxu0
    %v852 = vadd.f32 %v748, %v851
    %v853 = vpop.f32.mrf.mxu0
    %v854 = vadd.f32 %v750, %v853
    %855 = vmatmul.bf16.gmra.mxu0 %v686
    %v856 = vpop.f32.mrf.mxu0
    %v857 = vadd.f32 %v753, %v856
    %v858 = vpop.f32.mrf.mxu0
    %v859 = vadd.f32 %v755, %v858
    %860 = vmatmul.bf16.gmra.mxu0 %v689
    %v861 = vpop.f32.mrf.mxu0
    %v862 = vadd.f32 %v758, %v861
    %v863 = vpop.f32.mrf.mxu0
    %v864 = vadd.f32 %v760, %v863
    %865 = vmatmul.bf16.gmra.mxu0 %v692
    %v866 = vpop.f32.mrf.mxu0
    %v867 = vadd.f32 %v763, %v866
    %v868 = vpop.f32.mrf.mxu0
    %v869 = vadd.f32 %v765, %v868
    %870 = vmatmul.bf16.gmra.mxu0 %v695
    %v871 = vpop.f32.mrf.mxu0
    %v872 = vadd.f32 %v768, %v871
    %v873 = vpop.f32.mrf.mxu0
    %v874 = vadd.f32 %v770, %v873
    %875 = vmatmul.bf16.gmra.mxu0 %v698
    %v876 = vpop.f32.mrf.mxu0
    %v877 = vadd.f32 %v773, %v876
    %v878 = vpop.f32.mrf.mxu0
    %v879 = vadd.f32 %v775, %v878
    %880 = vmatmul.bf16.gmra.mxu0 %v701
    %v881 = vpop.f32.mrf.mxu0
    %v882 = vadd.f32 %v778, %v881
    %v883 = vpop.f32.mrf.mxu0
    %v884 = vadd.f32 %v780, %v883
    %885 = vmatmul.bf16.gmra.mxu0 %v704
    %v886 = vpop.f32.mrf.mxu0
    %v887 = vadd.f32 %v783, %v886
    %v888 = vpop.f32.mrf.mxu0
    %v889 = vadd.f32 %v785, %v888
    %890 = vmatmul.bf16.gmra.mxu0 %v707
    %v891 = vpop.f32.mrf.mxu0
    %v892 = vadd.f32 %v788, %v891
    %v893 = vpop.f32.mrf.mxu0
    %v894 = vadd.f32 %v790, %v893
    %895 = vmatmul.bf16.gmra.mxu0 %v710
    %v896 = vpop.f32.mrf.mxu0
    %v897 = vadd.f32 %v793, %v896
    %v898 = vpop.f32.mrf.mxu0
    %v899 = vadd.f32 %v795, %v898
    %900 = vmatmul.bf16.gmra.mxu0 %v713
    %v901 = vpop.f32.mrf.mxu0
    %v902 = vadd.f32 %v798, %v901
    %v903 = vpop.f32.mrf.mxu0
    %v904 = vadd.f32 %v800, %v903
    %905 = vdwg.mxu0
    %v906 = vld [vmem:[%s5] sm:$0x1]
    %v908 = vperm.slane %v906, 0
    %v910 = vadd.f32 %v832, %v908
    %v911 = vadd.f32 %v834, %v908
    %v912 = vadd.f32 %v837, %v908
    %v913 = vadd.f32 %v839, %v908
    %v914 = vadd.f32 %v842, %v908
    %v915 = vadd.f32 %v844, %v908
    %v916 = vadd.f32 %v847, %v908
    %v917 = vadd.f32 %v849, %v908
    %v918 = vadd.f32 %v852, %v908
    %v919 = vadd.f32 %v854, %v908
    %v920 = vadd.f32 %v857, %v908
    %v921 = vadd.f32 %v859, %v908
    %v922 = vadd.f32 %v862, %v908
    %v923 = vadd.f32 %v864, %v908
    %v924 = vadd.f32 %v867, %v908
    %v925 = vadd.f32 %v869, %v908
    %v926 = vadd.f32 %v872, %v908
    %v927 = vadd.f32 %v874, %v908
    %v928 = vadd.f32 %v877, %v908
    %v929 = vadd.f32 %v879, %v908
    %v930 = vadd.f32 %v882, %v908
    %v931 = vadd.f32 %v884, %v908
    %v932 = vadd.f32 %v887, %v908
    %v933 = vadd.f32 %v889, %v908
    %v934 = vadd.f32 %v892, %v908
    %v935 = vadd.f32 %v894, %v908
    %v936 = vadd.f32 %v897, %v908
    %v937 = vadd.f32 %v899, %v908
    %v938 = vadd.f32 %v902, %v908
    %v939 = vadd.f32 %v904, %v908
    %v940 = vtanh.pop %v910
    %v941 = vtanh.pop %v911
    %v942 = vtanh.pop %v912
    %v943 = vtanh.pop %v913
    %v944 = vtanh.pop %v914
    %v945 = vtanh.pop %v915
    %v946 = vtanh.pop %v916
    %v947 = vtanh.pop %v917
    %v948 = vtanh.pop %v918
    %v949 = vtanh.pop %v919
    %v950 = vtanh.pop %v920
    %v951 = vtanh.pop %v921
    %v952 = vtanh.pop %v922
    %v953 = vtanh.pop %v923
    %v954 = vtanh.pop %v924
    %v955 = vtanh.pop %v925
    %v956 = vtanh.pop %v926
    %v957 = vtanh.pop %v927
    %v958 = vtanh.pop %v928
    %v959 = vtanh.pop %v929
    %v960 = vtanh.pop %v930
    %v961 = vtanh.pop %v931
    %v962 = vtanh.pop %v932
    %v963 = vtanh.pop %v933
    %v964 = vtanh.pop %v934
    %v965 = vtanh.pop %v935
    %v966 = vtanh.pop %v936
    %v967 = vtanh.pop %v937
    %v968 = vtanh.pop %v938
    %v969 = vtanh.pop %v939
    %v970 = vxor.u32 %v910, 2147483648
    %v971 = vxor.u32 %v911, 2147483648
    %v972 = vxor.u32 %v912, 2147483648
    %v973 = vxor.u32 %v913, 2147483648
    %v974 = vxor.u32 %v914, 2147483648
    %v975 = vxor.u32 %v915, 2147483648
    %v976 = vxor.u32 %v916, 2147483648
    %v977 = vxor.u32 %v917, 2147483648
    %v978 = vxor.u32 %v918, 2147483648
    %v979 = vxor.u32 %v919, 2147483648
    %v980 = vxor.u32 %v920, 2147483648
    %v981 = vxor.u32 %v921, 2147483648
    %v982 = vxor.u32 %v922, 2147483648
    %v983 = vxor.u32 %v923, 2147483648
    %v984 = vxor.u32 %v924, 2147483648
    %v985 = vxor.u32 %v925, 2147483648
    %v986 = vxor.u32 %v926, 2147483648
    %v987 = vxor.u32 %v927, 2147483648
    %v988 = vxor.u32 %v928, 2147483648
    %v989 = vxor.u32 %v929, 2147483648
    %v990 = vxor.u32 %v930, 2147483648
    %v991 = vxor.u32 %v931, 2147483648
    %v992 = vxor.u32 %v932, 2147483648
    %v993 = vxor.u32 %v933, 2147483648
    %v994 = vxor.u32 %v934, 2147483648
    %v995 = vxor.u32 %v935, 2147483648
    %v996 = vxor.u32 %v936, 2147483648
    %v997 = vxor.u32 %v937, 2147483648
    %v998 = vxor.u32 %v938, 2147483648
    %v999 = vxor.u32 %v939, 2147483648
    %v1000 = vmul.f32 %v970, 1.442695
    %v1001 = vpow.pop %v1000
    %v1002 = vmul.f32 %v971, 1.442695
    %v1003 = vpow.pop %v1002
    %v1004 = vmul.f32 %v972, 1.442695
    %v1005 = vpow.pop %v1004
    %v1006 = vmul.f32 %v973, 1.442695
    %v1007 = vpow.pop %v1006
    %v1008 = vmul.f32 %v974, 1.442695
    %v1009 = vpow.pop %v1008
    %v1010 = vmul.f32 %v975, 1.442695
    %v1011 = vpow.pop %v1010
    %v1012 = vmul.f32 %v976, 1.442695
    %v1013 = vpow.pop %v1012
    %v1014 = vmul.f32 %v977, 1.442695
    %v1015 = vpow.pop %v1014
    %v1016 = vmul.f32 %v978, 1.442695
    %v1017 = vpow.pop %v1016
    %v1018 = vmul.f32 %v979, 1.442695
    %v1019 = vpow.pop %v1018
    %v1020 = vmul.f32 %v980, 1.442695
    %v1021 = vpow.pop %v1020
    %v1022 = vmul.f32 %v981, 1.442695
    %v1023 = vpow.pop %v1022
    %v1024 = vmul.f32 %v982, 1.442695
    %v1025 = vpow.pop %v1024
    %v1026 = vmul.f32 %v983, 1.442695
    %v1027 = vpow.pop %v1026
    %v1028 = vmul.f32 %v984, 1.442695
    %v1029 = vpow.pop %v1028
    %v1030 = vmul.f32 %v985, 1.442695
    %v1031 = vpow.pop %v1030
    %v1032 = vmul.f32 %v986, 1.442695
    %v1033 = vpow.pop %v1032
    %v1034 = vmul.f32 %v987, 1.442695
    %v1035 = vpow.pop %v1034
    %v1036 = vmul.f32 %v988, 1.442695
    %v1037 = vpow.pop %v1036
    %v1038 = vmul.f32 %v989, 1.442695
    %v1039 = vpow.pop %v1038
    %v1040 = vmul.f32 %v990, 1.442695
    %v1041 = vpow.pop %v1040
    %v1042 = vmul.f32 %v991, 1.442695
    %v1043 = vpow.pop %v1042
    %v1044 = vmul.f32 %v992, 1.442695
    %v1045 = vpow.pop %v1044
    %v1046 = vmul.f32 %v993, 1.442695
    %v1047 = vpow.pop %v1046
    %v1048 = vmul.f32 %v994, 1.442695
    %v1049 = vpow.pop %v1048
    %v1050 = vmul.f32 %v995, 1.442695
    %v1051 = vpow.pop %v1050
    %v1052 = vmul.f32 %v996, 1.442695
    %v1053 = vpow.pop %v1052
    %v1054 = vmul.f32 %v997, 1.442695
    %v1055 = vpow.pop %v1054
    %v1056 = vmul.f32 %v998, 1.442695
    %v1057 = vpow.pop %v1056
    %v1058 = vmul.f32 %v999, 1.442695
    %v1059 = vpow.pop %v1058
    %v1060 = vadd.f32 %v1001, 1.0
    %v1061 = vadd.f32 %v1003, 1.0
    %v1062 = vadd.f32 %v1005, 1.0
    %v1063 = vadd.f32 %v1007, 1.0
    %v1064 = vadd.f32 %v1009, 1.0
    %v1065 = vadd.f32 %v1011, 1.0
    %v1066 = vadd.f32 %v1013, 1.0
    %v1067 = vadd.f32 %v1015, 1.0
    %v1068 = vadd.f32 %v1017, 1.0
    %v1069 = vadd.f32 %v1019, 1.0
    %v1070 = vadd.f32 %v1021, 1.0
    %v1071 = vadd.f32 %v1023, 1.0
    %v1072 = vadd.f32 %v1025, 1.0
    %v1073 = vadd.f32 %v1027, 1.0
    %v1074 = vadd.f32 %v1029, 1.0
    %v1075 = vadd.f32 %v1031, 1.0
    %v1076 = vadd.f32 %v1033, 1.0
    %v1077 = vadd.f32 %v1035, 1.0
    %v1078 = vadd.f32 %v1037, 1.0
    %v1079 = vadd.f32 %v1039, 1.0
    %v1080 = vadd.f32 %v1041, 1.0
    %v1081 = vadd.f32 %v1043, 1.0
    %v1082 = vadd.f32 %v1045, 1.0
    %v1083 = vadd.f32 %v1047, 1.0
    %v1084 = vadd.f32 %v1049, 1.0
    %v1085 = vadd.f32 %v1051, 1.0
    %v1086 = vadd.f32 %v1053, 1.0
    %v1087 = vadd.f32 %v1055, 1.0
    %v1088 = vadd.f32 %v1057, 1.0
    %v1089 = vadd.f32 %v1059, 1.0
    %v1090 = vrcp.pop %v1060
    %v1091 = vmul.f32 %v1060, %v1090
    %v1092 = vsub.f32 1.0, %v1091
    %v1093 = vmul.f32 %v1090, %v1092
    %v1094 = vadd.f32 %v1090, %v1093
    %vm1095 = vweird.f32 %v1060
    %vm1096 = vweird.f32 %v1090
    %vm1097 = vmor %vm1095, %vm1096
    %v1098 = vsel %vm1097, %v1090, %v1094
    %v1099 = vand.u32 2147483647, %v1060
    %vm1100 = vcmp.eq.f32.partialorder %v1099, 8.507059e+37
    %v1101 = vand.u32 %v1060, 2147483648
    %v1102 = vor.u32 1.1754944e-38, %v1101
    %v1103 = vsel %vm1100, %v1102, %v1098
    %v1104 = vmul.f32 1.0, %v1103
    %v1105 = vrcp.pop %v1061
    %v1106 = vmul.f32 %v1061, %v1105
    %v1107 = vsub.f32 1.0, %v1106
    %v1108 = vmul.f32 %v1105, %v1107
    %v1109 = vadd.f32 %v1105, %v1108
    %vm1110 = vweird.f32 %v1061
    %vm1111 = vweird.f32 %v1105
    %vm1112 = vmor %vm1110, %vm1111
    %v1113 = vsel %vm1112, %v1105, %v1109
    %v1114 = vand.u32 2147483647, %v1061
    %vm1115 = vcmp.eq.f32.partialorder %v1114, 8.507059e+37
    %v1116 = vand.u32 %v1061, 2147483648
    %v1117 = vor.u32 1.1754944e-38, %v1116
    %v1118 = vsel %vm1115, %v1117, %v1113
    %v1119 = vmul.f32 1.0, %v1118
    %v1120 = vrcp.pop %v1062
    %v1121 = vmul.f32 %v1062, %v1120
    %v1122 = vsub.f32 1.0, %v1121
    %v1123 = vmul.f32 %v1120, %v1122
    %v1124 = vadd.f32 %v1120, %v1123
    %vm1125 = vweird.f32 %v1062
    %vm1126 = vweird.f32 %v1120
    %vm1127 = vmor %vm1125, %vm1126
    %v1128 = vsel %vm1127, %v1120, %v1124
    %v1129 = vand.u32 2147483647, %v1062
    %vm1130 = vcmp.eq.f32.partialorder %v1129, 8.507059e+37
    %v1131 = vand.u32 %v1062, 2147483648
    %v1132 = vor.u32 1.1754944e-38, %v1131
    %v1133 = vsel %vm1130, %v1132, %v1128
    %v1134 = vmul.f32 1.0, %v1133
    %v1135 = vrcp.pop %v1063
    %v1136 = vmul.f32 %v1063, %v1135
    %v1137 = vsub.f32 1.0, %v1136
    %v1138 = vmul.f32 %v1135, %v1137
    %v1139 = vadd.f32 %v1135, %v1138
    %vm1140 = vweird.f32 %v1063
    %vm1141 = vweird.f32 %v1135
    %vm1142 = vmor %vm1140, %vm1141
    %v1143 = vsel %vm1142, %v1135, %v1139
    %v1144 = vand.u32 2147483647, %v1063
    %vm1145 = vcmp.eq.f32.partialorder %v1144, 8.507059e+37
    %v1146 = vand.u32 %v1063, 2147483648
    %v1147 = vor.u32 1.1754944e-38, %v1146
    %v1148 = vsel %vm1145, %v1147, %v1143
    %v1149 = vmul.f32 1.0, %v1148
    %v1150 = vrcp.pop %v1064
    %v1151 = vmul.f32 %v1064, %v1150
    %v1152 = vsub.f32 1.0, %v1151
    %v1153 = vmul.f32 %v1150, %v1152
    %v1154 = vadd.f32 %v1150, %v1153
    %vm1155 = vweird.f32 %v1064
    %vm1156 = vweird.f32 %v1150
    %vm1157 = vmor %vm1155, %vm1156
    %v1158 = vsel %vm1157, %v1150, %v1154
    %v1159 = vand.u32 2147483647, %v1064
    %vm1160 = vcmp.eq.f32.partialorder %v1159, 8.507059e+37
    %v1161 = vand.u32 %v1064, 2147483648
    %v1162 = vor.u32 1.1754944e-38, %v1161
    %v1163 = vsel %vm1160, %v1162, %v1158
    %v1164 = vmul.f32 1.0, %v1163
    %v1165 = vrcp.pop %v1065
    %v1166 = vmul.f32 %v1065, %v1165
    %v1167 = vsub.f32 1.0, %v1166
    %v1168 = vmul.f32 %v1165, %v1167
    %v1169 = vadd.f32 %v1165, %v1168
    %vm1170 = vweird.f32 %v1065
    %vm1171 = vweird.f32 %v1165
    %vm1172 = vmor %vm1170, %vm1171
    %v1173 = vsel %vm1172, %v1165, %v1169
    %v1174 = vand.u32 2147483647, %v1065
    %vm1175 = vcmp.eq.f32.partialorder %v1174, 8.507059e+37
    %v1176 = vand.u32 %v1065, 2147483648
    %v1177 = vor.u32 1.1754944e-38, %v1176
    %v1178 = vsel %vm1175, %v1177, %v1173
    %v1179 = vmul.f32 1.0, %v1178
    %v1180 = vrcp.pop %v1066
    %v1181 = vmul.f32 %v1066, %v1180
    %v1182 = vsub.f32 1.0, %v1181
    %v1183 = vmul.f32 %v1180, %v1182
    %v1184 = vadd.f32 %v1180, %v1183
    %vm1185 = vweird.f32 %v1066
    %vm1186 = vweird.f32 %v1180
    %vm1187 = vmor %vm1185, %vm1186
    %v1188 = vsel %vm1187, %v1180, %v1184
    %v1189 = vand.u32 2147483647, %v1066
    %vm1190 = vcmp.eq.f32.partialorder %v1189, 8.507059e+37
    %v1191 = vand.u32 %v1066, 2147483648
    %v1192 = vor.u32 1.1754944e-38, %v1191
    %v1193 = vsel %vm1190, %v1192, %v1188
    %v1194 = vmul.f32 1.0, %v1193
    %v1195 = vrcp.pop %v1067
    %v1196 = vmul.f32 %v1067, %v1195
    %v1197 = vsub.f32 1.0, %v1196
    %v1198 = vmul.f32 %v1195, %v1197
    %v1199 = vadd.f32 %v1195, %v1198
    %vm1200 = vweird.f32 %v1067
    %vm1201 = vweird.f32 %v1195
    %vm1202 = vmor %vm1200, %vm1201
    %v1203 = vsel %vm1202, %v1195, %v1199
    %v1204 = vand.u32 2147483647, %v1067
    %vm1205 = vcmp.eq.f32.partialorder %v1204, 8.507059e+37
    %v1206 = vand.u32 %v1067, 2147483648
    %v1207 = vor.u32 1.1754944e-38, %v1206
    %v1208 = vsel %vm1205, %v1207, %v1203
    %v1209 = vmul.f32 1.0, %v1208
    %v1210 = vrcp.pop %v1068
    %v1211 = vmul.f32 %v1068, %v1210
    %v1212 = vsub.f32 1.0, %v1211
    %v1213 = vmul.f32 %v1210, %v1212
    %v1214 = vadd.f32 %v1210, %v1213
    %vm1215 = vweird.f32 %v1068
    %vm1216 = vweird.f32 %v1210
    %vm1217 = vmor %vm1215, %vm1216
    %v1218 = vsel %vm1217, %v1210, %v1214
    %v1219 = vand.u32 2147483647, %v1068
    %vm1220 = vcmp.eq.f32.partialorder %v1219, 8.507059e+37
    %v1221 = vand.u32 %v1068, 2147483648
    %v1222 = vor.u32 1.1754944e-38, %v1221
    %v1223 = vsel %vm1220, %v1222, %v1218
    %v1224 = vmul.f32 1.0, %v1223
    %v1225 = vrcp.pop %v1069
    %v1226 = vmul.f32 %v1069, %v1225
    %v1227 = vsub.f32 1.0, %v1226
    %v1228 = vmul.f32 %v1225, %v1227
    %v1229 = vadd.f32 %v1225, %v1228
    %vm1230 = vweird.f32 %v1069
    %vm1231 = vweird.f32 %v1225
    %vm1232 = vmor %vm1230, %vm1231
    %v1233 = vsel %vm1232, %v1225, %v1229
    %v1234 = vand.u32 2147483647, %v1069
    %vm1235 = vcmp.eq.f32.partialorder %v1234, 8.507059e+37
    %v1236 = vand.u32 %v1069, 2147483648
    %v1237 = vor.u32 1.1754944e-38, %v1236
    %v1238 = vsel %vm1235, %v1237, %v1233
    %v1239 = vmul.f32 1.0, %v1238
    %v1240 = vrcp.pop %v1070
    %v1241 = vmul.f32 %v1070, %v1240
    %v1242 = vsub.f32 1.0, %v1241
    %v1243 = vmul.f32 %v1240, %v1242
    %v1244 = vadd.f32 %v1240, %v1243
    %vm1245 = vweird.f32 %v1070
    %vm1246 = vweird.f32 %v1240
    %vm1247 = vmor %vm1245, %vm1246
    %v1248 = vsel %vm1247, %v1240, %v1244
    %v1249 = vand.u32 2147483647, %v1070
    %vm1250 = vcmp.eq.f32.partialorder %v1249, 8.507059e+37
    %v1251 = vand.u32 %v1070, 2147483648
    %v1252 = vor.u32 1.1754944e-38, %v1251
    %v1253 = vsel %vm1250, %v1252, %v1248
    %v1254 = vmul.f32 1.0, %v1253
    %v1255 = vrcp.pop %v1071
    %v1256 = vmul.f32 %v1071, %v1255
    %v1257 = vsub.f32 1.0, %v1256
    %v1258 = vmul.f32 %v1255, %v1257
    %v1259 = vadd.f32 %v1255, %v1258
    %vm1260 = vweird.f32 %v1071
    %vm1261 = vweird.f32 %v1255
    %vm1262 = vmor %vm1260, %vm1261
    %v1263 = vsel %vm1262, %v1255, %v1259
    %v1264 = vand.u32 2147483647, %v1071
    %vm1265 = vcmp.eq.f32.partialorder %v1264, 8.507059e+37
    %v1266 = vand.u32 %v1071, 2147483648
    %v1267 = vor.u32 1.1754944e-38, %v1266
    %v1268 = vsel %vm1265, %v1267, %v1263
    %v1269 = vmul.f32 1.0, %v1268
    %v1270 = vrcp.pop %v1072
    %v1271 = vmul.f32 %v1072, %v1270
    %v1272 = vsub.f32 1.0, %v1271
    %v1273 = vmul.f32 %v1270, %v1272
    %v1274 = vadd.f32 %v1270, %v1273
    %vm1275 = vweird.f32 %v1072
    %vm1276 = vweird.f32 %v1270
    %vm1277 = vmor %vm1275, %vm1276
    %v1278 = vsel %vm1277, %v1270, %v1274
    %v1279 = vand.u32 2147483647, %v1072
    %vm1280 = vcmp.eq.f32.partialorder %v1279, 8.507059e+37
    %v1281 = vand.u32 %v1072, 2147483648
    %v1282 = vor.u32 1.1754944e-38, %v1281
    %v1283 = vsel %vm1280, %v1282, %v1278
    %v1284 = vmul.f32 1.0, %v1283
    %v1285 = vrcp.pop %v1073
    %v1286 = vmul.f32 %v1073, %v1285
    %v1287 = vsub.f32 1.0, %v1286
    %v1288 = vmul.f32 %v1285, %v1287
    %v1289 = vadd.f32 %v1285, %v1288
    %vm1290 = vweird.f32 %v1073
    %vm1291 = vweird.f32 %v1285
    %vm1292 = vmor %vm1290, %vm1291
    %v1293 = vsel %vm1292, %v1285, %v1289
    %v1294 = vand.u32 2147483647, %v1073
    %vm1295 = vcmp.eq.f32.partialorder %v1294, 8.507059e+37
    %v1296 = vand.u32 %v1073, 2147483648
    %v1297 = vor.u32 1.1754944e-38, %v1296
    %v1298 = vsel %vm1295, %v1297, %v1293
    %v1299 = vmul.f32 1.0, %v1298
    %v1300 = vrcp.pop %v1074
    %v1301 = vmul.f32 %v1074, %v1300
    %v1302 = vsub.f32 1.0, %v1301
    %v1303 = vmul.f32 %v1300, %v1302
    %v1304 = vadd.f32 %v1300, %v1303
    %vm1305 = vweird.f32 %v1074
    %vm1306 = vweird.f32 %v1300
    %vm1307 = vmor %vm1305, %vm1306
    %v1308 = vsel %vm1307, %v1300, %v1304
    %v1309 = vand.u32 2147483647, %v1074
    %vm1310 = vcmp.eq.f32.partialorder %v1309, 8.507059e+37
    %v1311 = vand.u32 %v1074, 2147483648
    %v1312 = vor.u32 1.1754944e-38, %v1311
    %v1313 = vsel %vm1310, %v1312, %v1308
    %v1314 = vmul.f32 1.0, %v1313
    %v1315 = vrcp.pop %v1075
    %v1316 = vmul.f32 %v1075, %v1315
    %v1317 = vsub.f32 1.0, %v1316
    %v1318 = vmul.f32 %v1315, %v1317
    %v1319 = vadd.f32 %v1315, %v1318
    %vm1320 = vweird.f32 %v1075
    %vm1321 = vweird.f32 %v1315
    %vm1322 = vmor %vm1320, %vm1321
    %v1323 = vsel %vm1322, %v1315, %v1319
    %v1324 = vand.u32 2147483647, %v1075
    %vm1325 = vcmp.eq.f32.partialorder %v1324, 8.507059e+37
    %v1326 = vand.u32 %v1075, 2147483648
    %v1327 = vor.u32 1.1754944e-38, %v1326
    %v1328 = vsel %vm1325, %v1327, %v1323
    %v1329 = vmul.f32 1.0, %v1328
    %v1330 = vrcp.pop %v1076
    %v1331 = vmul.f32 %v1076, %v1330
    %v1332 = vsub.f32 1.0, %v1331
    %v1333 = vmul.f32 %v1330, %v1332
    %v1334 = vadd.f32 %v1330, %v1333
    %vm1335 = vweird.f32 %v1076
    %vm1336 = vweird.f32 %v1330
    %vm1337 = vmor %vm1335, %vm1336
    %v1338 = vsel %vm1337, %v1330, %v1334
    %v1339 = vand.u32 2147483647, %v1076
    %vm1340 = vcmp.eq.f32.partialorder %v1339, 8.507059e+37
    %v1341 = vand.u32 %v1076, 2147483648
    %v1342 = vor.u32 1.1754944e-38, %v1341
    %v1343 = vsel %vm1340, %v1342, %v1338
    %v1344 = vmul.f32 1.0, %v1343
    %v1345 = vrcp.pop %v1077
    %v1346 = vmul.f32 %v1077, %v1345
    %v1347 = vsub.f32 1.0, %v1346
    %v1348 = vmul.f32 %v1345, %v1347
    %v1349 = vadd.f32 %v1345, %v1348
    %vm1350 = vweird.f32 %v1077
    %vm1351 = vweird.f32 %v1345
    %vm1352 = vmor %vm1350, %vm1351
    %v1353 = vsel %vm1352, %v1345, %v1349
    %v1354 = vand.u32 2147483647, %v1077
    %vm1355 = vcmp.eq.f32.partialorder %v1354, 8.507059e+37
    %v1356 = vand.u32 %v1077, 2147483648
    %v1357 = vor.u32 1.1754944e-38, %v1356
    %v1358 = vsel %vm1355, %v1357, %v1353
    %v1359 = vmul.f32 1.0, %v1358
    %v1360 = vrcp.pop %v1078
    %v1361 = vmul.f32 %v1078, %v1360
    %v1362 = vsub.f32 1.0, %v1361
    %v1363 = vmul.f32 %v1360, %v1362
    %v1364 = vadd.f32 %v1360, %v1363
    %vm1365 = vweird.f32 %v1078
    %vm1366 = vweird.f32 %v1360
    %vm1367 = vmor %vm1365, %vm1366
    %v1368 = vsel %vm1367, %v1360, %v1364
    %v1369 = vand.u32 2147483647, %v1078
    %vm1370 = vcmp.eq.f32.partialorder %v1369, 8.507059e+37
    %v1371 = vand.u32 %v1078, 2147483648
    %v1372 = vor.u32 1.1754944e-38, %v1371
    %v1373 = vsel %vm1370, %v1372, %v1368
    %v1374 = vmul.f32 1.0, %v1373
    %v1375 = vrcp.pop %v1079
    %v1376 = vmul.f32 %v1079, %v1375
    %v1377 = vsub.f32 1.0, %v1376
    %v1378 = vmul.f32 %v1375, %v1377
    %v1379 = vadd.f32 %v1375, %v1378
    %vm1380 = vweird.f32 %v1079
    %vm1381 = vweird.f32 %v1375
    %vm1382 = vmor %vm1380, %vm1381
    %v1383 = vsel %vm1382, %v1375, %v1379
    %v1384 = vand.u32 2147483647, %v1079
    %vm1385 = vcmp.eq.f32.partialorder %v1384, 8.507059e+37
    %v1386 = vand.u32 %v1079, 2147483648
    %v1387 = vor.u32 1.1754944e-38, %v1386
    %v1388 = vsel %vm1385, %v1387, %v1383
    %v1389 = vmul.f32 1.0, %v1388
    %v1390 = vrcp.pop %v1080
    %v1391 = vmul.f32 %v1080, %v1390
    %v1392 = vsub.f32 1.0, %v1391
    %v1393 = vmul.f32 %v1390, %v1392
    %v1394 = vadd.f32 %v1390, %v1393
    %vm1395 = vweird.f32 %v1080
    %vm1396 = vweird.f32 %v1390
    %vm1397 = vmor %vm1395, %vm1396
    %v1398 = vsel %vm1397, %v1390, %v1394
    %v1399 = vand.u32 2147483647, %v1080
    %vm1400 = vcmp.eq.f32.partialorder %v1399, 8.507059e+37
    %v1401 = vand.u32 %v1080, 2147483648
    %v1402 = vor.u32 1.1754944e-38, %v1401
    %v1403 = vsel %vm1400, %v1402, %v1398
    %v1404 = vmul.f32 1.0, %v1403
    %v1405 = vrcp.pop %v1081
    %v1406 = vmul.f32 %v1081, %v1405
    %v1407 = vsub.f32 1.0, %v1406
    %v1408 = vmul.f32 %v1405, %v1407
    %v1409 = vadd.f32 %v1405, %v1408
    %vm1410 = vweird.f32 %v1081
    %vm1411 = vweird.f32 %v1405
    %vm1412 = vmor %vm1410, %vm1411
    %v1413 = vsel %vm1412, %v1405, %v1409
    %v1414 = vand.u32 2147483647, %v1081
    %vm1415 = vcmp.eq.f32.partialorder %v1414, 8.507059e+37
    %v1416 = vand.u32 %v1081, 2147483648
    %v1417 = vor.u32 1.1754944e-38, %v1416
    %v1418 = vsel %vm1415, %v1417, %v1413
    %v1419 = vmul.f32 1.0, %v1418
    %v1420 = vrcp.pop %v1082
    %v1421 = vmul.f32 %v1082, %v1420
    %v1422 = vsub.f32 1.0, %v1421
    %v1423 = vmul.f32 %v1420, %v1422
    %v1424 = vadd.f32 %v1420, %v1423
    %vm1425 = vweird.f32 %v1082
    %vm1426 = vweird.f32 %v1420
    %vm1427 = vmor %vm1425, %vm1426
    %v1428 = vsel %vm1427, %v1420, %v1424
    %v1429 = vand.u32 2147483647, %v1082
    %vm1430 = vcmp.eq.f32.partialorder %v1429, 8.507059e+37
    %v1431 = vand.u32 %v1082, 2147483648
    %v1432 = vor.u32 1.1754944e-38, %v1431
    %v1433 = vsel %vm1430, %v1432, %v1428
    %v1434 = vmul.f32 1.0, %v1433
    %v1435 = vrcp.pop %v1083
    %v1436 = vmul.f32 %v1083, %v1435
    %v1437 = vsub.f32 1.0, %v1436
    %v1438 = vmul.f32 %v1435, %v1437
    %v1439 = vadd.f32 %v1435, %v1438
    %vm1440 = vweird.f32 %v1083
    %vm1441 = vweird.f32 %v1435
    %vm1442 = vmor %vm1440, %vm1441
    %v1443 = vsel %vm1442, %v1435, %v1439
    %v1444 = vand.u32 2147483647, %v1083
    %vm1445 = vcmp.eq.f32.partialorder %v1444, 8.507059e+37
    %v1446 = vand.u32 %v1083, 2147483648
    %v1447 = vor.u32 1.1754944e-38, %v1446
    %v1448 = vsel %vm1445, %v1447, %v1443
    %v1449 = vmul.f32 1.0, %v1448
    %v1450 = vrcp.pop %v1084
    %v1451 = vmul.f32 %v1084, %v1450
    %v1452 = vsub.f32 1.0, %v1451
    %v1453 = vmul.f32 %v1450, %v1452
    %v1454 = vadd.f32 %v1450, %v1453
    %vm1455 = vweird.f32 %v1084
    %vm1456 = vweird.f32 %v1450
    %vm1457 = vmor %vm1455, %vm1456
    %v1458 = vsel %vm1457, %v1450, %v1454
    %v1459 = vand.u32 2147483647, %v1084
    %vm1460 = vcmp.eq.f32.partialorder %v1459, 8.507059e+37
    %v1461 = vand.u32 %v1084, 2147483648
    %v1462 = vor.u32 1.1754944e-38, %v1461
    %v1463 = vsel %vm1460, %v1462, %v1458
    %v1464 = vmul.f32 1.0, %v1463
    %v1465 = vrcp.pop %v1085
    %v1466 = vmul.f32 %v1085, %v1465
    %v1467 = vsub.f32 1.0, %v1466
    %v1468 = vmul.f32 %v1465, %v1467
    %v1469 = vadd.f32 %v1465, %v1468
    %vm1470 = vweird.f32 %v1085
    %vm1471 = vweird.f32 %v1465
    %vm1472 = vmor %vm1470, %vm1471
    %v1473 = vsel %vm1472, %v1465, %v1469
    %v1474 = vand.u32 2147483647, %v1085
    %vm1475 = vcmp.eq.f32.partialorder %v1474, 8.507059e+37
    %v1476 = vand.u32 %v1085, 2147483648
    %v1477 = vor.u32 1.1754944e-38, %v1476
    %v1478 = vsel %vm1475, %v1477, %v1473
    %v1479 = vmul.f32 1.0, %v1478
    %v1480 = vrcp.pop %v1086
    %v1481 = vmul.f32 %v1086, %v1480
    %v1482 = vsub.f32 1.0, %v1481
    %v1483 = vmul.f32 %v1480, %v1482
    %v1484 = vadd.f32 %v1480, %v1483
    %vm1485 = vweird.f32 %v1086
    %vm1486 = vweird.f32 %v1480
    %vm1487 = vmor %vm1485, %vm1486
    %v1488 = vsel %vm1487, %v1480, %v1484
    %v1489 = vand.u32 2147483647, %v1086
    %vm1490 = vcmp.eq.f32.partialorder %v1489, 8.507059e+37
    %v1491 = vand.u32 %v1086, 2147483648
    %v1492 = vor.u32 1.1754944e-38, %v1491
    %v1493 = vsel %vm1490, %v1492, %v1488
    %v1494 = vmul.f32 1.0, %v1493
    %v1495 = vrcp.pop %v1087
    %v1496 = vmul.f32 %v1087, %v1495
    %v1497 = vsub.f32 1.0, %v1496
    %v1498 = vmul.f32 %v1495, %v1497
    %v1499 = vadd.f32 %v1495, %v1498
    %vm1500 = vweird.f32 %v1087
    %vm1501 = vweird.f32 %v1495
    %vm1502 = vmor %vm1500, %vm1501
    %v1503 = vsel %vm1502, %v1495, %v1499
    %v1504 = vand.u32 2147483647, %v1087
    %vm1505 = vcmp.eq.f32.partialorder %v1504, 8.507059e+37
    %v1506 = vand.u32 %v1087, 2147483648
    %v1507 = vor.u32 1.1754944e-38, %v1506
    %v1508 = vsel %vm1505, %v1507, %v1503
    %v1509 = vmul.f32 1.0, %v1508
    %v1510 = vrcp.pop %v1088
    %v1511 = vmul.f32 %v1088, %v1510
    %v1512 = vsub.f32 1.0, %v1511
    %v1513 = vmul.f32 %v1510, %v1512
    %v1514 = vadd.f32 %v1510, %v1513
    %vm1515 = vweird.f32 %v1088
    %vm1516 = vweird.f32 %v1510
    %vm1517 = vmor %vm1515, %vm1516
    %v1518 = vsel %vm1517, %v1510, %v1514
    %v1519 = vand.u32 2147483647, %v1088
    %vm1520 = vcmp.eq.f32.partialorder %v1519, 8.507059e+37
    %v1521 = vand.u32 %v1088, 2147483648
    %v1522 = vor.u32 1.1754944e-38, %v1521
    %v1523 = vsel %vm1520, %v1522, %v1518
    %v1524 = vmul.f32 1.0, %v1523
    %v1525 = vrcp.pop %v1089
    %v1526 = vmul.f32 %v1089, %v1525
    %v1527 = vsub.f32 1.0, %v1526
    %v1528 = vmul.f32 %v1525, %v1527
    %v1529 = vadd.f32 %v1525, %v1528
    %vm1530 = vweird.f32 %v1089
    %vm1531 = vweird.f32 %v1525
    %vm1532 = vmor %vm1530, %vm1531
    %v1533 = vsel %vm1532, %v1525, %v1529
    %v1534 = vand.u32 2147483647, %v1089
    %vm1535 = vcmp.eq.f32.partialorder %v1534, 8.507059e+37
    %v1536 = vand.u32 %v1089, 2147483648
    %v1537 = vor.u32 1.1754944e-38, %v1536
    %v1538 = vsel %vm1535, %v1537, %v1533
    %v1539 = vmul.f32 1.0, %v1538
    %1570 = vrot.lane.b32.xlu0 %v1104, 96
    %v1571 = vpop.permute.xlu0 %1570
    %1572 = vrot.lane.b32.xlu0 %v1119, 96
    %v1573 = vpop.permute.xlu0 %1572
    %1574 = vrot.lane.b32.xlu0 %v1134, 96
    %v1575 = vpop.permute.xlu0 %1574
    %1576 = vrot.lane.b32.xlu0 %v1149, 96
    %v1577 = vpop.permute.xlu0 %1576
    %1578 = vrot.lane.b32.xlu0 %v1164, 96
    %v1579 = vpop.permute.xlu0 %1578
    %1580 = vrot.lane.b32.xlu0 %v1179, 96
    %v1581 = vpop.permute.xlu0 %1580
    %1582 = vrot.lane.b32.xlu0 %v1194, 96
    %v1583 = vpop.permute.xlu0 %1582
    %1584 = vrot.lane.b32.xlu0 %v1209, 96
    %v1585 = vpop.permute.xlu0 %1584
    %1586 = vrot.lane.b32.xlu0 %v1224, 96
    %v1587 = vpop.permute.xlu0 %1586
    %1588 = vrot.lane.b32.xlu0 %v1239, 96
    %v1589 = vpop.permute.xlu0 %1588
    %1590 = vrot.lane.b32.xlu0 %v1254, 96
    %v1591 = vpop.permute.xlu0 %1590
    %1592 = vrot.lane.b32.xlu0 %v1269, 96
    %v1593 = vpop.permute.xlu0 %1592
    %1594 = vrot.lane.b32.xlu0 %v1284, 96
    %v1595 = vpop.permute.xlu0 %1594
    %1596 = vrot.lane.b32.xlu0 %v1299, 96
    %v1597 = vpop.permute.xlu0 %1596
    %1598 = vrot.lane.b32.xlu0 %v1314, 96
    %v1599 = vpop.permute.xlu0 %1598
    %1600 = vrot.lane.b32.xlu0 %v1329, 96
    %v1601 = vpop.permute.xlu0 %1600
    %1602 = vrot.lane.b32.xlu0 %v1344, 96
    %v1603 = vpop.permute.xlu0 %1602
    %1604 = vrot.lane.b32.xlu0 %v1359, 96
    %v1605 = vpop.permute.xlu0 %1604
    %1606 = vrot.lane.b32.xlu0 %v1374, 96
    %v1607 = vpop.permute.xlu0 %1606
    %1608 = vrot.lane.b32.xlu0 %v1389, 96
    %v1609 = vpop.permute.xlu0 %1608
    %1610 = vrot.lane.b32.xlu0 %v1404, 96
    %v1611 = vpop.permute.xlu0 %1610
    %1612 = vrot.lane.b32.xlu0 %v1419, 96
    %v1613 = vpop.permute.xlu0 %1612
    %1614 = vrot.lane.b32.xlu0 %v1434, 96
    %v1615 = vpop.permute.xlu0 %1614
    %1616 = vrot.lane.b32.xlu0 %v1449, 96
    %v1617 = vpop.permute.xlu0 %1616
    %1618 = vrot.lane.b32.xlu0 %v1464, 96
    %v1619 = vpop.permute.xlu0 %1618
    %1620 = vrot.lane.b32.xlu0 %v1479, 96
    %v1621 = vpop.permute.xlu0 %1620
    %1622 = vrot.lane.b32.xlu0 %v1494, 96
    %v1623 = vpop.permute.xlu0 %1622
    %1624 = vrot.lane.b32.xlu0 %v1509, 96
    %v1625 = vpop.permute.xlu0 %1624
    %1626 = vrot.lane.b32.xlu0 %v1524, 96
    %v1627 = vpop.permute.xlu0 %1626
    %1628 = vrot.lane.b32.xlu0 %v1539, 96
    %v1629 = vpop.permute.xlu0 %1628
    %v1660 = vmul.f32 %v940, %v1571
    %v1661 = vmul.f32 %v941, %v1573
    %v1662 = vmul.f32 %v942, %v1575
    %v1663 = vmul.f32 %v943, %v1577
    %v1664 = vmul.f32 %v944, %v1579
    %v1665 = vmul.f32 %v945, %v1581
    %v1666 = vmul.f32 %v946, %v1583
    %v1667 = vmul.f32 %v947, %v1585
    %v1668 = vmul.f32 %v948, %v1587
    %v1669 = vmul.f32 %v949, %v1589
    %v1670 = vmul.f32 %v950, %v1591
    %v1671 = vmul.f32 %v951, %v1593
    %v1672 = vmul.f32 %v952, %v1595
    %v1673 = vmul.f32 %v953, %v1597
    %v1674 = vmul.f32 %v954, %v1599
    %v1675 = vmul.f32 %v955, %v1601
    %v1676 = vmul.f32 %v956, %v1603
    %v1677 = vmul.f32 %v957, %v1605
    %v1678 = vmul.f32 %v958, %v1607
    %v1679 = vmul.f32 %v959, %v1609
    %v1680 = vmul.f32 %v960, %v1611
    %v1681 = vmul.f32 %v961, %v1613
    %v1682 = vmul.f32 %v962, %v1615
    %v1683 = vmul.f32 %v963, %v1617
    %v1684 = vmul.f32 %v964, %v1619
    %v1685 = vmul.f32 %v965, %v1621
    %v1686 = vmul.f32 %v966, %v1623
    %v1687 = vmul.f32 %v967, %v1625
    %v1688 = vmul.f32 %v968, %v1627
    %v1689 = vmul.f32 %v969, %v1629
    %v1690 = vadd.f32 %v1688, 0.0
    %v1691 = vadd.f32 %v1689, 0.0
    %v1692 = vadd.f32 %v1660, %v515
    %v1693 = vadd.f32 %v1661, %v516
    %v1694 = vadd.f32 %v1662, %v517
    %v1695 = vadd.f32 %v1663, %v518
    %v1696 = vadd.f32 %v1664, %v519
    %v1697 = vadd.f32 %v1665, %v520
    %v1698 = vadd.f32 %v1666, %v521
    %v1699 = vadd.f32 %v1667, %v522
    %v1700 = vadd.f32 %v1668, %v523
    %v1701 = vadd.f32 %v1669, %v524
    %v1702 = vadd.f32 %v1670, %v525
    %v1703 = vadd.f32 %v1671, %v526
    %v1704 = vadd.f32 %v1672, %v527
    %v1705 = vadd.f32 %v1673, %v528
    %v1706 = vadd.f32 %v1674, %v529
    %v1707 = vadd.f32 %v1675, %v530
    %v1708 = vadd.f32 %v1676, %v531
    %v1709 = vadd.f32 %v1677, %v532
    %v1710 = vadd.f32 %v1678, %v533
    %v1711 = vadd.f32 %v1679, %v534
    %v1712 = vadd.f32 %v1680, %v535
    %v1713 = vadd.f32 %v1681, %v536
    %v1714 = vadd.f32 %v1682, %v537
    %v1715 = vadd.f32 %v1683, %v538
    %v1716 = vadd.f32 %v1684, %v539
    %v1717 = vadd.f32 %v1685, %v540
    %v1718 = vadd.f32 %v1686, %v541
    %v1719 = vadd.f32 %v1687, %v542
    %v1720 = vadd.f32 %v1688, %v543
    %v1721 = vadd.f32 %v1689, %v544
    %v1722 = vsel %vm672, %v1692, 0.0
    %v1723 = vsel %vm672, %v1693, 0.0
    %v1724 = vadd.f32 %v1722, %v1723
    %v1725 = vsel %vm672, %v1694, 0.0
    %v1726 = vadd.f32 %v1724, %v1725
    %v1727 = vsel %vm672, %v1695, 0.0
    %v1728 = vadd.f32 %v1726, %v1727
    %v1729 = vsel %vm672, %v1696, 0.0
    %v1730 = vadd.f32 %v1728, %v1729
    %v1731 = vsel %vm672, %v1697, 0.0
    %v1732 = vadd.f32 %v1730, %v1731
    %v1733 = vsel %vm672, %v1698, 0.0
    %v1734 = vadd.f32 %v1732, %v1733
    %v1735 = vsel %vm672, %v1699, 0.0
    %v1736 = vadd.f32 %v1734, %v1735
    %v1737 = vsel %vm672, %v1700, 0.0
    %v1738 = vadd.f32 %v1736, %v1737
    %v1739 = vsel %vm672, %v1701, 0.0
    %v1740 = vadd.f32 %v1738, %v1739
    %v1741 = vsel %vm672, %v1702, 0.0
    %v1742 = vadd.f32 %v1740, %v1741
    %v1743 = vsel %vm672, %v1703, 0.0
    %v1744 = vadd.f32 %v1742, %v1743
    %v1745 = vsel %vm672, %v1704, 0.0
    %v1746 = vadd.f32 %v1744, %v1745
    %v1747 = vsel %vm672, %v1705, 0.0
    %v1748 = vadd.f32 %v1746, %v1747
    %v1749 = vsel %vm672, %v1706, 0.0
    %v1750 = vadd.f32 %v1748, %v1749
    %v1751 = vsel %vm672, %v1707, 0.0
    %v1752 = vadd.f32 %v1750, %v1751
    %v1753 = vsel %vm672, %v1708, 0.0
    %v1754 = vadd.f32 %v1752, %v1753
    %v1755 = vsel %vm672, %v1709, 0.0
    %v1756 = vadd.f32 %v1754, %v1755
    %v1757 = vsel %vm672, %v1710, 0.0
    %v1758 = vadd.f32 %v1756, %v1757
    %v1759 = vsel %vm672, %v1711, 0.0
    %v1760 = vadd.f32 %v1758, %v1759
    %v1761 = vsel %vm672, %v1712, 0.0
    %v1762 = vadd.f32 %v1760, %v1761
    %v1763 = vsel %vm672, %v1713, 0.0
    %v1764 = vadd.f32 %v1762, %v1763
    %v1765 = vsel %vm672, %v1714, 0.0
    %v1766 = vadd.f32 %v1764, %v1765
    %v1767 = vsel %vm672, %v1715, 0.0
    %v1768 = vadd.f32 %v1766, %v1767
    %v1769 = vsel %vm672, %v1716, 0.0
    %v1770 = vadd.f32 %v1768, %v1769
    %v1771 = vsel %vm672, %v1717, 0.0
    %v1772 = vadd.f32 %v1770, %v1771
    %v1773 = vsel %vm672, %v1718, 0.0
    %v1774 = vadd.f32 %v1772, %v1773
    %v1775 = vsel %vm672, %v1719, 0.0
    %v1776 = vadd.f32 %v1774, %v1775
    %v1777 = vsel %vm672, %v1720, 0.0
    %v1778 = vadd.f32 %v1776, %v1777
    %v1779 = vsel %vm672, %v1721, 0.0
    %v1780 = vadd.f32 %v1778, %v1779
    %v1781 = vrot.slane %v1780, 4
    %v1782 = vadd.f32 %v1780, %v1781
    %v1783 = vrot.slane %v1782, 2
    %v1784 = vadd.f32 %v1782, %v1783
    %v1785 = vrot.slane %v1784, 1
    %v1786 = vadd.f32 %v1784, %v1785
    %v1787 = vmul.f32 %v1692, %v1692
    %v1788 = vmul.f32 %v1693, %v1693
    %v1789 = vmul.f32 %v1694, %v1694
    %v1790 = vmul.f32 %v1695, %v1695
    %v1791 = vmul.f32 %v1696, %v1696
    %v1792 = vmul.f32 %v1697, %v1697
    %v1793 = vmul.f32 %v1698, %v1698
    %v1794 = vmul.f32 %v1699, %v1699
    %v1795 = vmul.f32 %v1700, %v1700
    %v1796 = vmul.f32 %v1701, %v1701
    %v1797 = vmul.f32 %v1702, %v1702
    %v1798 = vmul.f32 %v1703, %v1703
    %v1799 = vmul.f32 %v1704, %v1704
    %v1800 = vmul.f32 %v1705, %v1705
    %v1801 = vmul.f32 %v1706, %v1706
    %v1802 = vmul.f32 %v1707, %v1707
    %v1803 = vmul.f32 %v1708, %v1708
    %v1804 = vmul.f32 %v1709, %v1709
    %v1805 = vmul.f32 %v1710, %v1710
    %v1806 = vmul.f32 %v1711, %v1711
    %v1807 = vmul.f32 %v1712, %v1712
    %v1808 = vmul.f32 %v1713, %v1713
    %v1809 = vmul.f32 %v1714, %v1714
    %v1810 = vmul.f32 %v1715, %v1715
    %v1811 = vmul.f32 %v1716, %v1716
    %v1812 = vmul.f32 %v1717, %v1717
    %v1813 = vmul.f32 %v1718, %v1718
    %v1814 = vmul.f32 %v1719, %v1719
    %v1815 = vmul.f32 %v1720, %v1720
    %v1816 = vmul.f32 %v1721, %v1721
    %v1817 = vsel %vm672, %v1787, 0.0
    %v1818 = vsel %vm672, %v1788, 0.0
    %v1819 = vadd.f32 %v1817, %v1818
    %v1820 = vsel %vm672, %v1789, 0.0
    %v1821 = vadd.f32 %v1819, %v1820
    %v1822 = vsel %vm672, %v1790, 0.0
    %v1823 = vadd.f32 %v1821, %v1822
    %v1824 = vsel %vm672, %v1791, 0.0
    %v1825 = vadd.f32 %v1823, %v1824
    %v1826 = vsel %vm672, %v1792, 0.0
    %v1827 = vadd.f32 %v1825, %v1826
    %v1828 = vsel %vm672, %v1793, 0.0
    %v1829 = vadd.f32 %v1827, %v1828
    %v1830 = vsel %vm672, %v1794, 0.0
    %v1831 = vadd.f32 %v1829, %v1830
    %v1832 = vsel %vm672, %v1795, 0.0
    %v1833 = vadd.f32 %v1831, %v1832
    %v1834 = vsel %vm672, %v1796, 0.0
    %v1835 = vadd.f32 %v1833, %v1834
    %v1836 = vsel %vm672, %v1797, 0.0
    %v1837 = vadd.f32 %v1835, %v1836
    %v1838 = vsel %vm672, %v1798, 0.0
    %v1839 = vadd.f32 %v1837, %v1838
    %v1840 = vsel %vm672, %v1799, 0.0
    %v1841 = vadd.f32 %v1839, %v1840
    %v1842 = vsel %vm672, %v1800, 0.0
    %v1843 = vadd.f32 %v1841, %v1842
    %v1844 = vsel %vm672, %v1801, 0.0
    %v1845 = vadd.f32 %v1843, %v1844
    %v1846 = vsel %vm672, %v1802, 0.0
    %v1847 = vadd.f32 %v1845, %v1846
    %v1848 = vsel %vm672, %v1803, 0.0
    %v1849 = vadd.f32 %v1847, %v1848
    %v1850 = vsel %vm672, %v1804, 0.0
    %v1851 = vadd.f32 %v1849, %v1850
    %v1852 = vsel %vm672, %v1805, 0.0
    %v1853 = vadd.f32 %v1851, %v1852
    %v1854 = vsel %vm672, %v1806, 0.0
    %v1855 = vadd.f32 %v1853, %v1854
    %v1856 = vsel %vm672, %v1807, 0.0
    %v1857 = vadd.f32 %v1855, %v1856
    %v1858 = vsel %vm672, %v1808, 0.0
    %v1859 = vadd.f32 %v1857, %v1858
    %v1860 = vsel %vm672, %v1809, 0.0
    %v1861 = vadd.f32 %v1859, %v1860
    %v1862 = vsel %vm672, %v1810, 0.0
    %v1863 = vadd.f32 %v1861, %v1862
    %v1864 = vsel %vm672, %v1811, 0.0
    %v1865 = vadd.f32 %v1863, %v1864
    %v1866 = vsel %vm672, %v1812, 0.0
    %v1867 = vadd.f32 %v1865, %v1866
    %v1868 = vsel %vm672, %v1813, 0.0
    %v1869 = vadd.f32 %v1867, %v1868
    %v1870 = vsel %vm672, %v1814, 0.0
    %v1871 = vadd.f32 %v1869, %v1870
    %v1872 = vsel %vm672, %v1815, 0.0
    %v1873 = vadd.f32 %v1871, %v1872
    %v1874 = vsel %vm672, %v1816, 0.0
    %v1875 = vadd.f32 %v1873, %v1874
    %v1876 = vrot.slane %v1875, 4
    %v1877 = vadd.f32 %v1875, %v1876
    %v1878 = vrot.slane %v1877, 2
    %v1879 = vadd.f32 %v1877, %v1878
    %v1880 = vrot.slane %v1879, 1
    %v1881 = vadd.f32 %v1879, %v1880
    %v1882 = vmul.f32 %v1786, 0.004166667
    %v1883 = vmul.f32 %v1881, 0.004166667
    %v1884 = vmul.f32 %v1882, %v1882
    %v1885 = vsub.f32 %v1883, %v1884
    %v1886 = vadd.f32 %v1885, 1e-05
    %v1887 = vrsqrt.pop %v1886
    %v1888 = vmul.f32 %v1887, %v1886
    %v1889 = vmul.f32 %v1888, %v1887
    %v1890 = vmul.f32 0.5, %v1889
    %v1891 = vsub.f32 1.5, %v1890
    %v1892 = vmul.f32 %v1887, %v1891
    %vm1893 = vweird.f32 %v1886
    %vm1894 = vweird.f32 %v1887
    %vm1895 = vmor %vm1893, %vm1894
    %v1896 = vsel %vm1895, %v1887, %v1892
    %v1897 = vsub.f32 %v1692, %v1882
    %v1898 = vsub.f32 %v1693, %v1882
    %v1899 = vsub.f32 %v1694, %v1882
    %v1900 = vsub.f32 %v1695, %v1882
    %v1901 = vsub.f32 %v1696, %v1882
    %v1902 = vsub.f32 %v1697, %v1882
    %v1903 = vsub.f32 %v1698, %v1882
    %v1904 = vsub.f32 %v1699, %v1882
    %v1905 = vsub.f32 %v1700, %v1882
    %v1906 = vsub.f32 %v1701, %v1882
    %v1907 = vsub.f32 %v1702, %v1882
    %v1908 = vsub.f32 %v1703, %v1882
    %v1909 = vsub.f32 %v1704, %v1882
    %v1910 = vsub.f32 %v1705, %v1882
    %v1911 = vsub.f32 %v1706, %v1882
    %v1912 = vsub.f32 %v1707, %v1882
    %v1913 = vsub.f32 %v1708, %v1882
    %v1914 = vsub.f32 %v1709, %v1882
    %v1915 = vsub.f32 %v1710, %v1882
    %v1916 = vsub.f32 %v1711, %v1882
    %v1917 = vsub.f32 %v1712, %v1882
    %v1918 = vsub.f32 %v1713, %v1882
    %v1919 = vsub.f32 %v1714, %v1882
    %v1920 = vsub.f32 %v1715, %v1882
    %v1921 = vsub.f32 %v1716, %v1882
    %v1922 = vsub.f32 %v1717, %v1882
    %v1923 = vsub.f32 %v1718, %v1882
    %v1924 = vsub.f32 %v1719, %v1882
    %v1925 = vsub.f32 %v1720, %v1882
    %v1926 = vsub.f32 %v1721, %v1882
    %v1927 = vld [vmem:[#allocation2] sm:$0x1]
    %v1928 = vmul.f32 %v1896, %v1927
    %v1929 = vperm.slane %v1928, 0
    %v1930 = vmul.f32 %v1897, %v1929
    %v1931 = vmul.f32 %v1898, %v1929
    %v1932 = vmul.f32 %v1899, %v1929
    %v1933 = vmul.f32 %v1900, %v1929
    %v1934 = vmul.f32 %v1901, %v1929
    %v1935 = vmul.f32 %v1902, %v1929
    %v1936 = vmul.f32 %v1903, %v1929
    %v1937 = vmul.f32 %v1904, %v1929
    %v1938 = vmul.f32 %v1905, %v1929
    %v1939 = vmul.f32 %v1906, %v1929
    %v1940 = vmul.f32 %v1907, %v1929
    %v1941 = vmul.f32 %v1908, %v1929
    %v1942 = vmul.f32 %v1909, %v1929
    %v1943 = vmul.f32 %v1910, %v1929
    %v1944 = vmul.f32 %v1911, %v1929
    %v1945 = vmul.f32 %v1912, %v1929
    %v1946 = vmul.f32 %v1913, %v1929
    %v1947 = vmul.f32 %v1914, %v1929
    %v1948 = vmul.f32 %v1915, %v1929
    %v1949 = vmul.f32 %v1916, %v1929
    %v1950 = vmul.f32 %v1917, %v1929
    %v1951 = vmul.f32 %v1918, %v1929
    %v1952 = vmul.f32 %v1919, %v1929
    %v1953 = vmul.f32 %v1920, %v1929
    %v1954 = vmul.f32 %v1921, %v1929
    %v1955 = vmul.f32 %v1922, %v1929
    %v1956 = vmul.f32 %v1923, %v1929
    %v1957 = vmul.f32 %v1924, %v1929
    %v1958 = vmul.f32 %v1925, %v1929
    %v1959 = vmul.f32 %v1926, %v1929
    %v1960 = vld [vmem:[#allocation5] sm:$0x1]
    %v1962 = vperm.slane %v1960, 0
    %v1964 = vadd.f32 %v1930, %v1962
    %v1965 = vadd.f32 %v1931, %v1962
    %v1966 = vadd.f32 %v1932, %v1962
    %v1967 = vadd.f32 %v1933, %v1962
    %v1968 = vadd.f32 %v1934, %v1962
    %v1969 = vadd.f32 %v1935, %v1962
    %v1970 = vadd.f32 %v1936, %v1962
    %v1971 = vadd.f32 %v1937, %v1962
    %v1972 = vadd.f32 %v1938, %v1962
    %v1973 = vadd.f32 %v1939, %v1962
    %v1974 = vadd.f32 %v1940, %v1962
    %v1975 = vadd.f32 %v1941, %v1962
    %v1976 = vadd.f32 %v1942, %v1962
    %v1977 = vadd.f32 %v1943, %v1962
    %v1978 = vadd.f32 %v1944, %v1962
    %v1979 = vadd.f32 %v1945, %v1962
    %v1980 = vadd.f32 %v1946, %v1962
    %v1981 = vadd.f32 %v1947, %v1962
    %v1982 = vadd.f32 %v1948, %v1962
    %v1983 = vadd.f32 %v1949, %v1962
    %v1984 = vadd.f32 %v1950, %v1962
    %v1985 = vadd.f32 %v1951, %v1962
    %v1986 = vadd.f32 %v1952, %v1962
    %v1987 = vadd.f32 %v1953, %v1962
    %v1988 = vadd.f32 %v1954, %v1962
    %v1989 = vadd.f32 %v1955, %v1962
    %v1990 = vadd.f32 %v1956, %v1962
    %v1991 = vadd.f32 %v1957, %v1962
    %v1992 = vadd.f32 %v1958, %v1962
    %v1993 = vadd.f32 %v1959, %v1962
    %v1994 = vpack.c.bf16 %v1964, %v1964
    %v1995 = vpack.c.bf16 %v1965, %v1965
    %v1996 = vpack.c.bf16 %v1966, %v1966
    %v1997 = vpack.c.bf16 %v1967, %v1967
    %v1998 = vpack.c.bf16 %v1968, %v1968
    %v1999 = vpack.c.bf16 %v1969, %v1969
    %v2000 = vpack.c.bf16 %v1970, %v1970
    %v2001 = vpack.c.bf16 %v1971, %v1971
    %v2002 = vpack.c.bf16 %v1972, %v1972
    %v2003 = vpack.c.bf16 %v1973, %v1973
    %v2004 = vpack.c.bf16 %v1974, %v1974
    %v2005 = vpack.c.bf16 %v1975, %v1975
    %v2006 = vpack.c.bf16 %v1976, %v1976
    %v2007 = vpack.c.bf16 %v1977, %v1977
    %v2008 = vpack.c.bf16 %v1978, %v1978
    %v2009 = vpack.c.bf16 %v1979, %v1979
    %v2010 = vpack.c.bf16 %v1980, %v1980
    %v2011 = vpack.c.bf16 %v1981, %v1981
    %v2012 = vpack.c.bf16 %v1982, %v1982
    %v2013 = vpack.c.bf16 %v1983, %v1983
    %v2014 = vpack.c.bf16 %v1984, %v1984
    %v2015 = vpack.c.bf16 %v1985, %v1985
    %v2016 = vpack.c.bf16 %v1986, %v1986
    %v2017 = vpack.c.bf16 %v1987, %v1987
    %v2018 = vpack.c.bf16 %v1988, %v1988
    %v2019 = vpack.c.bf16 %v1989, %v1989
    %v2020 = vpack.c.bf16 %v1990, %v1990
    %v2021 = vpack.c.bf16 %v1991, %v1991
    %v2022 = vpack.c.bf16 %v1992, %v1992
    %v2023 = vpack.c.bf16 %v1993, %v1993
    %s2024 = scalar_lea.vmem %s3, 16
    %v2025 = vld [vmem:[%s2024] sm:$0xf]
    %v2026 = vld [vmem:[%s2024 + $0x4] sm:$0xf]
    %v2027 = vld [vmem:[%s2024 + $0x8] sm:$0xf]
    %v2028 = vld [vmem:[%s2024 + $0xc] sm:$0xf]
    %s2029 = scalar_lea.vmem %s4, 16
    %v2030 = vld [vmem:[%s2029] sm:$0xf]
    %v2031 = vld [vmem:[%s2029 + $0x4] sm:$0xf]
    %v2032 = vld [vmem:[%s2029 + $0x8] sm:$0xf]
    %v2033 = vld [vmem:[%s2029 + $0xc] sm:$0xf]
    %v2060 = vunpack.c.l.b16 %v1998
    %v2061 = vunpack.c.l.b16 %v1999
    %v2062 = vunpack.c.l.b16 %v2000
    %v2063 = vunpack.c.l.b16 %v2001
    %v2064 = vunpack.c.l.b16 %v2002
    %v2065 = vunpack.c.l.b16 %v2003
    %v2066 = vunpack.c.l.b16 %v2004
    %v2067 = vunpack.c.l.b16 %v2005
    %v2068 = vunpack.c.l.b16 %v2006
    %v2069 = vunpack.c.l.b16 %v2007
    %v2070 = vunpack.c.l.b16 %v2008
    %v2071 = vunpack.c.l.b16 %v2009
    %v2072 = vunpack.c.l.b16 %v2010
    %v2073 = vunpack.c.l.b16 %v2011
    %v2074 = vunpack.c.l.b16 %v2012
    %v2075 = vunpack.c.l.b16 %v2013
    %v2076 = vunpack.c.l.b16 %v2014
    %v2077 = vunpack.c.l.b16 %v2015
    %v2078 = vunpack.c.l.b16 %v2016
    %v2079 = vunpack.c.l.b16 %v2017
    %v2080 = vunpack.c.l.b16 %v2018
    %v2081 = vunpack.c.l.b16 %v2019
    %v2082 = vunpack.c.l.b16 %v2020
    %v2083 = vunpack.c.l.b16 %v2021
    %v2084 = vunpack.c.l.b16 %v2022
    %v2085 = vunpack.c.l.b16 %v2023
    %v2086 = vpack.c.b16 %v2061, %v2060
    %v2087 = vpack.c.b16 %v2063, %v2062
    %v2088 = vpack.c.b16 %v2065, %v2064
    %v2089 = vpack.c.b16 %v2067, %v2066
    %v2090 = vpack.c.b16 %v2069, %v2068
    %v2091 = vpack.c.b16 %v2071, %v2070
    %v2092 = vpack.c.b16 %v2073, %v2072
    %v2093 = vpack.c.b16 %v2075, %v2074
    %v2094 = vpack.c.b16 %v2077, %v2076
    %v2095 = vpack.c.b16 %v2079, %v2078
    %v2096 = vpack.c.b16 %v2081, %v2080
    %v2097 = vpack.c.b16 %v2083, %v2082
    %v2098 = vpack.c.b16 %v2085, %v2084
    %v2103 = vunpack.c.l.b16 %v2030
    %v2104 = vunpack.c.l.b16 %v2031
    %v2105 = vunpack.c.l.b16 %v2032
    %v2106 = vunpack.c.l.b16 %v2033
    %v2107 = vpack.c.b16 %v2104, %v2103
    %v2108 = vpack.c.b16 %v2106, %v2105
    %v2112 = vsel %vm672, %v2086, 0
    %v2115 = vsel %vm672, %v2087, 0
    %v2118 = vsel %vm672, %v2088, 0
    %v2121 = vsel %vm672, %v2089, 0
    %v2124 = vsel %vm672, %v2090, 0
    %v2127 = vsel %vm672, %v2091, 0
    %v2130 = vsel %vm672, %v2092, 0
    %v2133 = vsel %vm672, %v2093, 0
    %v2136 = vsel %vm672, %v2094, 0
    %v2139 = vsel %vm672, %v2095, 0
    %v2142 = vsel %vm672, %v2096, 0
    %v2145 = vsel %vm672, %v2097, 0
    %v2148 = vsel %vm672, %v2098, 0
    %2150 = vmatpush.bf16.msra.mxu0 0
    %2151 = vmatpush.bf16.msra.mxu0 0
    %2152 = vmatpush.bf16.msra.mxu0 0
    %2153 = vmatpush.bf16.msra.mxu0 0
    %2154 = vmatpush.bf16.msra.mxu0 0
    %2155 = vmatpush.bf16.msra.mxu0 0
    %2156 = vmatpush.bf16.msra.mxu0 %v2108
    %2157 = vmatpush.bf16.msra.mxu0 %v2107
    %2158 = vmatmul.bf16.gmra.mxu0 %v2112
    %v2159 = vpop.f32.mrf.mxu0
    %v2160 = vadd.f32 0.0, %v2159
    %v2161 = vpop.f32.mrf.mxu0
    %v2162 = vadd.f32 0.0, %v2161
    %2163 = vmatmul.bf16.gmra.mxu0 %v2115
    %v2164 = vpop.f32.mrf.mxu0
    %v2165 = vadd.f32 0.0, %v2164
    %v2166 = vpop.f32.mrf.mxu0
    %v2167 = vadd.f32 0.0, %v2166
    %2168 = vmatmul.bf16.gmra.mxu0 %v2118
    %v2169 = vpop.f32.mrf.mxu0
    %v2170 = vadd.f32 0.0, %v2169
    %v2171 = vpop.f32.mrf.mxu0
    %v2172 = vadd.f32 0.0, %v2171
    %2173 = vmatmul.bf16.gmra.mxu0 %v2121
    %v2174 = vpop.f32.mrf.mxu0
    %v2175 = vadd.f32 0.0, %v2174
    %v2176 = vpop.f32.mrf.mxu0
    %v2177 = vadd.f32 0.0, %v2176
    %2178 = vmatmul.bf16.gmra.mxu0 %v2124
    %v2179 = vpop.f32.mrf.mxu0
    %v2180 = vadd.f32 0.0, %v2179
    %v2181 = vpop.f32.mrf.mxu0
    %v2182 = vadd.f32 0.0, %v2181
    %2183 = vmatmul.bf16.gmra.mxu0 %v2127
    %v2184 = vpop.f32.mrf.mxu0
    %v2185 = vadd.f32 0.0, %v2184
    %v2186 = vpop.f32.mrf.mxu0
    %v2187 = vadd.f32 0.0, %v2186
    %2188 = vmatmul.bf16.gmra.mxu0 %v2130
    %v2189 = vpop.f32.mrf.mxu0
    %v2190 = vadd.f32 0.0, %v2189
    %v2191 = vpop.f32.mrf.mxu0
    %v2192 = vadd.f32 0.0, %v2191
    %2193 = vmatmul.bf16.gmra.mxu0 %v2133
    %v2194 = vpop.f32.mrf.mxu0
    %v2195 = vadd.f32 0.0, %v2194
    %v2196 = vpop.f32.mrf.mxu0
    %v2197 = vadd.f32 0.0, %v2196
    %2198 = vmatmul.bf16.gmra.mxu0 %v2136
    %v2199 = vpop.f32.mrf.mxu0
    %v2200 = vadd.f32 0.0, %v2199
    %v2201 = vpop.f32.mrf.mxu0
    %v2202 = vadd.f32 0.0, %v2201
    %2203 = vmatmul.bf16.gmra.mxu0 %v2139
    %v2204 = vpop.f32.mrf.mxu0
    %v2205 = vadd.f32 0.0, %v2204
    %v2206 = vpop.f32.mrf.mxu0
    %v2207 = vadd.f32 0.0, %v2206
    %2208 = vmatmul.bf16.gmra.mxu0 %v2142
    %v2209 = vpop.f32.mrf.mxu0
    %v2210 = vadd.f32 0.0, %v2209
    %v2211 = vpop.f32.mrf.mxu0
    %v2212 = vadd.f32 0.0, %v2211
    %2213 = vmatmul.bf16.gmra.mxu0 %v2145
    %v2214 = vpop.f32.mrf.mxu0
    %v2215 = vadd.f32 0.0, %v2214
    %v2216 = vpop.f32.mrf.mxu0
    %v2217 = vadd.f32 0.0, %v2216
    %2218 = vmatmul.bf16.gmra.mxu0 %v2148
    %v2219 = vpop.f32.mrf.mxu0
    %v2220 = vadd.f32 0.0, %v2219
    %v2221 = vpop.f32.mrf.mxu0
    %v2222 = vadd.f32 0.0, %v2221
    %2223 = vdwg.mxu0
    %v2228 = vunpack.c.l.b16 %v1994
    %v2229 = vunpack.c.l.b16 %v1995
    %v2230 = vunpack.c.l.b16 %v1996
    %v2231 = vunpack.c.l.b16 %v1997
    %v2232 = vpack.c.b16 %v2229, %v2228
    %v2233 = vpack.c.b16 %v2231, %v2230
    %v2238 = vunpack.c.l.b16 %v2025
    %v2239 = vunpack.c.l.b16 %v2026
    %v2240 = vunpack.c.l.b16 %v2027
    %v2241 = vunpack.c.l.b16 %v2028
    %v2242 = vpack.c.b16 %v2239, %v2238
    %v2243 = vpack.c.b16 %v2241, %v2240
    %v2247 = vsel %vm672, %v2232, 0
    %v2250 = vsel %vm672, %v2233, 0
    %2252 = vmatpush.bf16.msra.mxu0 0
    %2253 = vmatpush.bf16.msra.mxu0 0
    %2254 = vmatpush.bf16.msra.mxu0 0
    %2255 = vmatpush.bf16.msra.mxu0 0
    %2256 = vmatpush.bf16.msra.mxu0 0
    %2257 = vmatpush.bf16.msra.mxu0 0
    %2258 = vmatpush.bf16.msra.mxu0 %v2243
    %2259 = vmatpush.bf16.msra.mxu0 %v2242
    %2260 = vmatmul.bf16.gmra.mxu0 %v2247
    %v2261 = vpop.f32.mrf.mxu0
    %v2262 = vadd.f32 %v2160, %v2261
    %v2263 = vpop.f32.mrf.mxu0
    %v2264 = vadd.f32 %v2162, %v2263
    %2265 = vmatmul.bf16.gmra.mxu0 %v2250
    %v2266 = vpop.f32.mrf.mxu0
    %v2267 = vadd.f32 %v2165, %v2266
    %v2268 = vpop.f32.mrf.mxu0
    %v2269 = vadd.f32 %v2167, %v2268
    %2270 = vmatmul.bf16.gmra.mxu0 %v2112
    %v2271 = vpop.f32.mrf.mxu0
    %v2272 = vadd.f32 %v2170, %v2271
    %v2273 = vpop.f32.mrf.mxu0
    %v2274 = vadd.f32 %v2172, %v2273
    %2275 = vmatmul.bf16.gmra.mxu0 %v2115
    %v2276 = vpop.f32.mrf.mxu0
    %v2277 = vadd.f32 %v2175, %v2276
    %v2278 = vpop.f32.mrf.mxu0
    %v2279 = vadd.f32 %v2177, %v2278
    %2280 = vmatmul.bf16.gmra.mxu0 %v2118
    %v2281 = vpop.f32.mrf.mxu0
    %v2282 = vadd.f32 %v2180, %v2281
    %v2283 = vpop.f32.mrf.mxu0
    %v2284 = vadd.f32 %v2182, %v2283
    %2285 = vmatmul.bf16.gmra.mxu0 %v2121
    %v2286 = vpop.f32.mrf.mxu0
    %v2287 = vadd.f32 %v2185, %v2286
    %v2288 = vpop.f32.mrf.mxu0
    %v2289 = vadd.f32 %v2187, %v2288
    %2290 = vmatmul.bf16.gmra.mxu0 %v2124
    %v2291 = vpop.f32.mrf.mxu0
    %v2292 = vadd.f32 %v2190, %v2291
    %v2293 = vpop.f32.mrf.mxu0
    %v2294 = vadd.f32 %v2192, %v2293
    %2295 = vmatmul.bf16.gmra.mxu0 %v2127
    %v2296 = vpop.f32.mrf.mxu0
    %v2297 = vadd.f32 %v2195, %v2296
    %v2298 = vpop.f32.mrf.mxu0
    %v2299 = vadd.f32 %v2197, %v2298
    %2300 = vmatmul.bf16.gmra.mxu0 %v2130
    %v2301 = vpop.f32.mrf.mxu0
    %v2302 = vadd.f32 %v2200, %v2301
    %v2303 = vpop.f32.mrf.mxu0
    %v2304 = vadd.f32 %v2202, %v2303
    %2305 = vmatmul.bf16.gmra.mxu0 %v2133
    %v2306 = vpop.f32.mrf.mxu0
    %v2307 = vadd.f32 %v2205, %v2306
    %v2308 = vpop.f32.mrf.mxu0
    %v2309 = vadd.f32 %v2207, %v2308
    %2310 = vmatmul.bf16.gmra.mxu0 %v2136
    %v2311 = vpop.f32.mrf.mxu0
    %v2312 = vadd.f32 %v2210, %v2311
    %v2313 = vpop.f32.mrf.mxu0
    %v2314 = vadd.f32 %v2212, %v2313
    %2315 = vmatmul.bf16.gmra.mxu0 %v2139
    %v2316 = vpop.f32.mrf.mxu0
    %v2317 = vadd.f32 %v2215, %v2316
    %v2318 = vpop.f32.mrf.mxu0
    %v2319 = vadd.f32 %v2217, %v2318
    %2320 = vmatmul.bf16.gmra.mxu0 %v2142
    %v2321 = vpop.f32.mrf.mxu0
    %v2322 = vadd.f32 %v2220, %v2321
    %v2323 = vpop.f32.mrf.mxu0
    %v2324 = vadd.f32 %v2222, %v2323
    %2325 = vdwg.mxu0
    %s2326 = scalar_lea.vmem %s5, 1
    %v2327 = vld [vmem:[%s2326] sm:$0x1]
    %v2329 = vperm.slane %v2327, 0
    %v2331 = vadd.f32 %v2262, %v2329
    %v2332 = vadd.f32 %v2264, %v2329
    %v2333 = vadd.f32 %v2267, %v2329
    %v2334 = vadd.f32 %v2269, %v2329
    %v2335 = vadd.f32 %v2272, %v2329
    %v2336 = vadd.f32 %v2274, %v2329
    %v2337 = vadd.f32 %v2277, %v2329
    %v2338 = vadd.f32 %v2279, %v2329
    %v2339 = vadd.f32 %v2282, %v2329
    %v2340 = vadd.f32 %v2284, %v2329
    %v2341 = vadd.f32 %v2287, %v2329
    %v2342 = vadd.f32 %v2289, %v2329
    %v2343 = vadd.f32 %v2292, %v2329
    %v2344 = vadd.f32 %v2294, %v2329
    %v2345 = vadd.f32 %v2297, %v2329
    %v2346 = vadd.f32 %v2299, %v2329
    %v2347 = vadd.f32 %v2302, %v2329
    %v2348 = vadd.f32 %v2304, %v2329
    %v2349 = vadd.f32 %v2307, %v2329
    %v2350 = vadd.f32 %v2309, %v2329
    %v2351 = vadd.f32 %v2312, %v2329
    %v2352 = vadd.f32 %v2314, %v2329
    %v2353 = vadd.f32 %v2317, %v2329
    %v2354 = vadd.f32 %v2319, %v2329
    %v2355 = vadd.f32 %v2322, %v2329
    %v2356 = vadd.f32 %v2324, %v2329
    %v2357 = vtanh.pop %v2331
    %v2358 = vtanh.pop %v2332
    %v2359 = vtanh.pop %v2333
    %v2360 = vtanh.pop %v2334
    %v2361 = vtanh.pop %v2335
    %v2362 = vtanh.pop %v2336
    %v2363 = vtanh.pop %v2337
    %v2364 = vtanh.pop %v2338
    %v2365 = vtanh.pop %v2339
    %v2366 = vtanh.pop %v2340
    %v2367 = vtanh.pop %v2341
    %v2368 = vtanh.pop %v2342
    %v2369 = vtanh.pop %v2343
    %v2370 = vtanh.pop %v2344
    %v2371 = vtanh.pop %v2345
    %v2372 = vtanh.pop %v2346
    %v2373 = vtanh.pop %v2347
    %v2374 = vtanh.pop %v2348
    %v2375 = vtanh.pop %v2349
    %v2376 = vtanh.pop %v2350
    %v2377 = vtanh.pop %v2351
    %v2378 = vtanh.pop %v2352
    %v2379 = vtanh.pop %v2353
    %v2380 = vtanh.pop %v2354
    %v2381 = vtanh.pop %v2355
    %v2382 = vtanh.pop %v2356
    %v2383 = vxor.u32 %v2331, 2147483648
    %v2384 = vxor.u32 %v2332, 2147483648
    %v2385 = vxor.u32 %v2333, 2147483648
    %v2386 = vxor.u32 %v2334, 2147483648
    %v2387 = vxor.u32 %v2335, 2147483648
    %v2388 = vxor.u32 %v2336, 2147483648
    %v2389 = vxor.u32 %v2337, 2147483648
    %v2390 = vxor.u32 %v2338, 2147483648
    %v2391 = vxor.u32 %v2339, 2147483648
    %v2392 = vxor.u32 %v2340, 2147483648
    %v2393 = vxor.u32 %v2341, 2147483648
    %v2394 = vxor.u32 %v2342, 2147483648
    %v2395 = vxor.u32 %v2343, 2147483648
    %v2396 = vxor.u32 %v2344, 2147483648
    %v2397 = vxor.u32 %v2345, 2147483648
    %v2398 = vxor.u32 %v2346, 2147483648
    %v2399 = vxor.u32 %v2347, 2147483648
    %v2400 = vxor.u32 %v2348, 2147483648
    %v2401 = vxor.u32 %v2349, 2147483648
    %v2402 = vxor.u32 %v2350, 2147483648
    %v2403 = vxor.u32 %v2351, 2147483648
    %v2404 = vxor.u32 %v2352, 2147483648
    %v2405 = vxor.u32 %v2353, 2147483648
    %v2406 = vxor.u32 %v2354, 2147483648
    %v2407 = vxor.u32 %v2355, 2147483648
    %v2408 = vxor.u32 %v2356, 2147483648
    %v2409 = vmul.f32 %v2383, 1.442695
    %v2410 = vpow.pop %v2409
    %v2411 = vmul.f32 %v2384, 1.442695
    %v2412 = vpow.pop %v2411
    %v2413 = vmul.f32 %v2385, 1.442695
    %v2414 = vpow.pop %v2413
    %v2415 = vmul.f32 %v2386, 1.442695
    %v2416 = vpow.pop %v2415
    %v2417 = vmul.f32 %v2387, 1.442695
    %v2418 = vpow.pop %v2417
    %v2419 = vmul.f32 %v2388, 1.442695
    %v2420 = vpow.pop %v2419
    %v2421 = vmul.f32 %v2389, 1.442695
    %v2422 = vpow.pop %v2421
    %v2423 = vmul.f32 %v2390, 1.442695
    %v2424 = vpow.pop %v2423
    %v2425 = vmul.f32 %v2391, 1.442695
    %v2426 = vpow.pop %v2425
    %v2427 = vmul.f32 %v2392, 1.442695
    %v2428 = vpow.pop %v2427
    %v2429 = vmul.f32 %v2393, 1.442695
    %v2430 = vpow.pop %v2429
    %v2431 = vmul.f32 %v2394, 1.442695
    %v2432 = vpow.pop %v2431
    %v2433 = vmul.f32 %v2395, 1.442695
    %v2434 = vpow.pop %v2433
    %v2435 = vmul.f32 %v2396, 1.442695
    %v2436 = vpow.pop %v2435
    %v2437 = vmul.f32 %v2397, 1.442695
    %v2438 = vpow.pop %v2437
    %v2439 = vmul.f32 %v2398, 1.442695
    %v2440 = vpow.pop %v2439
    %v2441 = vmul.f32 %v2399, 1.442695
    %v2442 = vpow.pop %v2441
    %v2443 = vmul.f32 %v2400, 1.442695
    %v2444 = vpow.pop %v2443
    %v2445 = vmul.f32 %v2401, 1.442695
    %v2446 = vpow.pop %v2445
    %v2447 = vmul.f32 %v2402, 1.442695
    %v2448 = vpow.pop %v2447
    %v2449 = vmul.f32 %v2403, 1.442695
    %v2450 = vpow.pop %v2449
    %v2451 = vmul.f32 %v2404, 1.442695
    %v2452 = vpow.pop %v2451
    %v2453 = vmul.f32 %v2405, 1.442695
    %v2454 = vpow.pop %v2453
    %v2455 = vmul.f32 %v2406, 1.442695
    %v2456 = vpow.pop %v2455
    %v2457 = vmul.f32 %v2407, 1.442695
    %v2458 = vpow.pop %v2457
    %v2459 = vmul.f32 %v2408, 1.442695
    %v2460 = vpow.pop %v2459
    %v2461 = vadd.f32 %v2410, 1.0
    %v2462 = vadd.f32 %v2412, 1.0
    %v2463 = vadd.f32 %v2414, 1.0
    %v2464 = vadd.f32 %v2416, 1.0
    %v2465 = vadd.f32 %v2418, 1.0
    %v2466 = vadd.f32 %v2420, 1.0
    %v2467 = vadd.f32 %v2422, 1.0
    %v2468 = vadd.f32 %v2424, 1.0
    %v2469 = vadd.f32 %v2426, 1.0
    %v2470 = vadd.f32 %v2428, 1.0
    %v2471 = vadd.f32 %v2430, 1.0
    %v2472 = vadd.f32 %v2432, 1.0
    %v2473 = vadd.f32 %v2434, 1.0
    %v2474 = vadd.f32 %v2436, 1.0
    %v2475 = vadd.f32 %v2438, 1.0
    %v2476 = vadd.f32 %v2440, 1.0
    %v2477 = vadd.f32 %v2442, 1.0
    %v2478 = vadd.f32 %v2444, 1.0
    %v2479 = vadd.f32 %v2446, 1.0
    %v2480 = vadd.f32 %v2448, 1.0
    %v2481 = vadd.f32 %v2450, 1.0
    %v2482 = vadd.f32 %v2452, 1.0
    %v2483 = vadd.f32 %v2454, 1.0
    %v2484 = vadd.f32 %v2456, 1.0
    %v2485 = vadd.f32 %v2458, 1.0
    %v2486 = vadd.f32 %v2460, 1.0
    %v2487 = vrcp.pop %v2461
    %v2488 = vmul.f32 %v2461, %v2487
    %v2489 = vsub.f32 1.0, %v2488
    %v2490 = vmul.f32 %v2487, %v2489
    %v2491 = vadd.f32 %v2487, %v2490
    %vm2492 = vweird.f32 %v2461
    %vm2493 = vweird.f32 %v2487
    %vm2494 = vmor %vm2492, %vm2493
    %v2495 = vsel %vm2494, %v2487, %v2491
    %v2496 = vand.u32 2147483647, %v2461
    %vm2497 = vcmp.eq.f32.partialorder %v2496, 8.507059e+37
    %v2498 = vand.u32 %v2461, 2147483648
    %v2499 = vor.u32 1.1754944e-38, %v2498
    %v2500 = vsel %vm2497, %v2499, %v2495
    %v2501 = vmul.f32 1.0, %v2500
    %v2502 = vrcp.pop %v2462
    %v2503 = vmul.f32 %v2462, %v2502
    %v2504 = vsub.f32 1.0, %v2503
    %v2505 = vmul.f32 %v2502, %v2504
    %v2506 = vadd.f32 %v2502, %v2505
    %vm2507 = vweird.f32 %v2462
    %vm2508 = vweird.f32 %v2502
    %vm2509 = vmor %vm2507, %vm2508
    %v2510 = vsel %vm2509, %v2502, %v2506
    %v2511 = vand.u32 2147483647, %v2462
    %vm2512 = vcmp.eq.f32.partialorder %v2511, 8.507059e+37
    %v2513 = vand.u32 %v2462, 2147483648
    %v2514 = vor.u32 1.1754944e-38, %v2513
    %v2515 = vsel %vm2512, %v2514, %v2510
    %v2516 = vmul.f32 1.0, %v2515
    %v2517 = vrcp.pop %v2463
    %v2518 = vmul.f32 %v2463, %v2517
    %v2519 = vsub.f32 1.0, %v2518
    %v2520 = vmul.f32 %v2517, %v2519
    %v2521 = vadd.f32 %v2517, %v2520
    %vm2522 = vweird.f32 %v2463
    %vm2523 = vweird.f32 %v2517
    %vm2524 = vmor %vm2522, %vm2523
    %v2525 = vsel %vm2524, %v2517, %v2521
    %v2526 = vand.u32 2147483647, %v2463
    %vm2527 = vcmp.eq.f32.partialorder %v2526, 8.507059e+37
    %v2528 = vand.u32 %v2463, 2147483648
    %v2529 = vor.u32 1.1754944e-38, %v2528
    %v2530 = vsel %vm2527, %v2529, %v2525
    %v2531 = vmul.f32 1.0, %v2530
    %v2532 = vrcp.pop %v2464
    %v2533 = vmul.f32 %v2464, %v2532
    %v2534 = vsub.f32 1.0, %v2533
    %v2535 = vmul.f32 %v2532, %v2534
    %v2536 = vadd.f32 %v2532, %v2535
    %vm2537 = vweird.f32 %v2464
    %vm2538 = vweird.f32 %v2532
    %vm2539 = vmor %vm2537, %vm2538
    %v2540 = vsel %vm2539, %v2532, %v2536
    %v2541 = vand.u32 2147483647, %v2464
    %vm2542 = vcmp.eq.f32.partialorder %v2541, 8.507059e+37
    %v2543 = vand.u32 %v2464, 2147483648
    %v2544 = vor.u32 1.1754944e-38, %v2543
    %v2545 = vsel %vm2542, %v2544, %v2540
    %v2546 = vmul.f32 1.0, %v2545
    %v2547 = vrcp.pop %v2465
    %v2548 = vmul.f32 %v2465, %v2547
    %v2549 = vsub.f32 1.0, %v2548
    %v2550 = vmul.f32 %v2547, %v2549
    %v2551 = vadd.f32 %v2547, %v2550
    %vm2552 = vweird.f32 %v2465
    %vm2553 = vweird.f32 %v2547
    %vm2554 = vmor %vm2552, %vm2553
    %v2555 = vsel %vm2554, %v2547, %v2551
    %v2556 = vand.u32 2147483647, %v2465
    %vm2557 = vcmp.eq.f32.partialorder %v2556, 8.507059e+37
    %v2558 = vand.u32 %v2465, 2147483648
    %v2559 = vor.u32 1.1754944e-38, %v2558
    %v2560 = vsel %vm2557, %v2559, %v2555
    %v2561 = vmul.f32 1.0, %v2560
    %v2562 = vrcp.pop %v2466
    %v2563 = vmul.f32 %v2466, %v2562
    %v2564 = vsub.f32 1.0, %v2563
    %v2565 = vmul.f32 %v2562, %v2564
    %v2566 = vadd.f32 %v2562, %v2565
    %vm2567 = vweird.f32 %v2466
    %vm2568 = vweird.f32 %v2562
    %vm2569 = vmor %vm2567, %vm2568
    %v2570 = vsel %vm2569, %v2562, %v2566
    %v2571 = vand.u32 2147483647, %v2466
    %vm2572 = vcmp.eq.f32.partialorder %v2571, 8.507059e+37
    %v2573 = vand.u32 %v2466, 2147483648
    %v2574 = vor.u32 1.1754944e-38, %v2573
    %v2575 = vsel %vm2572, %v2574, %v2570
    %v2576 = vmul.f32 1.0, %v2575
    %v2577 = vrcp.pop %v2467
    %v2578 = vmul.f32 %v2467, %v2577
    %v2579 = vsub.f32 1.0, %v2578
    %v2580 = vmul.f32 %v2577, %v2579
    %v2581 = vadd.f32 %v2577, %v2580
    %vm2582 = vweird.f32 %v2467
    %vm2583 = vweird.f32 %v2577
    %vm2584 = vmor %vm2582, %vm2583
    %v2585 = vsel %vm2584, %v2577, %v2581
    %v2586 = vand.u32 2147483647, %v2467
    %vm2587 = vcmp.eq.f32.partialorder %v2586, 8.507059e+37
    %v2588 = vand.u32 %v2467, 2147483648
    %v2589 = vor.u32 1.1754944e-38, %v2588
    %v2590 = vsel %vm2587, %v2589, %v2585
    %v2591 = vmul.f32 1.0, %v2590
    %v2592 = vrcp.pop %v2468
    %v2593 = vmul.f32 %v2468, %v2592
    %v2594 = vsub.f32 1.0, %v2593
    %v2595 = vmul.f32 %v2592, %v2594
    %v2596 = vadd.f32 %v2592, %v2595
    %vm2597 = vweird.f32 %v2468
    %vm2598 = vweird.f32 %v2592
    %vm2599 = vmor %vm2597, %vm2598
    %v2600 = vsel %vm2599, %v2592, %v2596
    %v2601 = vand.u32 2147483647, %v2468
    %vm2602 = vcmp.eq.f32.partialorder %v2601, 8.507059e+37
    %v2603 = vand.u32 %v2468, 2147483648
    %v2604 = vor.u32 1.1754944e-38, %v2603
    %v2605 = vsel %vm2602, %v2604, %v2600
    %v2606 = vmul.f32 1.0, %v2605
    %v2607 = vrcp.pop %v2469
    %v2608 = vmul.f32 %v2469, %v2607
    %v2609 = vsub.f32 1.0, %v2608
    %v2610 = vmul.f32 %v2607, %v2609
    %v2611 = vadd.f32 %v2607, %v2610
    %vm2612 = vweird.f32 %v2469
    %vm2613 = vweird.f32 %v2607
    %vm2614 = vmor %vm2612, %vm2613
    %v2615 = vsel %vm2614, %v2607, %v2611
    %v2616 = vand.u32 2147483647, %v2469
    %vm2617 = vcmp.eq.f32.partialorder %v2616, 8.507059e+37
    %v2618 = vand.u32 %v2469, 2147483648
    %v2619 = vor.u32 1.1754944e-38, %v2618
    %v2620 = vsel %vm2617, %v2619, %v2615
    %v2621 = vmul.f32 1.0, %v2620
    %v2622 = vrcp.pop %v2470
    %v2623 = vmul.f32 %v2470, %v2622
    %v2624 = vsub.f32 1.0, %v2623
    %v2625 = vmul.f32 %v2622, %v2624
    %v2626 = vadd.f32 %v2622, %v2625
    %vm2627 = vweird.f32 %v2470
    %vm2628 = vweird.f32 %v2622
    %vm2629 = vmor %vm2627, %vm2628
    %v2630 = vsel %vm2629, %v2622, %v2626
    %v2631 = vand.u32 2147483647, %v2470
    %vm2632 = vcmp.eq.f32.partialorder %v2631, 8.507059e+37
    %v2633 = vand.u32 %v2470, 2147483648
    %v2634 = vor.u32 1.1754944e-38, %v2633
    %v2635 = vsel %vm2632, %v2634, %v2630
    %v2636 = vmul.f32 1.0, %v2635
    %v2637 = vrcp.pop %v2471
    %v2638 = vmul.f32 %v2471, %v2637
    %v2639 = vsub.f32 1.0, %v2638
    %v2640 = vmul.f32 %v2637, %v2639
    %v2641 = vadd.f32 %v2637, %v2640
    %vm2642 = vweird.f32 %v2471
    %vm2643 = vweird.f32 %v2637
    %vm2644 = vmor %vm2642, %vm2643
    %v2645 = vsel %vm2644, %v2637, %v2641
    %v2646 = vand.u32 2147483647, %v2471
    %vm2647 = vcmp.eq.f32.partialorder %v2646, 8.507059e+37
    %v2648 = vand.u32 %v2471, 2147483648
    %v2649 = vor.u32 1.1754944e-38, %v2648
    %v2650 = vsel %vm2647, %v2649, %v2645
    %v2651 = vmul.f32 1.0, %v2650
    %v2652 = vrcp.pop %v2472
    %v2653 = vmul.f32 %v2472, %v2652
    %v2654 = vsub.f32 1.0, %v2653
    %v2655 = vmul.f32 %v2652, %v2654
    %v2656 = vadd.f32 %v2652, %v2655
    %vm2657 = vweird.f32 %v2472
    %vm2658 = vweird.f32 %v2652
    %vm2659 = vmor %vm2657, %vm2658
    %v2660 = vsel %vm2659, %v2652, %v2656
    %v2661 = vand.u32 2147483647, %v2472
    %vm2662 = vcmp.eq.f32.partialorder %v2661, 8.507059e+37
    %v2663 = vand.u32 %v2472, 2147483648
    %v2664 = vor.u32 1.1754944e-38, %v2663
    %v2665 = vsel %vm2662, %v2664, %v2660
    %v2666 = vmul.f32 1.0, %v2665
    %v2667 = vrcp.pop %v2473
    %v2668 = vmul.f32 %v2473, %v2667
    %v2669 = vsub.f32 1.0, %v2668
    %v2670 = vmul.f32 %v2667, %v2669
    %v2671 = vadd.f32 %v2667, %v2670
    %vm2672 = vweird.f32 %v2473
    %vm2673 = vweird.f32 %v2667
    %vm2674 = vmor %vm2672, %vm2673
    %v2675 = vsel %vm2674, %v2667, %v2671
    %v2676 = vand.u32 2147483647, %v2473
    %vm2677 = vcmp.eq.f32.partialorder %v2676, 8.507059e+37
    %v2678 = vand.u32 %v2473, 2147483648
    %v2679 = vor.u32 1.1754944e-38, %v2678
    %v2680 = vsel %vm2677, %v2679, %v2675
    %v2681 = vmul.f32 1.0, %v2680
    %v2682 = vrcp.pop %v2474
    %v2683 = vmul.f32 %v2474, %v2682
    %v2684 = vsub.f32 1.0, %v2683
    %v2685 = vmul.f32 %v2682, %v2684
    %v2686 = vadd.f32 %v2682, %v2685
    %vm2687 = vweird.f32 %v2474
    %vm2688 = vweird.f32 %v2682
    %vm2689 = vmor %vm2687, %vm2688
    %v2690 = vsel %vm2689, %v2682, %v2686
    %v2691 = vand.u32 2147483647, %v2474
    %vm2692 = vcmp.eq.f32.partialorder %v2691, 8.507059e+37
    %v2693 = vand.u32 %v2474, 2147483648
    %v2694 = vor.u32 1.1754944e-38, %v2693
    %v2695 = vsel %vm2692, %v2694, %v2690
    %v2696 = vmul.f32 1.0, %v2695
    %v2697 = vrcp.pop %v2475
    %v2698 = vmul.f32 %v2475, %v2697
    %v2699 = vsub.f32 1.0, %v2698
    %v2700 = vmul.f32 %v2697, %v2699
    %v2701 = vadd.f32 %v2697, %v2700
    %vm2702 = vweird.f32 %v2475
    %vm2703 = vweird.f32 %v2697
    %vm2704 = vmor %vm2702, %vm2703
    %v2705 = vsel %vm2704, %v2697, %v2701
    %v2706 = vand.u32 2147483647, %v2475
    %vm2707 = vcmp.eq.f32.partialorder %v2706, 8.507059e+37
    %v2708 = vand.u32 %v2475, 2147483648
    %v2709 = vor.u32 1.1754944e-38, %v2708
    %v2710 = vsel %vm2707, %v2709, %v2705
    %v2711 = vmul.f32 1.0, %v2710
    %v2712 = vrcp.pop %v2476
    %v2713 = vmul.f32 %v2476, %v2712
    %v2714 = vsub.f32 1.0, %v2713
    %v2715 = vmul.f32 %v2712, %v2714
    %v2716 = vadd.f32 %v2712, %v2715
    %vm2717 = vweird.f32 %v2476
    %vm2718 = vweird.f32 %v2712
    %vm2719 = vmor %vm2717, %vm2718
    %v2720 = vsel %vm2719, %v2712, %v2716
    %v2721 = vand.u32 2147483647, %v2476
    %vm2722 = vcmp.eq.f32.partialorder %v2721, 8.507059e+37
    %v2723 = vand.u32 %v2476, 2147483648
    %v2724 = vor.u32 1.1754944e-38, %v2723
    %v2725 = vsel %vm2722, %v2724, %v2720
    %v2726 = vmul.f32 1.0, %v2725
    %v2727 = vrcp.pop %v2477
    %v2728 = vmul.f32 %v2477, %v2727
    %v2729 = vsub.f32 1.0, %v2728
    %v2730 = vmul.f32 %v2727, %v2729
    %v2731 = vadd.f32 %v2727, %v2730
    %vm2732 = vweird.f32 %v2477
    %vm2733 = vweird.f32 %v2727
    %vm2734 = vmor %vm2732, %vm2733
    %v2735 = vsel %vm2734, %v2727, %v2731
    %v2736 = vand.u32 2147483647, %v2477
    %vm2737 = vcmp.eq.f32.partialorder %v2736, 8.507059e+37
    %v2738 = vand.u32 %v2477, 2147483648
    %v2739 = vor.u32 1.1754944e-38, %v2738
    %v2740 = vsel %vm2737, %v2739, %v2735
    %v2741 = vmul.f32 1.0, %v2740
    %v2742 = vrcp.pop %v2478
    %v2743 = vmul.f32 %v2478, %v2742
    %v2744 = vsub.f32 1.0, %v2743
    %v2745 = vmul.f32 %v2742, %v2744
    %v2746 = vadd.f32 %v2742, %v2745
    %vm2747 = vweird.f32 %v2478
    %vm2748 = vweird.f32 %v2742
    %vm2749 = vmor %vm2747, %vm2748
    %v2750 = vsel %vm2749, %v2742, %v2746
    %v2751 = vand.u32 2147483647, %v2478
    %vm2752 = vcmp.eq.f32.partialorder %v2751, 8.507059e+37
    %v2753 = vand.u32 %v2478, 2147483648
    %v2754 = vor.u32 1.1754944e-38, %v2753
    %v2755 = vsel %vm2752, %v2754, %v2750
    %v2756 = vmul.f32 1.0, %v2755
    %v2757 = vrcp.pop %v2479
    %v2758 = vmul.f32 %v2479, %v2757
    %v2759 = vsub.f32 1.0, %v2758
    %v2760 = vmul.f32 %v2757, %v2759
    %v2761 = vadd.f32 %v2757, %v2760
    %vm2762 = vweird.f32 %v2479
    %vm2763 = vweird.f32 %v2757
    %vm2764 = vmor %vm2762, %vm2763
    %v2765 = vsel %vm2764, %v2757, %v2761
    %v2766 = vand.u32 2147483647, %v2479
    %vm2767 = vcmp.eq.f32.partialorder %v2766, 8.507059e+37
    %v2768 = vand.u32 %v2479, 2147483648
    %v2769 = vor.u32 1.1754944e-38, %v2768
    %v2770 = vsel %vm2767, %v2769, %v2765
    %v2771 = vmul.f32 1.0, %v2770
    %v2772 = vrcp.pop %v2480
    %v2773 = vmul.f32 %v2480, %v2772
    %v2774 = vsub.f32 1.0, %v2773
    %v2775 = vmul.f32 %v2772, %v2774
    %v2776 = vadd.f32 %v2772, %v2775
    %vm2777 = vweird.f32 %v2480
    %vm2778 = vweird.f32 %v2772
    %vm2779 = vmor %vm2777, %vm2778
    %v2780 = vsel %vm2779, %v2772, %v2776
    %v2781 = vand.u32 2147483647, %v2480
    %vm2782 = vcmp.eq.f32.partialorder %v2781, 8.507059e+37
    %v2783 = vand.u32 %v2480, 2147483648
    %v2784 = vor.u32 1.1754944e-38, %v2783
    %v2785 = vsel %vm2782, %v2784, %v2780
    %v2786 = vmul.f32 1.0, %v2785
    %v2787 = vrcp.pop %v2481
    %v2788 = vmul.f32 %v2481, %v2787
    %v2789 = vsub.f32 1.0, %v2788
    %v2790 = vmul.f32 %v2787, %v2789
    %v2791 = vadd.f32 %v2787, %v2790
    %vm2792 = vweird.f32 %v2481
    %vm2793 = vweird.f32 %v2787
    %vm2794 = vmor %vm2792, %vm2793
    %v2795 = vsel %vm2794, %v2787, %v2791
    %v2796 = vand.u32 2147483647, %v2481
    %vm2797 = vcmp.eq.f32.partialorder %v2796, 8.507059e+37
    %v2798 = vand.u32 %v2481, 2147483648
    %v2799 = vor.u32 1.1754944e-38, %v2798
    %v2800 = vsel %vm2797, %v2799, %v2795
    %v2801 = vmul.f32 1.0, %v2800
    %v2802 = vrcp.pop %v2482
    %v2803 = vmul.f32 %v2482, %v2802
    %v2804 = vsub.f32 1.0, %v2803
    %v2805 = vmul.f32 %v2802, %v2804
    %v2806 = vadd.f32 %v2802, %v2805
    %vm2807 = vweird.f32 %v2482
    %vm2808 = vweird.f32 %v2802
    %vm2809 = vmor %vm2807, %vm2808
    %v2810 = vsel %vm2809, %v2802, %v2806
    %v2811 = vand.u32 2147483647, %v2482
    %vm2812 = vcmp.eq.f32.partialorder %v2811, 8.507059e+37
    %v2813 = vand.u32 %v2482, 2147483648
    %v2814 = vor.u32 1.1754944e-38, %v2813
    %v2815 = vsel %vm2812, %v2814, %v2810
    %v2816 = vmul.f32 1.0, %v2815
    %v2817 = vrcp.pop %v2483
    %v2818 = vmul.f32 %v2483, %v2817
    %v2819 = vsub.f32 1.0, %v2818
    %v2820 = vmul.f32 %v2817, %v2819
    %v2821 = vadd.f32 %v2817, %v2820
    %vm2822 = vweird.f32 %v2483
    %vm2823 = vweird.f32 %v2817
    %vm2824 = vmor %vm2822, %vm2823
    %v2825 = vsel %vm2824, %v2817, %v2821
    %v2826 = vand.u32 2147483647, %v2483
    %vm2827 = vcmp.eq.f32.partialorder %v2826, 8.507059e+37
    %v2828 = vand.u32 %v2483, 2147483648
    %v2829 = vor.u32 1.1754944e-38, %v2828
    %v2830 = vsel %vm2827, %v2829, %v2825
    %v2831 = vmul.f32 1.0, %v2830
    %v2832 = vrcp.pop %v2484
    %v2833 = vmul.f32 %v2484, %v2832
    %v2834 = vsub.f32 1.0, %v2833
    %v2835 = vmul.f32 %v2832, %v2834
    %v2836 = vadd.f32 %v2832, %v2835
    %vm2837 = vweird.f32 %v2484
    %vm2838 = vweird.f32 %v2832
    %vm2839 = vmor %vm2837, %vm2838
    %v2840 = vsel %vm2839, %v2832, %v2836
    %v2841 = vand.u32 2147483647, %v2484
    %vm2842 = vcmp.eq.f32.partialorder %v2841, 8.507059e+37
    %v2843 = vand.u32 %v2484, 2147483648
    %v2844 = vor.u32 1.1754944e-38, %v2843
    %v2845 = vsel %vm2842, %v2844, %v2840
    %v2846 = vmul.f32 1.0, %v2845
    %v2847 = vrcp.pop %v2485
    %v2848 = vmul.f32 %v2485, %v2847
    %v2849 = vsub.f32 1.0, %v2848
    %v2850 = vmul.f32 %v2847, %v2849
    %v2851 = vadd.f32 %v2847, %v2850
    %vm2852 = vweird.f32 %v2485
    %vm2853 = vweird.f32 %v2847
    %vm2854 = vmor %vm2852, %vm2853
    %v2855 = vsel %vm2854, %v2847, %v2851
    %v2856 = vand.u32 2147483647, %v2485
    %vm2857 = vcmp.eq.f32.partialorder %v2856, 8.507059e+37
    %v2858 = vand.u32 %v2485, 2147483648
    %v2859 = vor.u32 1.1754944e-38, %v2858
    %v2860 = vsel %vm2857, %v2859, %v2855
    %v2861 = vmul.f32 1.0, %v2860
    %v2862 = vrcp.pop %v2486
    %v2863 = vmul.f32 %v2486, %v2862
    %v2864 = vsub.f32 1.0, %v2863
    %v2865 = vmul.f32 %v2862, %v2864
    %v2866 = vadd.f32 %v2862, %v2865
    %vm2867 = vweird.f32 %v2486
    %vm2868 = vweird.f32 %v2862
    %vm2869 = vmor %vm2867, %vm2868
    %v2870 = vsel %vm2869, %v2862, %v2866
    %v2871 = vand.u32 2147483647, %v2486
    %vm2872 = vcmp.eq.f32.partialorder %v2871, 8.507059e+37
    %v2873 = vand.u32 %v2486, 2147483648
    %v2874 = vor.u32 1.1754944e-38, %v2873
    %v2875 = vsel %vm2872, %v2874, %v2870
    %v2876 = vmul.f32 1.0, %v2875
    %2903 = vrot.lane.b32.xlu0 %v2501, 96
    %v2904 = vpop.permute.xlu0 %2903
    %2905 = vrot.lane.b32.xlu0 %v2516, 96
    %v2906 = vpop.permute.xlu0 %2905
    %2907 = vrot.lane.b32.xlu0 %v2531, 96
    %v2908 = vpop.permute.xlu0 %2907
    %2909 = vrot.lane.b32.xlu0 %v2546, 96
    %v2910 = vpop.permute.xlu0 %2909
    %2911 = vrot.lane.b32.xlu0 %v2561, 96
    %v2912 = vpop.permute.xlu0 %2911
    %2913 = vrot.lane.b32.xlu0 %v2576, 96
    %v2914 = vpop.permute.xlu0 %2913
    %2915 = vrot.lane.b32.xlu0 %v2591, 96
    %v2916 = vpop.permute.xlu0 %2915
    %2917 = vrot.lane.b32.xlu0 %v2606, 96
    %v2918 = vpop.permute.xlu0 %2917
    %2919 = vrot.lane.b32.xlu0 %v2621, 96
    %v2920 = vpop.permute.xlu0 %2919
    %2921 = vrot.lane.b32.xlu0 %v2636, 96
    %v2922 = vpop.permute.xlu0 %2921
    %2923 = vrot.lane.b32.xlu0 %v2651, 96
    %v2924 = vpop.permute.xlu0 %2923
    %2925 = vrot.lane.b32.xlu0 %v2666, 96
    %v2926 = vpop.permute.xlu0 %2925
    %2927 = vrot.lane.b32.xlu0 %v2681, 96
    %v2928 = vpop.permute.xlu0 %2927
    %2929 = vrot.lane.b32.xlu0 %v2696, 96
    %v2930 = vpop.permute.xlu0 %2929
    %2931 = vrot.lane.b32.xlu0 %v2711, 96
    %v2932 = vpop.permute.xlu0 %2931
    %2933 = vrot.lane.b32.xlu0 %v2726, 96
    %v2934 = vpop.permute.xlu0 %2933
    %2935 = vrot.lane.b32.xlu0 %v2741, 96
    %v2936 = vpop.permute.xlu0 %2935
    %2937 = vrot.lane.b32.xlu0 %v2756, 96
    %v2938 = vpop.permute.xlu0 %2937
    %2939 = vrot.lane.b32.xlu0 %v2771, 96
    %v2940 = vpop.permute.xlu0 %2939
    %2941 = vrot.lane.b32.xlu0 %v2786, 96
    %v2942 = vpop.permute.xlu0 %2941
    %2943 = vrot.lane.b32.xlu0 %v2801, 96
    %v2944 = vpop.permute.xlu0 %2943
    %2945 = vrot.lane.b32.xlu0 %v2816, 96
    %v2946 = vpop.permute.xlu0 %2945
    %2947 = vrot.lane.b32.xlu0 %v2831, 96
    %v2948 = vpop.permute.xlu0 %2947
    %2949 = vrot.lane.b32.xlu0 %v2846, 96
    %v2950 = vpop.permute.xlu0 %2949
    %2951 = vrot.lane.b32.xlu0 %v2861, 96
    %v2952 = vpop.permute.xlu0 %2951
    %2953 = vrot.lane.b32.xlu0 %v2876, 96
    %v2954 = vpop.permute.xlu0 %2953
    %v2981 = vmul.f32 %v2357, %v2904
    %v2982 = vmul.f32 %v2358, %v2906
    %v2983 = vmul.f32 %v2359, %v2908
    %v2984 = vmul.f32 %v2360, %v2910
    %v2985 = vmul.f32 %v2361, %v2912
    %v2986 = vmul.f32 %v2362, %v2914
    %v2987 = vmul.f32 %v2363, %v2916
    %v2988 = vmul.f32 %v2364, %v2918
    %v2989 = vmul.f32 %v2365, %v2920
    %v2990 = vmul.f32 %v2366, %v2922
    %v2991 = vmul.f32 %v2367, %v2924
    %v2992 = vmul.f32 %v2368, %v2926
    %v2993 = vmul.f32 %v2369, %v2928
    %v2994 = vmul.f32 %v2370, %v2930
    %v2995 = vmul.f32 %v2371, %v2932
    %v2996 = vmul.f32 %v2372, %v2934
    %v2997 = vmul.f32 %v2373, %v2936
    %v2998 = vmul.f32 %v2374, %v2938
    %v2999 = vmul.f32 %v2375, %v2940
    %v3000 = vmul.f32 %v2376, %v2942
    %v3001 = vmul.f32 %v2377, %v2944
    %v3002 = vmul.f32 %v2378, %v2946
    %v3003 = vmul.f32 %v2379, %v2948
    %v3004 = vmul.f32 %v2380, %v2950
    %v3005 = vmul.f32 %v2381, %v2952
    %v3006 = vmul.f32 %v2382, %v2954
    %v3007 = vadd.f32 %v1690, %v3005
    %v3008 = vadd.f32 %v1691, %v3006
    %v3009 = vadd.f32 %v2981, %v1968
    %v3010 = vadd.f32 %v2982, %v1969
    %v3011 = vadd.f32 %v2983, %v1970
    %v3012 = vadd.f32 %v2984, %v1971
    %v3013 = vadd.f32 %v2985, %v1972
    %v3014 = vadd.f32 %v2986, %v1973
    %v3015 = vadd.f32 %v2987, %v1974
    %v3016 = vadd.f32 %v2988, %v1975
    %v3017 = vadd.f32 %v2989, %v1976
    %v3018 = vadd.f32 %v2990, %v1977
    %v3019 = vadd.f32 %v2991, %v1978
    %v3020 = vadd.f32 %v2992, %v1979
    %v3021 = vadd.f32 %v2993, %v1980
    %v3022 = vadd.f32 %v2994, %v1981
    %v3023 = vadd.f32 %v2995, %v1982
    %v3024 = vadd.f32 %v2996, %v1983
    %v3025 = vadd.f32 %v2997, %v1984
    %v3026 = vadd.f32 %v2998, %v1985
    %v3027 = vadd.f32 %v2999, %v1986
    %v3028 = vadd.f32 %v3000, %v1987
    %v3029 = vadd.f32 %v3001, %v1988
    %v3030 = vadd.f32 %v3002, %v1989
    %v3031 = vadd.f32 %v3003, %v1990
    %v3032 = vadd.f32 %v3004, %v1991
    %v3033 = vadd.f32 %v3005, %v1992
    %v3034 = vadd.f32 %v3006, %v1993
    %v3035 = vsel %vm672, %v3009, 0.0
    %v3036 = vsel %vm672, %v3010, 0.0
    %v3037 = vadd.f32 %v3035, %v3036
    %v3038 = vsel %vm672, %v3011, 0.0
    %v3039 = vadd.f32 %v3037, %v3038
    %v3040 = vsel %vm672, %v3012, 0.0
    %v3041 = vadd.f32 %v3039, %v3040
    %v3042 = vsel %vm672, %v3013, 0.0
    %v3043 = vadd.f32 %v3041, %v3042
    %v3044 = vsel %vm672, %v3014, 0.0
    %v3045 = vadd.f32 %v3043, %v3044
    %v3046 = vsel %vm672, %v3015, 0.0
    %v3047 = vadd.f32 %v3045, %v3046
    %v3048 = vsel %vm672, %v3016, 0.0
    %v3049 = vadd.f32 %v3047, %v3048
    %v3050 = vsel %vm672, %v3017, 0.0
    %v3051 = vadd.f32 %v3049, %v3050
    %v3052 = vsel %vm672, %v3018, 0.0
    %v3053 = vadd.f32 %v3051, %v3052
    %v3054 = vsel %vm672, %v3019, 0.0
    %v3055 = vadd.f32 %v3053, %v3054
    %v3056 = vsel %vm672, %v3020, 0.0
    %v3057 = vadd.f32 %v3055, %v3056
    %v3058 = vsel %vm672, %v3021, 0.0
    %v3059 = vadd.f32 %v3057, %v3058
    %v3060 = vsel %vm672, %v3022, 0.0
    %v3061 = vadd.f32 %v3059, %v3060
    %v3062 = vsel %vm672, %v3023, 0.0
    %v3063 = vadd.f32 %v3061, %v3062
    %v3064 = vsel %vm672, %v3024, 0.0
    %v3065 = vadd.f32 %v3063, %v3064
    %v3066 = vsel %vm672, %v3025, 0.0
    %v3067 = vadd.f32 %v3065, %v3066
    %v3068 = vsel %vm672, %v3026, 0.0
    %v3069 = vadd.f32 %v3067, %v3068
    %v3070 = vsel %vm672, %v3027, 0.0
    %v3071 = vadd.f32 %v3069, %v3070
    %v3072 = vsel %vm672, %v3028, 0.0
    %v3073 = vadd.f32 %v3071, %v3072
    %v3074 = vsel %vm672, %v3029, 0.0
    %v3075 = vadd.f32 %v3073, %v3074
    %v3076 = vsel %vm672, %v3030, 0.0
    %v3077 = vadd.f32 %v3075, %v3076
    %v3078 = vsel %vm672, %v3031, 0.0
    %v3079 = vadd.f32 %v3077, %v3078
    %v3080 = vsel %vm672, %v3032, 0.0
    %v3081 = vadd.f32 %v3079, %v3080
    %v3082 = vsel %vm672, %v3033, 0.0
    %v3083 = vadd.f32 %v3081, %v3082
    %v3084 = vsel %vm672, %v3034, 0.0
    %v3085 = vadd.f32 %v3083, %v3084
    %v3086 = vrot.slane %v3085, 4
    %v3087 = vadd.f32 %v3085, %v3086
    %v3088 = vrot.slane %v3087, 2
    %v3089 = vadd.f32 %v3087, %v3088
    %v3090 = vrot.slane %v3089, 1
    %v3091 = vadd.f32 %v3089, %v3090
    %v3092 = vmul.f32 %v3009, %v3009
    %v3093 = vmul.f32 %v3010, %v3010
    %v3094 = vmul.f32 %v3011, %v3011
    %v3095 = vmul.f32 %v3012, %v3012
    %v3096 = vmul.f32 %v3013, %v3013
    %v3097 = vmul.f32 %v3014, %v3014
    %v3098 = vmul.f32 %v3015, %v3015
    %v3099 = vmul.f32 %v3016, %v3016
    %v3100 = vmul.f32 %v3017, %v3017
    %v3101 = vmul.f32 %v3018, %v3018
    %v3102 = vmul.f32 %v3019, %v3019
    %v3103 = vmul.f32 %v3020, %v3020
    %v3104 = vmul.f32 %v3021, %v3021
    %v3105 = vmul.f32 %v3022, %v3022
    %v3106 = vmul.f32 %v3023, %v3023
    %v3107 = vmul.f32 %v3024, %v3024
    %v3108 = vmul.f32 %v3025, %v3025
    %v3109 = vmul.f32 %v3026, %v3026
    %v3110 = vmul.f32 %v3027, %v3027
    %v3111 = vmul.f32 %v3028, %v3028
    %v3112 = vmul.f32 %v3029, %v3029
    %v3113 = vmul.f32 %v3030, %v3030
    %v3114 = vmul.f32 %v3031, %v3031
    %v3115 = vmul.f32 %v3032, %v3032
    %v3116 = vmul.f32 %v3033, %v3033
    %v3117 = vmul.f32 %v3034, %v3034
    %v3118 = vsel %vm672, %v3092, 0.0
    %v3119 = vsel %vm672, %v3093, 0.0
    %v3120 = vadd.f32 %v3118, %v3119
    %v3121 = vsel %vm672, %v3094, 0.0
    %v3122 = vadd.f32 %v3120, %v3121
    %v3123 = vsel %vm672, %v3095, 0.0
    %v3124 = vadd.f32 %v3122, %v3123
    %v3125 = vsel %vm672, %v3096, 0.0
    %v3126 = vadd.f32 %v3124, %v3125
    %v3127 = vsel %vm672, %v3097, 0.0
    %v3128 = vadd.f32 %v3126, %v3127
    %v3129 = vsel %vm672, %v3098, 0.0
    %v3130 = vadd.f32 %v3128, %v3129
    %v3131 = vsel %vm672, %v3099, 0.0
    %v3132 = vadd.f32 %v3130, %v3131
    %v3133 = vsel %vm672, %v3100, 0.0
    %v3134 = vadd.f32 %v3132, %v3133
    %v3135 = vsel %vm672, %v3101, 0.0
    %v3136 = vadd.f32 %v3134, %v3135
    %v3137 = vsel %vm672, %v3102, 0.0
    %v3138 = vadd.f32 %v3136, %v3137
    %v3139 = vsel %vm672, %v3103, 0.0
    %v3140 = vadd.f32 %v3138, %v3139
    %v3141 = vsel %vm672, %v3104, 0.0
    %v3142 = vadd.f32 %v3140, %v3141
    %v3143 = vsel %vm672, %v3105, 0.0
    %v3144 = vadd.f32 %v3142, %v3143
    %v3145 = vsel %vm672, %v3106, 0.0
    %v3146 = vadd.f32 %v3144, %v3145
    %v3147 = vsel %vm672, %v3107, 0.0
    %v3148 = vadd.f32 %v3146, %v3147
    %v3149 = vsel %vm672, %v3108, 0.0
    %v3150 = vadd.f32 %v3148, %v3149
    %v3151 = vsel %vm672, %v3109, 0.0
    %v3152 = vadd.f32 %v3150, %v3151
    %v3153 = vsel %vm672, %v3110, 0.0
    %v3154 = vadd.f32 %v3152, %v3153
    %v3155 = vsel %vm672, %v3111, 0.0
    %v3156 = vadd.f32 %v3154, %v3155
    %v3157 = vsel %vm672, %v3112, 0.0
    %v3158 = vadd.f32 %v3156, %v3157
    %v3159 = vsel %vm672, %v3113, 0.0
    %v3160 = vadd.f32 %v3158, %v3159
    %v3161 = vsel %vm672, %v3114, 0.0
    %v3162 = vadd.f32 %v3160, %v3161
    %v3163 = vsel %vm672, %v3115, 0.0
    %v3164 = vadd.f32 %v3162, %v3163
    %v3165 = vsel %vm672, %v3116, 0.0
    %v3166 = vadd.f32 %v3164, %v3165
    %v3167 = vsel %vm672, %v3117, 0.0
    %v3168 = vadd.f32 %v3166, %v3167
    %v3169 = vrot.slane %v3168, 4
    %v3170 = vadd.f32 %v3168, %v3169
    %v3171 = vrot.slane %v3170, 2
    %v3172 = vadd.f32 %v3170, %v3171
    %v3173 = vrot.slane %v3172, 1
    %v3174 = vadd.f32 %v3172, %v3173
    %v3175 = vmul.f32 %v3091, 0.0048076925
    %v3176 = vmul.f32 %v3174, 0.0048076925
    %v3177 = vmul.f32 %v3175, %v3175
    %v3178 = vsub.f32 %v3176, %v3177
    %v3179 = vadd.f32 %v3178, 1e-05
    %v3180 = vrsqrt.pop %v3179
    %v3181 = vmul.f32 %v3180, %v3179
    %v3182 = vmul.f32 %v3181, %v3180
    %v3183 = vmul.f32 0.5, %v3182
    %v3184 = vsub.f32 1.5, %v3183
    %v3185 = vmul.f32 %v3180, %v3184
    %vm3186 = vweird.f32 %v3179
    %vm3187 = vweird.f32 %v3180
    %vm3188 = vmor %vm3186, %vm3187
    %v3189 = vsel %vm3188, %v3180, %v3185
    %v3190 = vsub.f32 %v3009, %v3175
    %v3191 = vsub.f32 %v3010, %v3175
    %v3192 = vsub.f32 %v3011, %v3175
    %v3193 = vsub.f32 %v3012, %v3175
    %v3194 = vsub.f32 %v3013, %v3175
    %v3195 = vsub.f32 %v3014, %v3175
    %v3196 = vsub.f32 %v3015, %v3175
    %v3197 = vsub.f32 %v3016, %v3175
    %v3198 = vsub.f32 %v3017, %v3175
    %v3199 = vsub.f32 %v3018, %v3175
    %v3200 = vsub.f32 %v3019, %v3175
    %v3201 = vsub.f32 %v3020, %v3175
    %v3202 = vsub.f32 %v3021, %v3175
    %v3203 = vsub.f32 %v3022, %v3175
    %v3204 = vsub.f32 %v3023, %v3175
    %v3205 = vsub.f32 %v3024, %v3175
    %v3206 = vsub.f32 %v3025, %v3175
    %v3207 = vsub.f32 %v3026, %v3175
    %v3208 = vsub.f32 %v3027, %v3175
    %v3209 = vsub.f32 %v3028, %v3175
    %v3210 = vsub.f32 %v3029, %v3175
    %v3211 = vsub.f32 %v3030, %v3175
    %v3212 = vsub.f32 %v3031, %v3175
    %v3213 = vsub.f32 %v3032, %v3175
    %v3214 = vsub.f32 %v3033, %v3175
    %v3215 = vsub.f32 %v3034, %v3175
    %s3216 = scalar_lea.vmem [#allocation2], 1
    %v3217 = vld [vmem:[%s3216] sm:$0x1]
    %v3218 = vmul.f32 %v3189, %v3217
    %v3219 = vperm.slane %v3218, 0
    %v3220 = vmul.f32 %v3190, %v3219
    %v3221 = vmul.f32 %v3191, %v3219
    %v3222 = vmul.f32 %v3192, %v3219
    %v3223 = vmul.f32 %v3193, %v3219
    %v3224 = vmul.f32 %v3194, %v3219
    %v3225 = vmul.f32 %v3195, %v3219
    %v3226 = vmul.f32 %v3196, %v3219
    %v3227 = vmul.f32 %v3197, %v3219
    %v3228 = vmul.f32 %v3198, %v3219
    %v3229 = vmul.f32 %v3199, %v3219
    %v3230 = vmul.f32 %v3200, %v3219
    %v3231 = vmul.f32 %v3201, %v3219
    %v3232 = vmul.f32 %v3202, %v3219
    %v3233 = vmul.f32 %v3203, %v3219
    %v3234 = vmul.f32 %v3204, %v3219
    %v3235 = vmul.f32 %v3205, %v3219
    %v3236 = vmul.f32 %v3206, %v3219
    %v3237 = vmul.f32 %v3207, %v3219
    %v3238 = vmul.f32 %v3208, %v3219
    %v3239 = vmul.f32 %v3209, %v3219
    %v3240 = vmul.f32 %v3210, %v3219
    %v3241 = vmul.f32 %v3211, %v3219
    %v3242 = vmul.f32 %v3212, %v3219
    %v3243 = vmul.f32 %v3213, %v3219
    %v3244 = vmul.f32 %v3214, %v3219
    %v3245 = vmul.f32 %v3215, %v3219
    %s3246 = scalar_lea.vmem [#allocation5], 1
    %v3247 = vld [vmem:[%s3246] sm:$0x1]
    %v3249 = vperm.slane %v3247, 0
    %v3251 = vadd.f32 %v3220, %v3249
    %v3252 = vadd.f32 %v3221, %v3249
    %v3253 = vadd.f32 %v3222, %v3249
    %v3254 = vadd.f32 %v3223, %v3249
    %v3255 = vadd.f32 %v3224, %v3249
    %v3256 = vadd.f32 %v3225, %v3249
    %v3257 = vadd.f32 %v3226, %v3249
    %v3258 = vadd.f32 %v3227, %v3249
    %v3259 = vadd.f32 %v3228, %v3249
    %v3260 = vadd.f32 %v3229, %v3249
    %v3261 = vadd.f32 %v3230, %v3249
    %v3262 = vadd.f32 %v3231, %v3249
    %v3263 = vadd.f32 %v3232, %v3249
    %v3264 = vadd.f32 %v3233, %v3249
    %v3265 = vadd.f32 %v3234, %v3249
    %v3266 = vadd.f32 %v3235, %v3249
    %v3267 = vadd.f32 %v3236, %v3249
    %v3268 = vadd.f32 %v3237, %v3249
    %v3269 = vadd.f32 %v3238, %v3249
    %v3270 = vadd.f32 %v3239, %v3249
    %v3271 = vadd.f32 %v3240, %v3249
    %v3272 = vadd.f32 %v3241, %v3249
    %v3273 = vadd.f32 %v3242, %v3249
    %v3274 = vadd.f32 %v3243, %v3249
    %v3275 = vadd.f32 %v3244, %v3249
    %v3276 = vadd.f32 %v3245, %v3249
    %v3277 = vpack.c.bf16 %v3251, %v3251
    %v3278 = vpack.c.bf16 %v3252, %v3252
    %v3279 = vpack.c.bf16 %v3253, %v3253
    %v3280 = vpack.c.bf16 %v3254, %v3254
    %v3281 = vpack.c.bf16 %v3255, %v3255
    %v3282 = vpack.c.bf16 %v3256, %v3256
    %v3283 = vpack.c.bf16 %v3257, %v3257
    %v3284 = vpack.c.bf16 %v3258, %v3258
    %v3285 = vpack.c.bf16 %v3259, %v3259
    %v3286 = vpack.c.bf16 %v3260, %v3260
    %v3287 = vpack.c.bf16 %v3261, %v3261
    %v3288 = vpack.c.bf16 %v3262, %v3262
    %v3289 = vpack.c.bf16 %v3263, %v3263
    %v3290 = vpack.c.bf16 %v3264, %v3264
    %v3291 = vpack.c.bf16 %v3265, %v3265
    %v3292 = vpack.c.bf16 %v3266, %v3266
    %v3293 = vpack.c.bf16 %v3267, %v3267
    %v3294 = vpack.c.bf16 %v3268, %v3268
    %v3295 = vpack.c.bf16 %v3269, %v3269
    %v3296 = vpack.c.bf16 %v3270, %v3270
    %v3297 = vpack.c.bf16 %v3271, %v3271
    %v3298 = vpack.c.bf16 %v3272, %v3272
    %v3299 = vpack.c.bf16 %v3273, %v3273
    %v3300 = vpack.c.bf16 %v3274, %v3274
    %v3301 = vpack.c.bf16 %v3275, %v3275
    %v3302 = vpack.c.bf16 %v3276, %v3276
    %s3303 = scalar_lea.vmem %s3, 32
    %v3304 = vld [vmem:[%s3303] sm:$0xf]
    %v3305 = vld [vmem:[%s3303 + $0x4] sm:$0xf]
    %v3306 = vld [vmem:[%s3303 + $0x8] sm:$0xf]
    %v3307 = vld [vmem:[%s3303 + $0xc] sm:$0xf]
    %s3308 = scalar_lea.vmem %s4, 32
    %v3309 = vld [vmem:[%s3308] sm:$0xf]
    %v3310 = vld [vmem:[%s3308 + $0x4] sm:$0xf]
    %v3311 = vld [vmem:[%s3308 + $0x8] sm:$0xf]
    %v3312 = vld [vmem:[%s3308 + $0xc] sm:$0xf]
    %v3331 = vunpack.c.l.b16 %v3285
    %v3332 = vunpack.c.l.b16 %v3286
    %v3333 = vunpack.c.l.b16 %v3287
    %v3334 = vunpack.c.l.b16 %v3288
    %v3335 = vunpack.c.l.b16 %v3289
    %v3336 = vunpack.c.l.b16 %v3290
    %v3337 = vunpack.c.l.b16 %v3291
    %v3338 = vunpack.c.l.b16 %v3292
    %v3339 = vunpack.c.l.b16 %v3293
    %v3340 = vunpack.c.l.b16 %v3294
    %v3341 = vunpack.c.l.b16 %v3295
    %v3342 = vunpack.c.l.b16 %v3296
    %v3343 = vunpack.c.l.b16 %v3297
    %v3344 = vunpack.c.l.b16 %v3298
    %v3345 = vunpack.c.l.b16 %v3299
    %v3346 = vunpack.c.l.b16 %v3300
    %v3347 = vunpack.c.l.b16 %v3301
    %v3348 = vunpack.c.l.b16 %v3302
    %v3349 = vpack.c.b16 %v3332, %v3331
    %v3350 = vpack.c.b16 %v3334, %v3333
    %v3351 = vpack.c.b16 %v3336, %v3335
    %v3352 = vpack.c.b16 %v3338, %v3337
    %v3353 = vpack.c.b16 %v3340, %v3339
    %v3354 = vpack.c.b16 %v3342, %v3341
    %v3355 = vpack.c.b16 %v3344, %v3343
    %v3356 = vpack.c.b16 %v3346, %v3345
    %v3357 = vpack.c.b16 %v3348, %v3347
    %v3362 = vunpack.c.l.b16 %v3309
    %v3363 = vunpack.c.l.b16 %v3310
    %v3364 = vunpack.c.l.b16 %v3311
    %v3365 = vunpack.c.l.b16 %v3312
    %v3366 = vpack.c.b16 %v3363, %v3362
    %v3367 = vpack.c.b16 %v3365, %v3364
    %v3371 = vsel %vm672, %v3349, 0
    %v3374 = vsel %vm672, %v3350, 0
    %v3377 = vsel %vm672, %v3351, 0
    %v3380 = vsel %vm672, %v3352, 0
    %v3383 = vsel %vm672, %v3353, 0
    %v3386 = vsel %vm672, %v3354, 0
    %v3389 = vsel %vm672, %v3355, 0
    %v3392 = vsel %vm672, %v3356, 0
    %v3395 = vsel %vm672, %v3357, 0
    %3397 = vmatpush.bf16.msra.mxu0 0
    %3398 = vmatpush.bf16.msra.mxu0 0
    %3399 = vmatpush.bf16.msra.mxu0 0
    %3400 = vmatpush.bf16.msra.mxu0 0
    %3401 = vmatpush.bf16.msra.mxu0 0
    %3402 = vmatpush.bf16.msra.mxu0 0
    %3403 = vmatpush.bf16.msra.mxu0 %v3367
    %3404 = vmatpush.bf16.msra.mxu0 %v3366
    %3405 = vmatmul.bf16.gmra.mxu0 %v3371
    %v3406 = vpop.f32.mrf.mxu0
    %v3407 = vadd.f32 0.0, %v3406
    %v3408 = vpop.f32.mrf.mxu0
    %v3409 = vadd.f32 0.0, %v3408
    %3410 = vmatmul.bf16.gmra.mxu0 %v3374
    %v3411 = vpop.f32.mrf.mxu0
    %v3412 = vadd.f32 0.0, %v3411
    %v3413 = vpop.f32.mrf.mxu0
    %v3414 = vadd.f32 0.0, %v3413
    %3415 = vmatmul.bf16.gmra.mxu0 %v3377
    %v3416 = vpop.f32.mrf.mxu0
    %v3417 = vadd.f32 0.0, %v3416
    %v3418 = vpop.f32.mrf.mxu0
    %v3419 = vadd.f32 0.0, %v3418
    %3420 = vmatmul.bf16.gmra.mxu0 %v3380
    %v3421 = vpop.f32.mrf.mxu0
    %v3422 = vadd.f32 0.0, %v3421
    %v3423 = vpop.f32.mrf.mxu0
    %v3424 = vadd.f32 0.0, %v3423
    %3425 = vmatmul.bf16.gmra.mxu0 %v3383
    %v3426 = vpop.f32.mrf.mxu0
    %v3427 = vadd.f32 0.0, %v3426
    %v3428 = vpop.f32.mrf.mxu0
    %v3429 = vadd.f32 0.0, %v3428
    %3430 = vmatmul.bf16.gmra.mxu0 %v3386
    %v3431 = vpop.f32.mrf.mxu0
    %v3432 = vadd.f32 0.0, %v3431
    %v3433 = vpop.f32.mrf.mxu0
    %v3434 = vadd.f32 0.0, %v3433
    %3435 = vmatmul.bf16.gmra.mxu0 %v3389
    %v3436 = vpop.f32.mrf.mxu0
    %v3437 = vadd.f32 0.0, %v3436
    %v3438 = vpop.f32.mrf.mxu0
    %v3439 = vadd.f32 0.0, %v3438
    %3440 = vmatmul.bf16.gmra.mxu0 %v3392
    %v3441 = vpop.f32.mrf.mxu0
    %v3442 = vadd.f32 0.0, %v3441
    %v3443 = vpop.f32.mrf.mxu0
    %v3444 = vadd.f32 0.0, %v3443
    %3445 = vmatmul.bf16.gmra.mxu0 %v3395
    %v3446 = vpop.f32.mrf.mxu0
    %v3447 = vadd.f32 0.0, %v3446
    %v3448 = vpop.f32.mrf.mxu0
    %v3449 = vadd.f32 0.0, %v3448
    %3450 = vdwg.mxu0
    %v3459 = vunpack.c.l.b16 %v3277
    %v3460 = vunpack.c.l.b16 %v3278
    %v3461 = vunpack.c.l.b16 %v3279
    %v3462 = vunpack.c.l.b16 %v3280
    %v3463 = vunpack.c.l.b16 %v3281
    %v3464 = vunpack.c.l.b16 %v3282
    %v3465 = vunpack.c.l.b16 %v3283
    %v3466 = vunpack.c.l.b16 %v3284
    %v3467 = vpack.c.b16 %v3460, %v3459
    %v3468 = vpack.c.b16 %v3462, %v3461
    %v3469 = vpack.c.b16 %v3464, %v3463
    %v3470 = vpack.c.b16 %v3466, %v3465
    %v3475 = vunpack.c.l.b16 %v3304
    %v3476 = vunpack.c.l.b16 %v3305
    %v3477 = vunpack.c.l.b16 %v3306
    %v3478 = vunpack.c.l.b16 %v3307
    %v3479 = vpack.c.b16 %v3476, %v3475
    %v3480 = vpack.c.b16 %v3478, %v3477
    %v3484 = vsel %vm672, %v3467, 0
    %v3487 = vsel %vm672, %v3468, 0
    %v3490 = vsel %vm672, %v3469, 0
    %v3493 = vsel %vm672, %v3470, 0
    %3495 = vmatpush.bf16.msra.mxu0 0
    %3496 = vmatpush.bf16.msra.mxu0 0
    %3497 = vmatpush.bf16.msra.mxu0 0
    %3498 = vmatpush.bf16.msra.mxu0 0
    %3499 = vmatpush.bf16.msra.mxu0 0
    %3500 = vmatpush.bf16.msra.mxu0 0
    %3501 = vmatpush.bf16.msra.mxu0 %v3480
    %3502 = vmatpush.bf16.msra.mxu0 %v3479
    %3503 = vmatmul.bf16.gmra.mxu0 %v3484
    %v3504 = vpop.f32.mrf.mxu0
    %v3505 = vadd.f32 %v3407, %v3504
    %v3506 = vpop.f32.mrf.mxu0
    %v3507 = vadd.f32 %v3409, %v3506
    %3508 = vmatmul.bf16.gmra.mxu0 %v3487
    %v3509 = vpop.f32.mrf.mxu0
    %v3510 = vadd.f32 %v3412, %v3509
    %v3511 = vpop.f32.mrf.mxu0
    %v3512 = vadd.f32 %v3414, %v3511
    %3513 = vmatmul.bf16.gmra.mxu0 %v3490
    %v3514 = vpop.f32.mrf.mxu0
    %v3515 = vadd.f32 %v3417, %v3514
    %v3516 = vpop.f32.mrf.mxu0
    %v3517 = vadd.f32 %v3419, %v3516
    %3518 = vmatmul.bf16.gmra.mxu0 %v3493
    %v3519 = vpop.f32.mrf.mxu0
    %v3520 = vadd.f32 %v3422, %v3519
    %v3521 = vpop.f32.mrf.mxu0
    %v3522 = vadd.f32 %v3424, %v3521
    %3523 = vmatmul.bf16.gmra.mxu0 %v3371
    %v3524 = vpop.f32.mrf.mxu0
    %v3525 = vadd.f32 %v3427, %v3524
    %v3526 = vpop.f32.mrf.mxu0
    %v3527 = vadd.f32 %v3429, %v3526
    %3528 = vmatmul.bf16.gmra.mxu0 %v3374
    %v3529 = vpop.f32.mrf.mxu0
    %v3530 = vadd.f32 %v3432, %v3529
    %v3531 = vpop.f32.mrf.mxu0
    %v3532 = vadd.f32 %v3434, %v3531
    %3533 = vmatmul.bf16.gmra.mxu0 %v3377
    %v3534 = vpop.f32.mrf.mxu0
    %v3535 = vadd.f32 %v3437, %v3534
    %v3536 = vpop.f32.mrf.mxu0
    %v3537 = vadd.f32 %v3439, %v3536
    %3538 = vmatmul.bf16.gmra.mxu0 %v3380
    %v3539 = vpop.f32.mrf.mxu0
    %v3540 = vadd.f32 %v3442, %v3539
    %v3541 = vpop.f32.mrf.mxu0
    %v3542 = vadd.f32 %v3444, %v3541
    %3543 = vmatmul.bf16.gmra.mxu0 %v3383
    %v3544 = vpop.f32.mrf.mxu0
    %v3545 = vadd.f32 %v3447, %v3544
    %v3546 = vpop.f32.mrf.mxu0
    %v3547 = vadd.f32 %v3449, %v3546
    %3548 = vdwg.mxu0
    %s3549 = scalar_lea.vmem %s5, 2
    %v3550 = vld [vmem:[%s3549] sm:$0x1]
    %v3552 = vperm.slane %v3550, 0
    %v3554 = vadd.f32 %v3505, %v3552
    %v3555 = vadd.f32 %v3507, %v3552
    %v3556 = vadd.f32 %v3510, %v3552
    %v3557 = vadd.f32 %v3512, %v3552
    %v3558 = vadd.f32 %v3515, %v3552
    %v3559 = vadd.f32 %v3517, %v3552
    %v3560 = vadd.f32 %v3520, %v3552
    %v3561 = vadd.f32 %v3522, %v3552
    %v3562 = vadd.f32 %v3525, %v3552
    %v3563 = vadd.f32 %v3527, %v3552
    %v3564 = vadd.f32 %v3530, %v3552
    %v3565 = vadd.f32 %v3532, %v3552
    %v3566 = vadd.f32 %v3535, %v3552
    %v3567 = vadd.f32 %v3537, %v3552
    %v3568 = vadd.f32 %v3540, %v3552
    %v3569 = vadd.f32 %v3542, %v3552
    %v3570 = vadd.f32 %v3545, %v3552
    %v3571 = vadd.f32 %v3547, %v3552
    %v3572 = vtanh.pop %v3554
    %v3573 = vtanh.pop %v3555
    %v3574 = vtanh.pop %v3556
    %v3575 = vtanh.pop %v3557
    %v3576 = vtanh.pop %v3558
    %v3577 = vtanh.pop %v3559
    %v3578 = vtanh.pop %v3560
    %v3579 = vtanh.pop %v3561
    %v3580 = vtanh.pop %v3562
    %v3581 = vtanh.pop %v3563
    %v3582 = vtanh.pop %v3564
    %v3583 = vtanh.pop %v3565
    %v3584 = vtanh.pop %v3566
    %v3585 = vtanh.pop %v3567
    %v3586 = vtanh.pop %v3568
    %v3587 = vtanh.pop %v3569
    %v3588 = vtanh.pop %v3570
    %v3589 = vtanh.pop %v3571
    %v3590 = vxor.u32 %v3554, 2147483648
    %v3591 = vxor.u32 %v3555, 2147483648
    %v3592 = vxor.u32 %v3556, 2147483648
    %v3593 = vxor.u32 %v3557, 2147483648
    %v3594 = vxor.u32 %v3558, 2147483648
    %v3595 = vxor.u32 %v3559, 2147483648
    %v3596 = vxor.u32 %v3560, 2147483648
    %v3597 = vxor.u32 %v3561, 2147483648
    %v3598 = vxor.u32 %v3562, 2147483648
    %v3599 = vxor.u32 %v3563, 2147483648
    %v3600 = vxor.u32 %v3564, 2147483648
    %v3601 = vxor.u32 %v3565, 2147483648
    %v3602 = vxor.u32 %v3566, 2147483648
    %v3603 = vxor.u32 %v3567, 2147483648
    %v3604 = vxor.u32 %v3568, 2147483648
    %v3605 = vxor.u32 %v3569, 2147483648
    %v3606 = vxor.u32 %v3570, 2147483648
    %v3607 = vxor.u32 %v3571, 2147483648
    %v3608 = vmul.f32 %v3590, 1.442695
    %v3609 = vpow.pop %v3608
    %v3610 = vmul.f32 %v3591, 1.442695
    %v3611 = vpow.pop %v3610
    %v3612 = vmul.f32 %v3592, 1.442695
    %v3613 = vpow.pop %v3612
    %v3614 = vmul.f32 %v3593, 1.442695
    %v3615 = vpow.pop %v3614
    %v3616 = vmul.f32 %v3594, 1.442695
    %v3617 = vpow.pop %v3616
    %v3618 = vmul.f32 %v3595, 1.442695
    %v3619 = vpow.pop %v3618
    %v3620 = vmul.f32 %v3596, 1.442695
    %v3621 = vpow.pop %v3620
    %v3622 = vmul.f32 %v3597, 1.442695
    %v3623 = vpow.pop %v3622
    %v3624 = vmul.f32 %v3598, 1.442695
    %v3625 = vpow.pop %v3624
    %v3626 = vmul.f32 %v3599, 1.442695
    %v3627 = vpow.pop %v3626
    %v3628 = vmul.f32 %v3600, 1.442695
    %v3629 = vpow.pop %v3628
    %v3630 = vmul.f32 %v3601, 1.442695
    %v3631 = vpow.pop %v3630
    %v3632 = vmul.f32 %v3602, 1.442695
    %v3633 = vpow.pop %v3632
    %v3634 = vmul.f32 %v3603, 1.442695
    %v3635 = vpow.pop %v3634
    %v3636 = vmul.f32 %v3604, 1.442695
    %v3637 = vpow.pop %v3636
    %v3638 = vmul.f32 %v3605, 1.442695
    %v3639 = vpow.pop %v3638
    %v3640 = vmul.f32 %v3606, 1.442695
    %v3641 = vpow.pop %v3640
    %v3642 = vmul.f32 %v3607, 1.442695
    %v3643 = vpow.pop %v3642
    %v3644 = vadd.f32 %v3609, 1.0
    %v3645 = vadd.f32 %v3611, 1.0
    %v3646 = vadd.f32 %v3613, 1.0
    %v3647 = vadd.f32 %v3615, 1.0
    %v3648 = vadd.f32 %v3617, 1.0
    %v3649 = vadd.f32 %v3619, 1.0
    %v3650 = vadd.f32 %v3621, 1.0
    %v3651 = vadd.f32 %v3623, 1.0
    %v3652 = vadd.f32 %v3625, 1.0
    %v3653 = vadd.f32 %v3627, 1.0
    %v3654 = vadd.f32 %v3629, 1.0
    %v3655 = vadd.f32 %v3631, 1.0
    %v3656 = vadd.f32 %v3633, 1.0
    %v3657 = vadd.f32 %v3635, 1.0
    %v3658 = vadd.f32 %v3637, 1.0
    %v3659 = vadd.f32 %v3639, 1.0
    %v3660 = vadd.f32 %v3641, 1.0
    %v3661 = vadd.f32 %v3643, 1.0
    %v3662 = vrcp.pop %v3644
    %v3663 = vmul.f32 %v3644, %v3662
    %v3664 = vsub.f32 1.0, %v3663
    %v3665 = vmul.f32 %v3662, %v3664
    %v3666 = vadd.f32 %v3662, %v3665
    %vm3667 = vweird.f32 %v3644
    %vm3668 = vweird.f32 %v3662
    %vm3669 = vmor %vm3667, %vm3668
    %v3670 = vsel %vm3669, %v3662, %v3666
    %v3671 = vand.u32 2147483647, %v3644
    %vm3672 = vcmp.eq.f32.partialorder %v3671, 8.507059e+37
    %v3673 = vand.u32 %v3644, 2147483648
    %v3674 = vor.u32 1.1754944e-38, %v3673
    %v3675 = vsel %vm3672, %v3674, %v3670
    %v3676 = vmul.f32 1.0, %v3675
    %v3677 = vrcp.pop %v3645
    %v3678 = vmul.f32 %v3645, %v3677
    %v3679 = vsub.f32 1.0, %v3678
    %v3680 = vmul.f32 %v3677, %v3679
    %v3681 = vadd.f32 %v3677, %v3680
    %vm3682 = vweird.f32 %v3645
    %vm3683 = vweird.f32 %v3677
    %vm3684 = vmor %vm3682, %vm3683
    %v3685 = vsel %vm3684, %v3677, %v3681
    %v3686 = vand.u32 2147483647, %v3645
    %vm3687 = vcmp.eq.f32.partialorder %v3686, 8.507059e+37
    %v3688 = vand.u32 %v3645, 2147483648
    %v3689 = vor.u32 1.1754944e-38, %v3688
    %v3690 = vsel %vm3687, %v3689, %v3685
    %v3691 = vmul.f32 1.0, %v3690
    %v3692 = vrcp.pop %v3646
    %v3693 = vmul.f32 %v3646, %v3692
    %v3694 = vsub.f32 1.0, %v3693
    %v3695 = vmul.f32 %v3692, %v3694
    %v3696 = vadd.f32 %v3692, %v3695
    %vm3697 = vweird.f32 %v3646
    %vm3698 = vweird.f32 %v3692
    %vm3699 = vmor %vm3697, %vm3698
    %v3700 = vsel %vm3699, %v3692, %v3696
    %v3701 = vand.u32 2147483647, %v3646
    %vm3702 = vcmp.eq.f32.partialorder %v3701, 8.507059e+37
    %v3703 = vand.u32 %v3646, 2147483648
    %v3704 = vor.u32 1.1754944e-38, %v3703
    %v3705 = vsel %vm3702, %v3704, %v3700
    %v3706 = vmul.f32 1.0, %v3705
    %v3707 = vrcp.pop %v3647
    %v3708 = vmul.f32 %v3647, %v3707
    %v3709 = vsub.f32 1.0, %v3708
    %v3710 = vmul.f32 %v3707, %v3709
    %v3711 = vadd.f32 %v3707, %v3710
    %vm3712 = vweird.f32 %v3647
    %vm3713 = vweird.f32 %v3707
    %vm3714 = vmor %vm3712, %vm3713
    %v3715 = vsel %vm3714, %v3707, %v3711
    %v3716 = vand.u32 2147483647, %v3647
    %vm3717 = vcmp.eq.f32.partialorder %v3716, 8.507059e+37
    %v3718 = vand.u32 %v3647, 2147483648
    %v3719 = vor.u32 1.1754944e-38, %v3718
    %v3720 = vsel %vm3717, %v3719, %v3715
    %v3721 = vmul.f32 1.0, %v3720
    %v3722 = vrcp.pop %v3648
    %v3723 = vmul.f32 %v3648, %v3722
    %v3724 = vsub.f32 1.0, %v3723
    %v3725 = vmul.f32 %v3722, %v3724
    %v3726 = vadd.f32 %v3722, %v3725
    %vm3727 = vweird.f32 %v3648
    %vm3728 = vweird.f32 %v3722
    %vm3729 = vmor %vm3727, %vm3728
    %v3730 = vsel %vm3729, %v3722, %v3726
    %v3731 = vand.u32 2147483647, %v3648
    %vm3732 = vcmp.eq.f32.partialorder %v3731, 8.507059e+37
    %v3733 = vand.u32 %v3648, 2147483648
    %v3734 = vor.u32 1.1754944e-38, %v3733
    %v3735 = vsel %vm3732, %v3734, %v3730
    %v3736 = vmul.f32 1.0, %v3735
    %v3737 = vrcp.pop %v3649
    %v3738 = vmul.f32 %v3649, %v3737
    %v3739 = vsub.f32 1.0, %v3738
    %v3740 = vmul.f32 %v3737, %v3739
    %v3741 = vadd.f32 %v3737, %v3740
    %vm3742 = vweird.f32 %v3649
    %vm3743 = vweird.f32 %v3737
    %vm3744 = vmor %vm3742, %vm3743
    %v3745 = vsel %vm3744, %v3737, %v3741
    %v3746 = vand.u32 2147483647, %v3649
    %vm3747 = vcmp.eq.f32.partialorder %v3746, 8.507059e+37
    %v3748 = vand.u32 %v3649, 2147483648
    %v3749 = vor.u32 1.1754944e-38, %v3748
    %v3750 = vsel %vm3747, %v3749, %v3745
    %v3751 = vmul.f32 1.0, %v3750
    %v3752 = vrcp.pop %v3650
    %v3753 = vmul.f32 %v3650, %v3752
    %v3754 = vsub.f32 1.0, %v3753
    %v3755 = vmul.f32 %v3752, %v3754
    %v3756 = vadd.f32 %v3752, %v3755
    %vm3757 = vweird.f32 %v3650
    %vm3758 = vweird.f32 %v3752
    %vm3759 = vmor %vm3757, %vm3758
    %v3760 = vsel %vm3759, %v3752, %v3756
    %v3761 = vand.u32 2147483647, %v3650
    %vm3762 = vcmp.eq.f32.partialorder %v3761, 8.507059e+37
    %v3763 = vand.u32 %v3650, 2147483648
    %v3764 = vor.u32 1.1754944e-38, %v3763
    %v3765 = vsel %vm3762, %v3764, %v3760
    %v3766 = vmul.f32 1.0, %v3765
    %v3767 = vrcp.pop %v3651
    %v3768 = vmul.f32 %v3651, %v3767
    %v3769 = vsub.f32 1.0, %v3768
    %v3770 = vmul.f32 %v3767, %v3769
    %v3771 = vadd.f32 %v3767, %v3770
    %vm3772 = vweird.f32 %v3651
    %vm3773 = vweird.f32 %v3767
    %vm3774 = vmor %vm3772, %vm3773
    %v3775 = vsel %vm3774, %v3767, %v3771
    %v3776 = vand.u32 2147483647, %v3651
    %vm3777 = vcmp.eq.f32.partialorder %v3776, 8.507059e+37
    %v3778 = vand.u32 %v3651, 2147483648
    %v3779 = vor.u32 1.1754944e-38, %v3778
    %v3780 = vsel %vm3777, %v3779, %v3775
    %v3781 = vmul.f32 1.0, %v3780
    %v3782 = vrcp.pop %v3652
    %v3783 = vmul.f32 %v3652, %v3782
    %v3784 = vsub.f32 1.0, %v3783
    %v3785 = vmul.f32 %v3782, %v3784
    %v3786 = vadd.f32 %v3782, %v3785
    %vm3787 = vweird.f32 %v3652
    %vm3788 = vweird.f32 %v3782
    %vm3789 = vmor %vm3787, %vm3788
    %v3790 = vsel %vm3789, %v3782, %v3786
    %v3791 = vand.u32 2147483647, %v3652
    %vm3792 = vcmp.eq.f32.partialorder %v3791, 8.507059e+37
    %v3793 = vand.u32 %v3652, 2147483648
    %v3794 = vor.u32 1.1754944e-38, %v3793
    %v3795 = vsel %vm3792, %v3794, %v3790
    %v3796 = vmul.f32 1.0, %v3795
    %v3797 = vrcp.pop %v3653
    %v3798 = vmul.f32 %v3653, %v3797
    %v3799 = vsub.f32 1.0, %v3798
    %v3800 = vmul.f32 %v3797, %v3799
    %v3801 = vadd.f32 %v3797, %v3800
    %vm3802 = vweird.f32 %v3653
    %vm3803 = vweird.f32 %v3797
    %vm3804 = vmor %vm3802, %vm3803
    %v3805 = vsel %vm3804, %v3797, %v3801
    %v3806 = vand.u32 2147483647, %v3653
    %vm3807 = vcmp.eq.f32.partialorder %v3806, 8.507059e+37
    %v3808 = vand.u32 %v3653, 2147483648
    %v3809 = vor.u32 1.1754944e-38, %v3808
    %v3810 = vsel %vm3807, %v3809, %v3805
    %v3811 = vmul.f32 1.0, %v3810
    %v3812 = vrcp.pop %v3654
    %v3813 = vmul.f32 %v3654, %v3812
    %v3814 = vsub.f32 1.0, %v3813
    %v3815 = vmul.f32 %v3812, %v3814
    %v3816 = vadd.f32 %v3812, %v3815
    %vm3817 = vweird.f32 %v3654
    %vm3818 = vweird.f32 %v3812
    %vm3819 = vmor %vm3817, %vm3818
    %v3820 = vsel %vm3819, %v3812, %v3816
    %v3821 = vand.u32 2147483647, %v3654
    %vm3822 = vcmp.eq.f32.partialorder %v3821, 8.507059e+37
    %v3823 = vand.u32 %v3654, 2147483648
    %v3824 = vor.u32 1.1754944e-38, %v3823
    %v3825 = vsel %vm3822, %v3824, %v3820
    %v3826 = vmul.f32 1.0, %v3825
    %v3827 = vrcp.pop %v3655
    %v3828 = vmul.f32 %v3655, %v3827
    %v3829 = vsub.f32 1.0, %v3828
    %v3830 = vmul.f32 %v3827, %v3829
    %v3831 = vadd.f32 %v3827, %v3830
    %vm3832 = vweird.f32 %v3655
    %vm3833 = vweird.f32 %v3827
    %vm3834 = vmor %vm3832, %vm3833
    %v3835 = vsel %vm3834, %v3827, %v3831
    %v3836 = vand.u32 2147483647, %v3655
    %vm3837 = vcmp.eq.f32.partialorder %v3836, 8.507059e+37
    %v3838 = vand.u32 %v3655, 2147483648
    %v3839 = vor.u32 1.1754944e-38, %v3838
    %v3840 = vsel %vm3837, %v3839, %v3835
    %v3841 = vmul.f32 1.0, %v3840
    %v3842 = vrcp.pop %v3656
    %v3843 = vmul.f32 %v3656, %v3842
    %v3844 = vsub.f32 1.0, %v3843
    %v3845 = vmul.f32 %v3842, %v3844
    %v3846 = vadd.f32 %v3842, %v3845
    %vm3847 = vweird.f32 %v3656
    %vm3848 = vweird.f32 %v3842
    %vm3849 = vmor %vm3847, %vm3848
    %v3850 = vsel %vm3849, %v3842, %v3846
    %v3851 = vand.u32 2147483647, %v3656
    %vm3852 = vcmp.eq.f32.partialorder %v3851, 8.507059e+37
    %v3853 = vand.u32 %v3656, 2147483648
    %v3854 = vor.u32 1.1754944e-38, %v3853
    %v3855 = vsel %vm3852, %v3854, %v3850
    %v3856 = vmul.f32 1.0, %v3855
    %v3857 = vrcp.pop %v3657
    %v3858 = vmul.f32 %v3657, %v3857
    %v3859 = vsub.f32 1.0, %v3858
    %v3860 = vmul.f32 %v3857, %v3859
    %v3861 = vadd.f32 %v3857, %v3860
    %vm3862 = vweird.f32 %v3657
    %vm3863 = vweird.f32 %v3857
    %vm3864 = vmor %vm3862, %vm3863
    %v3865 = vsel %vm3864, %v3857, %v3861
    %v3866 = vand.u32 2147483647, %v3657
    %vm3867 = vcmp.eq.f32.partialorder %v3866, 8.507059e+37
    %v3868 = vand.u32 %v3657, 2147483648
    %v3869 = vor.u32 1.1754944e-38, %v3868
    %v3870 = vsel %vm3867, %v3869, %v3865
    %v3871 = vmul.f32 1.0, %v3870
    %v3872 = vrcp.pop %v3658
    %v3873 = vmul.f32 %v3658, %v3872
    %v3874 = vsub.f32 1.0, %v3873
    %v3875 = vmul.f32 %v3872, %v3874
    %v3876 = vadd.f32 %v3872, %v3875
    %vm3877 = vweird.f32 %v3658
    %vm3878 = vweird.f32 %v3872
    %vm3879 = vmor %vm3877, %vm3878
    %v3880 = vsel %vm3879, %v3872, %v3876
    %v3881 = vand.u32 2147483647, %v3658
    %vm3882 = vcmp.eq.f32.partialorder %v3881, 8.507059e+37
    %v3883 = vand.u32 %v3658, 2147483648
    %v3884 = vor.u32 1.1754944e-38, %v3883
    %v3885 = vsel %vm3882, %v3884, %v3880
    %v3886 = vmul.f32 1.0, %v3885
    %v3887 = vrcp.pop %v3659
    %v3888 = vmul.f32 %v3659, %v3887
    %v3889 = vsub.f32 1.0, %v3888
    %v3890 = vmul.f32 %v3887, %v3889
    %v3891 = vadd.f32 %v3887, %v3890
    %vm3892 = vweird.f32 %v3659
    %vm3893 = vweird.f32 %v3887
    %vm3894 = vmor %vm3892, %vm3893
    %v3895 = vsel %vm3894, %v3887, %v3891
    %v3896 = vand.u32 2147483647, %v3659
    %vm3897 = vcmp.eq.f32.partialorder %v3896, 8.507059e+37
    %v3898 = vand.u32 %v3659, 2147483648
    %v3899 = vor.u32 1.1754944e-38, %v3898
    %v3900 = vsel %vm3897, %v3899, %v3895
    %v3901 = vmul.f32 1.0, %v3900
    %v3902 = vrcp.pop %v3660
    %v3903 = vmul.f32 %v3660, %v3902
    %v3904 = vsub.f32 1.0, %v3903
    %v3905 = vmul.f32 %v3902, %v3904
    %v3906 = vadd.f32 %v3902, %v3905
    %vm3907 = vweird.f32 %v3660
    %vm3908 = vweird.f32 %v3902
    %vm3909 = vmor %vm3907, %vm3908
    %v3910 = vsel %vm3909, %v3902, %v3906
    %v3911 = vand.u32 2147483647, %v3660
    %vm3912 = vcmp.eq.f32.partialorder %v3911, 8.507059e+37
    %v3913 = vand.u32 %v3660, 2147483648
    %v3914 = vor.u32 1.1754944e-38, %v3913
    %v3915 = vsel %vm3912, %v3914, %v3910
    %v3916 = vmul.f32 1.0, %v3915
    %v3917 = vrcp.pop %v3661
    %v3918 = vmul.f32 %v3661, %v3917
    %v3919 = vsub.f32 1.0, %v3918
    %v3920 = vmul.f32 %v3917, %v3919
    %v3921 = vadd.f32 %v3917, %v3920
    %vm3922 = vweird.f32 %v3661
    %vm3923 = vweird.f32 %v3917
    %vm3924 = vmor %vm3922, %vm3923
    %v3925 = vsel %vm3924, %v3917, %v3921
    %v3926 = vand.u32 2147483647, %v3661
    %vm3927 = vcmp.eq.f32.partialorder %v3926, 8.507059e+37
    %v3928 = vand.u32 %v3661, 2147483648
    %v3929 = vor.u32 1.1754944e-38, %v3928
    %v3930 = vsel %vm3927, %v3929, %v3925
    %v3931 = vmul.f32 1.0, %v3930
    %3950 = vrot.lane.b32.xlu0 %v3676, 96
    %v3951 = vpop.permute.xlu0 %3950
    %3952 = vrot.lane.b32.xlu0 %v3691, 96
    %v3953 = vpop.permute.xlu0 %3952
    %3954 = vrot.lane.b32.xlu0 %v3706, 96
    %v3955 = vpop.permute.xlu0 %3954
    %3956 = vrot.lane.b32.xlu0 %v3721, 96
    %v3957 = vpop.permute.xlu0 %3956
    %3958 = vrot.lane.b32.xlu0 %v3736, 96
    %v3959 = vpop.permute.xlu0 %3958
    %3960 = vrot.lane.b32.xlu0 %v3751, 96
    %v3961 = vpop.permute.xlu0 %3960
    %3962 = vrot.lane.b32.xlu0 %v3766, 96
    %v3963 = vpop.permute.xlu0 %3962
    %3964 = vrot.lane.b32.xlu0 %v3781, 96
    %v3965 = vpop.permute.xlu0 %3964
    %3966 = vrot.lane.b32.xlu0 %v3796, 96
    %v3967 = vpop.permute.xlu0 %3966
    %3968 = vrot.lane.b32.xlu0 %v3811, 96
    %v3969 = vpop.permute.xlu0 %3968
    %3970 = vrot.lane.b32.xlu0 %v3826, 96
    %v3971 = vpop.permute.xlu0 %3970
    %3972 = vrot.lane.b32.xlu0 %v3841, 96
    %v3973 = vpop.permute.xlu0 %3972
    %3974 = vrot.lane.b32.xlu0 %v3856, 96
    %v3975 = vpop.permute.xlu0 %3974
    %3976 = vrot.lane.b32.xlu0 %v3871, 96
    %v3977 = vpop.permute.xlu0 %3976
    %3978 = vrot.lane.b32.xlu0 %v3886, 96
    %v3979 = vpop.permute.xlu0 %3978
    %3980 = vrot.lane.b32.xlu0 %v3901, 96
    %v3981 = vpop.permute.xlu0 %3980
    %3982 = vrot.lane.b32.xlu0 %v3916, 96
    %v3983 = vpop.permute.xlu0 %3982
    %3984 = vrot.lane.b32.xlu0 %v3931, 96
    %v3985 = vpop.permute.xlu0 %3984
    %v4004 = vmul.f32 %v3572, %v3951
    %v4005 = vmul.f32 %v3573, %v3953
    %v4006 = vmul.f32 %v3574, %v3955
    %v4007 = vmul.f32 %v3575, %v3957
    %v4008 = vmul.f32 %v3576, %v3959
    %v4009 = vmul.f32 %v3577, %v3961
    %v4010 = vmul.f32 %v3578, %v3963
    %v4011 = vmul.f32 %v3579, %v3965
    %v4012 = vmul.f32 %v3580, %v3967
    %v4013 = vmul.f32 %v3581, %v3969
    %v4014 = vmul.f32 %v3582, %v3971
    %v4015 = vmul.f32 %v3583, %v3973
    %v4016 = vmul.f32 %v3584, %v3975
    %v4017 = vmul.f32 %v3585, %v3977
    %v4018 = vmul.f32 %v3586, %v3979
    %v4019 = vmul.f32 %v3587, %v3981
    %v4020 = vmul.f32 %v3588, %v3983
    %v4021 = vmul.f32 %v3589, %v3985
    %v4022 = vadd.f32 %v3007, %v4020
    %v4023 = vadd.f32 %v3008, %v4021
    %v4024 = vadd.f32 %v4004, %v3259
    %v4025 = vadd.f32 %v4005, %v3260
    %v4026 = vadd.f32 %v4006, %v3261
    %v4027 = vadd.f32 %v4007, %v3262
    %v4028 = vadd.f32 %v4008, %v3263
    %v4029 = vadd.f32 %v4009, %v3264
    %v4030 = vadd.f32 %v4010, %v3265
    %v4031 = vadd.f32 %v4011, %v3266
    %v4032 = vadd.f32 %v4012, %v3267
    %v4033 = vadd.f32 %v4013, %v3268
    %v4034 = vadd.f32 %v4014, %v3269
    %v4035 = vadd.f32 %v4015, %v3270
    %v4036 = vadd.f32 %v4016, %v3271
    %v4037 = vadd.f32 %v4017, %v3272
    %v4038 = vadd.f32 %v4018, %v3273
    %v4039 = vadd.f32 %v4019, %v3274
    %v4040 = vadd.f32 %v4020, %v3275
    %v4041 = vadd.f32 %v4021, %v3276
    %v4042 = vsel %vm672, %v4024, 0.0
    %v4043 = vsel %vm672, %v4025, 0.0
    %v4044 = vadd.f32 %v4042, %v4043
    %v4045 = vsel %vm672, %v4026, 0.0
    %v4046 = vadd.f32 %v4044, %v4045
    %v4047 = vsel %vm672, %v4027, 0.0
    %v4048 = vadd.f32 %v4046, %v4047
    %v4049 = vsel %vm672, %v4028, 0.0
    %v4050 = vadd.f32 %v4048, %v4049
    %v4051 = vsel %vm672, %v4029, 0.0
    %v4052 = vadd.f32 %v4050, %v4051
    %v4053 = vsel %vm672, %v4030, 0.0
    %v4054 = vadd.f32 %v4052, %v4053
    %v4055 = vsel %vm672, %v4031, 0.0
    %v4056 = vadd.f32 %v4054, %v4055
    %v4057 = vsel %vm672, %v4032, 0.0
    %v4058 = vadd.f32 %v4056, %v4057
    %v4059 = vsel %vm672, %v4033, 0.0
    %v4060 = vadd.f32 %v4058, %v4059
    %v4061 = vsel %vm672, %v4034, 0.0
    %v4062 = vadd.f32 %v4060, %v4061
    %v4063 = vsel %vm672, %v4035, 0.0
    %v4064 = vadd.f32 %v4062, %v4063
    %v4065 = vsel %vm672, %v4036, 0.0
    %v4066 = vadd.f32 %v4064, %v4065
    %v4067 = vsel %vm672, %v4037, 0.0
    %v4068 = vadd.f32 %v4066, %v4067
    %v4069 = vsel %vm672, %v4038, 0.0
    %v4070 = vadd.f32 %v4068, %v4069
    %v4071 = vsel %vm672, %v4039, 0.0
    %v4072 = vadd.f32 %v4070, %v4071
    %v4073 = vsel %vm672, %v4040, 0.0
    %v4074 = vadd.f32 %v4072, %v4073
    %v4075 = vsel %vm672, %v4041, 0.0
    %v4076 = vadd.f32 %v4074, %v4075
    %v4077 = vrot.slane %v4076, 4
    %v4078 = vadd.f32 %v4076, %v4077
    %v4079 = vrot.slane %v4078, 2
    %v4080 = vadd.f32 %v4078, %v4079
    %v4081 = vrot.slane %v4080, 1
    %v4082 = vadd.f32 %v4080, %v4081
    %v4083 = vmul.f32 %v4024, %v4024
    %v4084 = vmul.f32 %v4025, %v4025
    %v4085 = vmul.f32 %v4026, %v4026
    %v4086 = vmul.f32 %v4027, %v4027
    %v4087 = vmul.f32 %v4028, %v4028
    %v4088 = vmul.f32 %v4029, %v4029
    %v4089 = vmul.f32 %v4030, %v4030
    %v4090 = vmul.f32 %v4031, %v4031
    %v4091 = vmul.f32 %v4032, %v4032
    %v4092 = vmul.f32 %v4033, %v4033
    %v4093 = vmul.f32 %v4034, %v4034
    %v4094 = vmul.f32 %v4035, %v4035
    %v4095 = vmul.f32 %v4036, %v4036
    %v4096 = vmul.f32 %v4037, %v4037
    %v4097 = vmul.f32 %v4038, %v4038
    %v4098 = vmul.f32 %v4039, %v4039
    %v4099 = vmul.f32 %v4040, %v4040
    %v4100 = vmul.f32 %v4041, %v4041
    %v4101 = vsel %vm672, %v4083, 0.0
    %v4102 = vsel %vm672, %v4084, 0.0
    %v4103 = vadd.f32 %v4101, %v4102
    %v4104 = vsel %vm672, %v4085, 0.0
    %v4105 = vadd.f32 %v4103, %v4104
    %v4106 = vsel %vm672, %v4086, 0.0
    %v4107 = vadd.f32 %v4105, %v4106
    %v4108 = vsel %vm672, %v4087, 0.0
    %v4109 = vadd.f32 %v4107, %v4108
    %v4110 = vsel %vm672, %v4088, 0.0
    %v4111 = vadd.f32 %v4109, %v4110
    %v4112 = vsel %vm672, %v4089, 0.0
    %v4113 = vadd.f32 %v4111, %v4112
    %v4114 = vsel %vm672, %v4090, 0.0
    %v4115 = vadd.f32 %v4113, %v4114
    %v4116 = vsel %vm672, %v4091, 0.0
    %v4117 = vadd.f32 %v4115, %v4116
    %v4118 = vsel %vm672, %v4092, 0.0
    %v4119 = vadd.f32 %v4117, %v4118
    %v4120 = vsel %vm672, %v4093, 0.0
    %v4121 = vadd.f32 %v4119, %v4120
    %v4122 = vsel %vm672, %v4094, 0.0
    %v4123 = vadd.f32 %v4121, %v4122
    %v4124 = vsel %vm672, %v4095, 0.0
    %v4125 = vadd.f32 %v4123, %v4124
    %v4126 = vsel %vm672, %v4096, 0.0
    %v4127 = vadd.f32 %v4125, %v4126
    %v4128 = vsel %vm672, %v4097, 0.0
    %v4129 = vadd.f32 %v4127, %v4128
    %v4130 = vsel %vm672, %v4098, 0.0
    %v4131 = vadd.f32 %v4129, %v4130
    %v4132 = vsel %vm672, %v4099, 0.0
    %v4133 = vadd.f32 %v4131, %v4132
    %v4134 = vsel %vm672, %v4100, 0.0
    %v4135 = vadd.f32 %v4133, %v4134
    %v4136 = vrot.slane %v4135, 4
    %v4137 = vadd.f32 %v4135, %v4136
    %v4138 = vrot.slane %v4137, 2
    %v4139 = vadd.f32 %v4137, %v4138
    %v4140 = vrot.slane %v4139, 1
    %v4141 = vadd.f32 %v4139, %v4140
    %v4142 = vmul.f32 %v4082, 0.0069444445
    %v4143 = vmul.f32 %v4141, 0.0069444445
    %v4144 = vmul.f32 %v4142, %v4142
    %v4145 = vsub.f32 %v4143, %v4144
    %v4146 = vadd.f32 %v4145, 1e-05
    %v4147 = vrsqrt.pop %v4146
    %v4148 = vmul.f32 %v4147, %v4146
    %v4149 = vmul.f32 %v4148, %v4147
    %v4150 = vmul.f32 0.5, %v4149
    %v4151 = vsub.f32 1.5, %v4150
    %v4152 = vmul.f32 %v4147, %v4151
    %vm4153 = vweird.f32 %v4146
    %vm4154 = vweird.f32 %v4147
    %vm4155 = vmor %vm4153, %vm4154
    %v4156 = vsel %vm4155, %v4147, %v4152
    %v4157 = vsub.f32 %v4024, %v4142
    %v4158 = vsub.f32 %v4025, %v4142
    %v4159 = vsub.f32 %v4040, %v4142
    %v4160 = vsub.f32 %v4041, %v4142
    %s4161 = scalar_lea.vmem [#allocation2], 2
    %v4162 = vld [vmem:[%s4161] sm:$0x1]
    %v4163 = vmul.f32 %v4156, %v4162
    %v4164 = vperm.slane %v4163, 0
    %v4165 = vmul.f32 %v4157, %v4164
    %v4166 = vmul.f32 %v4158, %v4164
    %v4167 = vmul.f32 %v4159, %v4164
    %v4168 = vmul.f32 %v4160, %v4164
    %s4169 = scalar_lea.vmem [#allocation5], 2
    %v4170 = vld [vmem:[%s4169] sm:$0x1]
    %v4172 = vperm.slane %v4170, 0
    %v4174 = vadd.f32 %v4165, %v4172
    %v4175 = vadd.f32 %v4166, %v4172
    %v4176 = vadd.f32 %v4167, %v4172
    %v4177 = vadd.f32 %v4168, %v4172
    %v4178 = vpack.c.bf16 %v4174, %v4174
    %v4179 = vpack.c.bf16 %v4175, %v4175
    %v4180 = vpack.c.bf16 %v4176, %v4176
    %v4181 = vpack.c.bf16 %v4177, %v4177
    %s4182 = scalar_lea.vmem %s3, 48
    %v4183 = vld [vmem:[%s4182] sm:$0xf]
    %v4184 = vld [vmem:[%s4182 + $0x4] sm:$0xf]
    %v4185 = vld [vmem:[%s4182 + $0x8] sm:$0xf]
    %v4186 = vld [vmem:[%s4182 + $0xc] sm:$0xf]
    %s4187 = scalar_lea.vmem %s4, 48
    %v4188 = vld [vmem:[%s4187] sm:$0xf]
    %v4189 = vld [vmem:[%s4187 + $0x4] sm:$0xf]
    %v4190 = vld [vmem:[%s4187 + $0x8] sm:$0xf]
    %v4191 = vld [vmem:[%s4187 + $0xc] sm:$0xf]
    %v4194 = vunpack.c.l.b16 %v4180
    %v4195 = vunpack.c.l.b16 %v4181
    %v4196 = vpack.c.b16 %v4195, %v4194
    %v4201 = vunpack.c.l.b16 %v4188
    %v4202 = vunpack.c.l.b16 %v4189
    %v4203 = vunpack.c.l.b16 %v4190
    %v4204 = vunpack.c.l.b16 %v4191
    %v4205 = vpack.c.b16 %v4202, %v4201
    %v4206 = vpack.c.b16 %v4204, %v4203
    %v4210 = vsel %vm672, %v4196, 0
    %4212 = vmatpush.bf16.msra.mxu0 0
    %4213 = vmatpush.bf16.msra.mxu0 0
    %4214 = vmatpush.bf16.msra.mxu0 0
    %4215 = vmatpush.bf16.msra.mxu0 0
    %4216 = vmatpush.bf16.msra.mxu0 0
    %4217 = vmatpush.bf16.msra.mxu0 0
    %4218 = vmatpush.bf16.msra.mxu0 %v4206
    %4219 = vmatpush.bf16.msra.mxu0 %v4205
    %4220 = vmatmul.bf16.gmra.mxu0 %v4210
    %v4221 = vpop.f32.mrf.mxu0
    %v4222 = vadd.f32 0.0, %v4221
    %v4223 = vpop.f32.mrf.mxu0
    %v4224 = vadd.f32 0.0, %v4223
    %4225 = vdwg.mxu0
    %v4228 = vunpack.c.l.b16 %v4178
    %v4229 = vunpack.c.l.b16 %v4179
    %v4230 = vpack.c.b16 %v4229, %v4228
    %v4235 = vunpack.c.l.b16 %v4183
    %v4236 = vunpack.c.l.b16 %v4184
    %v4237 = vunpack.c.l.b16 %v4185
    %v4238 = vunpack.c.l.b16 %v4186
    %v4239 = vpack.c.b16 %v4236, %v4235
    %v4240 = vpack.c.b16 %v4238, %v4237
    %v4244 = vsel %vm672, %v4230, 0
    %4246 = vmatpush.bf16.msra.mxu0 0
    %4247 = vmatpush.bf16.msra.mxu0 0
    %4248 = vmatpush.bf16.msra.mxu0 0
    %4249 = vmatpush.bf16.msra.mxu0 0
    %4250 = vmatpush.bf16.msra.mxu0 0
    %4251 = vmatpush.bf16.msra.mxu0 0
    %4252 = vmatpush.bf16.msra.mxu0 %v4240
    %4253 = vmatpush.bf16.msra.mxu0 %v4239
    %4254 = vmatmul.bf16.gmra.mxu0 %v4244
    %v4255 = vpop.f32.mrf.mxu0
    %v4256 = vadd.f32 %v4222, %v4255
    %v4257 = vpop.f32.mrf.mxu0
    %v4258 = vadd.f32 %v4224, %v4257
    %4259 = vdwg.mxu0
    %s4260 = scalar_lea.vmem %s5, 3
    %v4261 = vld [vmem:[%s4260] sm:$0x1]
    %v4263 = vperm.slane %v4261, 0
    %v4265 = vadd.f32 %v4256, %v4263
    %v4266 = vadd.f32 %v4258, %v4263
    %v4267 = vtanh.pop %v4265
    %v4268 = vtanh.pop %v4266
    %v4269 = vxor.u32 %v4265, 2147483648
    %v4270 = vxor.u32 %v4266, 2147483648
    %v4271 = vmul.f32 %v4269, 1.442695
    %v4272 = vpow.pop %v4271
    %v4273 = vmul.f32 %v4270, 1.442695
    %v4274 = vpow.pop %v4273
    %v4275 = vadd.f32 %v4272, 1.0
    %v4276 = vadd.f32 %v4274, 1.0
    %v4277 = vrcp.pop %v4275
    %v4278 = vmul.f32 %v4275, %v4277
    %v4279 = vsub.f32 1.0, %v4278
    %v4280 = vmul.f32 %v4277, %v4279
    %v4281 = vadd.f32 %v4277, %v4280
    %vm4282 = vweird.f32 %v4275
    %vm4283 = vweird.f32 %v4277
    %vm4284 = vmor %vm4282, %vm4283
    %v4285 = vsel %vm4284, %v4277, %v4281
    %v4286 = vand.u32 2147483647, %v4275
    %vm4287 = vcmp.eq.f32.partialorder %v4286, 8.507059e+37
    %v4288 = vand.u32 %v4275, 2147483648
    %v4289 = vor.u32 1.1754944e-38, %v4288
    %v4290 = vsel %vm4287, %v4289, %v4285
    %v4291 = vmul.f32 1.0, %v4290
    %v4292 = vrcp.pop %v4276
    %v4293 = vmul.f32 %v4276, %v4292
    %v4294 = vsub.f32 1.0, %v4293
    %v4295 = vmul.f32 %v4292, %v4294
    %v4296 = vadd.f32 %v4292, %v4295
    %vm4297 = vweird.f32 %v4276
    %vm4298 = vweird.f32 %v4292
    %vm4299 = vmor %vm4297, %vm4298
    %v4300 = vsel %vm4299, %v4292, %v4296
    %v4301 = vand.u32 2147483647, %v4276
    %vm4302 = vcmp.eq.f32.partialorder %v4301, 8.507059e+37
    %v4303 = vand.u32 %v4276, 2147483648
    %v4304 = vor.u32 1.1754944e-38, %v4303
    %v4305 = vsel %vm4302, %v4304, %v4300
    %v4306 = vmul.f32 1.0, %v4305
    %4309 = vrot.lane.b32.xlu0 %v4291, 96
    %v4310 = vpop.permute.xlu0 %4309
    %4311 = vrot.lane.b32.xlu0 %v4306, 96
    %v4312 = vpop.permute.xlu0 %4311
    %v4315 = vmul.f32 %v4267, %v4310
    %v4316 = vmul.f32 %v4268, %v4312
    %v4317 = vadd.f32 %v4022, %v4315
    %v4318 = vadd.f32 %v4023, %v4316
    %v4319 = vsel %vm672, %v4317, 0.0
    %v4320 = vrot.slane %v4319, 4
    %v4321 = vadd.f32 %v4319, %v4320
    %v4322 = vrot.slane %v4321, 2
    %v4323 = vadd.f32 %v4321, %v4322
    %v4324 = vrot.slane %v4323, 1
    %v4325 = vadd.f32 %v4323, %v4324
    %v4326 = vsel %vm672, %v4318, 0.0
    %v4327 = vrot.slane %v4326, 4
    %v4328 = vadd.f32 %v4326, %v4327
    %v4329 = vrot.slane %v4328, 2
    %v4330 = vadd.f32 %v4328, %v4329
    %v4331 = vrot.slane %v4330, 1
    %v4332 = vadd.f32 %v4330, %v4331
    %v4333 = vrcp.pop 8.0
    %v4334 = vmul.f32 8.0, %v4333
    %v4335 = vsub.f32 1.0, %v4334
    %v4336 = vmul.f32 %v4333, %v4335
    %v4337 = vadd.f32 %v4333, %v4336
    %vm4338 = vweird.f32 %v4333
    %v4339 = vsel %vm4338, %v4333, %v4337
    %v4340 = vmul.f32 %v4325, %v4339
    %v4341 = vmul.f32 %v4332, %v4339
    %v4342 = vpack.c.bf16 %v4340, %v4340
    %v4343 = vpack.c.bf16 %v4341, %v4341
    %v4344 = vld [vmem:[#allocation7] sm:$0xf]
    %v4345 = vld [vmem:[#allocation7 + $0x4] sm:$0xf]
    %v4346 = vld [vmem:[#allocation7 + $0x8] sm:$0xf]
    %v4347 = vld [vmem:[#allocation7 + $0xc] sm:$0xf]
    %v4350 = vunpack.c.l.b16 %v4342
    %v4351 = vunpack.c.l.b16 %v4343
    %vm4352 = vcmask 1041409
    %v4353 = vsel %vm4352, %v4351, %v4350
    %v4354 = vpack.c.b16 %v4353, %v4353
    %v4359 = vunpack.c.l.b16 %v4344
    %v4360 = vunpack.c.l.b16 %v4345
    %v4361 = vunpack.c.l.b16 %v4346
    %v4362 = vunpack.c.l.b16 %v4347
    %v4363 = vpack.c.b16 %v4360, %v4359
    %v4364 = vpack.c.b16 %v4362, %v4361
    %v4368 = vsel %vm672, %v4354, 0
    %4370 = vmatpush.bf16.msra.mxu0 0
    %4371 = vmatpush.bf16.msra.mxu0 0
    %4372 = vmatpush.bf16.msra.mxu0 0
    %4373 = vmatpush.bf16.msra.mxu0 0
    %4374 = vmatpush.bf16.msra.mxu0 0
    %4375 = vmatpush.bf16.msra.mxu0 0
    %4376 = vmatpush.bf16.msra.mxu0 %v4364
    %4377 = vmatpush.bf16.msra.mxu0 %v4363
    %4378 = vmatmul.bf16.gmra.mxu0 %v4368
    %v4379 = vpop.f32.mrf.mxu0
    %v4380 = vadd.f32 0.0, %v4379
    %v4381 = vpop.f32.mrf.mxu0
    %4382 = vdwg.mxu0
    %v4383 = vmax.f32 %v4380, 0.0
    %v4384 = vpack.c.bf16 %v4383, %v4383
    %v4385 = vld [vmem:[#allocation8] sm:$0x3]
    %vm4386 = vcmask 31744
    %v4388 = vsel %vm4386, %v4384, 0
    %vm4390 = vcmask 1041408
    %v4392 = vsel %vm4390, %v4385, 0
    %4394 = vmatpush.bf16.msra.mxu0 0
    %4395 = vmatpush.bf16.msra.mxu0 0
    %4396 = vmatpush.bf16.msra.mxu0 0
    %4397 = vmatpush.bf16.msra.mxu0 0
    %4398 = vmatpush.bf16.msra.mxu0 0
    %4399 = vmatpush.bf16.msra.mxu0 0
    %4400 = vmatpush.bf16.msra.mxu0 0
    %4401 = vmatpush.bf16.msra.mxu0 %v4392
    %4402 = vmatmul.bf16.gmra.mxu0 %v4388
    %v4403 = vpop.f32.mrf.mxu0
    %v4404 = vadd.f32 0.0, %v4403
    %v4405 = vpop.f32.mrf.mxu0
    %4406 = vdwg.mxu0
    %v4407 = vxor.u32 %v4404, 2147483648
    %v4408 = vmul.f32 %v4407, 1.442695
    %v4409 = vpow.pop %v4408
    %v4410 = vadd.f32 %v4409, 1.0
    %v4411 = vrcp.pop %v4410
    %v4412 = vmul.f32 %v4410, %v4411
    %v4413 = vsub.f32 1.0, %v4412
    %v4414 = vmul.f32 %v4411, %v4413
    %v4415 = vadd.f32 %v4411, %v4414
    %vm4416 = vweird.f32 %v4410
    %vm4417 = vweird.f32 %v4411
    %vm4418 = vmor %vm4416, %vm4417
    %v4419 = vsel %vm4418, %v4411, %v4415
    %v4420 = vand.u32 2147483647, %v4410
    %vm4421 = vcmp.eq.f32.partialorder %v4420, 8.507059e+37
    %v4422 = vand.u32 %v4410, 2147483648
    %v4423 = vor.u32 1.1754944e-38, %v4422
    %v4424 = vsel %vm4421, %v4423, %v4419
    %v4425 = vmul.f32 1.0, %v4424
    %v4427 = vrot.slane %v4425, 1
    %v4428 = vperm.slane %v4425, 0
    %v4429 = vperm.slane %v4427, 0
    %v4432 = vmul.f32 %v4317, %v4428
    %v4433 = vmul.f32 %v4318, %v4429
    %v4434 = vpack.c.bf16 %v4433, %v4432
    %v4435 = vld [vmem:[%s10] sm:$0xf]
    %v4436 = vld [vmem:[%s10 + $0x4] sm:$0xf]
    %v4437 = vld [vmem:[%s10 + $0x8] sm:$0xf]
    %v4438 = vld [vmem:[%s10 + $0xc] sm:$0xf]
    %v4439 = vld [vmem:[#allocation10] sm:$0x1]
    %v4441 = vperm.slane %v4439, 0
    %v4447 = vunpack.c.l.b16 %v4435
    %v4448 = vunpack.c.l.b16 %v4436
    %v4449 = vunpack.c.l.b16 %v4437
    %v4450 = vunpack.c.l.b16 %v4438
    %v4451 = vpack.c.b16 %v4448, %v4447
    %v4452 = vpack.c.b16 %v4450, %v4449
    %v4456 = vsel %vm672, %v4434, 0
    %4458 = vmatpush.bf16.msra.mxu0 0
    %4459 = vmatpush.bf16.msra.mxu0 0
    %4460 = vmatpush.bf16.msra.mxu0 0
    %4461 = vmatpush.bf16.msra.mxu0 0
    %4462 = vmatpush.bf16.msra.mxu0 0
    %4463 = vmatpush.bf16.msra.mxu0 0
    %4464 = vmatpush.bf16.msra.mxu0 %v4452
    %4465 = vmatpush.bf16.msra.mxu0 %v4451
    %4466 = vmatmul.bf16.gmra.mxu0 %v4456
    %v4467 = vpop.f32.mrf.mxu0
    %v4468 = vadd.f32 %v4441, %v4467
    %v4469 = vpop.f32.mrf.mxu0
    %v4470 = vadd.f32 %v4441, %v4469
    %4471 = vdwg.mxu0
    %v4472 = vpack.c.bf16 %v4468, %v4468
    %v4473 = vpack.c.bf16 %v4470, %v4470
    %v4475 = vunpack.c.l.b16 %v4472
    %v4476 = vpack.c.b16 %v4475, %v4475
    %4477 = vrot.lane.b32.xlu0 %v4476, 96
    %v4478 = vpop.permute.xlu0 %4477
    %v4480 = vsel %vm4386, %v4472, 0
    %v4483 = vsel %vm4386, %v4478, 0
    %4485 = vmatpush.bf16.xpose.msra.mxu0 0
    %4486 = vmatpush.bf16.xpose.msra.mxu0 0
    %4487 = vmatpush.bf16.xpose.msra.mxu0 0
    %4488 = vmatpush.bf16.xpose.msra.mxu0 0
    %4489 = vmatpush.bf16.xpose.msra.mxu0 0
    %4490 = vmatpush.bf16.xpose.msra.mxu0 0
    %4491 = vmatpush.bf16.xpose.msra.mxu0 0
    %4492 = vmatpush.bf16.xpose.msra.mxu0 %v4483
    %4493 = vmatmul.bf16.gmra.mxu0 %v4480
    %v4494 = vpop.f32.mrf.mxu0
    %v4495 = vadd.f32 0.0, %v4494
    %v4496 = vpop.f32.mrf.mxu0
    %4497 = vdwg.mxu0
    %v4499 = vunpack.c.l.b16 %v4473
    %v4500 = vpack.c.b16 %v4499, %v4499
    %4501 = vrot.lane.b32.xlu0 %v4500, 96
    %v4502 = vpop.permute.xlu0 %4501
    %v4504 = vsel %vm4386, %v4473, 0
    %v4507 = vsel %vm4386, %v4502, 0
    %4509 = vmatpush.bf16.xpose.msra.mxu0 0
    %4510 = vmatpush.bf16.xpose.msra.mxu0 0
    %4511 = vmatpush.bf16.xpose.msra.mxu0 0
    %4512 = vmatpush.bf16.xpose.msra.mxu0 0
    %4513 = vmatpush.bf16.xpose.msra.mxu0 0
    %4514 = vmatpush.bf16.xpose.msra.mxu0 0
    %4515 = vmatpush.bf16.xpose.msra.mxu0 0
    %4516 = vmatpush.bf16.xpose.msra.mxu0 %v4507
    %4517 = vmatmul.bf16.gmra.mxu0 %v4504
    %v4518 = vpop.f32.mrf.mxu0
    %v4519 = vadd.f32 0.0, %v4518
    %v4520 = vpop.f32.mrf.mxu0
    %4521 = vdwg.mxu0
    %vm4522 = vcmask 64512
    %v4523 = vsel %vm4522, %v4495, -inf
    %4524 = vmax.xlane.f32.xlu0 %v4523
    %v4525 = vpop.xlane.xlu0 %4524
    %v4526 = vsel %vm4522, %v4519, -inf
    %4527 = vmax.xlane.f32.xlu0 %v4526
    %v4528 = vpop.xlane.xlu0 %4527
    %v4529 = vsub.f32 %v4495, %v4525
    %v4530 = vsub.f32 %v4519, %v4528
    %v4531 = vmul.f32 %v4529, 1.442695
    %v4532 = vpow.pop %v4531
    %v4533 = vmul.f32 %v4530, 1.442695
    %v4534 = vpow.pop %v4533
    %v4535 = vsel %vm4522, %v4532, 0.0
    %4536 = vadd.xlane.f32.xlu0 %v4535
    %v4537 = vpop.xlane.xlu0 %4536
    %v4538 = vsel %vm4522, %v4534, 0.0
    %4539 = vadd.xlane.f32.xlu0 %v4538
    %v4540 = vpop.xlane.xlu0 %4539
    %v4541 = vrcp.pop %v4537
    %v4542 = vrcp.pop %v4540
    %v4543 = vmul.f32 %v4532, %v4541
    %v4544 = vmul.f32 %v4534, %v4542
    %v4545 = vpack.c.bf16 %v4543, %v4543
    %v4546 = vpack.c.bf16 %v4544, %v4544
    %4547 = vrot.lane.b32.xlu0 %v4476, 64
    %v4548 = vpop.permute.xlu0 %4547
    %v4550 = vsel %vm4522, %v4545, 0
    %vm4552 = vcmask 1043456
    %v4554 = vsel %vm4552, %v4548, 0
    %4556 = vmatpush.bf16.msra.mxu0 0
    %4557 = vmatpush.bf16.msra.mxu0 0
    %4558 = vmatpush.bf16.msra.mxu0 0
    %4559 = vmatpush.bf16.msra.mxu0 0
    %4560 = vmatpush.bf16.msra.mxu0 0
    %4561 = vmatpush.bf16.msra.mxu0 0
    %4562 = vmatpush.bf16.msra.mxu0 0
    %4563 = vmatpush.bf16.msra.mxu0 %v4554
    %4564 = vmatmul.bf16.gmra.mxu0 %v4550
    %v4565 = vpop.f32.mrf.mxu0
    %v4566 = vadd.f32 0.0, %v4565
    %v4567 = vpop.f32.mrf.mxu0
    %4568 = vdwg.mxu0
    %4569 = vrot.lane.b32.xlu0 %v4500, 64
    %v4570 = vpop.permute.xlu0 %4569
    %v4572 = vsel %vm4522, %v4546, 0
    %v4575 = vsel %vm4552, %v4570, 0
    %4577 = vmatpush.bf16.msra.mxu0 0
    %4578 = vmatpush.bf16.msra.mxu0 0
    %4579 = vmatpush.bf16.msra.mxu0 0
    %4580 = vmatpush.bf16.msra.mxu0 0
    %4581 = vmatpush.bf16.msra.mxu0 0
    %4582 = vmatpush.bf16.msra.mxu0 0
    %4583 = vmatpush.bf16.msra.mxu0 0
    %4584 = vmatpush.bf16.msra.mxu0 %v4575
    %4585 = vmatmul.bf16.gmra.mxu0 %v4572
    %v4586 = vpop.f32.mrf.mxu0
    %v4587 = vadd.f32 0.0, %v4586
    %v4588 = vpop.f32.mrf.mxu0
    %4589 = vdwg.mxu0
    %v4590 = vpack.c.bf16 %v4587, %v4566
    %v4591 = vld [vmem:[#allocation11] sm:$0x3]
    %4592 = vrot.lane.b32.xlu0 %v4476, 124
    %v4593 = vpop.permute.xlu0 %4592
    %4594 = vrot.lane.b32.xlu0 %v4476, 92
    %v4595 = vpop.permute.xlu0 %4594
    %v4597 = vsel %vm4386, %v4593, 0
    %v4600 = vsel %vm4386, %v4595, 0
    %4602 = vmatpush.bf16.xpose.msra.mxu0 0
    %4603 = vmatpush.bf16.xpose.msra.mxu0 0
    %4604 = vmatpush.bf16.xpose.msra.mxu0 0
    %4605 = vmatpush.bf16.xpose.msra.mxu0 0
    %4606 = vmatpush.bf16.xpose.msra.mxu0 0
    %4607 = vmatpush.bf16.xpose.msra.mxu0 0
    %4608 = vmatpush.bf16.xpose.msra.mxu0 0
    %4609 = vmatpush.bf16.xpose.msra.mxu0 %v4600
    %4610 = vmatmul.bf16.gmra.mxu0 %v4597
    %v4611 = vpop.f32.mrf.mxu0
    %v4612 = vadd.f32 0.0, %v4611
    %v4613 = vpop.f32.mrf.mxu0
    %4614 = vdwg.mxu0
    %4615 = vrot.lane.b32.xlu0 %v4500, 124
    %v4616 = vpop.permute.xlu0 %4615
    %4617 = vrot.lane.b32.xlu0 %v4500, 92
    %v4618 = vpop.permute.xlu0 %4617
    %v4620 = vsel %vm4386, %v4616, 0
    %v4623 = vsel %vm4386, %v4618, 0
    %4625 = vmatpush.bf16.xpose.msra.mxu0 0
    %4626 = vmatpush.bf16.xpose.msra.mxu0 0
    %4627 = vmatpush.bf16.xpose.msra.mxu0 0
    %4628 = vmatpush.bf16.xpose.msra.mxu0 0
    %4629 = vmatpush.bf16.xpose.msra.mxu0 0
    %4630 = vmatpush.bf16.xpose.msra.mxu0 0
    %4631 = vmatpush.bf16.xpose.msra.mxu0 0
    %4632 = vmatpush.bf16.xpose.msra.mxu0 %v4623
    %4633 = vmatmul.bf16.gmra.mxu0 %v4620
    %v4634 = vpop.f32.mrf.mxu0
    %v4635 = vadd.f32 0.0, %v4634
    %v4636 = vpop.f32.mrf.mxu0
    %4637 = vdwg.mxu0
    %v4638 = vsel %vm4522, %v4612, -inf
    %4639 = vmax.xlane.f32.xlu0 %v4638
    %v4640 = vpop.xlane.xlu0 %4639
    %v4641 = vsel %vm4522, %v4635, -inf
    %4642 = vmax.xlane.f32.xlu0 %v4641
    %v4643 = vpop.xlane.xlu0 %4642
    %v4644 = vsub.f32 %v4612, %v4640
    %v4645 = vsub.f32 %v4635, %v4643
    %v4646 = vmul.f32 %v4644, 1.442695
    %v4647 = vpow.pop %v4646
    %v4648 = vmul.f32 %v4645, 1.442695
    %v4649 = vpow.pop %v4648
    %v4650 = vsel %vm4522, %v4647, 0.0
    %4651 = vadd.xlane.f32.xlu0 %v4650
    %v4652 = vpop.xlane.xlu0 %4651
    %v4653 = vsel %vm4522, %v4649, 0.0
    %4654 = vadd.xlane.f32.xlu0 %v4653
    %v4655 = vpop.xlane.xlu0 %4654
    %v4656 = vrcp.pop %v4652
    %v4657 = vrcp.pop %v4655
    %v4658 = vmul.f32 %v4647, %v4656
    %v4659 = vmul.f32 %v4649, %v4657
    %v4660 = vpack.c.bf16 %v4658, %v4658
    %v4661 = vpack.c.bf16 %v4659, %v4659
    %4662 = vrot.lane.b32.xlu0 %v4476, 60
    %v4663 = vpop.permute.xlu0 %4662
    %v4665 = vsel %vm4522, %v4660, 0
    %v4668 = vsel %vm4552, %v4663, 0
    %4670 = vmatpush.bf16.msra.mxu0 0
    %4671 = vmatpush.bf16.msra.mxu0 0
    %4672 = vmatpush.bf16.msra.mxu0 0
    %4673 = vmatpush.bf16.msra.mxu0 0
    %4674 = vmatpush.bf16.msra.mxu0 0
    %4675 = vmatpush.bf16.msra.mxu0 0
    %4676 = vmatpush.bf16.msra.mxu0 0
    %4677 = vmatpush.bf16.msra.mxu0 %v4668
    %4678 = vmatmul.bf16.gmra.mxu0 %v4665
    %v4679 = vpop.f32.mrf.mxu0
    %v4680 = vadd.f32 0.0, %v4679
    %v4681 = vpop.f32.mrf.mxu0
    %4682 = vdwg.mxu0
    %4683 = vrot.lane.b32.xlu0 %v4500, 60
    %v4684 = vpop.permute.xlu0 %4683
    %v4686 = vsel %vm4522, %v4661, 0
    %v4689 = vsel %vm4552, %v4684, 0
    %4691 = vmatpush.bf16.msra.mxu0 0
    %4692 = vmatpush.bf16.msra.mxu0 0
    %4693 = vmatpush.bf16.msra.mxu0 0
    %4694 = vmatpush.bf16.msra.mxu0 0
    %4695 = vmatpush.bf16.msra.mxu0 0
    %4696 = vmatpush.bf16.msra.mxu0 0
    %4697 = vmatpush.bf16.msra.mxu0 0
    %4698 = vmatpush.bf16.msra.mxu0 %v4689
    %4699 = vmatmul.bf16.gmra.mxu0 %v4686
    %v4700 = vpop.f32.mrf.mxu0
    %v4701 = vadd.f32 0.0, %v4700
    %v4702 = vpop.f32.mrf.mxu0
    %4703 = vdwg.mxu0
    %v4704 = vpack.c.bf16 %v4701, %v4680
    %s4705 = scalar_lea.vmem [#allocation11], 2
    %v4706 = vld [vmem:[%s4705] sm:$0x3]
    %v4708 = vsel %vm4386, %v4704, 0
    %v4711 = vsel %vm4390, %v4706, 0
    %4713 = vmatpush.bf16.msra.mxu0 0
    %4714 = vmatpush.bf16.msra.mxu0 0
    %4715 = vmatpush.bf16.msra.mxu0 0
    %4716 = vmatpush.bf16.msra.mxu0 0
    %4717 = vmatpush.bf16.msra.mxu0 0
    %4718 = vmatpush.bf16.msra.mxu0 0
    %4719 = vmatpush.bf16.msra.mxu0 0
    %4720 = vmatpush.bf16.msra.mxu0 %v4711
    %4721 = vmatmul.bf16.gmra.mxu0 %v4708
    %v4722 = vpop.f32.mrf.mxu0
    %v4723 = vadd.f32 0.0, %v4722
    %v4724 = vpop.f32.mrf.mxu0
    %v4725 = vadd.f32 0.0, %v4724
    %4726 = vdwg.mxu0
    %v4728 = vsel %vm4386, %v4590, 0
    %v4731 = vsel %vm4390, %v4591, 0
    %4733 = vmatpush.bf16.msra.mxu0 0
    %4734 = vmatpush.bf16.msra.mxu0 0
    %4735 = vmatpush.bf16.msra.mxu0 0
    %4736 = vmatpush.bf16.msra.mxu0 0
    %4737 = vmatpush.bf16.msra.mxu0 0
    %4738 = vmatpush.bf16.msra.mxu0 0
    %4739 = vmatpush.bf16.msra.mxu0 0
    %4740 = vmatpush.bf16.msra.mxu0 %v4731
    %4741 = vmatmul.bf16.gmra.mxu0 %v4728
    %v4742 = vpop.f32.mrf.mxu0
    %v4743 = vadd.f32 %v4723, %v4742
    %v4744 = vpop.f32.mrf.mxu0
    %v4745 = vadd.f32 %v4725, %v4744
    %4746 = vdwg.mxu0
    %4747 = vrot.lane.b32.xlu0 %v4476, 120
    %v4748 = vpop.permute.xlu0 %4747
    %4749 = vrot.lane.b32.xlu0 %v4476, 88
    %v4750 = vpop.permute.xlu0 %4749
    %v4752 = vsel %vm4386, %v4748, 0
    %v4755 = vsel %vm4386, %v4750, 0
    %4757 = vmatpush.bf16.xpose.msra.mxu0 0
    %4758 = vmatpush.bf16.xpose.msra.mxu0 0
    %4759 = vmatpush.bf16.xpose.msra.mxu0 0
    %4760 = vmatpush.bf16.xpose.msra.mxu0 0
    %4761 = vmatpush.bf16.xpose.msra.mxu0 0
    %4762 = vmatpush.bf16.xpose.msra.mxu0 0
    %4763 = vmatpush.bf16.xpose.msra.mxu0 0
    %4764 = vmatpush.bf16.xpose.msra.mxu0 %v4755
    %4765 = vmatmul.bf16.gmra.mxu0 %v4752
    %v4766 = vpop.f32.mrf.mxu0
    %v4767 = vadd.f32 0.0, %v4766
    %v4768 = vpop.f32.mrf.mxu0
    %4769 = vdwg.mxu0
    %4770 = vrot.lane.b32.xlu0 %v4500, 120
    %v4771 = vpop.permute.xlu0 %4770
    %4772 = vrot.lane.b32.xlu0 %v4500, 88
    %v4773 = vpop.permute.xlu0 %4772
    %v4775 = vsel %vm4386, %v4771, 0
    %v4778 = vsel %vm4386, %v4773, 0
    %4780 = vmatpush.bf16.xpose.msra.mxu0 0
    %4781 = vmatpush.bf16.xpose.msra.mxu0 0
    %4782 = vmatpush.bf16.xpose.msra.mxu0 0
    %4783 = vmatpush.bf16.xpose.msra.mxu0 0
    %4784 = vmatpush.bf16.xpose.msra.mxu0 0
    %4785 = vmatpush.bf16.xpose.msra.mxu0 0
    %4786 = vmatpush.bf16.xpose.msra.mxu0 0
    %4787 = vmatpush.bf16.xpose.msra.mxu0 %v4778
    %4788 = vmatmul.bf16.gmra.mxu0 %v4775
    %v4789 = vpop.f32.mrf.mxu0
    %v4790 = vadd.f32 0.0, %v4789
    %v4791 = vpop.f32.mrf.mxu0
    %4792 = vdwg.mxu0
    %v4793 = vsel %vm4522, %v4767, -inf
    %4794 = vmax.xlane.f32.xlu0 %v4793
    %v4795 = vpop.xlane.xlu0 %4794
    %v4796 = vsel %vm4522, %v4790, -inf
    %4797 = vmax.xlane.f32.xlu0 %v4796
    %v4798 = vpop.xlane.xlu0 %4797
    %v4799 = vsub.f32 %v4767, %v4795
    %v4800 = vsub.f32 %v4790, %v4798
    %v4801 = vmul.f32 %v4799, 1.442695
    %v4802 = vpow.pop %v4801
    %v4803 = vmul.f32 %v4800, 1.442695
    %v4804 = vpow.pop %v4803
    %v4805 = vsel %vm4522, %v4802, 0.0
    %4806 = vadd.xlane.f32.xlu0 %v4805
    %v4807 = vpop.xlane.xlu0 %4806
    %v4808 = vsel %vm4522, %v4804, 0.0
    %4809 = vadd.xlane.f32.xlu0 %v4808
    %v4810 = vpop.xlane.xlu0 %4809
    %v4811 = vrcp.pop %v4807
    %v4812 = vrcp.pop %v4810
    %v4813 = vmul.f32 %v4802, %v4811
    %v4814 = vmul.f32 %v4804, %v4812
    %v4815 = vpack.c.bf16 %v4813, %v4813
    %v4816 = vpack.c.bf16 %v4814, %v4814
    %4817 = vrot.lane.b32.xlu0 %v4476, 56
    %v4818 = vpop.permute.xlu0 %4817
    %v4820 = vsel %vm4522, %v4815, 0
    %v4823 = vsel %vm4552, %v4818, 0
    %4825 = vmatpush.bf16.msra.mxu0 0
    %4826 = vmatpush.bf16.msra.mxu0 0
    %4827 = vmatpush.bf16.msra.mxu0 0
    %4828 = vmatpush.bf16.msra.mxu0 0
    %4829 = vmatpush.bf16.msra.mxu0 0
    %4830 = vmatpush.bf16.msra.mxu0 0
    %4831 = vmatpush.bf16.msra.mxu0 0
    %4832 = vmatpush.bf16.msra.mxu0 %v4823
    %4833 = vmatmul.bf16.gmra.mxu0 %v4820
    %v4834 = vpop.f32.mrf.mxu0
    %v4835 = vadd.f32 0.0, %v4834
    %v4836 = vpop.f32.mrf.mxu0
    %4837 = vdwg.mxu0
    %4838 = vrot.lane.b32.xlu0 %v4500, 56
    %v4839 = vpop.permute.xlu0 %4838
    %v4841 = vsel %vm4522, %v4816, 0
    %v4844 = vsel %vm4552, %v4839, 0
    %4846 = vmatpush.bf16.msra.mxu0 0
    %4847 = vmatpush.bf16.msra.mxu0 0
    %4848 = vmatpush.bf16.msra.mxu0 0
    %4849 = vmatpush.bf16.msra.mxu0 0
    %4850 = vmatpush.bf16.msra.mxu0 0
    %4851 = vmatpush.bf16.msra.mxu0 0
    %4852 = vmatpush.bf16.msra.mxu0 0
    %4853 = vmatpush.bf16.msra.mxu0 %v4844
    %4854 = vmatmul.bf16.gmra.mxu0 %v4841
    %v4855 = vpop.f32.mrf.mxu0
    %v4856 = vadd.f32 0.0, %v4855
    %v4857 = vpop.f32.mrf.mxu0
    %4858 = vdwg.mxu0
    %v4859 = vpack.c.bf16 %v4856, %v4835
    %s4860 = scalar_lea.vmem [#allocation11], 4
    %v4861 = vld [vmem:[%s4860] sm:$0x3]
    %v4863 = vsel %vm4386, %v4859, 0
    %v4866 = vsel %vm4390, %v4861, 0
    %4868 = vmatpush.bf16.msra.mxu0 0
    %4869 = vmatpush.bf16.msra.mxu0 0
    %4870 = vmatpush.bf16.msra.mxu0 0
    %4871 = vmatpush.bf16.msra.mxu0 0
    %4872 = vmatpush.bf16.msra.mxu0 0
    %4873 = vmatpush.bf16.msra.mxu0 0
    %4874 = vmatpush.bf16.msra.mxu0 0
    %4875 = vmatpush.bf16.msra.mxu0 %v4866
    %4876 = vmatmul.bf16.gmra.mxu0 %v4863
    %v4877 = vpop.f32.mrf.mxu0
    %v4878 = vadd.f32 0.0, %v4877
    %v4879 = vpop.f32.mrf.mxu0
    %v4880 = vadd.f32 0.0, %v4879
    %4881 = vdwg.mxu0
    %v4882 = vadd.f32 %v4743, %v4878
    %v4883 = vadd.f32 %v4745, %v4880
    %4884 = vrot.lane.b32.xlu0 %v4476, 116
    %v4885 = vpop.permute.xlu0 %4884
    %4886 = vrot.lane.b32.xlu0 %v4476, 84
    %v4887 = vpop.permute.xlu0 %4886
    %v4889 = vsel %vm4386, %v4885, 0
    %v4892 = vsel %vm4386, %v4887, 0
    %4894 = vmatpush.bf16.xpose.msra.mxu0 0
    %4895 = vmatpush.bf16.xpose.msra.mxu0 0
    %4896 = vmatpush.bf16.xpose.msra.mxu0 0
    %4897 = vmatpush.bf16.xpose.msra.mxu0 0
    %4898 = vmatpush.bf16.xpose.msra.mxu0 0
    %4899 = vmatpush.bf16.xpose.msra.mxu0 0
    %4900 = vmatpush.bf16.xpose.msra.mxu0 0
    %4901 = vmatpush.bf16.xpose.msra.mxu0 %v4892
    %4902 = vmatmul.bf16.gmra.mxu0 %v4889
    %v4903 = vpop.f32.mrf.mxu0
    %v4904 = vadd.f32 0.0, %v4903
    %v4905 = vpop.f32.mrf.mxu0
    %4906 = vdwg.mxu0
    %4907 = vrot.lane.b32.xlu0 %v4500, 116
    %v4908 = vpop.permute.xlu0 %4907
    %4909 = vrot.lane.b32.xlu0 %v4500, 84
    %v4910 = vpop.permute.xlu0 %4909
    %v4912 = vsel %vm4386, %v4908, 0
    %v4915 = vsel %vm4386, %v4910, 0
    %4917 = vmatpush.bf16.xpose.msra.mxu0 0
    %4918 = vmatpush.bf16.xpose.msra.mxu0 0
    %4919 = vmatpush.bf16.xpose.msra.mxu0 0
    %4920 = vmatpush.bf16.xpose.msra.mxu0 0
    %4921 = vmatpush.bf16.xpose.msra.mxu0 0
    %4922 = vmatpush.bf16.xpose.msra.mxu0 0
    %4923 = vmatpush.bf16.xpose.msra.mxu0 0
    %4924 = vmatpush.bf16.xpose.msra.mxu0 %v4915
    %4925 = vmatmul.bf16.gmra.mxu0 %v4912
    %v4926 = vpop.f32.mrf.mxu0
    %v4927 = vadd.f32 0.0, %v4926
    %v4928 = vpop.f32.mrf.mxu0
    %4929 = vdwg.mxu0
    %v4930 = vsel %vm4522, %v4904, -inf
    %4931 = vmax.xlane.f32.xlu0 %v4930
    %v4932 = vpop.xlane.xlu0 %4931
    %v4933 = vsel %vm4522, %v4927, -inf
    %4934 = vmax.xlane.f32.xlu0 %v4933
    %v4935 = vpop.xlane.xlu0 %4934
    %v4936 = vsub.f32 %v4904, %v4932
    %v4937 = vsub.f32 %v4927, %v4935
    %v4938 = vmul.f32 %v4936, 1.442695
    %v4939 = vpow.pop %v4938
    %v4940 = vmul.f32 %v4937, 1.442695
    %v4941 = vpow.pop %v4940
    %v4942 = vsel %vm4522, %v4939, 0.0
    %4943 = vadd.xlane.f32.xlu0 %v4942
    %v4944 = vpop.xlane.xlu0 %4943
    %v4945 = vsel %vm4522, %v4941, 0.0
    %4946 = vadd.xlane.f32.xlu0 %v4945
    %v4947 = vpop.xlane.xlu0 %4946
    %v4948 = vrcp.pop %v4944
    %v4949 = vrcp.pop %v4947
    %v4950 = vmul.f32 %v4939, %v4948
    %v4951 = vmul.f32 %v4941, %v4949
    %v4952 = vpack.c.bf16 %v4950, %v4950
    %v4953 = vpack.c.bf16 %v4951, %v4951
    %4954 = vrot.lane.b32.xlu0 %v4476, 52
    %v4955 = vpop.permute.xlu0 %4954
    %v4957 = vsel %vm4522, %v4952, 0
    %v4960 = vsel %vm4552, %v4955, 0
    %4962 = vmatpush.bf16.msra.mxu0 0
    %4963 = vmatpush.bf16.msra.mxu0 0
    %4964 = vmatpush.bf16.msra.mxu0 0
    %4965 = vmatpush.bf16.msra.mxu0 0
    %4966 = vmatpush.bf16.msra.mxu0 0
    %4967 = vmatpush.bf16.msra.mxu0 0
    %4968 = vmatpush.bf16.msra.mxu0 0
    %4969 = vmatpush.bf16.msra.mxu0 %v4960
    %4970 = vmatmul.bf16.gmra.mxu0 %v4957
    %v4971 = vpop.f32.mrf.mxu0
    %v4972 = vadd.f32 0.0, %v4971
    %v4973 = vpop.f32.mrf.mxu0
    %4974 = vdwg.mxu0
    %4975 = vrot.lane.b32.xlu0 %v4500, 52
    %v4976 = vpop.permute.xlu0 %4975
    %v4978 = vsel %vm4522, %v4953, 0
    %v4981 = vsel %vm4552, %v4976, 0
    %4983 = vmatpush.bf16.msra.mxu0 0
    %4984 = vmatpush.bf16.msra.mxu0 0
    %4985 = vmatpush.bf16.msra.mxu0 0
    %4986 = vmatpush.bf16.msra.mxu0 0
    %4987 = vmatpush.bf16.msra.mxu0 0
    %4988 = vmatpush.bf16.msra.mxu0 0
    %4989 = vmatpush.bf16.msra.mxu0 0
    %4990 = vmatpush.bf16.msra.mxu0 %v4981
    %4991 = vmatmul.bf16.gmra.mxu0 %v4978
    %v4992 = vpop.f32.mrf.mxu0
    %v4993 = vadd.f32 0.0, %v4992
    %v4994 = vpop.f32.mrf.mxu0
    %4995 = vdwg.mxu0
    %v4996 = vpack.c.bf16 %v4993, %v4972
    %s4997 = scalar_lea.vmem [#allocation11], 6
    %v4998 = vld [vmem:[%s4997] sm:$0x3]
    %v5000 = vsel %vm4386, %v4996, 0
    %v5003 = vsel %vm4390, %v4998, 0
    %5005 = vmatpush.bf16.msra.mxu0 0
    %5006 = vmatpush.bf16.msra.mxu0 0
    %5007 = vmatpush.bf16.msra.mxu0 0
    %5008 = vmatpush.bf16.msra.mxu0 0
    %5009 = vmatpush.bf16.msra.mxu0 0
    %5010 = vmatpush.bf16.msra.mxu0 0
    %5011 = vmatpush.bf16.msra.mxu0 0
    %5012 = vmatpush.bf16.msra.mxu0 %v5003
    %5013 = vmatmul.bf16.gmra.mxu0 %v5000
    %v5014 = vpop.f32.mrf.mxu0
    %v5015 = vadd.f32 0.0, %v5014
    %v5016 = vpop.f32.mrf.mxu0
    %v5017 = vadd.f32 0.0, %v5016
    %5018 = vdwg.mxu0
    %v5019 = vadd.f32 %v4882, %v5015
    %v5020 = vadd.f32 %v4883, %v5017
    %5021 = vrot.lane.b32.xlu0 %v4476, 112
    %v5022 = vpop.permute.xlu0 %5021
    %5023 = vrot.lane.b32.xlu0 %v4476, 80
    %v5024 = vpop.permute.xlu0 %5023
    %v5026 = vsel %vm4386, %v5022, 0
    %v5029 = vsel %vm4386, %v5024, 0
    %5031 = vmatpush.bf16.xpose.msra.mxu0 0
    %5032 = vmatpush.bf16.xpose.msra.mxu0 0
    %5033 = vmatpush.bf16.xpose.msra.mxu0 0
    %5034 = vmatpush.bf16.xpose.msra.mxu0 0
    %5035 = vmatpush.bf16.xpose.msra.mxu0 0
    %5036 = vmatpush.bf16.xpose.msra.mxu0 0
    %5037 = vmatpush.bf16.xpose.msra.mxu0 0
    %5038 = vmatpush.bf16.xpose.msra.mxu0 %v5029
    %5039 = vmatmul.bf16.gmra.mxu0 %v5026
    %v5040 = vpop.f32.mrf.mxu0
    %v5041 = vadd.f32 0.0, %v5040
    %v5042 = vpop.f32.mrf.mxu0
    %5043 = vdwg.mxu0
    %5044 = vrot.lane.b32.xlu0 %v4500, 112
    %v5045 = vpop.permute.xlu0 %5044
    %5046 = vrot.lane.b32.xlu0 %v4500, 80
    %v5047 = vpop.permute.xlu0 %5046
    %v5049 = vsel %vm4386, %v5045, 0
    %v5052 = vsel %vm4386, %v5047, 0
    %5054 = vmatpush.bf16.xpose.msra.mxu0 0
    %5055 = vmatpush.bf16.xpose.msra.mxu0 0
    %5056 = vmatpush.bf16.xpose.msra.mxu0 0
    %5057 = vmatpush.bf16.xpose.msra.mxu0 0
    %5058 = vmatpush.bf16.xpose.msra.mxu0 0
    %5059 = vmatpush.bf16.xpose.msra.mxu0 0
    %5060 = vmatpush.bf16.xpose.msra.mxu0 0
    %5061 = vmatpush.bf16.xpose.msra.mxu0 %v5052
    %5062 = vmatmul.bf16.gmra.mxu0 %v5049
    %v5063 = vpop.f32.mrf.mxu0
    %v5064 = vadd.f32 0.0, %v5063
    %v5065 = vpop.f32.mrf.mxu0
    %5066 = vdwg.mxu0
    %v5067 = vsel %vm4522, %v5041, -inf
    %5068 = vmax.xlane.f32.xlu0 %v5067
    %v5069 = vpop.xlane.xlu0 %5068
    %v5070 = vsel %vm4522, %v5064, -inf
    %5071 = vmax.xlane.f32.xlu0 %v5070
    %v5072 = vpop.xlane.xlu0 %5071
    %v5073 = vsub.f32 %v5041, %v5069
    %v5074 = vsub.f32 %v5064, %v5072
    %v5075 = vmul.f32 %v5073, 1.442695
    %v5076 = vpow.pop %v5075
    %v5077 = vmul.f32 %v5074, 1.442695
    %v5078 = vpow.pop %v5077
    %v5079 = vsel %vm4522, %v5076, 0.0
    %5080 = vadd.xlane.f32.xlu0 %v5079
    %v5081 = vpop.xlane.xlu0 %5080
    %v5082 = vsel %vm4522, %v5078, 0.0
    %5083 = vadd.xlane.f32.xlu0 %v5082
    %v5084 = vpop.xlane.xlu0 %5083
    %v5085 = vrcp.pop %v5081
    %v5086 = vrcp.pop %v5084
    %v5087 = vmul.f32 %v5076, %v5085
    %v5088 = vmul.f32 %v5078, %v5086
    %v5089 = vpack.c.bf16 %v5087, %v5087
    %v5090 = vpack.c.bf16 %v5088, %v5088
    %5091 = vrot.lane.b32.xlu0 %v4476, 48
    %v5092 = vpop.permute.xlu0 %5091
    %v5094 = vsel %vm4522, %v5089, 0
    %v5097 = vsel %vm4552, %v5092, 0
    %5099 = vmatpush.bf16.msra.mxu0 0
    %5100 = vmatpush.bf16.msra.mxu0 0
    %5101 = vmatpush.bf16.msra.mxu0 0
    %5102 = vmatpush.bf16.msra.mxu0 0
    %5103 = vmatpush.bf16.msra.mxu0 0
    %5104 = vmatpush.bf16.msra.mxu0 0
    %5105 = vmatpush.bf16.msra.mxu0 0
    %5106 = vmatpush.bf16.msra.mxu0 %v5097
    %5107 = vmatmul.bf16.gmra.mxu0 %v5094
    %v5108 = vpop.f32.mrf.mxu0
    %v5109 = vadd.f32 0.0, %v5108
    %v5110 = vpop.f32.mrf.mxu0
    %5111 = vdwg.mxu0
    %5112 = vrot.lane.b32.xlu0 %v4500, 48
    %v5113 = vpop.permute.xlu0 %5112
    %v5115 = vsel %vm4522, %v5090, 0
    %v5118 = vsel %vm4552, %v5113, 0
    %5120 = vmatpush.bf16.msra.mxu0 0
    %5121 = vmatpush.bf16.msra.mxu0 0
    %5122 = vmatpush.bf16.msra.mxu0 0
    %5123 = vmatpush.bf16.msra.mxu0 0
    %5124 = vmatpush.bf16.msra.mxu0 0
    %5125 = vmatpush.bf16.msra.mxu0 0
    %5126 = vmatpush.bf16.msra.mxu0 0
    %5127 = vmatpush.bf16.msra.mxu0 %v5118
    %5128 = vmatmul.bf16.gmra.mxu0 %v5115
    %v5129 = vpop.f32.mrf.mxu0
    %v5130 = vadd.f32 0.0, %v5129
    %v5131 = vpop.f32.mrf.mxu0
    %5132 = vdwg.mxu0
    %v5133 = vpack.c.bf16 %v5130, %v5109
    %s5134 = scalar_lea.vmem [#allocation11], 8
    %v5135 = vld [vmem:[%s5134] sm:$0x3]
    %v5137 = vsel %vm4386, %v5133, 0
    %v5140 = vsel %vm4390, %v5135, 0
    %5142 = vmatpush.bf16.msra.mxu0 0
    %5143 = vmatpush.bf16.msra.mxu0 0
    %5144 = vmatpush.bf16.msra.mxu0 0
    %5145 = vmatpush.bf16.msra.mxu0 0
    %5146 = vmatpush.bf16.msra.mxu0 0
    %5147 = vmatpush.bf16.msra.mxu0 0
    %5148 = vmatpush.bf16.msra.mxu0 0
    %5149 = vmatpush.bf16.msra.mxu0 %v5140
    %5150 = vmatmul.bf16.gmra.mxu0 %v5137
    %v5151 = vpop.f32.mrf.mxu0
    %v5152 = vadd.f32 0.0, %v5151
    %v5153 = vpop.f32.mrf.mxu0
    %v5154 = vadd.f32 0.0, %v5153
    %5155 = vdwg.mxu0
    %v5156 = vadd.f32 %v5019, %v5152
    %v5157 = vadd.f32 %v5020, %v5154
    %5158 = vrot.lane.b32.xlu0 %v4476, 108
    %v5159 = vpop.permute.xlu0 %5158
    %5160 = vrot.lane.b32.xlu0 %v4476, 76
    %v5161 = vpop.permute.xlu0 %5160
    %v5163 = vsel %vm4386, %v5159, 0
    %v5166 = vsel %vm4386, %v5161, 0
    %5168 = vmatpush.bf16.xpose.msra.mxu0 0
    %5169 = vmatpush.bf16.xpose.msra.mxu0 0
    %5170 = vmatpush.bf16.xpose.msra.mxu0 0
    %5171 = vmatpush.bf16.xpose.msra.mxu0 0
    %5172 = vmatpush.bf16.xpose.msra.mxu0 0
    %5173 = vmatpush.bf16.xpose.msra.mxu0 0
    %5174 = vmatpush.bf16.xpose.msra.mxu0 0
    %5175 = vmatpush.bf16.xpose.msra.mxu0 %v5166
    %5176 = vmatmul.bf16.gmra.mxu0 %v5163
    %v5177 = vpop.f32.mrf.mxu0
    %v5178 = vadd.f32 0.0, %v5177
    %v5179 = vpop.f32.mrf.mxu0
    %5180 = vdwg.mxu0
    %5181 = vrot.lane.b32.xlu0 %v4500, 108
    %v5182 = vpop.permute.xlu0 %5181
    %5183 = vrot.lane.b32.xlu0 %v4500, 76
    %v5184 = vpop.permute.xlu0 %5183
    %v5186 = vsel %vm4386, %v5182, 0
    %v5189 = vsel %vm4386, %v5184, 0
    %5191 = vmatpush.bf16.xpose.msra.mxu0 0
    %5192 = vmatpush.bf16.xpose.msra.mxu0 0
    %5193 = vmatpush.bf16.xpose.msra.mxu0 0
    %5194 = vmatpush.bf16.xpose.msra.mxu0 0
    %5195 = vmatpush.bf16.xpose.msra.mxu0 0
    %5196 = vmatpush.bf16.xpose.msra.mxu0 0
    %5197 = vmatpush.bf16.xpose.msra.mxu0 0
    %5198 = vmatpush.bf16.xpose.msra.mxu0 %v5189
    %5199 = vmatmul.bf16.gmra.mxu0 %v5186
    %v5200 = vpop.f32.mrf.mxu0
    %v5201 = vadd.f32 0.0, %v5200
    %v5202 = vpop.f32.mrf.mxu0
    %5203 = vdwg.mxu0
    %v5204 = vsel %vm4522, %v5178, -inf
    %5205 = vmax.xlane.f32.xlu0 %v5204
    %v5206 = vpop.xlane.xlu0 %5205
    %v5207 = vsel %vm4522, %v5201, -inf
    %5208 = vmax.xlane.f32.xlu0 %v5207
    %v5209 = vpop.xlane.xlu0 %5208
    %v5210 = vsub.f32 %v5178, %v5206
    %v5211 = vsub.f32 %v5201, %v5209
    %v5212 = vmul.f32 %v5210, 1.442695
    %v5213 = vpow.pop %v5212
    %v5214 = vmul.f32 %v5211, 1.442695
    %v5215 = vpow.pop %v5214
    %v5216 = vsel %vm4522, %v5213, 0.0
    %5217 = vadd.xlane.f32.xlu0 %v5216
    %v5218 = vpop.xlane.xlu0 %5217
    %v5219 = vsel %vm4522, %v5215, 0.0
    %5220 = vadd.xlane.f32.xlu0 %v5219
    %v5221 = vpop.xlane.xlu0 %5220
    %v5222 = vrcp.pop %v5218
    %v5223 = vrcp.pop %v5221
    %v5224 = vmul.f32 %v5213, %v5222
    %v5225 = vmul.f32 %v5215, %v5223
    %v5226 = vpack.c.bf16 %v5224, %v5224
    %v5227 = vpack.c.bf16 %v5225, %v5225
    %5228 = vrot.lane.b32.xlu0 %v4476, 44
    %v5229 = vpop.permute.xlu0 %5228
    %v5231 = vsel %vm4522, %v5226, 0
    %v5234 = vsel %vm4552, %v5229, 0
    %5236 = vmatpush.bf16.msra.mxu0 0
    %5237 = vmatpush.bf16.msra.mxu0 0
    %5238 = vmatpush.bf16.msra.mxu0 0
    %5239 = vmatpush.bf16.msra.mxu0 0
    %5240 = vmatpush.bf16.msra.mxu0 0
    %5241 = vmatpush.bf16.msra.mxu0 0
    %5242 = vmatpush.bf16.msra.mxu0 0
    %5243 = vmatpush.bf16.msra.mxu0 %v5234
    %5244 = vmatmul.bf16.gmra.mxu0 %v5231
    %v5245 = vpop.f32.mrf.mxu0
    %v5246 = vadd.f32 0.0, %v5245
    %v5247 = vpop.f32.mrf.mxu0
    %5248 = vdwg.mxu0
    %5249 = vrot.lane.b32.xlu0 %v4500, 44
    %v5250 = vpop.permute.xlu0 %5249
    %v5252 = vsel %vm4522, %v5227, 0
    %v5255 = vsel %vm4552, %v5250, 0
    %5257 = vmatpush.bf16.msra.mxu0 0
    %5258 = vmatpush.bf16.msra.mxu0 0
    %5259 = vmatpush.bf16.msra.mxu0 0
    %5260 = vmatpush.bf16.msra.mxu0 0
    %5261 = vmatpush.bf16.msra.mxu0 0
    %5262 = vmatpush.bf16.msra.mxu0 0
    %5263 = vmatpush.bf16.msra.mxu0 0
    %5264 = vmatpush.bf16.msra.mxu0 %v5255
    %5265 = vmatmul.bf16.gmra.mxu0 %v5252
    %v5266 = vpop.f32.mrf.mxu0
    %v5267 = vadd.f32 0.0, %v5266
    %v5268 = vpop.f32.mrf.mxu0
    %5269 = vdwg.mxu0
    %v5270 = vpack.c.bf16 %v5267, %v5246
    %s5271 = scalar_lea.vmem [#allocation11], 10
    %v5272 = vld [vmem:[%s5271] sm:$0x3]
    %v5274 = vsel %vm4386, %v5270, 0
    %v5277 = vsel %vm4390, %v5272, 0
    %5279 = vmatpush.bf16.msra.mxu0 0
    %5280 = vmatpush.bf16.msra.mxu0 0
    %5281 = vmatpush.bf16.msra.mxu0 0
    %5282 = vmatpush.bf16.msra.mxu0 0
    %5283 = vmatpush.bf16.msra.mxu0 0
    %5284 = vmatpush.bf16.msra.mxu0 0
    %5285 = vmatpush.bf16.msra.mxu0 0
    %5286 = vmatpush.bf16.msra.mxu0 %v5277
    %5287 = vmatmul.bf16.gmra.mxu0 %v5274
    %v5288 = vpop.f32.mrf.mxu0
    %v5289 = vadd.f32 0.0, %v5288
    %v5290 = vpop.f32.mrf.mxu0
    %v5291 = vadd.f32 0.0, %v5290
    %5292 = vdwg.mxu0
    %v5293 = vadd.f32 %v5156, %v5289
    %v5294 = vadd.f32 %v5157, %v5291
    %5295 = vrot.lane.b32.xlu0 %v4476, 104
    %v5296 = vpop.permute.xlu0 %5295
    %5297 = vrot.lane.b32.xlu0 %v4476, 72
    %v5298 = vpop.permute.xlu0 %5297
    %v5300 = vsel %vm4386, %v5296, 0
    %v5303 = vsel %vm4386, %v5298, 0
    %5305 = vmatpush.bf16.xpose.msra.mxu0 0
    %5306 = vmatpush.bf16.xpose.msra.mxu0 0
    %5307 = vmatpush.bf16.xpose.msra.mxu0 0
    %5308 = vmatpush.bf16.xpose.msra.mxu0 0
    %5309 = vmatpush.bf16.xpose.msra.mxu0 0
    %5310 = vmatpush.bf16.xpose.msra.mxu0 0
    %5311 = vmatpush.bf16.xpose.msra.mxu0 0
    %5312 = vmatpush.bf16.xpose.msra.mxu0 %v5303
    %5313 = vmatmul.bf16.gmra.mxu0 %v5300
    %v5314 = vpop.f32.mrf.mxu0
    %v5315 = vadd.f32 0.0, %v5314
    %v5316 = vpop.f32.mrf.mxu0
    %5317 = vdwg.mxu0
    %5318 = vrot.lane.b32.xlu0 %v4500, 104
    %v5319 = vpop.permute.xlu0 %5318
    %5320 = vrot.lane.b32.xlu0 %v4500, 72
    %v5321 = vpop.permute.xlu0 %5320
    %v5323 = vsel %vm4386, %v5319, 0
    %v5326 = vsel %vm4386, %v5321, 0
    %5328 = vmatpush.bf16.xpose.msra.mxu0 0
    %5329 = vmatpush.bf16.xpose.msra.mxu0 0
    %5330 = vmatpush.bf16.xpose.msra.mxu0 0
    %5331 = vmatpush.bf16.xpose.msra.mxu0 0
    %5332 = vmatpush.bf16.xpose.msra.mxu0 0
    %5333 = vmatpush.bf16.xpose.msra.mxu0 0
    %5334 = vmatpush.bf16.xpose.msra.mxu0 0
    %5335 = vmatpush.bf16.xpose.msra.mxu0 %v5326
    %5336 = vmatmul.bf16.gmra.mxu0 %v5323
    %v5337 = vpop.f32.mrf.mxu0
    %v5338 = vadd.f32 0.0, %v5337
    %v5339 = vpop.f32.mrf.mxu0
    %5340 = vdwg.mxu0
    %v5341 = vsel %vm4522, %v5315, -inf
    %5342 = vmax.xlane.f32.xlu0 %v5341
    %v5343 = vpop.xlane.xlu0 %5342
    %v5344 = vsel %vm4522, %v5338, -inf
    %5345 = vmax.xlane.f32.xlu0 %v5344
    %v5346 = vpop.xlane.xlu0 %5345
    %v5347 = vsub.f32 %v5315, %v5343
    %v5348 = vsub.f32 %v5338, %v5346
    %v5349 = vmul.f32 %v5347, 1.442695
    %v5350 = vpow.pop %v5349
    %v5351 = vmul.f32 %v5348, 1.442695
    %v5352 = vpow.pop %v5351
    %v5353 = vsel %vm4522, %v5350, 0.0
    %5354 = vadd.xlane.f32.xlu0 %v5353
    %v5355 = vpop.xlane.xlu0 %5354
    %v5356 = vsel %vm4522, %v5352, 0.0
    %5357 = vadd.xlane.f32.xlu0 %v5356
    %v5358 = vpop.xlane.xlu0 %5357
    %v5359 = vrcp.pop %v5355
    %v5360 = vrcp.pop %v5358
    %v5361 = vmul.f32 %v5350, %v5359
    %v5362 = vmul.f32 %v5352, %v5360
    %v5363 = vpack.c.bf16 %v5361, %v5361
    %v5364 = vpack.c.bf16 %v5362, %v5362
    %5365 = vrot.lane.b32.xlu0 %v4476, 40
    %v5366 = vpop.permute.xlu0 %5365
    %v5368 = vsel %vm4522, %v5363, 0
    %v5371 = vsel %vm4552, %v5366, 0
    %5373 = vmatpush.bf16.msra.mxu0 0
    %5374 = vmatpush.bf16.msra.mxu0 0
    %5375 = vmatpush.bf16.msra.mxu0 0
    %5376 = vmatpush.bf16.msra.mxu0 0
    %5377 = vmatpush.bf16.msra.mxu0 0
    %5378 = vmatpush.bf16.msra.mxu0 0
    %5379 = vmatpush.bf16.msra.mxu0 0
    %5380 = vmatpush.bf16.msra.mxu0 %v5371
    %5381 = vmatmul.bf16.gmra.mxu0 %v5368
    %v5382 = vpop.f32.mrf.mxu0
    %v5383 = vadd.f32 0.0, %v5382
    %v5384 = vpop.f32.mrf.mxu0
    %5385 = vdwg.mxu0
    %5386 = vrot.lane.b32.xlu0 %v4500, 40
    %v5387 = vpop.permute.xlu0 %5386
    %v5389 = vsel %vm4522, %v5364, 0
    %v5392 = vsel %vm4552, %v5387, 0
    %5394 = vmatpush.bf16.msra.mxu0 0
    %5395 = vmatpush.bf16.msra.mxu0 0
    %5396 = vmatpush.bf16.msra.mxu0 0
    %5397 = vmatpush.bf16.msra.mxu0 0
    %5398 = vmatpush.bf16.msra.mxu0 0
    %5399 = vmatpush.bf16.msra.mxu0 0
    %5400 = vmatpush.bf16.msra.mxu0 0
    %5401 = vmatpush.bf16.msra.mxu0 %v5392
    %5402 = vmatmul.bf16.gmra.mxu0 %v5389
    %v5403 = vpop.f32.mrf.mxu0
    %v5404 = vadd.f32 0.0, %v5403
    %v5405 = vpop.f32.mrf.mxu0
    %5406 = vdwg.mxu0
    %v5407 = vpack.c.bf16 %v5404, %v5383
    %s5408 = scalar_lea.vmem [#allocation11], 12
    %v5409 = vld [vmem:[%s5408] sm:$0x3]
    %v5411 = vsel %vm4386, %v5407, 0
    %v5414 = vsel %vm4390, %v5409, 0
    %5416 = vmatpush.bf16.msra.mxu0 0
    %5417 = vmatpush.bf16.msra.mxu0 0
    %5418 = vmatpush.bf16.msra.mxu0 0
    %5419 = vmatpush.bf16.msra.mxu0 0
    %5420 = vmatpush.bf16.msra.mxu0 0
    %5421 = vmatpush.bf16.msra.mxu0 0
    %5422 = vmatpush.bf16.msra.mxu0 0
    %5423 = vmatpush.bf16.msra.mxu0 %v5414
    %5424 = vmatmul.bf16.gmra.mxu0 %v5411
    %v5425 = vpop.f32.mrf.mxu0
    %v5426 = vadd.f32 0.0, %v5425
    %v5427 = vpop.f32.mrf.mxu0
    %v5428 = vadd.f32 0.0, %v5427
    %5429 = vdwg.mxu0
    %v5430 = vadd.f32 %v5293, %v5426
    %v5431 = vadd.f32 %v5294, %v5428
    %5432 = vrot.lane.b32.xlu0 %v4476, 100
    %v5433 = vpop.permute.xlu0 %5432
    %5434 = vrot.lane.b32.xlu0 %v4476, 68
    %v5435 = vpop.permute.xlu0 %5434
    %v5437 = vsel %vm4386, %v5433, 0
    %v5440 = vsel %vm4386, %v5435, 0
    %5442 = vmatpush.bf16.xpose.msra.mxu0 0
    %5443 = vmatpush.bf16.xpose.msra.mxu0 0
    %5444 = vmatpush.bf16.xpose.msra.mxu0 0
    %5445 = vmatpush.bf16.xpose.msra.mxu0 0
    %5446 = vmatpush.bf16.xpose.msra.mxu0 0
    %5447 = vmatpush.bf16.xpose.msra.mxu0 0
    %5448 = vmatpush.bf16.xpose.msra.mxu0 0
    %5449 = vmatpush.bf16.xpose.msra.mxu0 %v5440
    %5450 = vmatmul.bf16.gmra.mxu0 %v5437
    %v5451 = vpop.f32.mrf.mxu0
    %v5452 = vadd.f32 0.0, %v5451
    %v5453 = vpop.f32.mrf.mxu0
    %5454 = vdwg.mxu0
    %5455 = vrot.lane.b32.xlu0 %v4500, 100
    %v5456 = vpop.permute.xlu0 %5455
    %5457 = vrot.lane.b32.xlu0 %v4500, 68
    %v5458 = vpop.permute.xlu0 %5457
    %v5460 = vsel %vm4386, %v5456, 0
    %v5463 = vsel %vm4386, %v5458, 0
    %5465 = vmatpush.bf16.xpose.msra.mxu0 0
    %5466 = vmatpush.bf16.xpose.msra.mxu0 0
    %5467 = vmatpush.bf16.xpose.msra.mxu0 0
    %5468 = vmatpush.bf16.xpose.msra.mxu0 0
    %5469 = vmatpush.bf16.xpose.msra.mxu0 0
    %5470 = vmatpush.bf16.xpose.msra.mxu0 0
    %5471 = vmatpush.bf16.xpose.msra.mxu0 0
    %5472 = vmatpush.bf16.xpose.msra.mxu0 %v5463
    %5473 = vmatmul.bf16.gmra.mxu0 %v5460
    %v5474 = vpop.f32.mrf.mxu0
    %v5475 = vadd.f32 0.0, %v5474
    %v5476 = vpop.f32.mrf.mxu0
    %5477 = vdwg.mxu0
    %v5478 = vsel %vm4522, %v5452, -inf
    %5479 = vmax.xlane.f32.xlu0 %v5478
    %v5480 = vpop.xlane.xlu0 %5479
    %v5481 = vsel %vm4522, %v5475, -inf
    %5482 = vmax.xlane.f32.xlu0 %v5481
    %v5483 = vpop.xlane.xlu0 %5482
    %v5484 = vsub.f32 %v5452, %v5480
    %v5485 = vsub.f32 %v5475, %v5483
    %v5486 = vmul.f32 %v5484, 1.442695
    %v5487 = vpow.pop %v5486
    %v5488 = vmul.f32 %v5485, 1.442695
    %v5489 = vpow.pop %v5488
    %v5490 = vsel %vm4522, %v5487, 0.0
    %5491 = vadd.xlane.f32.xlu0 %v5490
    %v5492 = vpop.xlane.xlu0 %5491
    %v5493 = vsel %vm4522, %v5489, 0.0
    %5494 = vadd.xlane.f32.xlu0 %v5493
    %v5495 = vpop.xlane.xlu0 %5494
    %v5496 = vrcp.pop %v5492
    %v5497 = vrcp.pop %v5495
    %v5498 = vmul.f32 %v5487, %v5496
    %v5499 = vmul.f32 %v5489, %v5497
    %v5500 = vpack.c.bf16 %v5498, %v5498
    %v5501 = vpack.c.bf16 %v5499, %v5499
    %5502 = vrot.lane.b32.xlu0 %v4476, 36
    %v5503 = vpop.permute.xlu0 %5502
    %v5505 = vsel %vm4522, %v5500, 0
    %v5508 = vsel %vm4552, %v5503, 0
    %5510 = vmatpush.bf16.msra.mxu0 0
    %5511 = vmatpush.bf16.msra.mxu0 0
    %5512 = vmatpush.bf16.msra.mxu0 0
    %5513 = vmatpush.bf16.msra.mxu0 0
    %5514 = vmatpush.bf16.msra.mxu0 0
    %5515 = vmatpush.bf16.msra.mxu0 0
    %5516 = vmatpush.bf16.msra.mxu0 0
    %5517 = vmatpush.bf16.msra.mxu0 %v5508
    %5518 = vmatmul.bf16.gmra.mxu0 %v5505
    %v5519 = vpop.f32.mrf.mxu0
    %v5520 = vadd.f32 0.0, %v5519
    %v5521 = vpop.f32.mrf.mxu0
    %5522 = vdwg.mxu0
    %5523 = vrot.lane.b32.xlu0 %v4500, 36
    %v5524 = vpop.permute.xlu0 %5523
    %v5526 = vsel %vm4522, %v5501, 0
    %v5529 = vsel %vm4552, %v5524, 0
    %5531 = vmatpush.bf16.msra.mxu0 0
    %5532 = vmatpush.bf16.msra.mxu0 0
    %5533 = vmatpush.bf16.msra.mxu0 0
    %5534 = vmatpush.bf16.msra.mxu0 0
    %5535 = vmatpush.bf16.msra.mxu0 0
    %5536 = vmatpush.bf16.msra.mxu0 0
    %5537 = vmatpush.bf16.msra.mxu0 0
    %5538 = vmatpush.bf16.msra.mxu0 %v5529
    %5539 = vmatmul.bf16.gmra.mxu0 %v5526
    %v5540 = vpop.f32.mrf.mxu0
    %v5541 = vadd.f32 0.0, %v5540
    %v5542 = vpop.f32.mrf.mxu0
    %5543 = vdwg.mxu0
    %v5544 = vpack.c.bf16 %v5541, %v5520
    %s5545 = scalar_lea.vmem [#allocation11], 14
    %v5546 = vld [vmem:[%s5545] sm:$0x3]
    %v5548 = vsel %vm4386, %v5544, 0
    %v5551 = vsel %vm4390, %v5546, 0
    %5553 = vmatpush.bf16.msra.mxu0 0
    %5554 = vmatpush.bf16.msra.mxu0 0
    %5555 = vmatpush.bf16.msra.mxu0 0
    %5556 = vmatpush.bf16.msra.mxu0 0
    %5557 = vmatpush.bf16.msra.mxu0 0
    %5558 = vmatpush.bf16.msra.mxu0 0
    %5559 = vmatpush.bf16.msra.mxu0 0
    %5560 = vmatpush.bf16.msra.mxu0 %v5551
    %5561 = vmatmul.bf16.gmra.mxu0 %v5548
    %v5562 = vpop.f32.mrf.mxu0
    %v5563 = vadd.f32 0.0, %v5562
    %v5564 = vpop.f32.mrf.mxu0
    %v5565 = vadd.f32 0.0, %v5564
    %5566 = vdwg.mxu0
    %v5567 = vadd.f32 %v5430, %v5563
    %v5568 = vadd.f32 %v5431, %v5565
    %v5569 = vld [vmem:[#allocation13] sm:$0x1]
    %v5571 = vperm.slane %v5569, 0
    %v5573 = vadd.f32 %v5567, %v5571
    %v5574 = vadd.f32 %v5568, %v5571
    %v5575 = vadd.f32 %v4432, %v5573
    %v5576 = vadd.f32 %v4433, %v5574
    %v5577 = vld [vmem:[%s14] sm:$0x1]
    %v5578 = vld [vmem:[%s15] sm:$0x1]
    %v5579 = vsel %vm672, %v5575, 0.0
    %5580 = vadd.xlane.f32.xlu0 %v5579
    %v5581 = vpop.xlane.xlu0 %5580
    %v5582 = vsel %vm672, %v5576, 0.0
    %5583 = vadd.xlane.f32.xlu0 %v5582
    %v5584 = vpop.xlane.xlu0 %5583
    %v5585 = vrcp.pop 32.0
    %v5586 = vmul.f32 32.0, %v5585
    %v5587 = vsub.f32 1.0, %v5586
    %v5588 = vmul.f32 %v5585, %v5587
    %v5589 = vadd.f32 %v5585, %v5588
    %vm5590 = vweird.f32 %v5585
    %v5591 = vsel %vm5590, %v5585, %v5589
    %v5592 = vmul.f32 %v5581, %v5591
    %v5593 = vmul.f32 %v5584, %v5591
    %v5594 = vsub.f32 %v5575, %v5592
    %v5595 = vsub.f32 %v5576, %v5593
    %v5596 = vmul.f32 %v5594, %v5594
    %v5597 = vmul.f32 %v5595, %v5595
    %v5598 = vsel %vm672, %v5596, 0.0
    %5599 = vadd.xlane.f32.xlu0 %v5598
    %v5600 = vpop.xlane.xlu0 %5599
    %v5601 = vsel %vm672, %v5597, 0.0
    %5602 = vadd.xlane.f32.xlu0 %v5601
    %v5603 = vpop.xlane.xlu0 %5602
    %v5604 = vmul.f32 %v5600, %v5591
    %v5605 = vmul.f32 %v5603, %v5591
    %v5606 = vadd.f32 %v5604, 1e-05
    %v5607 = vadd.f32 %v5605, 1e-05
    %v5608 = vrsqrt.pop %v5606
    %v5609 = vmul.f32 %v5608, %v5606
    %v5610 = vmul.f32 %v5609, %v5608
    %v5611 = vmul.f32 0.5, %v5610
    %v5612 = vsub.f32 1.5, %v5611
    %v5613 = vmul.f32 %v5608, %v5612
    %vm5614 = vweird.f32 %v5606
    %vm5615 = vweird.f32 %v5608
    %vm5616 = vmor %vm5614, %vm5615
    %v5617 = vsel %vm5616, %v5608, %v5613
    %v5618 = vrsqrt.pop %v5607
    %v5619 = vmul.f32 %v5618, %v5607
    %v5620 = vmul.f32 %v5619, %v5618
    %v5621 = vmul.f32 0.5, %v5620
    %v5622 = vsub.f32 1.5, %v5621
    %v5623 = vmul.f32 %v5618, %v5622
    %vm5624 = vweird.f32 %v5607
    %vm5625 = vweird.f32 %v5618
    %vm5626 = vmor %vm5624, %vm5625
    %v5627 = vsel %vm5626, %v5618, %v5623
    %v5628 = vmul.f32 %v5594, %v5617
    %v5629 = vmul.f32 %v5595, %v5627
    %v5631 = vperm.slane %v5577, 0
    %v5633 = vmul.f32 %v5628, %v5631
    %v5634 = vmul.f32 %v5629, %v5631
    %v5636 = vperm.slane %v5578, 0
    %v5638 = vadd.f32 %v5633, %v5636
    %v5639 = vadd.f32 %v5634, %v5636
    %v5640 = vpack.c.bf16 %v5639, %v5638
    %v5641 = vld [vmem:[#allocation14] sm:$0xf]
    %v5642 = vld [vmem:[#allocation14 + $0x4] sm:$0xf]
    %v5643 = vld [vmem:[#allocation14 + $0x8] sm:$0xf]
    %v5644 = vld [vmem:[#allocation14 + $0xc] sm:$0xf]
    %v5645 = vld [vmem:[#allocation16] sm:$0x1]
    %v5647 = vperm.slane %v5645, 0
    %v5653 = vunpack.c.l.b16 %v5641
    %v5654 = vunpack.c.l.b16 %v5642
    %v5655 = vunpack.c.l.b16 %v5643
    %v5656 = vunpack.c.l.b16 %v5644
    %v5657 = vpack.c.b16 %v5654, %v5653
    %v5658 = vpack.c.b16 %v5656, %v5655
    %v5662 = vsel %vm672, %v5640, 0
    %5664 = vmatpush.bf16.msra.mxu0 0
    %5665 = vmatpush.bf16.msra.mxu0 0
    %5666 = vmatpush.bf16.msra.mxu0 0
    %5667 = vmatpush.bf16.msra.mxu0 0
    %5668 = vmatpush.bf16.msra.mxu0 0
    %5669 = vmatpush.bf16.msra.mxu0 0
    %5670 = vmatpush.bf16.msra.mxu0 %v5658
    %5671 = vmatpush.bf16.msra.mxu0 %v5657
    %5672 = vmatmul.bf16.gmra.mxu0 %v5662
    %v5673 = vpop.f32.mrf.mxu0
    %v5674 = vadd.f32 %v5647, %v5673
    %v5675 = vpop.f32.mrf.mxu0
    %v5676 = vadd.f32 %v5647, %v5675
    %5677 = vdwg.mxu0
    %v5678 = vmax.f32 %v5674, 0.0
    %v5679 = vmax.f32 %v5676, 0.0
    %v5680 = vpack.c.bf16 %v5679, %v5678
    %v5681 = vld [vmem:[%s18] sm:$0xf]
    %v5682 = vld [vmem:[%s18 + $0x4] sm:$0xf]
    %v5683 = vld [vmem:[%s18 + $0x8] sm:$0xf]
    %v5684 = vld [vmem:[%s18 + $0xc] sm:$0xf]
    %v5685 = vld [vmem:[%s18 + $0x10] sm:$0xf]
    %v5686 = vld [vmem:[%s18 + $0x14] sm:$0xf]
    %v5687 = vld [vmem:[%s18 + $0x18] sm:$0xf]
    %v5688 = vld [vmem:[%s18 + $0x1c] sm:$0xf]
    %v5689 = vld [vmem:[%s18 + $0x20] sm:$0xf]
    %v5690 = vld [vmem:[%s18 + $0x24] sm:$0xf]
    %v5691 = vld [vmem:[%s18 + $0x28] sm:$0xf]
    %v5692 = vld [vmem:[%s18 + $0x2c] sm:$0xf]
    %v5693 = vld [vmem:[%s18 + $0x30] sm:$0xf]
    %v5694 = vld [vmem:[%s18 + $0x34] sm:$0xf]
    %v5695 = vld [vmem:[%s18 + $0x38] sm:$0xf]
    %v5696 = vld [vmem:[%s18 + $0x3c] sm:$0xf]
    %v5697 = vld [vmem:[#allocation17] sm:$0x1]
    %v5699 = vperm.slane %v5697, 0
    %v5717 = vunpack.c.l.b16 %v5681
    %v5718 = vunpack.c.l.b16 %v5682
    %v5719 = vunpack.c.l.b16 %v5683
    %v5720 = vunpack.c.l.b16 %v5684
    %v5721 = vunpack.c.l.b16 %v5685
    %v5722 = vunpack.c.l.b16 %v5686
    %v5723 = vunpack.c.l.b16 %v5687
    %v5724 = vunpack.c.l.b16 %v5688
    %v5725 = vunpack.c.l.b16 %v5689
    %v5726 = vunpack.c.l.b16 %v5690
    %v5727 = vunpack.c.l.b16 %v5691
    %v5728 = vunpack.c.l.b16 %v5692
    %v5729 = vunpack.c.l.b16 %v5693
    %v5730 = vunpack.c.l.b16 %v5694
    %v5731 = vunpack.c.l.b16 %v5695
    %v5732 = vunpack.c.l.b16 %v5696
    %v5733 = vpack.c.b16 %v5718, %v5717
    %v5734 = vpack.c.b16 %v5720, %v5719
    %v5735 = vpack.c.b16 %v5722, %v5721
    %v5736 = vpack.c.b16 %v5724, %v5723
    %v5737 = vpack.c.b16 %v5726, %v5725
    %v5738 = vpack.c.b16 %v5728, %v5727
    %v5739 = vpack.c.b16 %v5730, %v5729
    %v5740 = vpack.c.b16 %v5732, %v5731
    %5749 = vmatpush.bf16.msra.mxu0 %v5740
    %5750 = vmatpush.bf16.msra.mxu0 %v5739
    %5751 = vmatpush.bf16.msra.mxu0 %v5738
    %5752 = vmatpush.bf16.msra.mxu0 %v5737
    %5753 = vmatpush.bf16.msra.mxu0 %v5736
    %5754 = vmatpush.bf16.msra.mxu0 %v5735
    %5755 = vmatpush.bf16.msra.mxu0 %v5734
    %5756 = vmatpush.bf16.msra.mxu0 %v5733
    %5757 = vmatmul.bf16.gmra.mxu0 %v5680
    %v5758 = vpop.f32.mrf.mxu0
    %v5759 = vadd.f32 %v5699, %v5758
    %v5760 = vpop.f32.mrf.mxu0
    %v5761 = vadd.f32 %v5699, %v5760
    %5762 = vdwg.mxu0
    %v5763 = vadd.f32 %v5638, %v5759
    %v5764 = vadd.f32 %v5639, %v5761
    %v5765 = vld [vmem:[%s20] sm:$0x1]
    %v5766 = vld [vmem:[%s21] sm:$0x1]
    %v5767 = vsel %vm672, %v5763, 0.0
    %5768 = vadd.xlane.f32.xlu0 %v5767
    %v5769 = vpop.xlane.xlu0 %5768
    %v5770 = vsel %vm672, %v5764, 0.0
    %5771 = vadd.xlane.f32.xlu0 %v5770
    %v5772 = vpop.xlane.xlu0 %5771
    %v5773 = vmul.f32 %v5769, %v5591
    %v5774 = vmul.f32 %v5772, %v5591
    %v5775 = vsub.f32 %v5763, %v5773
    %v5776 = vsub.f32 %v5764, %v5774
    %v5777 = vmul.f32 %v5775, %v5775
    %v5778 = vmul.f32 %v5776, %v5776
    %v5779 = vsel %vm672, %v5777, 0.0
    %5780 = vadd.xlane.f32.xlu0 %v5779
    %v5781 = vpop.xlane.xlu0 %5780
    %v5782 = vsel %vm672, %v5778, 0.0
    %5783 = vadd.xlane.f32.xlu0 %v5782
    %v5784 = vpop.xlane.xlu0 %5783
    %v5785 = vmul.f32 %v5781, %v5591
    %v5786 = vmul.f32 %v5784, %v5591
    %v5787 = vadd.f32 %v5785, 1e-05
    %v5788 = vadd.f32 %v5786, 1e-05
    %v5789 = vrsqrt.pop %v5787
    %v5790 = vmul.f32 %v5789, %v5787
    %v5791 = vmul.f32 %v5790, %v5789
    %v5792 = vmul.f32 0.5, %v5791
    %v5793 = vsub.f32 1.5, %v5792
    %v5794 = vmul.f32 %v5789, %v5793
    %vm5795 = vweird.f32 %v5787
    %vm5796 = vweird.f32 %v5789
    %vm5797 = vmor %vm5795, %vm5796
    %v5798 = vsel %vm5797, %v5789, %v5794
    %v5799 = vrsqrt.pop %v5788
    %v5800 = vmul.f32 %v5799, %v5788
    %v5801 = vmul.f32 %v5800, %v5799
    %v5802 = vmul.f32 0.5, %v5801
    %v5803 = vsub.f32 1.5, %v5802
    %v5804 = vmul.f32 %v5799, %v5803
    %vm5805 = vweird.f32 %v5788
    %vm5806 = vweird.f32 %v5799
    %vm5807 = vmor %vm5805, %vm5806
    %v5808 = vsel %vm5807, %v5799, %v5804
    %v5809 = vmul.f32 %v5775, %v5798
    %v5810 = vmul.f32 %v5776, %v5808
    %v5812 = vperm.slane %v5765, 0
    %v5814 = vmul.f32 %v5809, %v5812
    %v5815 = vmul.f32 %v5810, %v5812
    %v5817 = vperm.slane %v5766, 0
    %v5819 = vadd.f32 %v5814, %v5817
    %v5820 = vadd.f32 %v5815, %v5817
    %v5821 = vpack.c.bf16 %v5820, %v5819
    %s5822 = scalar_lea.vmem %s10, 16
    %v5823 = vld [vmem:[%s5822] sm:$0xf]
    %v5824 = vld [vmem:[%s5822 + $0x4] sm:$0xf]
    %v5825 = vld [vmem:[%s5822 + $0x8] sm:$0xf]
    %v5826 = vld [vmem:[%s5822 + $0xc] sm:$0xf]
    %s5827 = scalar_lea.vmem [#allocation10], 1
    %v5828 = vld [vmem:[%s5827] sm:$0x1]
    %v5830 = vperm.slane %v5828, 0
    %v5836 = vunpack.c.l.b16 %v5823
    %v5837 = vunpack.c.l.b16 %v5824
    %v5838 = vunpack.c.l.b16 %v5825
    %v5839 = vunpack.c.l.b16 %v5826
    %v5840 = vpack.c.b16 %v5837, %v5836
    %v5841 = vpack.c.b16 %v5839, %v5838
    %v5845 = vsel %vm672, %v5821, 0
    %5847 = vmatpush.bf16.msra.mxu0 0
    %5848 = vmatpush.bf16.msra.mxu0 0
    %5849 = vmatpush.bf16.msra.mxu0 0
    %5850 = vmatpush.bf16.msra.mxu0 0
    %5851 = vmatpush.bf16.msra.mxu0 0
    %5852 = vmatpush.bf16.msra.mxu0 0
    %5853 = vmatpush.bf16.msra.mxu0 %v5841
    %5854 = vmatpush.bf16.msra.mxu0 %v5840
    %5855 = vmatmul.bf16.gmra.mxu0 %v5845
    %v5856 = vpop.f32.mrf.mxu0
    %v5857 = vadd.f32 %v5830, %v5856
    %v5858 = vpop.f32.mrf.mxu0
    %v5859 = vadd.f32 %v5830, %v5858
    %5860 = vdwg.mxu0
    %v5861 = vpack.c.bf16 %v5857, %v5857
    %v5862 = vpack.c.bf16 %v5859, %v5859
    %v5864 = vunpack.c.l.b16 %v5861
    %v5865 = vpack.c.b16 %v5864, %v5864
    %5866 = vrot.lane.b32.xlu0 %v5865, 96
    %v5867 = vpop.permute.xlu0 %5866
    %v5869 = vsel %vm4386, %v5861, 0
    %v5872 = vsel %vm4386, %v5867, 0
    %5874 = vmatpush.bf16.xpose.msra.mxu0 0
    %5875 = vmatpush.bf16.xpose.msra.mxu0 0
    %5876 = vmatpush.bf16.xpose.msra.mxu0 0
    %5877 = vmatpush.bf16.xpose.msra.mxu0 0
    %5878 = vmatpush.bf16.xpose.msra.mxu0 0
    %5879 = vmatpush.bf16.xpose.msra.mxu0 0
    %5880 = vmatpush.bf16.xpose.msra.mxu0 0
    %5881 = vmatpush.bf16.xpose.msra.mxu0 %v5872
    %5882 = vmatmul.bf16.gmra.mxu0 %v5869
    %v5883 = vpop.f32.mrf.mxu0
    %v5884 = vadd.f32 0.0, %v5883
    %v5885 = vpop.f32.mrf.mxu0
    %5886 = vdwg.mxu0
    %v5888 = vunpack.c.l.b16 %v5862
    %v5889 = vpack.c.b16 %v5888, %v5888
    %5890 = vrot.lane.b32.xlu0 %v5889, 96
    %v5891 = vpop.permute.xlu0 %5890
    %v5893 = vsel %vm4386, %v5862, 0
    %v5896 = vsel %vm4386, %v5891, 0
    %5898 = vmatpush.bf16.xpose.msra.mxu0 0
    %5899 = vmatpush.bf16.xpose.msra.mxu0 0
    %5900 = vmatpush.bf16.xpose.msra.mxu0 0
    %5901 = vmatpush.bf16.xpose.msra.mxu0 0
    %5902 = vmatpush.bf16.xpose.msra.mxu0 0
    %5903 = vmatpush.bf16.xpose.msra.mxu0 0
    %5904 = vmatpush.bf16.xpose.msra.mxu0 0
    %5905 = vmatpush.bf16.xpose.msra.mxu0 %v5896
    %5906 = vmatmul.bf16.gmra.mxu0 %v5893
    %v5907 = vpop.f32.mrf.mxu0
    %v5908 = vadd.f32 0.0, %v5907
    %v5909 = vpop.f32.mrf.mxu0
    %5910 = vdwg.mxu0
    %v5911 = vsel %vm4522, %v5884, -inf
    %5912 = vmax.xlane.f32.xlu0 %v5911
    %v5913 = vpop.xlane.xlu0 %5912
    %v5914 = vsel %vm4522, %v5908, -inf
    %5915 = vmax.xlane.f32.xlu0 %v5914
    %v5916 = vpop.xlane.xlu0 %5915
    %v5917 = vsub.f32 %v5884, %v5913
    %v5918 = vsub.f32 %v5908, %v5916
    %v5919 = vmul.f32 %v5917, 1.442695
    %v5920 = vpow.pop %v5919
    %v5921 = vmul.f32 %v5918, 1.442695
    %v5922 = vpow.pop %v5921
    %v5923 = vsel %vm4522, %v5920, 0.0
    %5924 = vadd.xlane.f32.xlu0 %v5923
    %v5925 = vpop.xlane.xlu0 %5924
    %v5926 = vsel %vm4522, %v5922, 0.0
    %5927 = vadd.xlane.f32.xlu0 %v5926
    %v5928 = vpop.xlane.xlu0 %5927
    %v5929 = vrcp.pop %v5925
    %v5930 = vrcp.pop %v5928
    %v5931 = vmul.f32 %v5920, %v5929
    %v5932 = vmul.f32 %v5922, %v5930
    %v5933 = vpack.c.bf16 %v5931, %v5931
    %v5934 = vpack.c.bf16 %v5932, %v5932
    %5935 = vrot.lane.b32.xlu0 %v5865, 64
    %v5936 = vpop.permute.xlu0 %5935
    %v5938 = vsel %vm4522, %v5933, 0
    %v5941 = vsel %vm4552, %v5936, 0
    %5943 = vmatpush.bf16.msra.mxu0 0
    %5944 = vmatpush.bf16.msra.mxu0 0
    %5945 = vmatpush.bf16.msra.mxu0 0
    %5946 = vmatpush.bf16.msra.mxu0 0
    %5947 = vmatpush.bf16.msra.mxu0 0
    %5948 = vmatpush.bf16.msra.mxu0 0
    %5949 = vmatpush.bf16.msra.mxu0 0
    %5950 = vmatpush.bf16.msra.mxu0 %v5941
    %5951 = vmatmul.bf16.gmra.mxu0 %v5938
    %v5952 = vpop.f32.mrf.mxu0
    %v5953 = vadd.f32 0.0, %v5952
    %v5954 = vpop.f32.mrf.mxu0
    %5955 = vdwg.mxu0
    %5956 = vrot.lane.b32.xlu0 %v5889, 64
    %v5957 = vpop.permute.xlu0 %5956
    %v5959 = vsel %vm4522, %v5934, 0
    %v5962 = vsel %vm4552, %v5957, 0
    %5964 = vmatpush.bf16.msra.mxu0 0
    %5965 = vmatpush.bf16.msra.mxu0 0
    %5966 = vmatpush.bf16.msra.mxu0 0
    %5967 = vmatpush.bf16.msra.mxu0 0
    %5968 = vmatpush.bf16.msra.mxu0 0
    %5969 = vmatpush.bf16.msra.mxu0 0
    %5970 = vmatpush.bf16.msra.mxu0 0
    %5971 = vmatpush.bf16.msra.mxu0 %v5962
    %5972 = vmatmul.bf16.gmra.mxu0 %v5959
    %v5973 = vpop.f32.mrf.mxu0
    %v5974 = vadd.f32 0.0, %v5973
    %v5975 = vpop.f32.mrf.mxu0
    %5976 = vdwg.mxu0
    %v5977 = vpack.c.bf16 %v5974, %v5953
    %s5978 = scalar_lea.vmem [#allocation11], 16
    %v5979 = vld [vmem:[%s5978] sm:$0x3]
    %5980 = vrot.lane.b32.xlu0 %v5865, 124
    %v5981 = vpop.permute.xlu0 %5980
    %5982 = vrot.lane.b32.xlu0 %v5865, 92
    %v5983 = vpop.permute.xlu0 %5982
    %v5985 = vsel %vm4386, %v5981, 0
    %v5988 = vsel %vm4386, %v5983, 0
    %5990 = vmatpush.bf16.xpose.msra.mxu0 0
    %5991 = vmatpush.bf16.xpose.msra.mxu0 0
    %5992 = vmatpush.bf16.xpose.msra.mxu0 0
    %5993 = vmatpush.bf16.xpose.msra.mxu0 0
    %5994 = vmatpush.bf16.xpose.msra.mxu0 0
    %5995 = vmatpush.bf16.xpose.msra.mxu0 0
    %5996 = vmatpush.bf16.xpose.msra.mxu0 0
    %5997 = vmatpush.bf16.xpose.msra.mxu0 %v5988
    %5998 = vmatmul.bf16.gmra.mxu0 %v5985
    %v5999 = vpop.f32.mrf.mxu0
    %v6000 = vadd.f32 0.0, %v5999
    %v6001 = vpop.f32.mrf.mxu0
    %6002 = vdwg.mxu0
    %6003 = vrot.lane.b32.xlu0 %v5889, 124
    %v6004 = vpop.permute.xlu0 %6003
    %6005 = vrot.lane.b32.xlu0 %v5889, 92
    %v6006 = vpop.permute.xlu0 %6005
    %v6008 = vsel %vm4386, %v6004, 0
    %v6011 = vsel %vm4386, %v6006, 0
    %6013 = vmatpush.bf16.xpose.msra.mxu0 0
    %6014 = vmatpush.bf16.xpose.msra.mxu0 0
    %6015 = vmatpush.bf16.xpose.msra.mxu0 0
    %6016 = vmatpush.bf16.xpose.msra.mxu0 0
    %6017 = vmatpush.bf16.xpose.msra.mxu0 0
    %6018 = vmatpush.bf16.xpose.msra.mxu0 0
    %6019 = vmatpush.bf16.xpose.msra.mxu0 0
    %6020 = vmatpush.bf16.xpose.msra.mxu0 %v6011
    %6021 = vmatmul.bf16.gmra.mxu0 %v6008
    %v6022 = vpop.f32.mrf.mxu0
    %v6023 = vadd.f32 0.0, %v6022
    %v6024 = vpop.f32.mrf.mxu0
    %6025 = vdwg.mxu0
    %v6026 = vsel %vm4522, %v6000, -inf
    %6027 = vmax.xlane.f32.xlu0 %v6026
    %v6028 = vpop.xlane.xlu0 %6027
    %v6029 = vsel %vm4522, %v6023, -inf
    %6030 = vmax.xlane.f32.xlu0 %v6029
    %v6031 = vpop.xlane.xlu0 %6030
    %v6032 = vsub.f32 %v6000, %v6028
    %v6033 = vsub.f32 %v6023, %v6031
    %v6034 = vmul.f32 %v6032, 1.442695
    %v6035 = vpow.pop %v6034
    %v6036 = vmul.f32 %v6033, 1.442695
    %v6037 = vpow.pop %v6036
    %v6038 = vsel %vm4522, %v6035, 0.0
    %6039 = vadd.xlane.f32.xlu0 %v6038
    %v6040 = vpop.xlane.xlu0 %6039
    %v6041 = vsel %vm4522, %v6037, 0.0
    %6042 = vadd.xlane.f32.xlu0 %v6041
    %v6043 = vpop.xlane.xlu0 %6042
    %v6044 = vrcp.pop %v6040
    %v6045 = vrcp.pop %v6043
    %v6046 = vmul.f32 %v6035, %v6044
    %v6047 = vmul.f32 %v6037, %v6045
    %v6048 = vpack.c.bf16 %v6046, %v6046
    %v6049 = vpack.c.bf16 %v6047, %v6047
    %6050 = vrot.lane.b32.xlu0 %v5865, 60
    %v6051 = vpop.permute.xlu0 %6050
    %v6053 = vsel %vm4522, %v6048, 0
    %v6056 = vsel %vm4552, %v6051, 0
    %6058 = vmatpush.bf16.msra.mxu0 0
    %6059 = vmatpush.bf16.msra.mxu0 0
    %6060 = vmatpush.bf16.msra.mxu0 0
    %6061 = vmatpush.bf16.msra.mxu0 0
    %6062 = vmatpush.bf16.msra.mxu0 0
    %6063 = vmatpush.bf16.msra.mxu0 0
    %6064 = vmatpush.bf16.msra.mxu0 0
    %6065 = vmatpush.bf16.msra.mxu0 %v6056
    %6066 = vmatmul.bf16.gmra.mxu0 %v6053
    %v6067 = vpop.f32.mrf.mxu0
    %v6068 = vadd.f32 0.0, %v6067
    %v6069 = vpop.f32.mrf.mxu0
    %6070 = vdwg.mxu0
    %6071 = vrot.lane.b32.xlu0 %v5889, 60
    %v6072 = vpop.permute.xlu0 %6071
    %v6074 = vsel %vm4522, %v6049, 0
    %v6077 = vsel %vm4552, %v6072, 0
    %6079 = vmatpush.bf16.msra.mxu0 0
    %6080 = vmatpush.bf16.msra.mxu0 0
    %6081 = vmatpush.bf16.msra.mxu0 0
    %6082 = vmatpush.bf16.msra.mxu0 0
    %6083 = vmatpush.bf16.msra.mxu0 0
    %6084 = vmatpush.bf16.msra.mxu0 0
    %6085 = vmatpush.bf16.msra.mxu0 0
    %6086 = vmatpush.bf16.msra.mxu0 %v6077
    %6087 = vmatmul.bf16.gmra.mxu0 %v6074
    %v6088 = vpop.f32.mrf.mxu0
    %v6089 = vadd.f32 0.0, %v6088
    %v6090 = vpop.f32.mrf.mxu0
    %6091 = vdwg.mxu0
    %v6092 = vpack.c.bf16 %v6089, %v6068
    %s6093 = scalar_lea.vmem [#allocation11], 18
    %v6094 = vld [vmem:[%s6093] sm:$0x3]
    %v6096 = vsel %vm4386, %v6092, 0
    %v6099 = vsel %vm4390, %v6094, 0
    %6101 = vmatpush.bf16.msra.mxu0 0
    %6102 = vmatpush.bf16.msra.mxu0 0
    %6103 = vmatpush.bf16.msra.mxu0 0
    %6104 = vmatpush.bf16.msra.mxu0 0
    %6105 = vmatpush.bf16.msra.mxu0 0
    %6106 = vmatpush.bf16.msra.mxu0 0
    %6107 = vmatpush.bf16.msra.mxu0 0
    %6108 = vmatpush.bf16.msra.mxu0 %v6099
    %6109 = vmatmul.bf16.gmra.mxu0 %v6096
    %v6110 = vpop.f32.mrf.mxu0
    %v6111 = vadd.f32 0.0, %v6110
    %v6112 = vpop.f32.mrf.mxu0
    %v6113 = vadd.f32 0.0, %v6112
    %6114 = vdwg.mxu0
    %v6116 = vsel %vm4386, %v5977, 0
    %v6119 = vsel %vm4390, %v5979, 0
    %6121 = vmatpush.bf16.msra.mxu0 0
    %6122 = vmatpush.bf16.msra.mxu0 0
    %6123 = vmatpush.bf16.msra.mxu0 0
    %6124 = vmatpush.bf16.msra.mxu0 0
    %6125 = vmatpush.bf16.msra.mxu0 0
    %6126 = vmatpush.bf16.msra.mxu0 0
    %6127 = vmatpush.bf16.msra.mxu0 0
    %6128 = vmatpush.bf16.msra.mxu0 %v6119
    %6129 = vmatmul.bf16.gmra.mxu0 %v6116
    %v6130 = vpop.f32.mrf.mxu0
    %v6131 = vadd.f32 %v6111, %v6130
    %v6132 = vpop.f32.mrf.mxu0
    %v6133 = vadd.f32 %v6113, %v6132
    %6134 = vdwg.mxu0
    %6135 = vrot.lane.b32.xlu0 %v5865, 120
    %v6136 = vpop.permute.xlu0 %6135
    %6137 = vrot.lane.b32.xlu0 %v5865, 88
    %v6138 = vpop.permute.xlu0 %6137
    %v6140 = vsel %vm4386, %v6136, 0
    %v6143 = vsel %vm4386, %v6138, 0
    %6145 = vmatpush.bf16.xpose.msra.mxu0 0
    %6146 = vmatpush.bf16.xpose.msra.mxu0 0
    %6147 = vmatpush.bf16.xpose.msra.mxu0 0
    %6148 = vmatpush.bf16.xpose.msra.mxu0 0
    %6149 = vmatpush.bf16.xpose.msra.mxu0 0
    %6150 = vmatpush.bf16.xpose.msra.mxu0 0
    %6151 = vmatpush.bf16.xpose.msra.mxu0 0
    %6152 = vmatpush.bf16.xpose.msra.mxu0 %v6143
    %6153 = vmatmul.bf16.gmra.mxu0 %v6140
    %v6154 = vpop.f32.mrf.mxu0
    %v6155 = vadd.f32 0.0, %v6154
    %v6156 = vpop.f32.mrf.mxu0
    %6157 = vdwg.mxu0
    %6158 = vrot.lane.b32.xlu0 %v5889, 120
    %v6159 = vpop.permute.xlu0 %6158
    %6160 = vrot.lane.b32.xlu0 %v5889, 88
    %v6161 = vpop.permute.xlu0 %6160
    %v6163 = vsel %vm4386, %v6159, 0
    %v6166 = vsel %vm4386, %v6161, 0
    %6168 = vmatpush.bf16.xpose.msra.mxu0 0
    %6169 = vmatpush.bf16.xpose.msra.mxu0 0
    %6170 = vmatpush.bf16.xpose.msra.mxu0 0
    %6171 = vmatpush.bf16.xpose.msra.mxu0 0
    %6172 = vmatpush.bf16.xpose.msra.mxu0 0
    %6173 = vmatpush.bf16.xpose.msra.mxu0 0
    %6174 = vmatpush.bf16.xpose.msra.mxu0 0
    %6175 = vmatpush.bf16.xpose.msra.mxu0 %v6166
    %6176 = vmatmul.bf16.gmra.mxu0 %v6163
    %v6177 = vpop.f32.mrf.mxu0
    %v6178 = vadd.f32 0.0, %v6177
    %v6179 = vpop.f32.mrf.mxu0
    %6180 = vdwg.mxu0
    %v6181 = vsel %vm4522, %v6155, -inf
    %6182 = vmax.xlane.f32.xlu0 %v6181
    %v6183 = vpop.xlane.xlu0 %6182
    %v6184 = vsel %vm4522, %v6178, -inf
    %6185 = vmax.xlane.f32.xlu0 %v6184
    %v6186 = vpop.xlane.xlu0 %6185
    %v6187 = vsub.f32 %v6155, %v6183
    %v6188 = vsub.f32 %v6178, %v6186
    %v6189 = vmul.f32 %v6187, 1.442695
    %v6190 = vpow.pop %v6189
    %v6191 = vmul.f32 %v6188, 1.442695
    %v6192 = vpow.pop %v6191
    %v6193 = vsel %vm4522, %v6190, 0.0
    %6194 = vadd.xlane.f32.xlu0 %v6193
    %v6195 = vpop.xlane.xlu0 %6194
    %v6196 = vsel %vm4522, %v6192, 0.0
    %6197 = vadd.xlane.f32.xlu0 %v6196
    %v6198 = vpop.xlane.xlu0 %6197
    %v6199 = vrcp.pop %v6195
    %v6200 = vrcp.pop %v6198
    %v6201 = vmul.f32 %v6190, %v6199
    %v6202 = vmul.f32 %v6192, %v6200
    %v6203 = vpack.c.bf16 %v6201, %v6201
    %v6204 = vpack.c.bf16 %v6202, %v6202
    %6205 = vrot.lane.b32.xlu0 %v5865, 56
    %v6206 = vpop.permute.xlu0 %6205
    %v6208 = vsel %vm4522, %v6203, 0
    %v6211 = vsel %vm4552, %v6206, 0
    %6213 = vmatpush.bf16.msra.mxu0 0
    %6214 = vmatpush.bf16.msra.mxu0 0
    %6215 = vmatpush.bf16.msra.mxu0 0
    %6216 = vmatpush.bf16.msra.mxu0 0
    %6217 = vmatpush.bf16.msra.mxu0 0
    %6218 = vmatpush.bf16.msra.mxu0 0
    %6219 = vmatpush.bf16.msra.mxu0 0
    %6220 = vmatpush.bf16.msra.mxu0 %v6211
    %6221 = vmatmul.bf16.gmra.mxu0 %v6208
    %v6222 = vpop.f32.mrf.mxu0
    %v6223 = vadd.f32 0.0, %v6222
    %v6224 = vpop.f32.mrf.mxu0
    %6225 = vdwg.mxu0
    %6226 = vrot.lane.b32.xlu0 %v5889, 56
    %v6227 = vpop.permute.xlu0 %6226
    %v6229 = vsel %vm4522, %v6204, 0
    %v6232 = vsel %vm4552, %v6227, 0
    %6234 = vmatpush.bf16.msra.mxu0 0
    %6235 = vmatpush.bf16.msra.mxu0 0
    %6236 = vmatpush.bf16.msra.mxu0 0
    %6237 = vmatpush.bf16.msra.mxu0 0
    %6238 = vmatpush.bf16.msra.mxu0 0
    %6239 = vmatpush.bf16.msra.mxu0 0
    %6240 = vmatpush.bf16.msra.mxu0 0
    %6241 = vmatpush.bf16.msra.mxu0 %v6232
    %6242 = vmatmul.bf16.gmra.mxu0 %v6229
    %v6243 = vpop.f32.mrf.mxu0
    %v6244 = vadd.f32 0.0, %v6243
    %v6245 = vpop.f32.mrf.mxu0
    %6246 = vdwg.mxu0
    %v6247 = vpack.c.bf16 %v6244, %v6223
    %s6248 = scalar_lea.vmem [#allocation11], 20
    %v6249 = vld [vmem:[%s6248] sm:$0x3]
    %v6251 = vsel %vm4386, %v6247, 0
    %v6254 = vsel %vm4390, %v6249, 0
    %6256 = vmatpush.bf16.msra.mxu0 0
    %6257 = vmatpush.bf16.msra.mxu0 0
    %6258 = vmatpush.bf16.msra.mxu0 0
    %6259 = vmatpush.bf16.msra.mxu0 0
    %6260 = vmatpush.bf16.msra.mxu0 0
    %6261 = vmatpush.bf16.msra.mxu0 0
    %6262 = vmatpush.bf16.msra.mxu0 0
    %6263 = vmatpush.bf16.msra.mxu0 %v6254
    %6264 = vmatmul.bf16.gmra.mxu0 %v6251
    %v6265 = vpop.f32.mrf.mxu0
    %v6266 = vadd.f32 0.0, %v6265
    %v6267 = vpop.f32.mrf.mxu0
    %v6268 = vadd.f32 0.0, %v6267
    %6269 = vdwg.mxu0
    %v6270 = vadd.f32 %v6131, %v6266
    %v6271 = vadd.f32 %v6133, %v6268
    %6272 = vrot.lane.b32.xlu0 %v5865, 116
    %v6273 = vpop.permute.xlu0 %6272
    %6274 = vrot.lane.b32.xlu0 %v5865, 84
    %v6275 = vpop.permute.xlu0 %6274
    %v6277 = vsel %vm4386, %v6273, 0
    %v6280 = vsel %vm4386, %v6275, 0
    %6282 = vmatpush.bf16.xpose.msra.mxu0 0
    %6283 = vmatpush.bf16.xpose.msra.mxu0 0
    %6284 = vmatpush.bf16.xpose.msra.mxu0 0
    %6285 = vmatpush.bf16.xpose.msra.mxu0 0
    %6286 = vmatpush.bf16.xpose.msra.mxu0 0
    %6287 = vmatpush.bf16.xpose.msra.mxu0 0
    %6288 = vmatpush.bf16.xpose.msra.mxu0 0
    %6289 = vmatpush.bf16.xpose.msra.mxu0 %v6280
    %6290 = vmatmul.bf16.gmra.mxu0 %v6277
    %v6291 = vpop.f32.mrf.mxu0
    %v6292 = vadd.f32 0.0, %v6291
    %v6293 = vpop.f32.mrf.mxu0
    %6294 = vdwg.mxu0
    %6295 = vrot.lane.b32.xlu0 %v5889, 116
    %v6296 = vpop.permute.xlu0 %6295
    %6297 = vrot.lane.b32.xlu0 %v5889, 84
    %v6298 = vpop.permute.xlu0 %6297
    %v6300 = vsel %vm4386, %v6296, 0
    %v6303 = vsel %vm4386, %v6298, 0
    %6305 = vmatpush.bf16.xpose.msra.mxu0 0
    %6306 = vmatpush.bf16.xpose.msra.mxu0 0
    %6307 = vmatpush.bf16.xpose.msra.mxu0 0
    %6308 = vmatpush.bf16.xpose.msra.mxu0 0
    %6309 = vmatpush.bf16.xpose.msra.mxu0 0
    %6310 = vmatpush.bf16.xpose.msra.mxu0 0
    %6311 = vmatpush.bf16.xpose.msra.mxu0 0
    %6312 = vmatpush.bf16.xpose.msra.mxu0 %v6303
    %6313 = vmatmul.bf16.gmra.mxu0 %v6300
    %v6314 = vpop.f32.mrf.mxu0
    %v6315 = vadd.f32 0.0, %v6314
    %v6316 = vpop.f32.mrf.mxu0
    %6317 = vdwg.mxu0
    %v6318 = vsel %vm4522, %v6292, -inf
    %6319 = vmax.xlane.f32.xlu0 %v6318
    %v6320 = vpop.xlane.xlu0 %6319
    %v6321 = vsel %vm4522, %v6315, -inf
    %6322 = vmax.xlane.f32.xlu0 %v6321
    %v6323 = vpop.xlane.xlu0 %6322
    %v6324 = vsub.f32 %v6292, %v6320
    %v6325 = vsub.f32 %v6315, %v6323
    %v6326 = vmul.f32 %v6324, 1.442695
    %v6327 = vpow.pop %v6326
    %v6328 = vmul.f32 %v6325, 1.442695
    %v6329 = vpow.pop %v6328
    %v6330 = vsel %vm4522, %v6327, 0.0
    %6331 = vadd.xlane.f32.xlu0 %v6330
    %v6332 = vpop.xlane.xlu0 %6331
    %v6333 = vsel %vm4522, %v6329, 0.0
    %6334 = vadd.xlane.f32.xlu0 %v6333
    %v6335 = vpop.xlane.xlu0 %6334
    %v6336 = vrcp.pop %v6332
    %v6337 = vrcp.pop %v6335
    %v6338 = vmul.f32 %v6327, %v6336
    %v6339 = vmul.f32 %v6329, %v6337
    %v6340 = vpack.c.bf16 %v6338, %v6338
    %v6341 = vpack.c.bf16 %v6339, %v6339
    %6342 = vrot.lane.b32.xlu0 %v5865, 52
    %v6343 = vpop.permute.xlu0 %6342
    %v6345 = vsel %vm4522, %v6340, 0
    %v6348 = vsel %vm4552, %v6343, 0
    %6350 = vmatpush.bf16.msra.mxu0 0
    %6351 = vmatpush.bf16.msra.mxu0 0
    %6352 = vmatpush.bf16.msra.mxu0 0
    %6353 = vmatpush.bf16.msra.mxu0 0
    %6354 = vmatpush.bf16.msra.mxu0 0
    %6355 = vmatpush.bf16.msra.mxu0 0
    %6356 = vmatpush.bf16.msra.mxu0 0
    %6357 = vmatpush.bf16.msra.mxu0 %v6348
    %6358 = vmatmul.bf16.gmra.mxu0 %v6345
    %v6359 = vpop.f32.mrf.mxu0
    %v6360 = vadd.f32 0.0, %v6359
    %v6361 = vpop.f32.mrf.mxu0
    %6362 = vdwg.mxu0
    %6363 = vrot.lane.b32.xlu0 %v5889, 52
    %v6364 = vpop.permute.xlu0 %6363
    %v6366 = vsel %vm4522, %v6341, 0
    %v6369 = vsel %vm4552, %v6364, 0
    %6371 = vmatpush.bf16.msra.mxu0 0
    %6372 = vmatpush.bf16.msra.mxu0 0
    %6373 = vmatpush.bf16.msra.mxu0 0
    %6374 = vmatpush.bf16.msra.mxu0 0
    %6375 = vmatpush.bf16.msra.mxu0 0
    %6376 = vmatpush.bf16.msra.mxu0 0
    %6377 = vmatpush.bf16.msra.mxu0 0
    %6378 = vmatpush.bf16.msra.mxu0 %v6369
    %6379 = vmatmul.bf16.gmra.mxu0 %v6366
    %v6380 = vpop.f32.mrf.mxu0
    %v6381 = vadd.f32 0.0, %v6380
    %v6382 = vpop.f32.mrf.mxu0
    %6383 = vdwg.mxu0
    %v6384 = vpack.c.bf16 %v6381, %v6360
    %s6385 = scalar_lea.vmem [#allocation11], 22
    %v6386 = vld [vmem:[%s6385] sm:$0x3]
    %v6388 = vsel %vm4386, %v6384, 0
    %v6391 = vsel %vm4390, %v6386, 0
    %6393 = vmatpush.bf16.msra.mxu0 0
    %6394 = vmatpush.bf16.msra.mxu0 0
    %6395 = vmatpush.bf16.msra.mxu0 0
    %6396 = vmatpush.bf16.msra.mxu0 0
    %6397 = vmatpush.bf16.msra.mxu0 0
    %6398 = vmatpush.bf16.msra.mxu0 0
    %6399 = vmatpush.bf16.msra.mxu0 0
    %6400 = vmatpush.bf16.msra.mxu0 %v6391
    %6401 = vmatmul.bf16.gmra.mxu0 %v6388
    %v6402 = vpop.f32.mrf.mxu0
    %v6403 = vadd.f32 0.0, %v6402
    %v6404 = vpop.f32.mrf.mxu0
    %v6405 = vadd.f32 0.0, %v6404
    %6406 = vdwg.mxu0
    %v6407 = vadd.f32 %v6270, %v6403
    %v6408 = vadd.f32 %v6271, %v6405
    %6409 = vrot.lane.b32.xlu0 %v5865, 112
    %v6410 = vpop.permute.xlu0 %6409
    %6411 = vrot.lane.b32.xlu0 %v5865, 80
    %v6412 = vpop.permute.xlu0 %6411
    %v6414 = vsel %vm4386, %v6410, 0
    %v6417 = vsel %vm4386, %v6412, 0
    %6419 = vmatpush.bf16.xpose.msra.mxu0 0
    %6420 = vmatpush.bf16.xpose.msra.mxu0 0
    %6421 = vmatpush.bf16.xpose.msra.mxu0 0
    %6422 = vmatpush.bf16.xpose.msra.mxu0 0
    %6423 = vmatpush.bf16.xpose.msra.mxu0 0
    %6424 = vmatpush.bf16.xpose.msra.mxu0 0
    %6425 = vmatpush.bf16.xpose.msra.mxu0 0
    %6426 = vmatpush.bf16.xpose.msra.mxu0 %v6417
    %6427 = vmatmul.bf16.gmra.mxu0 %v6414
    %v6428 = vpop.f32.mrf.mxu0
    %v6429 = vadd.f32 0.0, %v6428
    %v6430 = vpop.f32.mrf.mxu0
    %6431 = vdwg.mxu0
    %6432 = vrot.lane.b32.xlu0 %v5889, 112
    %v6433 = vpop.permute.xlu0 %6432
    %6434 = vrot.lane.b32.xlu0 %v5889, 80
    %v6435 = vpop.permute.xlu0 %6434
    %v6437 = vsel %vm4386, %v6433, 0
    %v6440 = vsel %vm4386, %v6435, 0
    %6442 = vmatpush.bf16.xpose.msra.mxu0 0
    %6443 = vmatpush.bf16.xpose.msra.mxu0 0
    %6444 = vmatpush.bf16.xpose.msra.mxu0 0
    %6445 = vmatpush.bf16.xpose.msra.mxu0 0
    %6446 = vmatpush.bf16.xpose.msra.mxu0 0
    %6447 = vmatpush.bf16.xpose.msra.mxu0 0
    %6448 = vmatpush.bf16.xpose.msra.mxu0 0
    %6449 = vmatpush.bf16.xpose.msra.mxu0 %v6440
    %6450 = vmatmul.bf16.gmra.mxu0 %v6437
    %v6451 = vpop.f32.mrf.mxu0
    %v6452 = vadd.f32 0.0, %v6451
    %v6453 = vpop.f32.mrf.mxu0
    %6454 = vdwg.mxu0
    %v6455 = vsel %vm4522, %v6429, -inf
    %6456 = vmax.xlane.f32.xlu0 %v6455
    %v6457 = vpop.xlane.xlu0 %6456
    %v6458 = vsel %vm4522, %v6452, -inf
    %6459 = vmax.xlane.f32.xlu0 %v6458
    %v6460 = vpop.xlane.xlu0 %6459
    %v6461 = vsub.f32 %v6429, %v6457
    %v6462 = vsub.f32 %v6452, %v6460
    %v6463 = vmul.f32 %v6461, 1.442695
    %v6464 = vpow.pop %v6463
    %v6465 = vmul.f32 %v6462, 1.442695
    %v6466 = vpow.pop %v6465
    %v6467 = vsel %vm4522, %v6464, 0.0
    %6468 = vadd.xlane.f32.xlu0 %v6467
    %v6469 = vpop.xlane.xlu0 %6468
    %v6470 = vsel %vm4522, %v6466, 0.0
    %6471 = vadd.xlane.f32.xlu0 %v6470
    %v6472 = vpop.xlane.xlu0 %6471
    %v6473 = vrcp.pop %v6469
    %v6474 = vrcp.pop %v6472
    %v6475 = vmul.f32 %v6464, %v6473
    %v6476 = vmul.f32 %v6466, %v6474
    %v6477 = vpack.c.bf16 %v6475, %v6475
    %v6478 = vpack.c.bf16 %v6476, %v6476
    %6479 = vrot.lane.b32.xlu0 %v5865, 48
    %v6480 = vpop.permute.xlu0 %6479
    %v6482 = vsel %vm4522, %v6477, 0
    %v6485 = vsel %vm4552, %v6480, 0
    %6487 = vmatpush.bf16.msra.mxu0 0
    %6488 = vmatpush.bf16.msra.mxu0 0
    %6489 = vmatpush.bf16.msra.mxu0 0
    %6490 = vmatpush.bf16.msra.mxu0 0
    %6491 = vmatpush.bf16.msra.mxu0 0
    %6492 = vmatpush.bf16.msra.mxu0 0
    %6493 = vmatpush.bf16.msra.mxu0 0
    %6494 = vmatpush.bf16.msra.mxu0 %v6485
    %6495 = vmatmul.bf16.gmra.mxu0 %v6482
    %v6496 = vpop.f32.mrf.mxu0
    %v6497 = vadd.f32 0.0, %v6496
    %v6498 = vpop.f32.mrf.mxu0
    %6499 = vdwg.mxu0
    %6500 = vrot.lane.b32.xlu0 %v5889, 48
    %v6501 = vpop.permute.xlu0 %6500
    %v6503 = vsel %vm4522, %v6478, 0
    %v6506 = vsel %vm4552, %v6501, 0
    %6508 = vmatpush.bf16.msra.mxu0 0
    %6509 = vmatpush.bf16.msra.mxu0 0
    %6510 = vmatpush.bf16.msra.mxu0 0
    %6511 = vmatpush.bf16.msra.mxu0 0
    %6512 = vmatpush.bf16.msra.mxu0 0
    %6513 = vmatpush.bf16.msra.mxu0 0
    %6514 = vmatpush.bf16.msra.mxu0 0
    %6515 = vmatpush.bf16.msra.mxu0 %v6506
    %6516 = vmatmul.bf16.gmra.mxu0 %v6503
    %v6517 = vpop.f32.mrf.mxu0
    %v6518 = vadd.f32 0.0, %v6517
    %v6519 = vpop.f32.mrf.mxu0
    %6520 = vdwg.mxu0
    %v6521 = vpack.c.bf16 %v6518, %v6497
    %s6522 = scalar_lea.vmem [#allocation11], 24
    %v6523 = vld [vmem:[%s6522] sm:$0x3]
    %v6525 = vsel %vm4386, %v6521, 0
    %v6528 = vsel %vm4390, %v6523, 0
    %6530 = vmatpush.bf16.msra.mxu0 0
    %6531 = vmatpush.bf16.msra.mxu0 0
    %6532 = vmatpush.bf16.msra.mxu0 0
    %6533 = vmatpush.bf16.msra.mxu0 0
    %6534 = vmatpush.bf16.msra.mxu0 0
    %6535 = vmatpush.bf16.msra.mxu0 0
    %6536 = vmatpush.bf16.msra.mxu0 0
    %6537 = vmatpush.bf16.msra.mxu0 %v6528
    %6538 = vmatmul.bf16.gmra.mxu0 %v6525
    %v6539 = vpop.f32.mrf.mxu0
    %v6540 = vadd.f32 0.0, %v6539
    %v6541 = vpop.f32.mrf.mxu0
    %v6542 = vadd.f32 0.0, %v6541
    %6543 = vdwg.mxu0
    %v6544 = vadd.f32 %v6407, %v6540
    %v6545 = vadd.f32 %v6408, %v6542
    %6546 = vrot.lane.b32.xlu0 %v5865, 108
    %v6547 = vpop.permute.xlu0 %6546
    %6548 = vrot.lane.b32.xlu0 %v5865, 76
    %v6549 = vpop.permute.xlu0 %6548
    %v6551 = vsel %vm4386, %v6547, 0
    %v6554 = vsel %vm4386, %v6549, 0
    %6556 = vmatpush.bf16.xpose.msra.mxu0 0
    %6557 = vmatpush.bf16.xpose.msra.mxu0 0
    %6558 = vmatpush.bf16.xpose.msra.mxu0 0
    %6559 = vmatpush.bf16.xpose.msra.mxu0 0
    %6560 = vmatpush.bf16.xpose.msra.mxu0 0
    %6561 = vmatpush.bf16.xpose.msra.mxu0 0
    %6562 = vmatpush.bf16.xpose.msra.mxu0 0
    %6563 = vmatpush.bf16.xpose.msra.mxu0 %v6554
    %6564 = vmatmul.bf16.gmra.mxu0 %v6551
    %v6565 = vpop.f32.mrf.mxu0
    %v6566 = vadd.f32 0.0, %v6565
    %v6567 = vpop.f32.mrf.mxu0
    %6568 = vdwg.mxu0
    %6569 = vrot.lane.b32.xlu0 %v5889, 108
    %v6570 = vpop.permute.xlu0 %6569
    %6571 = vrot.lane.b32.xlu0 %v5889, 76
    %v6572 = vpop.permute.xlu0 %6571
    %v6574 = vsel %vm4386, %v6570, 0
    %v6577 = vsel %vm4386, %v6572, 0
    %6579 = vmatpush.bf16.xpose.msra.mxu0 0
    %6580 = vmatpush.bf16.xpose.msra.mxu0 0
    %6581 = vmatpush.bf16.xpose.msra.mxu0 0
    %6582 = vmatpush.bf16.xpose.msra.mxu0 0
    %6583 = vmatpush.bf16.xpose.msra.mxu0 0
    %6584 = vmatpush.bf16.xpose.msra.mxu0 0
    %6585 = vmatpush.bf16.xpose.msra.mxu0 0
    %6586 = vmatpush.bf16.xpose.msra.mxu0 %v6577
    %6587 = vmatmul.bf16.gmra.mxu0 %v6574
    %v6588 = vpop.f32.mrf.mxu0
    %v6589 = vadd.f32 0.0, %v6588
    %v6590 = vpop.f32.mrf.mxu0
    %6591 = vdwg.mxu0
    %v6592 = vsel %vm4522, %v6566, -inf
    %6593 = vmax.xlane.f32.xlu0 %v6592
    %v6594 = vpop.xlane.xlu0 %6593
    %v6595 = vsel %vm4522, %v6589, -inf
    %6596 = vmax.xlane.f32.xlu0 %v6595
    %v6597 = vpop.xlane.xlu0 %6596
    %v6598 = vsub.f32 %v6566, %v6594
    %v6599 = vsub.f32 %v6589, %v6597
    %v6600 = vmul.f32 %v6598, 1.442695
    %v6601 = vpow.pop %v6600
    %v6602 = vmul.f32 %v6599, 1.442695
    %v6603 = vpow.pop %v6602
    %v6604 = vsel %vm4522, %v6601, 0.0
    %6605 = vadd.xlane.f32.xlu0 %v6604
    %v6606 = vpop.xlane.xlu0 %6605
    %v6607 = vsel %vm4522, %v6603, 0.0
    %6608 = vadd.xlane.f32.xlu0 %v6607
    %v6609 = vpop.xlane.xlu0 %6608
    %v6610 = vrcp.pop %v6606
    %v6611 = vrcp.pop %v6609
    %v6612 = vmul.f32 %v6601, %v6610
    %v6613 = vmul.f32 %v6603, %v6611
    %v6614 = vpack.c.bf16 %v6612, %v6612
    %v6615 = vpack.c.bf16 %v6613, %v6613
    %6616 = vrot.lane.b32.xlu0 %v5865, 44
    %v6617 = vpop.permute.xlu0 %6616
    %v6619 = vsel %vm4522, %v6614, 0
    %v6622 = vsel %vm4552, %v6617, 0
    %6624 = vmatpush.bf16.msra.mxu0 0
    %6625 = vmatpush.bf16.msra.mxu0 0
    %6626 = vmatpush.bf16.msra.mxu0 0
    %6627 = vmatpush.bf16.msra.mxu0 0
    %6628 = vmatpush.bf16.msra.mxu0 0
    %6629 = vmatpush.bf16.msra.mxu0 0
    %6630 = vmatpush.bf16.msra.mxu0 0
    %6631 = vmatpush.bf16.msra.mxu0 %v6622
    %6632 = vmatmul.bf16.gmra.mxu0 %v6619
    %v6633 = vpop.f32.mrf.mxu0
    %v6634 = vadd.f32 0.0, %v6633
    %v6635 = vpop.f32.mrf.mxu0
    %6636 = vdwg.mxu0
    %6637 = vrot.lane.b32.xlu0 %v5889, 44
    %v6638 = vpop.permute.xlu0 %6637
    %v6640 = vsel %vm4522, %v6615, 0
    %v6643 = vsel %vm4552, %v6638, 0
    %6645 = vmatpush.bf16.msra.mxu0 0
    %6646 = vmatpush.bf16.msra.mxu0 0
    %6647 = vmatpush.bf16.msra.mxu0 0
    %6648 = vmatpush.bf16.msra.mxu0 0
    %6649 = vmatpush.bf16.msra.mxu0 0
    %6650 = vmatpush.bf16.msra.mxu0 0
    %6651 = vmatpush.bf16.msra.mxu0 0
    %6652 = vmatpush.bf16.msra.mxu0 %v6643
    %6653 = vmatmul.bf16.gmra.mxu0 %v6640
    %v6654 = vpop.f32.mrf.mxu0
    %v6655 = vadd.f32 0.0, %v6654
    %v6656 = vpop.f32.mrf.mxu0
    %6657 = vdwg.mxu0
    %v6658 = vpack.c.bf16 %v6655, %v6634
    %s6659 = scalar_lea.vmem [#allocation11], 26
    %v6660 = vld [vmem:[%s6659] sm:$0x3]
    %v6662 = vsel %vm4386, %v6658, 0
    %v6665 = vsel %vm4390, %v6660, 0
    %6667 = vmatpush.bf16.msra.mxu0 0
    %6668 = vmatpush.bf16.msra.mxu0 0
    %6669 = vmatpush.bf16.msra.mxu0 0
    %6670 = vmatpush.bf16.msra.mxu0 0
    %6671 = vmatpush.bf16.msra.mxu0 0
    %6672 = vmatpush.bf16.msra.mxu0 0
    %6673 = vmatpush.bf16.msra.mxu0 0
    %6674 = vmatpush.bf16.msra.mxu0 %v6665
    %6675 = vmatmul.bf16.gmra.mxu0 %v6662
    %v6676 = vpop.f32.mrf.mxu0
    %v6677 = vadd.f32 0.0, %v6676
    %v6678 = vpop.f32.mrf.mxu0
    %v6679 = vadd.f32 0.0, %v6678
    %6680 = vdwg.mxu0
    %v6681 = vadd.f32 %v6544, %v6677
    %v6682 = vadd.f32 %v6545, %v6679
    %6683 = vrot.lane.b32.xlu0 %v5865, 104
    %v6684 = vpop.permute.xlu0 %6683
    %6685 = vrot.lane.b32.xlu0 %v5865, 72
    %v6686 = vpop.permute.xlu0 %6685
    %v6688 = vsel %vm4386, %v6684, 0
    %v6691 = vsel %vm4386, %v6686, 0
    %6693 = vmatpush.bf16.xpose.msra.mxu0 0
    %6694 = vmatpush.bf16.xpose.msra.mxu0 0
    %6695 = vmatpush.bf16.xpose.msra.mxu0 0
    %6696 = vmatpush.bf16.xpose.msra.mxu0 0
    %6697 = vmatpush.bf16.xpose.msra.mxu0 0
    %6698 = vmatpush.bf16.xpose.msra.mxu0 0
    %6699 = vmatpush.bf16.xpose.msra.mxu0 0
    %6700 = vmatpush.bf16.xpose.msra.mxu0 %v6691
    %6701 = vmatmul.bf16.gmra.mxu0 %v6688
    %v6702 = vpop.f32.mrf.mxu0
    %v6703 = vadd.f32 0.0, %v6702
    %v6704 = vpop.f32.mrf.mxu0
    %6705 = vdwg.mxu0
    %6706 = vrot.lane.b32.xlu0 %v5889, 104
    %v6707 = vpop.permute.xlu0 %6706
    %6708 = vrot.lane.b32.xlu0 %v5889, 72
    %v6709 = vpop.permute.xlu0 %6708
    %v6711 = vsel %vm4386, %v6707, 0
    %v6714 = vsel %vm4386, %v6709, 0
    %6716 = vmatpush.bf16.xpose.msra.mxu0 0
    %6717 = vmatpush.bf16.xpose.msra.mxu0 0
    %6718 = vmatpush.bf16.xpose.msra.mxu0 0
    %6719 = vmatpush.bf16.xpose.msra.mxu0 0
    %6720 = vmatpush.bf16.xpose.msra.mxu0 0
    %6721 = vmatpush.bf16.xpose.msra.mxu0 0
    %6722 = vmatpush.bf16.xpose.msra.mxu0 0
    %6723 = vmatpush.bf16.xpose.msra.mxu0 %v6714
    %6724 = vmatmul.bf16.gmra.mxu0 %v6711
    %v6725 = vpop.f32.mrf.mxu0
    %v6726 = vadd.f32 0.0, %v6725
    %v6727 = vpop.f32.mrf.mxu0
    %6728 = vdwg.mxu0
    %v6729 = vsel %vm4522, %v6703, -inf
    %6730 = vmax.xlane.f32.xlu0 %v6729
    %v6731 = vpop.xlane.xlu0 %6730
    %v6732 = vsel %vm4522, %v6726, -inf
    %6733 = vmax.xlane.f32.xlu0 %v6732
    %v6734 = vpop.xlane.xlu0 %6733
    %v6735 = vsub.f32 %v6703, %v6731
    %v6736 = vsub.f32 %v6726, %v6734
    %v6737 = vmul.f32 %v6735, 1.442695
    %v6738 = vpow.pop %v6737
    %v6739 = vmul.f32 %v6736, 1.442695
    %v6740 = vpow.pop %v6739
    %v6741 = vsel %vm4522, %v6738, 0.0
    %6742 = vadd.xlane.f32.xlu0 %v6741
    %v6743 = vpop.xlane.xlu0 %6742
    %v6744 = vsel %vm4522, %v6740, 0.0
    %6745 = vadd.xlane.f32.xlu0 %v6744
    %v6746 = vpop.xlane.xlu0 %6745
    %v6747 = vrcp.pop %v6743
    %v6748 = vrcp.pop %v6746
    %v6749 = vmul.f32 %v6738, %v6747
    %v6750 = vmul.f32 %v6740, %v6748
    %v6751 = vpack.c.bf16 %v6749, %v6749
    %v6752 = vpack.c.bf16 %v6750, %v6750
    %6753 = vrot.lane.b32.xlu0 %v5865, 40
    %v6754 = vpop.permute.xlu0 %6753
    %v6756 = vsel %vm4522, %v6751, 0
    %v6759 = vsel %vm4552, %v6754, 0
    %6761 = vmatpush.bf16.msra.mxu0 0
    %6762 = vmatpush.bf16.msra.mxu0 0
    %6763 = vmatpush.bf16.msra.mxu0 0
    %6764 = vmatpush.bf16.msra.mxu0 0
    %6765 = vmatpush.bf16.msra.mxu0 0
    %6766 = vmatpush.bf16.msra.mxu0 0
    %6767 = vmatpush.bf16.msra.mxu0 0
    %6768 = vmatpush.bf16.msra.mxu0 %v6759
    %6769 = vmatmul.bf16.gmra.mxu0 %v6756
    %v6770 = vpop.f32.mrf.mxu0
    %v6771 = vadd.f32 0.0, %v6770
    %v6772 = vpop.f32.mrf.mxu0
    %6773 = vdwg.mxu0
    %6774 = vrot.lane.b32.xlu0 %v5889, 40
    %v6775 = vpop.permute.xlu0 %6774
    %v6777 = vsel %vm4522, %v6752, 0
    %v6780 = vsel %vm4552, %v6775, 0
    %6782 = vmatpush.bf16.msra.mxu0 0
    %6783 = vmatpush.bf16.msra.mxu0 0
    %6784 = vmatpush.bf16.msra.mxu0 0
    %6785 = vmatpush.bf16.msra.mxu0 0
    %6786 = vmatpush.bf16.msra.mxu0 0
    %6787 = vmatpush.bf16.msra.mxu0 0
    %6788 = vmatpush.bf16.msra.mxu0 0
    %6789 = vmatpush.bf16.msra.mxu0 %v6780
    %6790 = vmatmul.bf16.gmra.mxu0 %v6777
    %v6791 = vpop.f32.mrf.mxu0
    %v6792 = vadd.f32 0.0, %v6791
    %v6793 = vpop.f32.mrf.mxu0
    %6794 = vdwg.mxu0
    %v6795 = vpack.c.bf16 %v6792, %v6771
    %s6796 = scalar_lea.vmem [#allocation11], 28
    %v6797 = vld [vmem:[%s6796] sm:$0x3]
    %v6799 = vsel %vm4386, %v6795, 0
    %v6802 = vsel %vm4390, %v6797, 0
    %6804 = vmatpush.bf16.msra.mxu0 0
    %6805 = vmatpush.bf16.msra.mxu0 0
    %6806 = vmatpush.bf16.msra.mxu0 0
    %6807 = vmatpush.bf16.msra.mxu0 0
    %6808 = vmatpush.bf16.msra.mxu0 0
    %6809 = vmatpush.bf16.msra.mxu0 0
    %6810 = vmatpush.bf16.msra.mxu0 0
    %6811 = vmatpush.bf16.msra.mxu0 %v6802
    %6812 = vmatmul.bf16.gmra.mxu0 %v6799
    %v6813 = vpop.f32.mrf.mxu0
    %v6814 = vadd.f32 0.0, %v6813
    %v6815 = vpop.f32.mrf.mxu0
    %v6816 = vadd.f32 0.0, %v6815
    %6817 = vdwg.mxu0
    %v6818 = vadd.f32 %v6681, %v6814
    %v6819 = vadd.f32 %v6682, %v6816
    %6820 = vrot.lane.b32.xlu0 %v5865, 100
    %v6821 = vpop.permute.xlu0 %6820
    %6822 = vrot.lane.b32.xlu0 %v5865, 68
    %v6823 = vpop.permute.xlu0 %6822
    %v6825 = vsel %vm4386, %v6821, 0
    %v6828 = vsel %vm4386, %v6823, 0
    %6830 = vmatpush.bf16.xpose.msra.mxu0 0
    %6831 = vmatpush.bf16.xpose.msra.mxu0 0
    %6832 = vmatpush.bf16.xpose.msra.mxu0 0
    %6833 = vmatpush.bf16.xpose.msra.mxu0 0
    %6834 = vmatpush.bf16.xpose.msra.mxu0 0
    %6835 = vmatpush.bf16.xpose.msra.mxu0 0
    %6836 = vmatpush.bf16.xpose.msra.mxu0 0
    %6837 = vmatpush.bf16.xpose.msra.mxu0 %v6828
    %6838 = vmatmul.bf16.gmra.mxu0 %v6825
    %v6839 = vpop.f32.mrf.mxu0
    %v6840 = vadd.f32 0.0, %v6839
    %v6841 = vpop.f32.mrf.mxu0
    %6842 = vdwg.mxu0
    %6843 = vrot.lane.b32.xlu0 %v5889, 100
    %v6844 = vpop.permute.xlu0 %6843
    %6845 = vrot.lane.b32.xlu0 %v5889, 68
    %v6846 = vpop.permute.xlu0 %6845
    %v6848 = vsel %vm4386, %v6844, 0
    %v6851 = vsel %vm4386, %v6846, 0
    %6853 = vmatpush.bf16.xpose.msra.mxu0 0
    %6854 = vmatpush.bf16.xpose.msra.mxu0 0
    %6855 = vmatpush.bf16.xpose.msra.mxu0 0
    %6856 = vmatpush.bf16.xpose.msra.mxu0 0
    %6857 = vmatpush.bf16.xpose.msra.mxu0 0
    %6858 = vmatpush.bf16.xpose.msra.mxu0 0
    %6859 = vmatpush.bf16.xpose.msra.mxu0 0
    %6860 = vmatpush.bf16.xpose.msra.mxu0 %v6851
    %6861 = vmatmul.bf16.gmra.mxu0 %v6848
    %v6862 = vpop.f32.mrf.mxu0
    %v6863 = vadd.f32 0.0, %v6862
    %v6864 = vpop.f32.mrf.mxu0
    %6865 = vdwg.mxu0
    %v6866 = vsel %vm4522, %v6840, -inf
    %6867 = vmax.xlane.f32.xlu0 %v6866
    %v6868 = vpop.xlane.xlu0 %6867
    %v6869 = vsel %vm4522, %v6863, -inf
    %6870 = vmax.xlane.f32.xlu0 %v6869
    %v6871 = vpop.xlane.xlu0 %6870
    %v6872 = vsub.f32 %v6840, %v6868
    %v6873 = vsub.f32 %v6863, %v6871
    %v6874 = vmul.f32 %v6872, 1.442695
    %v6875 = vpow.pop %v6874
    %v6876 = vmul.f32 %v6873, 1.442695
    %v6877 = vpow.pop %v6876
    %v6878 = vsel %vm4522, %v6875, 0.0
    %6879 = vadd.xlane.f32.xlu0 %v6878
    %v6880 = vpop.xlane.xlu0 %6879
    %v6881 = vsel %vm4522, %v6877, 0.0
    %6882 = vadd.xlane.f32.xlu0 %v6881
    %v6883 = vpop.xlane.xlu0 %6882
    %v6884 = vrcp.pop %v6880
    %v6885 = vrcp.pop %v6883
    %v6886 = vmul.f32 %v6875, %v6884
    %v6887 = vmul.f32 %v6877, %v6885
    %v6888 = vpack.c.bf16 %v6886, %v6886
    %v6889 = vpack.c.bf16 %v6887, %v6887
    %6890 = vrot.lane.b32.xlu0 %v5865, 36
    %v6891 = vpop.permute.xlu0 %6890
    %v6893 = vsel %vm4522, %v6888, 0
    %v6896 = vsel %vm4552, %v6891, 0
    %6898 = vmatpush.bf16.msra.mxu0 0
    %6899 = vmatpush.bf16.msra.mxu0 0
    %6900 = vmatpush.bf16.msra.mxu0 0
    %6901 = vmatpush.bf16.msra.mxu0 0
    %6902 = vmatpush.bf16.msra.mxu0 0
    %6903 = vmatpush.bf16.msra.mxu0 0
    %6904 = vmatpush.bf16.msra.mxu0 0
    %6905 = vmatpush.bf16.msra.mxu0 %v6896
    %6906 = vmatmul.bf16.gmra.mxu0 %v6893
    %v6907 = vpop.f32.mrf.mxu0
    %v6908 = vadd.f32 0.0, %v6907
    %v6909 = vpop.f32.mrf.mxu0
    %6910 = vdwg.mxu0
    %6911 = vrot.lane.b32.xlu0 %v5889, 36
    %v6912 = vpop.permute.xlu0 %6911
    %v6914 = vsel %vm4522, %v6889, 0
    %v6917 = vsel %vm4552, %v6912, 0
    %6919 = vmatpush.bf16.msra.mxu0 0
    %6920 = vmatpush.bf16.msra.mxu0 0
    %6921 = vmatpush.bf16.msra.mxu0 0
    %6922 = vmatpush.bf16.msra.mxu0 0
    %6923 = vmatpush.bf16.msra.mxu0 0
    %6924 = vmatpush.bf16.msra.mxu0 0
    %6925 = vmatpush.bf16.msra.mxu0 0
    %6926 = vmatpush.bf16.msra.mxu0 %v6917
    %6927 = vmatmul.bf16.gmra.mxu0 %v6914
    %v6928 = vpop.f32.mrf.mxu0
    %v6929 = vadd.f32 0.0, %v6928
    %v6930 = vpop.f32.mrf.mxu0
    %6931 = vdwg.mxu0
    %v6932 = vpack.c.bf16 %v6929, %v6908
    %s6933 = scalar_lea.vmem [#allocation11], 30
    %v6934 = vld [vmem:[%s6933] sm:$0x3]
    %v6936 = vsel %vm4386, %v6932, 0
    %v6939 = vsel %vm4390, %v6934, 0
    %6941 = vmatpush.bf16.msra.mxu0 0
    %6942 = vmatpush.bf16.msra.mxu0 0
    %6943 = vmatpush.bf16.msra.mxu0 0
    %6944 = vmatpush.bf16.msra.mxu0 0
    %6945 = vmatpush.bf16.msra.mxu0 0
    %6946 = vmatpush.bf16.msra.mxu0 0
    %6947 = vmatpush.bf16.msra.mxu0 0
    %6948 = vmatpush.bf16.msra.mxu0 %v6939
    %6949 = vmatmul.bf16.gmra.mxu0 %v6936
    %v6950 = vpop.f32.mrf.mxu0
    %v6951 = vadd.f32 0.0, %v6950
    %v6952 = vpop.f32.mrf.mxu0
    %v6953 = vadd.f32 0.0, %v6952
    %6954 = vdwg.mxu0
    %v6955 = vadd.f32 %v6818, %v6951
    %v6956 = vadd.f32 %v6819, %v6953
    %s6957 = scalar_lea.vmem [#allocation13], 1
    %v6958 = vld [vmem:[%s6957] sm:$0x1]
    %v6960 = vperm.slane %v6958, 0
    %v6962 = vadd.f32 %v6955, %v6960
    %v6963 = vadd.f32 %v6956, %v6960
    %v6964 = vadd.f32 %v5819, %v6962
    %v6965 = vadd.f32 %v5820, %v6963
    %s6966 = scalar_lea.vmem %s14, 1
    %v6967 = vld [vmem:[%s6966] sm:$0x1]
    %s6968 = scalar_lea.vmem %s15, 1
    %v6969 = vld [vmem:[%s6968] sm:$0x1]
    %v6970 = vsel %vm672, %v6964, 0.0
    %6971 = vadd.xlane.f32.xlu0 %v6970
    %v6972 = vpop.xlane.xlu0 %6971
    %v6973 = vsel %vm672, %v6965, 0.0
    %6974 = vadd.xlane.f32.xlu0 %v6973
    %v6975 = vpop.xlane.xlu0 %6974
    %v6976 = vmul.f32 %v6972, %v5591
    %v6977 = vmul.f32 %v6975, %v5591
    %v6978 = vsub.f32 %v6964, %v6976
    %v6979 = vsub.f32 %v6965, %v6977
    %v6980 = vmul.f32 %v6978, %v6978
    %v6981 = vmul.f32 %v6979, %v6979
    %v6982 = vsel %vm672, %v6980, 0.0
    %6983 = vadd.xlane.f32.xlu0 %v6982
    %v6984 = vpop.xlane.xlu0 %6983
    %v6985 = vsel %vm672, %v6981, 0.0
    %6986 = vadd.xlane.f32.xlu0 %v6985
    %v6987 = vpop.xlane.xlu0 %6986
    %v6988 = vmul.f32 %v6984, %v5591
    %v6989 = vmul.f32 %v6987, %v5591
    %v6990 = vadd.f32 %v6988, 1e-05
    %v6991 = vadd.f32 %v6989, 1e-05
    %v6992 = vrsqrt.pop %v6990
    %v6993 = vmul.f32 %v6992, %v6990
    %v6994 = vmul.f32 %v6993, %v6992
    %v6995 = vmul.f32 0.5, %v6994
    %v6996 = vsub.f32 1.5, %v6995
    %v6997 = vmul.f32 %v6992, %v6996
    %vm6998 = vweird.f32 %v6990
    %vm6999 = vweird.f32 %v6992
    %vm7000 = vmor %vm6998, %vm6999
    %v7001 = vsel %vm7000, %v6992, %v6997
    %v7002 = vrsqrt.pop %v6991
    %v7003 = vmul.f32 %v7002, %v6991
    %v7004 = vmul.f32 %v7003, %v7002
    %v7005 = vmul.f32 0.5, %v7004
    %v7006 = vsub.f32 1.5, %v7005
    %v7007 = vmul.f32 %v7002, %v7006
    %vm7008 = vweird.f32 %v6991
    %vm7009 = vweird.f32 %v7002
    %vm7010 = vmor %vm7008, %vm7009
    %v7011 = vsel %vm7010, %v7002, %v7007
    %v7012 = vmul.f32 %v6978, %v7001
    %v7013 = vmul.f32 %v6979, %v7011
    %v7015 = vperm.slane %v6967, 0
    %v7017 = vmul.f32 %v7012, %v7015
    %v7018 = vmul.f32 %v7013, %v7015
    %v7020 = vperm.slane %v6969, 0
    %v7022 = vadd.f32 %v7017, %v7020
    %v7023 = vadd.f32 %v7018, %v7020
    %v7024 = vpack.c.bf16 %v7023, %v7022
    %s7025 = scalar_lea.vmem [#allocation14], 16
    %v7026 = vld [vmem:[%s7025] sm:$0xf]
    %v7027 = vld [vmem:[%s7025 + $0x4] sm:$0xf]
    %v7028 = vld [vmem:[%s7025 + $0x8] sm:$0xf]
    %v7029 = vld [vmem:[%s7025 + $0xc] sm:$0xf]
    %s7030 = scalar_lea.vmem [#allocation16], 1
    %v7031 = vld [vmem:[%s7030] sm:$0x1]
    %v7033 = vperm.slane %v7031, 0
    %v7039 = vunpack.c.l.b16 %v7026
    %v7040 = vunpack.c.l.b16 %v7027
    %v7041 = vunpack.c.l.b16 %v7028
    %v7042 = vunpack.c.l.b16 %v7029
    %v7043 = vpack.c.b16 %v7040, %v7039
    %v7044 = vpack.c.b16 %v7042, %v7041
    %v7048 = vsel %vm672, %v7024, 0
    %7050 = vmatpush.bf16.msra.mxu0 0
    %7051 = vmatpush.bf16.msra.mxu0 0
    %7052 = vmatpush.bf16.msra.mxu0 0
    %7053 = vmatpush.bf16.msra.mxu0 0
    %7054 = vmatpush.bf16.msra.mxu0 0
    %7055 = vmatpush.bf16.msra.mxu0 0
    %7056 = vmatpush.bf16.msra.mxu0 %v7044
    %7057 = vmatpush.bf16.msra.mxu0 %v7043
    %7058 = vmatmul.bf16.gmra.mxu0 %v7048
    %v7059 = vpop.f32.mrf.mxu0
    %v7060 = vadd.f32 %v7033, %v7059
    %v7061 = vpop.f32.mrf.mxu0
    %v7062 = vadd.f32 %v7033, %v7061
    %7063 = vdwg.mxu0
    %v7064 = vmax.f32 %v7060, 0.0
    %v7065 = vmax.f32 %v7062, 0.0
    %v7066 = vpack.c.bf16 %v7065, %v7064
    %s7067 = scalar_lea.vmem %s18, 64
    %v7068 = vld [vmem:[%s7067] sm:$0xf]
    %v7069 = vld [vmem:[%s7067 + $0x4] sm:$0xf]
    %v7070 = vld [vmem:[%s7067 + $0x8] sm:$0xf]
    %v7071 = vld [vmem:[%s7067 + $0xc] sm:$0xf]
    %v7072 = vld [vmem:[%s7067 + $0x10] sm:$0xf]
    %v7073 = vld [vmem:[%s7067 + $0x14] sm:$0xf]
    %v7074 = vld [vmem:[%s7067 + $0x18] sm:$0xf]
    %v7075 = vld [vmem:[%s7067 + $0x1c] sm:$0xf]
    %v7076 = vld [vmem:[%s7067 + $0x20] sm:$0xf]
    %v7077 = vld [vmem:[%s7067 + $0x24] sm:$0xf]
    %v7078 = vld [vmem:[%s7067 + $0x28] sm:$0xf]
    %v7079 = vld [vmem:[%s7067 + $0x2c] sm:$0xf]
    %v7080 = vld [vmem:[%s7067 + $0x30] sm:$0xf]
    %v7081 = vld [vmem:[%s7067 + $0x34] sm:$0xf]
    %v7082 = vld [vmem:[%s7067 + $0x38] sm:$0xf]
    %v7083 = vld [vmem:[%s7067 + $0x3c] sm:$0xf]
    %s7084 = scalar_lea.vmem [#allocation17], 1
    %v7085 = vld [vmem:[%s7084] sm:$0x1]
    %v7087 = vperm.slane %v7085, 0
    %v7105 = vunpack.c.l.b16 %v7068
    %v7106 = vunpack.c.l.b16 %v7069
    %v7107 = vunpack.c.l.b16 %v7070
    %v7108 = vunpack.c.l.b16 %v7071
    %v7109 = vunpack.c.l.b16 %v7072
    %v7110 = vunpack.c.l.b16 %v7073
    %v7111 = vunpack.c.l.b16 %v7074
    %v7112 = vunpack.c.l.b16 %v7075
    %v7113 = vunpack.c.l.b16 %v7076
    %v7114 = vunpack.c.l.b16 %v7077
    %v7115 = vunpack.c.l.b16 %v7078
    %v7116 = vunpack.c.l.b16 %v7079
    %v7117 = vunpack.c.l.b16 %v7080
    %v7118 = vunpack.c.l.b16 %v7081
    %v7119 = vunpack.c.l.b16 %v7082
    %v7120 = vunpack.c.l.b16 %v7083
    %v7121 = vpack.c.b16 %v7106, %v7105
    %v7122 = vpack.c.b16 %v7108, %v7107
    %v7123 = vpack.c.b16 %v7110, %v7109
    %v7124 = vpack.c.b16 %v7112, %v7111
    %v7125 = vpack.c.b16 %v7114, %v7113
    %v7126 = vpack.c.b16 %v7116, %v7115
    %v7127 = vpack.c.b16 %v7118, %v7117
    %v7128 = vpack.c.b16 %v7120, %v7119
    %7137 = vmatpush.bf16.msra.mxu0 %v7128
    %7138 = vmatpush.bf16.msra.mxu0 %v7127
    %7139 = vmatpush.bf16.msra.mxu0 %v7126
    %7140 = vmatpush.bf16.msra.mxu0 %v7125
    %7141 = vmatpush.bf16.msra.mxu0 %v7124
    %7142 = vmatpush.bf16.msra.mxu0 %v7123
    %7143 = vmatpush.bf16.msra.mxu0 %v7122
    %7144 = vmatpush.bf16.msra.mxu0 %v7121
    %7145 = vmatmul.bf16.gmra.mxu0 %v7066
    %v7146 = vpop.f32.mrf.mxu0
    %v7147 = vadd.f32 %v7087, %v7146
    %v7148 = vpop.f32.mrf.mxu0
    %v7149 = vadd.f32 %v7087, %v7148
    %7150 = vdwg.mxu0
    %v7151 = vadd.f32 %v7022, %v7147
    %v7152 = vadd.f32 %v7023, %v7149
    %s7153 = scalar_lea.vmem %s20, 1
    %v7154 = vld [vmem:[%s7153] sm:$0x1]
    %s7155 = scalar_lea.vmem %s21, 1
    %v7156 = vld [vmem:[%s7155] sm:$0x1]
    %v7157 = vsel %vm672, %v7151, 0.0
    %7158 = vadd.xlane.f32.xlu0 %v7157
    %v7159 = vpop.xlane.xlu0 %7158
    %v7160 = vsel %vm672, %v7152, 0.0
    %7161 = vadd.xlane.f32.xlu0 %v7160
    %v7162 = vpop.xlane.xlu0 %7161
    %v7163 = vmul.f32 %v7159, %v5591
    %v7164 = vmul.f32 %v7162, %v5591
    %v7165 = vsub.f32 %v7151, %v7163
    %v7166 = vsub.f32 %v7152, %v7164
    %v7167 = vmul.f32 %v7165, %v7165
    %v7168 = vmul.f32 %v7166, %v7166
    %v7169 = vsel %vm672, %v7167, 0.0
    %7170 = vadd.xlane.f32.xlu0 %v7169
    %v7171 = vpop.xlane.xlu0 %7170
    %v7172 = vsel %vm672, %v7168, 0.0
    %7173 = vadd.xlane.f32.xlu0 %v7172
    %v7174 = vpop.xlane.xlu0 %7173
    %v7175 = vmul.f32 %v7171, %v5591
    %v7176 = vmul.f32 %v7174, %v5591
    %v7177 = vadd.f32 %v7175, 1e-05
    %v7178 = vadd.f32 %v7176, 1e-05
    %v7179 = vrsqrt.pop %v7177
    %v7180 = vmul.f32 %v7179, %v7177
    %v7181 = vmul.f32 %v7180, %v7179
    %v7182 = vmul.f32 0.5, %v7181
    %v7183 = vsub.f32 1.5, %v7182
    %v7184 = vmul.f32 %v7179, %v7183
    %vm7185 = vweird.f32 %v7177
    %vm7186 = vweird.f32 %v7179
    %vm7187 = vmor %vm7185, %vm7186
    %v7188 = vsel %vm7187, %v7179, %v7184
    %v7189 = vrsqrt.pop %v7178
    %v7190 = vmul.f32 %v7189, %v7178
    %v7191 = vmul.f32 %v7190, %v7189
    %v7192 = vmul.f32 0.5, %v7191
    %v7193 = vsub.f32 1.5, %v7192
    %v7194 = vmul.f32 %v7189, %v7193
    %vm7195 = vweird.f32 %v7178
    %vm7196 = vweird.f32 %v7189
    %vm7197 = vmor %vm7195, %vm7196
    %v7198 = vsel %vm7197, %v7189, %v7194
    %v7199 = vmul.f32 %v7165, %v7188
    %v7200 = vmul.f32 %v7166, %v7198
    %v7202 = vperm.slane %v7154, 0
    %v7204 = vmul.f32 %v7199, %v7202
    %v7205 = vmul.f32 %v7200, %v7202
    %v7207 = vperm.slane %v7156, 0
    %v7209 = vadd.f32 %v7204, %v7207
    %v7210 = vadd.f32 %v7205, %v7207
    %v7211 = vadd.f32 %v7209, %v4432
    %v7212 = vadd.f32 %v7210, %v4433
    %v7213 = vpack.c.bf16 %v7212, %v7211
    %v7214 = vld [vmem:[#allocation19] sm:$0xf]
    %v7215 = vld [vmem:[#allocation19 + $0x4] sm:$0xf]
    %v7216 = vld [vmem:[#allocation19 + $0x8] sm:$0xf]
    %v7217 = vld [vmem:[#allocation19 + $0xc] sm:$0xf]
    %v7218 = vld [vmem:[#allocation20] sm:$0x1]
    %v7220 = vperm.slane %v7218, 0
    %v7226 = vunpack.c.l.b16 %v7214
    %v7227 = vunpack.c.l.b16 %v7215
    %v7228 = vunpack.c.l.b16 %v7216
    %v7229 = vunpack.c.l.b16 %v7217
    %v7230 = vpack.c.b16 %v7227, %v7226
    %v7231 = vpack.c.b16 %v7229, %v7228
    %v7235 = vsel %vm672, %v7213, 0
    %7237 = vmatpush.bf16.msra.mxu0 0
    %7238 = vmatpush.bf16.msra.mxu0 0
    %7239 = vmatpush.bf16.msra.mxu0 0
    %7240 = vmatpush.bf16.msra.mxu0 0
    %7241 = vmatpush.bf16.msra.mxu0 0
    %7242 = vmatpush.bf16.msra.mxu0 0
    %7243 = vmatpush.bf16.msra.mxu0 %v7231
    %7244 = vmatpush.bf16.msra.mxu0 %v7230
    %7245 = vmatmul.bf16.gmra.mxu0 %v7235
    %v7246 = vpop.f32.mrf.mxu0
    %v7247 = vadd.f32 %v7220, %v7246
    %v7248 = vpop.f32.mrf.mxu0
    %v7249 = vadd.f32 %v7220, %v7248
    %7250 = vdwg.mxu0
    %v7251 = vmax.f32 %v7247, 0.0
    %v7252 = vmax.f32 %v7249, 0.0
    %v7253 = vpack.c.bf16 %v7252, %v7251
    %v7254 = vld [vmem:[%s24] sm:$0xf]
    %v7255 = vld [vmem:[%s24 + $0x4] sm:$0xf]
    %v7256 = vld [vmem:[%s24 + $0x8] sm:$0xf]
    %v7257 = vld [vmem:[%s24 + $0xc] sm:$0xf]
    %v7258 = vld [vmem:[%s24 + $0x10] sm:$0xf]
    %v7259 = vld [vmem:[%s24 + $0x14] sm:$0xf]
    %v7260 = vld [vmem:[%s24 + $0x18] sm:$0xf]
    %v7261 = vld [vmem:[%s24 + $0x1c] sm:$0xf]
    %v7262 = vld [vmem:[%s24 + $0x20] sm:$0xf]
    %v7263 = vld [vmem:[%s24 + $0x24] sm:$0xf]
    %v7264 = vld [vmem:[%s24 + $0x28] sm:$0xf]
    %v7265 = vld [vmem:[%s24 + $0x2c] sm:$0xf]
    %v7266 = vld [vmem:[%s24 + $0x30] sm:$0xf]
    %v7267 = vld [vmem:[%s24 + $0x34] sm:$0xf]
    %v7268 = vld [vmem:[%s24 + $0x38] sm:$0xf]
    %v7269 = vld [vmem:[%s24 + $0x3c] sm:$0xf]
    %v7270 = vld [vmem:[#allocation22] sm:$0x1]
    %v7272 = vperm.slane %v7270, 0
    %v7290 = vunpack.c.l.b16 %v7254
    %v7291 = vunpack.c.l.b16 %v7255
    %v7292 = vunpack.c.l.b16 %v7256
    %v7293 = vunpack.c.l.b16 %v7257
    %v7294 = vunpack.c.l.b16 %v7258
    %v7295 = vunpack.c.l.b16 %v7259
    %v7296 = vunpack.c.l.b16 %v7260
    %v7297 = vunpack.c.l.b16 %v7261
    %v7298 = vunpack.c.l.b16 %v7262
    %v7299 = vunpack.c.l.b16 %v7263
    %v7300 = vunpack.c.l.b16 %v7264
    %v7301 = vunpack.c.l.b16 %v7265
    %v7302 = vunpack.c.l.b16 %v7266
    %v7303 = vunpack.c.l.b16 %v7267
    %v7304 = vunpack.c.l.b16 %v7268
    %v7305 = vunpack.c.l.b16 %v7269
    %v7306 = vpack.c.b16 %v7291, %v7290
    %v7307 = vpack.c.b16 %v7293, %v7292
    %v7308 = vpack.c.b16 %v7295, %v7294
    %v7309 = vpack.c.b16 %v7297, %v7296
    %v7310 = vpack.c.b16 %v7299, %v7298
    %v7311 = vpack.c.b16 %v7301, %v7300
    %v7312 = vpack.c.b16 %v7303, %v7302
    %v7313 = vpack.c.b16 %v7305, %v7304
    %7322 = vmatpush.bf16.msra.mxu0 %v7313
    %7323 = vmatpush.bf16.msra.mxu0 %v7312
    %7324 = vmatpush.bf16.msra.mxu0 %v7311
    %7325 = vmatpush.bf16.msra.mxu0 %v7310
    %7326 = vmatpush.bf16.msra.mxu0 %v7309
    %7327 = vmatpush.bf16.msra.mxu0 %v7308
    %7328 = vmatpush.bf16.msra.mxu0 %v7307
    %7329 = vmatpush.bf16.msra.mxu0 %v7306
    %7330 = vmatmul.bf16.gmra.mxu0 %v7253
    %v7331 = vpop.f32.mrf.mxu0
    %v7332 = vadd.f32 %v7272, %v7331
    %v7333 = vpop.f32.mrf.mxu0
    %v7334 = vadd.f32 %v7272, %v7333
    %7335 = vdwg.mxu0
    %vm7336 = vcmask 97280
    %7337 = vst.msk [vmem:[#allocation23] sm:$0xff] %vm7336, %v7332
    %7338 = vst.msk [vmem:[#allocation23 + $0x8] sm:$0xff] %vm7336, %v7334
    // Predicated region
    $region158: #{_lambda_.1} parent=1 // pred_check
      _
    $region159: #{_lambda_.1} parent=1 // pred_check_branch
      %7340 = sbr.rel (0) target = $region161
    $region160: #{_lambda_.1} parent=1 // pred_region
      %7342 = vsyncadd [#allocation4], 0
      %s7343 = sshll.u32 [#allocation23], 4
      %s7344 = int_to_ptr.vmem [resolvable:$true] %s7343
      %s7345 = sshll.u32 %s26, 4
      %s7346 = int_to_ptr.hbm [resolvable:$true] %s7345
      %7351 = dma.vmem_to_hbm [thread:$0]  %s7344, 256, %s7346, [#allocation4], 128, 128, 8
    $region161: #{_lambda_.1} parent=1 // pred_fallthru
      _
    // Predicated region
    $region162: #{_lambda_.1} parent=1 // pred_check
      _
    $region163: #{_lambda_.1} parent=1 // pred_check_branch
      %7353 = sbr.rel (0) target = $region165
    $region164: #{_lambda_.1} parent=1 // pred_region
      %7355 = dma.done [#allocation4], 256
    $region165: #{_lambda_.1} parent=1 // pred_fallthru
      _
    %7356 = vsyncpa [#allocation3], 1
    %7357 = vsyncpa [#allocation6], 1
    %7358 = vsyncpa [#allocation9], 1
    %7359 = vsyncpa [#allocation12], 1
    %7360 = vsyncpa [#allocation15], 1
    %7361 = vsyncpa [#allocation18], 1
    %7362 = vsyncpa [#allocation21], 1
    %7363 = vsyncpa [#allocation4], 1

</llo_original>
